<compile_context>
chip_gen: v7x
topology: tpu7x:2x2x1
jax: 0.10.0
libtpu: 0.0.40
codegen_flags: <defaults>
</compile_context>

<pallas_src>
import functools

import jax
import jax.numpy as jnp
from jax import lax
from jax.experimental import pallas as pl
from jax.experimental.pallas import tpu as pltpu

EXPANSION = 4
BN_EPS = 1e-5
_LPAD = 8   # interior of the padded conv1 output starts at this (8-aligned)
            # sublane offset; the 1-wide 3x3 halo sits at column _LPAD - 1.


# ----------------------------------------------------------------------------
# Kernel: NB batch samples per grid step, everything fused.
# ----------------------------------------------------------------------------
def _bottleneck_kernel(x_ref,                      # (NB, H, W, Cin)   bf16
                       w1_ref, b1_ref,             # (Cin, P) bf16, (1, P) f32
                       w2_ref, b2_ref,             # (9P, P)  bf16, (1, P) f32
                       w3_ref, b3_ref,             # (P[+Cin], 4P) bf16, (1,4P) f32
                       out_ref,                    # (NB, Ho, Wo, 4P)  bf16
                       pad_ref, col_ref,           # VMEM scratch (bf16)
                       *, stride, has_projection):
    NB, H, W, Cin = x_ref.shape
    P = w1_ref.shape[1]
    _, Ho, Wo, Cout = out_ref.shape
    cdt = pad_ref.dtype                      # matmul operand dtype (bf16)
    f32 = jnp.float32
    M = NB * Ho * Wo

    # ---- conv1 (1x1) + bn1 + relu, written straight into the pad scratch ----
    o1 = jnp.dot(x_ref[...].reshape(NB * H * W, Cin), w1_ref[...],
                 preferred_element_type=f32)
    o1 = jnp.maximum(o1 + b1_ref[...], 0.0)
    pad_ref[:, 1:H + 1, _LPAD:_LPAD + W, :] = o1.reshape(NB, H, W, P).astype(cdt)

    # Zero only the 1-wide halo conv2 reads (cheap; redone every step so the
    # kernel stays correct however the batch grid axis is split across cores).
    zrow = jnp.zeros((NB, 1, W + 2, P), cdt)
    pad_ref[:, 0:1, _LPAD - 1:_LPAD + W + 1, :] = zrow
    pad_ref[:, H + 1:H + 2, _LPAD - 1:_LPAD + W + 1, :] = zrow
    zcol = jnp.zeros((NB, H, 1, P), cdt)
    pad_ref[:, 1:H + 1, _LPAD - 1:_LPAD, :] = zcol
    pad_ref[:, 1:H + 1, _LPAD + W:_LPAD + W + 1, :] = zcol

    # ---- conv2 (3x3, stride, pad=1): one im2col matmul with K = 9P ----------
    # All ref reads are contiguous static slices; the stride-2 decimation is
    # applied on the loaded value (no strided ref indexing).
    # TODO(synk): for stride=2 a polyphase (even/odd column) pad layout would
    # turn these value-level strided slices into fully contiguous reads.
    # TODO(synk): for P=64 the lane-misaligned tap stores could be paired into
    # 128-lane groups; P in {128,256,512} is unaffected.
    rspan = (Ho - 1) * stride + 1
    cspan = (Wo - 1) * stride + 1
    for dy in range(3):
        for dx in range(3):
            c0 = _LPAD - 1 + dx
            tap = pad_ref[:, dy:dy + rspan, c0:c0 + cspan, :]
            if stride != 1:
                tap = tap[:, ::stride, ::stride, :]
            t = dy * 3 + dx
            col_ref[:, :, :, t * P:(t + 1) * P] = tap       # (NB, Ho, Wo, P)

    o2 = jnp.dot(col_ref[...].reshape(M, 9 * P), w2_ref[...],
                 preferred_element_type=f32)
    o2 = jnp.maximum(o2 + b2_ref[...], 0.0)                 # (M, P) f32

    # ---- conv3 (1x1) + bn3 (+ fused proj. shortcut) + residual + relu -------
    if has_projection:
        # w3_ref holds [w3; wsc] stacked along K; one matmul covers conv3 and
        # the strided 1x1 projection shortcut (their BN biases were fused).
        xs = x_ref[...]
        if stride != 1:
            xs = xs[:, ::stride, ::stride, :]
        lhs = jnp.concatenate([o2.astype(cdt), xs.reshape(M, Cin)], axis=-1)
        o3 = jnp.dot(lhs, w3_ref[...], preferred_element_type=f32)
    else:
        # identity shortcut: no extra matmul, just add the input back.
        o3 = jnp.dot(o2.astype(cdt), w3_ref[...], preferred_element_type=f32)
        o3 = o3 + x_ref[...].reshape(M, Cout).astype(f32)

    out = jnp.maximum(o3 + b3_ref[...], 0.0)                # f32 epilogue
    out_ref[...] = out.reshape(NB, Ho, Wo, Cout).astype(out_ref.dtype)


# ----------------------------------------------------------------------------
# Glue: BN folding, weight layout, batch blocking, pallas_call setup.
# ----------------------------------------------------------------------------
def _full_spec(shape):
    return pl.BlockSpec(shape, lambda n: (0,) * len(shape))


def _fold_bn(gamma, beta, mean, var, eps=BN_EPS):
    scale = (gamma / jnp.sqrt(var + eps)).astype(jnp.float32)
    bias = (beta - mean * scale).astype(jnp.float32)
    return scale, bias


def bottleneck_forward_nhwc(x_nhwc, params, stride=1,
                            compute_dtype=jnp.bfloat16, out_dtype=None):
    """Bottleneck block, NHWC in / NHWC out (bf16 out by default so chained
    blocks consume it directly; pass out_dtype=jnp.float32 to override)."""
    if out_dtype is None:
        out_dtype = compute_dtype
    N, H, W, Cin = x_nhwc.shape
    P = params["conv1_w"].shape[0]
    Cout = EXPANSION * P
    Ho = (H - 1) // stride + 1
    Wo = (W - 1) // stride + 1
    has_projection = "sc_w" in params
    if not has_projection:
        assert stride == 1 and Cin == Cout, "identity shortcut shape mismatch"

    s1, b1 = _fold_bn(*params["bn1"])
    s2, b2 = _fold_bn(*params["bn2"])
    s3, b3 = _fold_bn(*params["bn3"])

    # Fold BN scales into the conv weights (per output channel), lay weights
    # out for channel matmuls, and cast MXU operands to bf16.
    w1 = (params["conv1_w"][:, :, 0, 0].T * s1[None, :]).astype(compute_dtype)
    w2 = (jnp.transpose(params["conv2_w"], (2, 3, 1, 0)) *
          s2[None, None, None, :]).reshape(9 * P, P).astype(compute_dtype)
    w3 = params["conv3_w"][:, :, 0, 0].T * s3[None, :]              # (P, 4P)
    b_last = b3
    if has_projection:
        ssc, bsc = _fold_bn(*params["bn_sc"])
        wsc = params["sc_w"][:, :, 0, 0].T * ssc[None, :]           # (Cin, 4P)
        w3 = jnp.concatenate([w3, wsc], axis=0)                     # (P+Cin, 4P)
        b_last = b3 + bsc                                           # fused bias
    w3 = w3.astype(compute_dtype)

    x = x_nhwc.astype(compute_dtype)
    b1 = b1.reshape(1, P).astype(jnp.float32)
    b2 = b2.reshape(1, P).astype(jnp.float32)
    b_last = b_last.reshape(1, Cout).astype(jnp.float32)

    # ---- VMEM budgeting (generation aware) + batch-block selection ----------
    cbytes = jnp.dtype(compute_dtype).itemsize
    obytes = jnp.dtype(out_dtype).itemsize
    pad_row = _LPAD + W + 1

    def per_sample_bytes(nb):
        pad = nb * (H + 2) * pad_row * P * cbytes
        col = nb * Ho * Wo * 9 * P * cbytes
        xblk = 2 * nb * H * W * Cin * cbytes            # double-buffered input
        oblk = 2 * nb * Ho * Wo * Cout * obytes         # double-buffered output
        interm = nb * (H * W * P * 4                    # o1 (f32)
                       + Ho * Wo * P * (4 + cbytes)     # o2 f32 + bf16 cast
                       + Ho * Wo * (P + Cin) * cbytes   # fused conv3 lhs
                       + 2 * Ho * Wo * Cout * 4)        # o3 + out (f32)
        return pad + col + xblk + oblk + interm

    # Constant-index-map weights/biases are fetched once (not double counted).
    fixed = ((w1.size + w2.size + w3.size) * cbytes
             + (b1.size + b2.size + b_last.size) * 4)

    try:
        phys_vmem = int(pltpu.get_tpu_info().vmem_capacity_bytes)
    except Exception:
        phys_vmem = 64 * 1024 * 1024        # conservative: v7x physical VMEM
    ceiling = int(0.80 * phys_vmem)

    # Batch-block small-spatial samples so the matmul M dim amortizes MXU
    # weight loads; bounded by a conservative VMEM budget (NB=1 for large H,W).
    nb = 1
    budget = int(0.70 * ceiling)
    for cand in range(1, N + 1):
        if N % cand == 0 and fixed + per_sample_bytes(cand) <= budget:
            nb = cand

    est = fixed + per_sample_bytes(nb)
    vmem_limit = max(32 * 1024 * 1024, int(1.25 * est) + (2 << 20))
    vmem_limit = min(vmem_limit, ceiling)

    # ---- pallas_call ---------------------------------------------------------
    in_specs = [
        pl.BlockSpec((nb, H, W, Cin), lambda n: (n, 0, 0, 0)),
        _full_spec(w1.shape), _full_spec(b1.shape),
        _full_spec(w2.shape), _full_spec(b2.shape),
        _full_spec(w3.shape), _full_spec(b_last.shape),
    ]
    scratch_shapes = [
        pltpu.VMEM((nb, H + 2, pad_row, P), compute_dtype),   # padded conv1 out
        pltpu.VMEM((nb, Ho, Wo, 9 * P), compute_dtype),       # im2col buffer
    ]
    grid_spec = pltpu.PrefetchScalarGridSpec(
        num_scalar_prefetch=0,
        grid=(N // nb,),
        in_specs=in_specs,
        out_specs=pl.BlockSpec((nb, Ho, Wo, Cout), lambda n: (n, 0, 0, 0)),
        scratch_shapes=scratch_shapes,
    )

    kernel = functools.partial(_bottleneck_kernel, stride=stride,
                               has_projection=has_projection)
    # TODO(synk): add a second "parallel" grid axis over output-row tiles (with
    # a 1-row halo) so both v7x TensorCores stay busy when N is small and so
    # 56x56 stages don't need the whole sample resident in VMEM.
    return pl.pallas_call(
        kernel,
        out_shape=jax.ShapeDtypeStruct((N, Ho, Wo, Cout), out_dtype),
        grid_spec=grid_spec,
        compiler_params=pltpu.CompilerParams(
            dimension_semantics=("parallel",),
            vmem_limit_bytes=vmem_limit),
    )(x, w1, b1, w2, b2, w3, b_last)


def bottleneck_forward(x_nchw, params, stride=1, compute_dtype=jnp.bfloat16,
                       out_dtype=None):
    """NCHW wrapper matching the PyTorch module. When chaining many blocks,
    use bottleneck_forward_nhwc and transpose once at network input/output."""
    x = jnp.transpose(x_nchw, (0, 2, 3, 1))
    out = bottleneck_forward_nhwc(x, params, stride=stride,
                                  compute_dtype=compute_dtype,
                                  out_dtype=out_dtype)
    return jnp.transpose(out, (0, 3, 1, 2))


# ----------------------------------------------------------------------------
# Pure-JAX f32 reference (inference-mode BatchNorm) for correctness checking.
# ----------------------------------------------------------------------------
def _ref_forward(x, p, stride=1):
    def conv(x, w, s, pad):
        return lax.conv_general_dilated(
            x, w, (s, s), pad, dimension_numbers=("NCHW", "OIHW", "NCHW"))

    def bn(x, stats):
        g, b, m, v = [a.reshape(1, -1, 1, 1) for a in stats]
        return (x - m) / jnp.sqrt(v + BN_EPS) * g + b

    out = jax.nn.relu(bn(conv(x, p["conv1_w"], 1, "VALID"), p["bn1"]))
    out = jax.nn.relu(bn(conv(out, p["conv2_w"], stride, [(1, 1), (1, 1)]), p["bn2"]))
    out = bn(conv(out, p["conv3_w"], 1, "VALID"), p["bn3"])
    if "sc_w" in p:
        sc = bn(conv(x, p["sc_w"], stride, "VALID"), p["bn_sc"])
    else:
        sc = x
    return jax.nn.relu(out + sc)


def _init_params(key, in_planes, planes, stride):
    cout = EXPANSION * planes
    ks = jax.random.split(key, 8)

    def bn_stats(k, c):
        k1, k2, k3, k4 = jax.random.split(k, 4)
        gamma = 1.0 + 0.1 * jax.random.normal(k1, (c,), jnp.float32)
        beta = 0.1 * jax.random.normal(k2, (c,), jnp.float32)
        mean = 0.1 * jax.random.normal(k3, (c,), jnp.float32)
        var = 1.0 + 0.1 * jax.random.uniform(k4, (c,), jnp.float32)
        return (gamma, beta, mean, var)

    params = {
        "conv1_w": 0.2 * jax.random.normal(ks[0], (planes, in_planes, 1, 1), jnp.float32),
        "bn1": bn_stats(ks[1], planes),
        "conv2_w": 0.2 * jax.random.normal(ks[2], (planes, planes, 3, 3), jnp.float32),
        "bn2": bn_stats(ks[3], planes),
        "conv3_w": 0.2 * jax.random.normal(ks[4], (cout, planes, 1, 1), jnp.float32),
        "bn3": bn_stats(ks[5], cout),
    }
    if stride != 1 or in_planes != cout:
        params["sc_w"] = 0.2 * jax.random.normal(ks[6], (cout, in_planes, 1, 1), jnp.float32)
        params["bn_sc"] = bn_stats(ks[7], cout)
    return params


if __name__ == "__main__":
    key = jax.random.PRNGKey(0)
    N, H, W = 2, 16, 16
    configs = [
        # (in_planes, planes, stride)
        (8, 4, 1),    # projection shortcut (channel change)
        (16, 4, 1),   # identity shortcut (no extra matmul)
        (8, 4, 2),    # strided projection shortcut
    ]
    for i, (in_planes, planes, stride) in enumerate(configs):
        kx, kp = jax.random.split(jax.random.fold_in(key, i))
        x = jax.random.normal(kx, (N, in_planes, H, W), jnp.float32)
        params = _init_params(kp, in_planes, planes, stride)

        out = jax.block_until_ready(bottleneck_forward(x, params, stride=stride))
        ref = jax.block_until_ready(_ref_forward(x, params, stride=stride))

        Ho = (H - 1) // stride + 1
        assert out.shape == (N, EXPANSION * planes, Ho, Ho), out.shape
        out_f32 = out.astype(jnp.float32)
        max_err = float(jnp.max(jnp.abs(out_f32 - ref)))
        # bf16 MXU operands + bf16 output -> compare loosely vs f32 reference.
        assert jnp.allclose(out_f32, ref, atol=1e-1, rtol=5e-2), (i, max_err)

    print("KERNEL_OK")
</pallas_src>

<mosaic_0001>
module attributes {stable_mosaic.version = 11 : i64} {
  func.func @_bottleneck_kernel(%arg0: i32, %arg1: memref<2x16x16x8xbf16, #tpu.memory_space<vmem>>, %arg2: memref<8x4xbf16, #tpu.memory_space<vmem>>, %arg3: memref<1x4xf32, #tpu.memory_space<vmem>>, %arg4: memref<36x4xbf16, #tpu.memory_space<vmem>>, %arg5: memref<1x4xf32, #tpu.memory_space<vmem>>, %arg6: memref<12x16xbf16, #tpu.memory_space<vmem>>, %arg7: memref<1x16xf32, #tpu.memory_space<vmem>>, %arg8: memref<2x16x16x16xbf16, #tpu.memory_space<vmem>>, %arg9: memref<2x18x25x4xbf16, #tpu.memory_space<vmem>>, %arg10: memref<2x16x16x36xbf16, #tpu.memory_space<vmem>>) attributes {dimension_semantics = [#tpu.dimension_semantics<parallel>], iteration_bounds = array<i64: 1>, scalar_prefetch = 0 : i64, scratch_operands = 2 : i64, tpu.core_type = #tpu.core_type<tc>, window_params = [{transform_indices = @transform_0, window_bounds = array<i64: 2, 16, 16, 8>}, {pipeline_mode = #tpu.pipeline_mode<synchronous>, transform_indices = @transform_1, window_bounds = array<i64: 8, 4>}, {pipeline_mode = #tpu.pipeline_mode<synchronous>, transform_indices = @transform_2, window_bounds = array<i64: 1, 4>}, {pipeline_mode = #tpu.pipeline_mode<synchronous>, transform_indices = @transform_3, window_bounds = array<i64: 36, 4>}, {pipeline_mode = #tpu.pipeline_mode<synchronous>, transform_indices = @transform_4, window_bounds = array<i64: 1, 4>}, {pipeline_mode = #tpu.pipeline_mode<synchronous>, transform_indices = @transform_5, window_bounds = array<i64: 12, 16>}, {pipeline_mode = #tpu.pipeline_mode<synchronous>, transform_indices = @transform_6, window_bounds = array<i64: 1, 16>}, {transform_indices = @transform_7, window_bounds = array<i64: 2, 16, 16, 16>}]} {
    %c0 = arith.constant 0 : index
    %c0_0 = arith.constant 0 : index
    %c0_1 = arith.constant 0 : index
    %c0_2 = arith.constant 0 : index
    %0 = vector.load %arg1[%c0, %c0_0, %c0_1, %c0_2] : memref<2x16x16x8xbf16, #tpu.memory_space<vmem>>, vector<2x16x16x8xbf16>
    %1 = vector.shape_cast %0 : vector<2x16x16x8xbf16> to vector<512x8xbf16>
    %c0_3 = arith.constant 0 : index
    %c0_4 = arith.constant 0 : index
    %2 = vector.load %arg2[%c0_3, %c0_4] : memref<8x4xbf16, #tpu.memory_space<vmem>>, vector<8x4xbf16>
    %cst = arith.constant dense<0.000000e+00> : vector<512x4xf32>
    %3 = tpu.matmul %1, %2, %cst {dimension_numbers = #tpu.dot_dimension_numbers<[1], [0], [0], [1], [0, 0, 1, 1], [], []>} : vector<512x8xbf16>, vector<8x4xbf16>, vector<512x4xf32> -> vector<512x4xf32>
    %c0_5 = arith.constant 0 : index
    %c0_6 = arith.constant 0 : index
    %4 = vector.load %arg3[%c0_5, %c0_6] : memref<1x4xf32, #tpu.memory_space<vmem>>, vector<1x4xf32>
    %5 = vector.broadcast %4 : vector<1x4xf32> to vector<512x4xf32>
    %6 = arith.addf %3, %5 : vector<512x4xf32>
    %cst_7 = arith.constant 0.000000e+00 : f32
    %7 = vector.broadcast %cst_7 : f32 to vector<512x4xf32>
    %8 = arith.maximumf %6, %7 : vector<512x4xf32>
    %9 = vector.shape_cast %8 : vector<512x4xf32> to vector<2x16x16x4xf32>
    %10 = arith.truncf %9 : vector<2x16x16x4xf32> to vector<2x16x16x4xbf16>
    %c0_8 = arith.constant 0 : index
    %c1 = arith.constant 1 : index
    %c8 = arith.constant 8 : index
    %c0_9 = arith.constant 0 : index
    %11 = vector.load %arg9[%c0_8, %c1, %c8, %c0_9] : memref<2x18x25x4xbf16, #tpu.memory_space<vmem>>, vector<2x16x16x4xbf16>
    tpu.vector_store %arg9[%c0_8, %c1, %c8, %c0_9], %10 {strides = array<i32>} : memref<2x18x25x4xbf16, #tpu.memory_space<vmem>>, vector<2x16x16x4xbf16>,
    %cst_10 = arith.constant 0.000000e+00 : bf16
    %12 = vector.broadcast %cst_10 : bf16 to vector<2x1x18x4xbf16>
    %c0_11 = arith.constant 0 : index
    %c0_12 = arith.constant 0 : index
    %c7 = arith.constant 7 : index
    %c0_13 = arith.constant 0 : index
    %13 = vector.load %arg9[%c0_11, %c0_12, %c7, %c0_13] : memref<2x18x25x4xbf16, #tpu.memory_space<vmem>>, vector<2x1x18x4xbf16>
    tpu.vector_store %arg9[%c0_11, %c0_12, %c7, %c0_13], %12 {strides = array<i32>} : memref<2x18x25x4xbf16, #tpu.memory_space<vmem>>, vector<2x1x18x4xbf16>,
    %c0_14 = arith.constant 0 : index
    %c17 = arith.constant 17 : index
    %c7_15 = arith.constant 7 : index
    %c0_16 = arith.constant 0 : index
    %14 = vector.load %arg9[%c0_14, %c17, %c7_15, %c0_16] : memref<2x18x25x4xbf16, #tpu.memory_space<vmem>>, vector<2x1x18x4xbf16>
    tpu.vector_store %arg9[%c0_14, %c17, %c7_15, %c0_16], %12 {strides = array<i32>} : memref<2x18x25x4xbf16, #tpu.memory_space<vmem>>, vector<2x1x18x4xbf16>,
    %cst_17 = arith.constant 0.000000e+00 : bf16
    %15 = vector.broadcast %cst_17 : bf16 to vector<2x16x1x4xbf16>
    %c0_18 = arith.constant 0 : index
    %c1_19 = arith.constant 1 : index
    %c7_20 = arith.constant 7 : index
    %c0_21 = arith.constant 0 : index
    %16 = vector.load %arg9[%c0_18, %c1_19, %c7_20, %c0_21] : memref<2x18x25x4xbf16, #tpu.memory_space<vmem>>, vector<2x16x1x4xbf16>
    tpu.vector_store %arg9[%c0_18, %c1_19, %c7_20, %c0_21], %15 {strides = array<i32>} : memref<2x18x25x4xbf16, #tpu.memory_space<vmem>>, vector<2x16x1x4xbf16>,
    %c0_22 = arith.constant 0 : index
    %c1_23 = arith.constant 1 : index
    %c24 = arith.constant 24 : index
    %c0_24 = arith.constant 0 : index
    %17 = vector.load %arg9[%c0_22, %c1_23, %c24, %c0_24] : memref<2x18x25x4xbf16, #tpu.memory_space<vmem>>, vector<2x16x1x4xbf16>
    tpu.vector_store %arg9[%c0_22, %c1_23, %c24, %c0_24], %15 {strides = array<i32>} : memref<2x18x25x4xbf16, #tpu.memory_space<vmem>>, vector<2x16x1x4xbf16>,
    %c0_25 = arith.constant 0 : index
    %c0_26 = arith.constant 0 : index
    %c7_27 = arith.constant 7 : index
    %c0_28 = arith.constant 0 : index
    %18 = vector.load %arg9[%c0_25, %c0_26, %c7_27, %c0_28] : memref<2x18x25x4xbf16, #tpu.memory_space<vmem>>, vector<2x16x16x4xbf16>
    %c0_29 = arith.constant 0 : index
    %c0_30 = arith.constant 0 : index
    %c0_31 = arith.constant 0 : index
    %c0_32 = arith.constant 0 : index
    %19 = vector.load %arg10[%c0_29, %c0_30, %c0_31, %c0_32] : memref<2x16x16x36xbf16, #tpu.memory_space<vmem>>, vector<2x16x16x4xbf16>
    tpu.vector_store %arg10[%c0_29, %c0_30, %c0_31, %c0_32], %18 {strides = array<i32>} : memref<2x16x16x36xbf16, #tpu.memory_space<vmem>>, vector<2x16x16x4xbf16>,
    %c0_33 = arith.constant 0 : index
    %c0_34 = arith.constant 0 : index
    %c8_35 = arith.constant 8 : index
    %c0_36 = arith.constant 0 : index
    %20 = vector.load %arg9[%c0_33, %c0_34, %c8_35, %c0_36] : memref<2x18x25x4xbf16, #tpu.memory_space<vmem>>, vector<2x16x16x4xbf16>
    %c0_37 = arith.constant 0 : index
    %c0_38 = arith.constant 0 : index
    %c0_39 = arith.constant 0 : index
    %c4 = arith.constant 4 : index
    %21 = vector.load %arg10[%c0_37, %c0_38, %c0_39, %c4] : memref<2x16x16x36xbf16, #tpu.memory_space<vmem>>, vector<2x16x16x4xbf16>
    tpu.vector_store %arg10[%c0_37, %c0_38, %c0_39, %c4], %20 {strides = array<i32>} : memref<2x16x16x36xbf16, #tpu.memory_space<vmem>>, vector<2x16x16x4xbf16>,
    %c0_40 = arith.constant 0 : index
    %c0_41 = arith.constant 0 : index
    %c9 = arith.constant 9 : index
    %c0_42 = arith.constant 0 : index
    %22 = vector.load %arg9[%c0_40, %c0_41, %c9, %c0_42] : memref<2x18x25x4xbf16, #tpu.memory_space<vmem>>, vector<2x16x16x4xbf16>
    %c0_43 = arith.constant 0 : index
    %c0_44 = arith.constant 0 : index
    %c0_45 = arith.constant 0 : index
    %c8_46 = arith.constant 8 : index
    %23 = vector.load %arg10[%c0_43, %c0_44, %c0_45, %c8_46] : memref<2x16x16x36xbf16, #tpu.memory_space<vmem>>, vector<2x16x16x4xbf16>
    tpu.vector_store %arg10[%c0_43, %c0_44, %c0_45, %c8_46], %22 {strides = array<i32>} : memref<2x16x16x36xbf16, #tpu.memory_space<vmem>>, vector<2x16x16x4xbf16>,
    %c0_47 = arith.constant 0 : index
    %c1_48 = arith.constant 1 : index
    %c7_49 = arith.constant 7 : index
    %c0_50 = arith.constant 0 : index
    %24 = vector.load %arg9[%c0_47, %c1_48, %c7_49, %c0_50] : memref<2x18x25x4xbf16, #tpu.memory_space<vmem>>, vector<2x16x16x4xbf16>
    %c0_51 = arith.constant 0 : index
    %c0_52 = arith.constant 0 : index
    %c0_53 = arith.constant 0 : index
    %c12 = arith.constant 12 : index
    %25 = vector.load %arg10[%c0_51, %c0_52, %c0_53, %c12] : memref<2x16x16x36xbf16, #tpu.memory_space<vmem>>, vector<2x16x16x4xbf16>
    tpu.vector_store %arg10[%c0_51, %c0_52, %c0_53, %c12], %24 {strides = array<i32>} : memref<2x16x16x36xbf16, #tpu.memory_space<vmem>>, vector<2x16x16x4xbf16>,
    %c0_54 = arith.constant 0 : index
    %c1_55 = arith.constant 1 : index
    %c8_56 = arith.constant 8 : index
    %c0_57 = arith.constant 0 : index
    %26 = vector.load %arg9[%c0_54, %c1_55, %c8_56, %c0_57] : memref<2x18x25x4xbf16, #tpu.memory_space<vmem>>, vector<2x16x16x4xbf16>
    %c0_58 = arith.constant 0 : index
    %c0_59 = arith.constant 0 : index
    %c0_60 = arith.constant 0 : index
    %c16 = arith.constant 16 : index
    %27 = vector.load %arg10[%c0_58, %c0_59, %c0_60, %c16] : memref<2x16x16x36xbf16, #tpu.memory_space<vmem>>, vector<2x16x16x4xbf16>
    tpu.vector_store %arg10[%c0_58, %c0_59, %c0_60, %c16], %26 {strides = array<i32>} : memref<2x16x16x36xbf16, #tpu.memory_space<vmem>>, vector<2x16x16x4xbf16>,
    %c0_61 = arith.constant 0 : index
    %c1_62 = arith.constant 1 : index
    %c9_63 = arith.constant 9 : index
    %c0_64 = arith.constant 0 : index
    %28 = vector.load %arg9[%c0_61, %c1_62, %c9_63, %c0_64] : memref<2x18x25x4xbf16, #tpu.memory_space<vmem>>, vector<2x16x16x4xbf16>
    %c0_65 = arith.constant 0 : index
    %c0_66 = arith.constant 0 : index
    %c0_67 = arith.constant 0 : index
    %c20 = arith.constant 20 : index
    %29 = vector.load %arg10[%c0_65, %c0_66, %c0_67, %c20] : memref<2x16x16x36xbf16, #tpu.memory_space<vmem>>, vector<2x16x16x4xbf16>
    tpu.vector_store %arg10[%c0_65, %c0_66, %c0_67, %c20], %28 {strides = array<i32>} : memref<2x16x16x36xbf16, #tpu.memory_space<vmem>>, vector<2x16x16x4xbf16>,
    %c0_68 = arith.constant 0 : index
    %c2 = arith.constant 2 : index
    %c7_69 = arith.constant 7 : index
    %c0_70 = arith.constant 0 : index
    %30 = vector.load %arg9[%c0_68, %c2, %c7_69, %c0_70] : memref<2x18x25x4xbf16, #tpu.memory_space<vmem>>, vector<2x16x16x4xbf16>
    %c0_71 = arith.constant 0 : index
    %c0_72 = arith.constant 0 : index
    %c0_73 = arith.constant 0 : index
    %c24_74 = arith.constant 24 : index
    %31 = vector.load %arg10[%c0_71, %c0_72, %c0_73, %c24_74] : memref<2x16x16x36xbf16, #tpu.memory_space<vmem>>, vector<2x16x16x4xbf16>
    tpu.vector_store %arg10[%c0_71, %c0_72, %c0_73, %c24_74], %30 {strides = array<i32>} : memref<2x16x16x36xbf16, #tpu.memory_space<vmem>>, vector<2x16x16x4xbf16>,
    %c0_75 = arith.constant 0 : index
    %c2_76 = arith.constant 2 : index
    %c8_77 = arith.constant 8 : index
    %c0_78 = arith.constant 0 : index
    %32 = vector.load %arg9[%c0_75, %c2_76, %c8_77, %c0_78] : memref<2x18x25x4xbf16, #tpu.memory_space<vmem>>, vector<2x16x16x4xbf16>
    %c0_79 = arith.constant 0 : index
    %c0_80 = arith.constant 0 : index
    %c0_81 = arith.constant 0 : index
    %c28 = arith.constant 28 : index
    %33 = vector.load %arg10[%c0_79, %c0_80, %c0_81, %c28] : memref<2x16x16x36xbf16, #tpu.memory_space<vmem>>, vector<2x16x16x4xbf16>
    tpu.vector_store %arg10[%c0_79, %c0_80, %c0_81, %c28], %32 {strides = array<i32>} : memref<2x16x16x36xbf16, #tpu.memory_space<vmem>>, vector<2x16x16x4xbf16>,
    %c0_82 = arith.constant 0 : index
    %c2_83 = arith.constant 2 : index
    %c9_84 = arith.constant 9 : index
    %c0_85 = arith.constant 0 : index
    %34 = vector.load %arg9[%c0_82, %c2_83, %c9_84, %c0_85] : memref<2x18x25x4xbf16, #tpu.memory_space<vmem>>, vector<2x16x16x4xbf16>
    %c0_86 = arith.constant 0 : index
    %c0_87 = arith.constant 0 : index
    %c0_88 = arith.constant 0 : index
    %c32 = arith.constant 32 : index
    %35 = vector.load %arg10[%c0_86, %c0_87, %c0_88, %c32] : memref<2x16x16x36xbf16, #tpu.memory_space<vmem>>, vector<2x16x16x4xbf16>
    tpu.vector_store %arg10[%c0_86, %c0_87, %c0_88, %c32], %34 {strides = array<i32>} : memref<2x16x16x36xbf16, #tpu.memory_space<vmem>>, vector<2x16x16x4xbf16>,
    %c0_89 = arith.constant 0 : index
    %c0_90 = arith.constant 0 : index
    %c0_91 = arith.constant 0 : index
    %c0_92 = arith.constant 0 : index
    %36 = vector.load %arg10[%c0_89, %c0_90, %c0_91, %c0_92] : memref<2x16x16x36xbf16, #tpu.memory_space<vmem>>, vector<2x16x16x36xbf16>
    %37 = vector.shape_cast %36 : vector<2x16x16x36xbf16> to vector<512x36xbf16>
    %c0_93 = arith.constant 0 : index
    %c0_94 = arith.constant 0 : index
    %38 = vector.load %arg4[%c0_93, %c0_94] : memref<36x4xbf16, #tpu.memory_space<vmem>>, vector<36x4xbf16>
    %cst_95 = arith.constant dense<0.000000e+00> : vector<512x4xf32>
    %39 = tpu.matmul %37, %38, %cst_95 {dimension_numbers = #tpu.dot_dimension_numbers<[1], [0], [0], [1], [0, 0, 1, 1], [], []>} : vector<512x36xbf16>, vector<36x4xbf16>, vector<512x4xf32> -> vector<512x4xf32>
    %c0_96 = arith.constant 0 : index
    %c0_97 = arith.constant 0 : index
    %40 = vector.load %arg5[%c0_96, %c0_97] : memref<1x4xf32, #tpu.memory_space<vmem>>, vector<1x4xf32>
    %41 = vector.broadcast %40 : vector<1x4xf32> to vector<512x4xf32>
    %42 = arith.addf %39, %41 : vector<512x4xf32>
    %cst_98 = arith.constant 0.000000e+00 : f32
    %43 = vector.broadcast %cst_98 : f32 to vector<512x4xf32>
    %44 = arith.maximumf %42, %43 : vector<512x4xf32>
    %c0_99 = arith.constant 0 : index
    %c0_100 = arith.constant 0 : index
    %c0_101 = arith.constant 0 : index
    %c0_102 = arith.constant 0 : index
    %45 = vector.load %arg1[%c0_99, %c0_100, %c0_101, %c0_102] : memref<2x16x16x8xbf16, #tpu.memory_space<vmem>>, vector<2x16x16x8xbf16>
    %46 = arith.truncf %44 : vector<512x4xf32> to vector<512x4xbf16>
    %47 = vector.shape_cast %45 : vector<2x16x16x8xbf16> to vector<512x8xbf16>
    %48 = tpu.concatenate %46, %47 in 1 : vector<512x4xbf16>, vector<512x8xbf16> -> vector<512x12xbf16>
    %c0_103 = arith.constant 0 : index
    %c0_104 = arith.constant 0 : index
    %49 = vector.load %arg6[%c0_103, %c0_104] : memref<12x16xbf16, #tpu.memory_space<vmem>>, vector<12x16xbf16>
    %cst_105 = arith.constant dense<0.000000e+00> : vector<512x16xf32>
    %50 = tpu.matmul %48, %49, %cst_105 {dimension_numbers = #tpu.dot_dimension_numbers<[1], [0], [0], [1], [0, 0, 1, 1], [], []>} : vector<512x12xbf16>, vector<12x16xbf16>, vector<512x16xf32> -> vector<512x16xf32>
    %c0_106 = arith.constant 0 : index
    %c0_107 = arith.constant 0 : index
    %51 = vector.load %arg7[%c0_106, %c0_107] : memref<1x16xf32, #tpu.memory_space<vmem>>, vector<1x16xf32>
    %52 = vector.broadcast %51 : vector<1x16xf32> to vector<512x16xf32>
    %53 = arith.addf %50, %52 : vector<512x16xf32>
    %cst_108 = arith.constant 0.000000e+00 : f32
    %54 = vector.broadcast %cst_108 : f32 to vector<512x16xf32>
    %55 = arith.maximumf %53, %54 : vector<512x16xf32>
    %56 = vector.shape_cast %55 : vector<512x16xf32> to vector<2x16x16x16xf32>
    %57 = arith.truncf %56 : vector<2x16x16x16xf32> to vector<2x16x16x16xbf16>
    %c0_109 = arith.constant 0 : index
    %c0_110 = arith.constant 0 : index
    %c0_111 = arith.constant 0 : index
    %c0_112 = arith.constant 0 : index
    %58 = vector.load %arg8[%c0_109, %c0_110, %c0_111, %c0_112] : memref<2x16x16x16xbf16, #tpu.memory_space<vmem>>, vector<2x16x16x16xbf16>
    tpu.vector_store %arg8[%c0_109, %c0_110, %c0_111, %c0_112], %57 {strides = array<i32>} : memref<2x16x16x16xbf16, #tpu.memory_space<vmem>>, vector<2x16x16x16xbf16>,
    return
  }
  func.func @transform_0(%arg0: i32) -> (i32, i32, i32, i32) {
    %c0_i32 = arith.constant 0 : i32
    %c0_i32_0 = arith.constant 0 : i32
    %c0_i32_1 = arith.constant 0 : i32
    %c0_i32_2 = arith.constant 0 : i32
    return %arg0, %c0_i32, %c0_i32_0, %c0_i32_1 : i32, i32, i32, i32
  }
  func.func @transform_1(%arg0: i32) -> (i32, i32) {
    %c0_i32 = arith.constant 0 : i32
    %c0_i32_0 = arith.constant 0 : i32
    %c0_i32_1 = arith.constant 0 : i32
    return %c0_i32, %c0_i32_0 : i32, i32
  }
  func.func @transform_2(%arg0: i32) -> (i32, i32) {
    %c0_i32 = arith.constant 0 : i32
    %c0_i32_0 = arith.constant 0 : i32
    %c0_i32_1 = arith.constant 0 : i32
    return %c0_i32, %c0_i32_0 : i32, i32
  }
  func.func @transform_3(%arg0: i32) -> (i32, i32) {
    %c0_i32 = arith.constant 0 : i32
    %c0_i32_0 = arith.constant 0 : i32
    %c0_i32_1 = arith.constant 0 : i32
    return %c0_i32, %c0_i32_0 : i32, i32
  }
  func.func @transform_4(%arg0: i32) -> (i32, i32) {
    %c0_i32 = arith.constant 0 : i32
    %c0_i32_0 = arith.constant 0 : i32
    %c0_i32_1 = arith.constant 0 : i32
    return %c0_i32, %c0_i32_0 : i32, i32
  }
  func.func @transform_5(%arg0: i32) -> (i32, i32) {
    %c0_i32 = arith.constant 0 : i32
    %c0_i32_0 = arith.constant 0 : i32
    %c0_i32_1 = arith.constant 0 : i32
    return %c0_i32, %c0_i32_0 : i32, i32
  }
  func.func @transform_6(%arg0: i32) -> (i32, i32) {
    %c0_i32 = arith.constant 0 : i32
    %c0_i32_0 = arith.constant 0 : i32
    %c0_i32_1 = arith.constant 0 : i32
    return %c0_i32, %c0_i32_0 : i32, i32
  }
  func.func @transform_7(%arg0: i32) -> (i32, i32, i32, i32) {
    %c0_i32 = arith.constant 0 : i32
    %c0_i32_0 = arith.constant 0 : i32
    %c0_i32_1 = arith.constant 0 : i32
    %c0_i32_2 = arith.constant 0 : i32
    return %arg0, %c0_i32, %c0_i32_0, %c0_i32_1 : i32, i32, i32, i32
  }
}

</mosaic_0001>

<llo_original>
// kernel: tpu_custom_call.1
$region0: #{tpu_custom_call.1}
  #allocation0 [shape = 'u32[]', space=smem, size = 0x4, offset = 0x4, fixed_abs, tag = 'smem constant byte address 0x4 - core index']
  #allocation1 [shape = 'u32[144,128]{1,0:T(1,128)}', space=vmem, size = 0x12000, scoped, tag = 'internal scratch']
  #allocation2 [shape = 'bf16[2,18,25,4]{3,2,1,0:T(8,128)(2,1)}', space=vmem, size = 0x48000, scoped, tag = 'scratch operand']
  #allocation3 [shape = 'bf16[2,16,16,36]{3,2,1,0:T(16,128)(2,1)}', space=vmem, size = 0x20000, scoped, tag = 'scratch operand']
  %s0 = inlined_call_operand.vmem [shape: bf16[2,16,16,8], index: 0, kind: input, shape index: {}]
  %s1 = inlined_call_operand.vmem [shape: bf16[8,4], index: 1, kind: input, shape index: {}]
  %s2 = inlined_call_operand.vmem [shape: f32[1,4], index: 2, kind: input, shape index: {}]
  %s3 = inlined_call_operand.vmem [shape: bf16[36,4], index: 3, kind: input, shape index: {}]
  %s4 = inlined_call_operand.vmem [shape: f32[1,4], index: 4, kind: input, shape index: {}]
  %s5 = inlined_call_operand.vmem [shape: bf16[12,16], index: 5, kind: input, shape index: {}]
  %s6 = inlined_call_operand.vmem [shape: f32[1,16], index: 6, kind: input, shape index: {}]
  %s7 = inlined_call_operand.hbm [shape: bf16[2,16,16,16], index: 7, kind: output, shape index: {}]
  %s8 = sld [smem:[#allocation0]]
  $region38: #{tpu_custom_call.1} parent=0
    _
  %s10 = ssub.s32 1, %s8
  %s11 = scalar_select 0, %s10, %s8
  $region1: #{tpu_custom_call.1} parent=0
    #allocation4 [shape = 'u8[131072]{0}', space=vmem, size = 0x20000, scoped, tag = 'output window, operand 0, single buffered']
    #allocation5 [shape = 's32[1]{0}', space=sflag, size = 0x4, scoped, tag = 'scoped memory for tpu_custom_call.1']
    %12 = vsyncpa [#allocation5], 0
    // Predicated region
    $region2: #{tpu_custom_call.1} parent=1 // pred_check
      _
    $region3: #{tpu_custom_call.1} parent=1 // pred_check_branch
      %14 = sbr.rel (0) target = $region5
    $region4: #{tpu_custom_call.1} parent=1 // pred_region
      _
    $region5: #{tpu_custom_call.1} parent=1 // pred_fallthru
      _
    // Predicated region
    $region6: #{tpu_custom_call.1} parent=1 // pred_check
      _
    $region7: #{tpu_custom_call.1} parent=1 // pred_check_branch
      %16 = sbr.rel (0) target = $region9
    $region8: #{tpu_custom_call.1} parent=1 // pred_region
      _
    $region9: #{tpu_custom_call.1} parent=1 // pred_fallthru
      _
    // Predicated region
    $region10: #{tpu_custom_call.1} parent=1 // pred_check
      _
    $region11: #{tpu_custom_call.1} parent=1 // pred_check_branch
      %18 = sbr.rel (0) target = $region13
    $region12: #{tpu_custom_call.1} parent=1 // pred_region
      _
    $region13: #{tpu_custom_call.1} parent=1 // pred_fallthru
      _
    // Predicated region
    $region14: #{tpu_custom_call.1} parent=1 // pred_check
      _
    $region15: #{tpu_custom_call.1} parent=1 // pred_check_branch
      %20 = sbr.rel (0) target = $region17
    $region16: #{tpu_custom_call.1} parent=1 // pred_region
      _
    $region17: #{tpu_custom_call.1} parent=1 // pred_fallthru
      _
    // Predicated region
    $region18: #{tpu_custom_call.1} parent=1 // pred_check
      _
    $region19: #{tpu_custom_call.1} parent=1 // pred_check_branch
      %22 = sbr.rel (0) target = $region21
    $region20: #{tpu_custom_call.1} parent=1 // pred_region
      _
    $region21: #{tpu_custom_call.1} parent=1 // pred_fallthru
      _
    // Predicated region
    $region22: #{tpu_custom_call.1} parent=1 // pred_check
      _
    $region23: #{tpu_custom_call.1} parent=1 // pred_check_branch
      %24 = sbr.rel (0) target = $region25
    $region24: #{tpu_custom_call.1} parent=1 // pred_region
      _
    $region25: #{tpu_custom_call.1} parent=1 // pred_fallthru
      _
    // Predicated region
    $region26: #{tpu_custom_call.1} parent=1 // pred_check
      _
    $region27: #{tpu_custom_call.1} parent=1 // pred_check_branch
      %26 = sbr.rel (0) target = $region29
    $region28: #{tpu_custom_call.1} parent=1 // pred_region
      _
    $region29: #{tpu_custom_call.1} parent=1 // pred_fallthru
      _
    %v28 = vld [vmem:[%s0] sm:$0xf]
    %v29 = vld [vmem:[%s0 + $0x4] sm:$0xf]
    %v30 = vld [vmem:[%s0 + $0x8] sm:$0xf]
    %v31 = vld [vmem:[%s0 + $0xc] sm:$0xf]
    %v32 = vld [vmem:[%s0 + $0x10] sm:$0xf]
    %v33 = vld [vmem:[%s0 + $0x14] sm:$0xf]
    %v34 = vld [vmem:[%s0 + $0x18] sm:$0xf]
    %v35 = vld [vmem:[%s0 + $0x1c] sm:$0xf]
    %v36 = vld [vmem:[%s0 + $0x20] sm:$0xf]
    %v37 = vld [vmem:[%s0 + $0x24] sm:$0xf]
    %v38 = vld [vmem:[%s0 + $0x28] sm:$0xf]
    %v39 = vld [vmem:[%s0 + $0x2c] sm:$0xf]
    %v40 = vld [vmem:[%s0 + $0x30] sm:$0xf]
    %v41 = vld [vmem:[%s0 + $0x34] sm:$0xf]
    %v42 = vld [vmem:[%s0 + $0x38] sm:$0xf]
    %v43 = vld [vmem:[%s0 + $0x3c] sm:$0xf]
    %v44 = vld [vmem:[%s0 + $0x40] sm:$0xf]
    %v45 = vld [vmem:[%s0 + $0x44] sm:$0xf]
    %v46 = vld [vmem:[%s0 + $0x48] sm:$0xf]
    %v47 = vld [vmem:[%s0 + $0x4c] sm:$0xf]
    %v48 = vld [vmem:[%s0 + $0x50] sm:$0xf]
    %v49 = vld [vmem:[%s0 + $0x54] sm:$0xf]
    %v50 = vld [vmem:[%s0 + $0x58] sm:$0xf]
    %v51 = vld [vmem:[%s0 + $0x5c] sm:$0xf]
    %v52 = vld [vmem:[%s0 + $0x60] sm:$0xf]
    %v53 = vld [vmem:[%s0 + $0x64] sm:$0xf]
    %v54 = vld [vmem:[%s0 + $0x68] sm:$0xf]
    %v55 = vld [vmem:[%s0 + $0x6c] sm:$0xf]
    %v56 = vld [vmem:[%s0 + $0x70] sm:$0xf]
    %v57 = vld [vmem:[%s0 + $0x74] sm:$0xf]
    %v58 = vld [vmem:[%s0 + $0x78] sm:$0xf]
    %v59 = vld [vmem:[%s0 + $0x7c] sm:$0xf]
    %v60 = vld [vmem:[%s0 + $0x80] sm:$0xf]
    %v61 = vld [vmem:[%s0 + $0x84] sm:$0xf]
    %v62 = vld [vmem:[%s0 + $0x88] sm:$0xf]
    %v63 = vld [vmem:[%s0 + $0x8c] sm:$0xf]
    %v64 = vld [vmem:[%s0 + $0x90] sm:$0xf]
    %v65 = vld [vmem:[%s0 + $0x94] sm:$0xf]
    %v66 = vld [vmem:[%s0 + $0x98] sm:$0xf]
    %v67 = vld [vmem:[%s0 + $0x9c] sm:$0xf]
    %v68 = vld [vmem:[%s0 + $0xa0] sm:$0xf]
    %v69 = vld [vmem:[%s0 + $0xa4] sm:$0xf]
    %v70 = vld [vmem:[%s0 + $0xa8] sm:$0xf]
    %v71 = vld [vmem:[%s0 + $0xac] sm:$0xf]
    %v72 = vld [vmem:[%s0 + $0xb0] sm:$0xf]
    %v73 = vld [vmem:[%s0 + $0xb4] sm:$0xf]
    %v74 = vld [vmem:[%s0 + $0xb8] sm:$0xf]
    %v75 = vld [vmem:[%s0 + $0xbc] sm:$0xf]
    %v76 = vld [vmem:[%s0 + $0xc0] sm:$0xf]
    %v77 = vld [vmem:[%s0 + $0xc4] sm:$0xf]
    %v78 = vld [vmem:[%s0 + $0xc8] sm:$0xf]
    %v79 = vld [vmem:[%s0 + $0xcc] sm:$0xf]
    %v80 = vld [vmem:[%s0 + $0xd0] sm:$0xf]
    %v81 = vld [vmem:[%s0 + $0xd4] sm:$0xf]
    %v82 = vld [vmem:[%s0 + $0xd8] sm:$0xf]
    %v83 = vld [vmem:[%s0 + $0xdc] sm:$0xf]
    %v84 = vld [vmem:[%s0 + $0xe0] sm:$0xf]
    %v85 = vld [vmem:[%s0 + $0xe4] sm:$0xf]
    %v86 = vld [vmem:[%s0 + $0xe8] sm:$0xf]
    %v87 = vld [vmem:[%s0 + $0xec] sm:$0xf]
    %v88 = vld [vmem:[%s0 + $0xf0] sm:$0xf]
    %v89 = vld [vmem:[%s0 + $0xf4] sm:$0xf]
    %v90 = vld [vmem:[%s0 + $0xf8] sm:$0xf]
    %v91 = vld [vmem:[%s0 + $0xfc] sm:$0xf]
    %v92 = vld [vmem:[%s1] sm:$0xf]
    %v93 = vld [vmem:[%s2] sm:$0x1]
    %v95 = vlaneseq
    %v96 = vshrl.u32 %v95, 7
    %v97 = vsub.s32 0, %v96
    %v98 = vrot.slane %v93, %v97
    %v164 = vunpack.c.l.b16 %v28
    %v165 = vunpack.c.l.b16 %v29
    %v166 = vunpack.c.l.b16 %v30
    %v167 = vunpack.c.l.b16 %v31
    %v168 = vunpack.c.l.b16 %v32
    %v169 = vunpack.c.l.b16 %v33
    %v170 = vunpack.c.l.b16 %v34
    %v171 = vunpack.c.l.b16 %v35
    %v172 = vunpack.c.l.b16 %v36
    %v173 = vunpack.c.l.b16 %v37
    %v174 = vunpack.c.l.b16 %v38
    %v175 = vunpack.c.l.b16 %v39
    %v176 = vunpack.c.l.b16 %v40
    %v177 = vunpack.c.l.b16 %v41
    %v178 = vunpack.c.l.b16 %v42
    %v179 = vunpack.c.l.b16 %v43
    %v180 = vunpack.c.l.b16 %v44
    %v181 = vunpack.c.l.b16 %v45
    %v182 = vunpack.c.l.b16 %v46
    %v183 = vunpack.c.l.b16 %v47
    %v184 = vunpack.c.l.b16 %v48
    %v185 = vunpack.c.l.b16 %v49
    %v186 = vunpack.c.l.b16 %v50
    %v187 = vunpack.c.l.b16 %v51
    %v188 = vunpack.c.l.b16 %v52
    %v189 = vunpack.c.l.b16 %v53
    %v190 = vunpack.c.l.b16 %v54
    %v191 = vunpack.c.l.b16 %v55
    %v192 = vunpack.c.l.b16 %v56
    %v193 = vunpack.c.l.b16 %v57
    %v194 = vunpack.c.l.b16 %v58
    %v195 = vunpack.c.l.b16 %v59
    %v196 = vunpack.c.l.b16 %v60
    %v197 = vunpack.c.l.b16 %v61
    %v198 = vunpack.c.l.b16 %v62
    %v199 = vunpack.c.l.b16 %v63
    %v200 = vunpack.c.l.b16 %v64
    %v201 = vunpack.c.l.b16 %v65
    %v202 = vunpack.c.l.b16 %v66
    %v203 = vunpack.c.l.b16 %v67
    %v204 = vunpack.c.l.b16 %v68
    %v205 = vunpack.c.l.b16 %v69
    %v206 = vunpack.c.l.b16 %v70
    %v207 = vunpack.c.l.b16 %v71
    %v208 = vunpack.c.l.b16 %v72
    %v209 = vunpack.c.l.b16 %v73
    %v210 = vunpack.c.l.b16 %v74
    %v211 = vunpack.c.l.b16 %v75
    %v212 = vunpack.c.l.b16 %v76
    %v213 = vunpack.c.l.b16 %v77
    %v214 = vunpack.c.l.b16 %v78
    %v215 = vunpack.c.l.b16 %v79
    %v216 = vunpack.c.l.b16 %v80
    %v217 = vunpack.c.l.b16 %v81
    %v218 = vunpack.c.l.b16 %v82
    %v219 = vunpack.c.l.b16 %v83
    %v220 = vunpack.c.l.b16 %v84
    %v221 = vunpack.c.l.b16 %v85
    %v222 = vunpack.c.l.b16 %v86
    %v223 = vunpack.c.l.b16 %v87
    %v224 = vunpack.c.l.b16 %v88
    %v225 = vunpack.c.l.b16 %v89
    %v226 = vunpack.c.l.b16 %v90
    %v227 = vunpack.c.l.b16 %v91
    %v228 = vpack.c.b16 %v165, %v164
    %v229 = vpack.c.b16 %v167, %v166
    %v230 = vpack.c.b16 %v169, %v168
    %v231 = vpack.c.b16 %v171, %v170
    %v232 = vpack.c.b16 %v173, %v172
    %v233 = vpack.c.b16 %v175, %v174
    %v234 = vpack.c.b16 %v177, %v176
    %v235 = vpack.c.b16 %v179, %v178
    %v236 = vpack.c.b16 %v181, %v180
    %v237 = vpack.c.b16 %v183, %v182
    %v238 = vpack.c.b16 %v185, %v184
    %v239 = vpack.c.b16 %v187, %v186
    %v240 = vpack.c.b16 %v189, %v188
    %v241 = vpack.c.b16 %v191, %v190
    %v242 = vpack.c.b16 %v193, %v192
    %v243 = vpack.c.b16 %v195, %v194
    %v244 = vpack.c.b16 %v197, %v196
    %v245 = vpack.c.b16 %v199, %v198
    %v246 = vpack.c.b16 %v201, %v200
    %v247 = vpack.c.b16 %v203, %v202
    %v248 = vpack.c.b16 %v205, %v204
    %v249 = vpack.c.b16 %v207, %v206
    %v250 = vpack.c.b16 %v209, %v208
    %v251 = vpack.c.b16 %v211, %v210
    %v252 = vpack.c.b16 %v213, %v212
    %v253 = vpack.c.b16 %v215, %v214
    %v254 = vpack.c.b16 %v217, %v216
    %v255 = vpack.c.b16 %v219, %v218
    %v256 = vpack.c.b16 %v221, %v220
    %v257 = vpack.c.b16 %v223, %v222
    %v258 = vpack.c.b16 %v225, %v224
    %v259 = vpack.c.b16 %v227, %v226
    %vm260 = vcmask 64512
    %v262 = vsel %vm260, %v228, 0
    %v265 = vsel %vm260, %v229, 0
    %v268 = vsel %vm260, %v230, 0
    %v271 = vsel %vm260, %v231, 0
    %v274 = vsel %vm260, %v232, 0
    %v277 = vsel %vm260, %v233, 0
    %v280 = vsel %vm260, %v234, 0
    %v283 = vsel %vm260, %v235, 0
    %v286 = vsel %vm260, %v236, 0
    %v289 = vsel %vm260, %v237, 0
    %v292 = vsel %vm260, %v238, 0
    %v295 = vsel %vm260, %v239, 0
    %v298 = vsel %vm260, %v240, 0
    %v301 = vsel %vm260, %v241, 0
    %v304 = vsel %vm260, %v242, 0
    %v307 = vsel %vm260, %v243, 0
    %v310 = vsel %vm260, %v244, 0
    %v313 = vsel %vm260, %v245, 0
    %v316 = vsel %vm260, %v246, 0
    %v319 = vsel %vm260, %v247, 0
    %v322 = vsel %vm260, %v248, 0
    %v325 = vsel %vm260, %v249, 0
    %v328 = vsel %vm260, %v250, 0
    %v331 = vsel %vm260, %v251, 0
    %v334 = vsel %vm260, %v252, 0
    %v337 = vsel %vm260, %v253, 0
    %v340 = vsel %vm260, %v254, 0
    %v343 = vsel %vm260, %v255, 0
    %v346 = vsel %vm260, %v256, 0
    %v349 = vsel %vm260, %v257, 0
    %v352 = vsel %vm260, %v258, 0
    %v355 = vsel %vm260, %v259, 0
    %vm357 = vcmask 1043456
    %v359 = vsel %vm357, %v92, 0
    %361 = vmatprep.subr.bf16.mxu0 0
    %362 = vmatpush1.bf16.msra.mxu0 %v359
    %363 = vmatprep.subr.bf16.mxu0 0
    %364 = vmatpush1.bf16.msra.mxu0 0
    %365 = vmatprep.subr.bf16.mxu0 0
    %366 = vmatpush1.bf16.msra.mxu0 0
    %367 = vmatprep.subr.bf16.mxu0 0
    %368 = vmatpush1.bf16.msra.mxu0 0
    %369 = vmatprep.subr.bf16.mxu0 0
    %370 = vmatpush1.bf16.msra.mxu0 0
    %371 = vmatprep.subr.bf16.mxu0 0
    %372 = vmatpush1.bf16.msra.mxu0 0
    %373 = vmatprep.subr.bf16.mxu0 0
    %374 = vmatpush1.bf16.msra.mxu0 0
    %375 = vmatprep.subr.bf16.mxu0 0
    %376 = vmatpush1.bf16.msra.mxu0 0
    %377 = vmatprep.subr.bf16.mxu0 0
    %378 = vmatpush1.bf16.msra.mxu0 0
    %379 = vmatprep.subr.bf16.mxu0 0
    %380 = vmatpush1.bf16.msra.mxu0 0
    %381 = vmatprep.subr.bf16.mxu0 0
    %382 = vmatpush1.bf16.msra.mxu0 0
    %383 = vmatprep.subr.bf16.mxu0 0
    %384 = vmatpush1.bf16.msra.mxu0 0
    %385 = vmatprep.subr.bf16.mxu0 0
    %386 = vmatpush1.bf16.msra.mxu0 0
    %387 = vmatprep.subr.bf16.mxu0 0
    %388 = vmatpush1.bf16.msra.mxu0 0
    %389 = vmatprep.subr.bf16.mxu0 0
    %390 = vmatpush1.bf16.msra.mxu0 0
    %391 = vmatprep.subr.bf16.mxu0 0
    %392 = vmatpush1.bf16.msra.mxu0 0
    %393 = vmatprep.mubr.bf16.mxu0 0
    %394 = vmatmul.mubr.bf16.gmra.mrb[0].mxu0 %v262
    %v395 = vpop.f32.mrb[0].mxu0
    %v396 = vadd.f32 %v98, %v395
    %v397 = vpop.f32.mrb[0].mxu0
    %v398 = vpop.f32.mrb[0].mxu0
    %v399 = vadd.f32 %v98, %v398
    %v400 = vpop.f32.mrb[0].mxu0
    %401 = vmatprep.mubr.bf16.mxu0 0
    %402 = vmatmul.mubr.bf16.gmra.mrb[0].mxu0 %v265
    %v403 = vpop.f32.mrb[0].mxu0
    %v404 = vadd.f32 %v98, %v403
    %v405 = vpop.f32.mrb[0].mxu0
    %v406 = vpop.f32.mrb[0].mxu0
    %v407 = vadd.f32 %v98, %v406
    %v408 = vpop.f32.mrb[0].mxu0
    %409 = vmatprep.mubr.bf16.mxu0 0
    %410 = vmatmul.mubr.bf16.gmra.mrb[0].mxu0 %v268
    %v411 = vpop.f32.mrb[0].mxu0
    %v412 = vadd.f32 %v98, %v411
    %v413 = vpop.f32.mrb[0].mxu0
    %v414 = vpop.f32.mrb[0].mxu0
    %v415 = vadd.f32 %v98, %v414
    %v416 = vpop.f32.mrb[0].mxu0
    %417 = vmatprep.mubr.bf16.mxu0 0
    %418 = vmatmul.mubr.bf16.gmra.mrb[0].mxu0 %v271
    %v419 = vpop.f32.mrb[0].mxu0
    %v420 = vadd.f32 %v98, %v419
    %v421 = vpop.f32.mrb[0].mxu0
    %v422 = vpop.f32.mrb[0].mxu0
    %v423 = vadd.f32 %v98, %v422
    %v424 = vpop.f32.mrb[0].mxu0
    %425 = vmatprep.mubr.bf16.mxu0 0
    %426 = vmatmul.mubr.bf16.gmra.mrb[0].mxu0 %v274
    %v427 = vpop.f32.mrb[0].mxu0
    %v428 = vadd.f32 %v98, %v427
    %v429 = vpop.f32.mrb[0].mxu0
    %v430 = vpop.f32.mrb[0].mxu0
    %v431 = vadd.f32 %v98, %v430
    %v432 = vpop.f32.mrb[0].mxu0
    %433 = vmatprep.mubr.bf16.mxu0 0
    %434 = vmatmul.mubr.bf16.gmra.mrb[0].mxu0 %v277
    %v435 = vpop.f32.mrb[0].mxu0
    %v436 = vadd.f32 %v98, %v435
    %v437 = vpop.f32.mrb[0].mxu0
    %v438 = vpop.f32.mrb[0].mxu0
    %v439 = vadd.f32 %v98, %v438
    %v440 = vpop.f32.mrb[0].mxu0
    %441 = vmatprep.mubr.bf16.mxu0 0
    %442 = vmatmul.mubr.bf16.gmra.mrb[0].mxu0 %v280
    %v443 = vpop.f32.mrb[0].mxu0
    %v444 = vadd.f32 %v98, %v443
    %v445 = vpop.f32.mrb[0].mxu0
    %v446 = vpop.f32.mrb[0].mxu0
    %v447 = vadd.f32 %v98, %v446
    %v448 = vpop.f32.mrb[0].mxu0
    %449 = vmatprep.mubr.bf16.mxu0 0
    %450 = vmatmul.mubr.bf16.gmra.mrb[0].mxu0 %v283
    %v451 = vpop.f32.mrb[0].mxu0
    %v452 = vadd.f32 %v98, %v451
    %v453 = vpop.f32.mrb[0].mxu0
    %v454 = vpop.f32.mrb[0].mxu0
    %v455 = vadd.f32 %v98, %v454
    %v456 = vpop.f32.mrb[0].mxu0
    %457 = vmatprep.mubr.bf16.mxu0 0
    %458 = vmatmul.mubr.bf16.gmra.mrb[0].mxu0 %v286
    %v459 = vpop.f32.mrb[0].mxu0
    %v460 = vadd.f32 %v98, %v459
    %v461 = vpop.f32.mrb[0].mxu0
    %v462 = vpop.f32.mrb[0].mxu0
    %v463 = vadd.f32 %v98, %v462
    %v464 = vpop.f32.mrb[0].mxu0
    %465 = vmatprep.mubr.bf16.mxu0 0
    %466 = vmatmul.mubr.bf16.gmra.mrb[0].mxu0 %v289
    %v467 = vpop.f32.mrb[0].mxu0
    %v468 = vadd.f32 %v98, %v467
    %v469 = vpop.f32.mrb[0].mxu0
    %v470 = vpop.f32.mrb[0].mxu0
    %v471 = vadd.f32 %v98, %v470
    %v472 = vpop.f32.mrb[0].mxu0
    %473 = vmatprep.mubr.bf16.mxu0 0
    %474 = vmatmul.mubr.bf16.gmra.mrb[0].mxu0 %v292
    %v475 = vpop.f32.mrb[0].mxu0
    %v476 = vadd.f32 %v98, %v475
    %v477 = vpop.f32.mrb[0].mxu0
    %v478 = vpop.f32.mrb[0].mxu0
    %v479 = vadd.f32 %v98, %v478
    %v480 = vpop.f32.mrb[0].mxu0
    %481 = vmatprep.mubr.bf16.mxu0 0
    %482 = vmatmul.mubr.bf16.gmra.mrb[0].mxu0 %v295
    %v483 = vpop.f32.mrb[0].mxu0
    %v484 = vadd.f32 %v98, %v483
    %v485 = vpop.f32.mrb[0].mxu0
    %v486 = vpop.f32.mrb[0].mxu0
    %v487 = vadd.f32 %v98, %v486
    %v488 = vpop.f32.mrb[0].mxu0
    %489 = vmatprep.mubr.bf16.mxu0 0
    %490 = vmatmul.mubr.bf16.gmra.mrb[0].mxu0 %v298
    %v491 = vpop.f32.mrb[0].mxu0
    %v492 = vadd.f32 %v98, %v491
    %v493 = vpop.f32.mrb[0].mxu0
    %v494 = vpop.f32.mrb[0].mxu0
    %v495 = vadd.f32 %v98, %v494
    %v496 = vpop.f32.mrb[0].mxu0
    %497 = vmatprep.mubr.bf16.mxu0 0
    %498 = vmatmul.mubr.bf16.gmra.mrb[0].mxu0 %v301
    %v499 = vpop.f32.mrb[0].mxu0
    %v500 = vadd.f32 %v98, %v499
    %v501 = vpop.f32.mrb[0].mxu0
    %v502 = vpop.f32.mrb[0].mxu0
    %v503 = vadd.f32 %v98, %v502
    %v504 = vpop.f32.mrb[0].mxu0
    %505 = vmatprep.mubr.bf16.mxu0 0
    %506 = vmatmul.mubr.bf16.gmra.mrb[0].mxu0 %v304
    %v507 = vpop.f32.mrb[0].mxu0
    %v508 = vadd.f32 %v98, %v507
    %v509 = vpop.f32.mrb[0].mxu0
    %v510 = vpop.f32.mrb[0].mxu0
    %v511 = vadd.f32 %v98, %v510
    %v512 = vpop.f32.mrb[0].mxu0
    %513 = vmatprep.mubr.bf16.mxu0 0
    %514 = vmatmul.mubr.bf16.gmra.mrb[0].mxu0 %v307
    %v515 = vpop.f32.mrb[0].mxu0
    %v516 = vadd.f32 %v98, %v515
    %v517 = vpop.f32.mrb[0].mxu0
    %v518 = vpop.f32.mrb[0].mxu0
    %v519 = vadd.f32 %v98, %v518
    %v520 = vpop.f32.mrb[0].mxu0
    %521 = vmatprep.mubr.bf16.mxu0 0
    %522 = vmatmul.mubr.bf16.gmra.mrb[0].mxu0 %v310
    %v523 = vpop.f32.mrb[0].mxu0
    %v524 = vadd.f32 %v98, %v523
    %v525 = vpop.f32.mrb[0].mxu0
    %v526 = vpop.f32.mrb[0].mxu0
    %v527 = vadd.f32 %v98, %v526
    %v528 = vpop.f32.mrb[0].mxu0
    %529 = vmatprep.mubr.bf16.mxu0 0
    %530 = vmatmul.mubr.bf16.gmra.mrb[0].mxu0 %v313
    %v531 = vpop.f32.mrb[0].mxu0
    %v532 = vadd.f32 %v98, %v531
    %v533 = vpop.f32.mrb[0].mxu0
    %v534 = vpop.f32.mrb[0].mxu0
    %v535 = vadd.f32 %v98, %v534
    %v536 = vpop.f32.mrb[0].mxu0
    %537 = vmatprep.mubr.bf16.mxu0 0
    %538 = vmatmul.mubr.bf16.gmra.mrb[0].mxu0 %v316
    %v539 = vpop.f32.mrb[0].mxu0
    %v540 = vadd.f32 %v98, %v539
    %v541 = vpop.f32.mrb[0].mxu0
    %v542 = vpop.f32.mrb[0].mxu0
    %v543 = vadd.f32 %v98, %v542
    %v544 = vpop.f32.mrb[0].mxu0
    %545 = vmatprep.mubr.bf16.mxu0 0
    %546 = vmatmul.mubr.bf16.gmra.mrb[0].mxu0 %v319
    %v547 = vpop.f32.mrb[0].mxu0
    %v548 = vadd.f32 %v98, %v547
    %v549 = vpop.f32.mrb[0].mxu0
    %v550 = vpop.f32.mrb[0].mxu0
    %v551 = vadd.f32 %v98, %v550
    %v552 = vpop.f32.mrb[0].mxu0
    %553 = vmatprep.mubr.bf16.mxu0 0
    %554 = vmatmul.mubr.bf16.gmra.mrb[0].mxu0 %v322
    %v555 = vpop.f32.mrb[0].mxu0
    %v556 = vadd.f32 %v98, %v555
    %v557 = vpop.f32.mrb[0].mxu0
    %v558 = vpop.f32.mrb[0].mxu0
    %v559 = vadd.f32 %v98, %v558
    %v560 = vpop.f32.mrb[0].mxu0
    %561 = vmatprep.mubr.bf16.mxu0 0
    %562 = vmatmul.mubr.bf16.gmra.mrb[0].mxu0 %v325
    %v563 = vpop.f32.mrb[0].mxu0
    %v564 = vadd.f32 %v98, %v563
    %v565 = vpop.f32.mrb[0].mxu0
    %v566 = vpop.f32.mrb[0].mxu0
    %v567 = vadd.f32 %v98, %v566
    %v568 = vpop.f32.mrb[0].mxu0
    %569 = vmatprep.mubr.bf16.mxu0 0
    %570 = vmatmul.mubr.bf16.gmra.mrb[0].mxu0 %v328
    %v571 = vpop.f32.mrb[0].mxu0
    %v572 = vadd.f32 %v98, %v571
    %v573 = vpop.f32.mrb[0].mxu0
    %v574 = vpop.f32.mrb[0].mxu0
    %v575 = vadd.f32 %v98, %v574
    %v576 = vpop.f32.mrb[0].mxu0
    %577 = vmatprep.mubr.bf16.mxu0 0
    %578 = vmatmul.mubr.bf16.gmra.mrb[0].mxu0 %v331
    %v579 = vpop.f32.mrb[0].mxu0
    %v580 = vadd.f32 %v98, %v579
    %v581 = vpop.f32.mrb[0].mxu0
    %v582 = vpop.f32.mrb[0].mxu0
    %v583 = vadd.f32 %v98, %v582
    %v584 = vpop.f32.mrb[0].mxu0
    %585 = vmatprep.mubr.bf16.mxu0 0
    %586 = vmatmul.mubr.bf16.gmra.mrb[0].mxu0 %v334
    %v587 = vpop.f32.mrb[0].mxu0
    %v588 = vadd.f32 %v98, %v587
    %v589 = vpop.f32.mrb[0].mxu0
    %v590 = vpop.f32.mrb[0].mxu0
    %v591 = vadd.f32 %v98, %v590
    %v592 = vpop.f32.mrb[0].mxu0
    %593 = vmatprep.mubr.bf16.mxu0 0
    %594 = vmatmul.mubr.bf16.gmra.mrb[0].mxu0 %v337
    %v595 = vpop.f32.mrb[0].mxu0
    %v596 = vadd.f32 %v98, %v595
    %v597 = vpop.f32.mrb[0].mxu0
    %v598 = vpop.f32.mrb[0].mxu0
    %v599 = vadd.f32 %v98, %v598
    %v600 = vpop.f32.mrb[0].mxu0
    %601 = vmatprep.mubr.bf16.mxu0 0
    %602 = vmatmul.mubr.bf16.gmra.mrb[0].mxu0 %v340
    %v603 = vpop.f32.mrb[0].mxu0
    %v604 = vadd.f32 %v98, %v603
    %v605 = vpop.f32.mrb[0].mxu0
    %v606 = vpop.f32.mrb[0].mxu0
    %v607 = vadd.f32 %v98, %v606
    %v608 = vpop.f32.mrb[0].mxu0
    %609 = vmatprep.mubr.bf16.mxu0 0
    %610 = vmatmul.mubr.bf16.gmra.mrb[0].mxu0 %v343
    %v611 = vpop.f32.mrb[0].mxu0
    %v612 = vadd.f32 %v98, %v611
    %v613 = vpop.f32.mrb[0].mxu0
    %v614 = vpop.f32.mrb[0].mxu0
    %v615 = vadd.f32 %v98, %v614
    %v616 = vpop.f32.mrb[0].mxu0
    %617 = vmatprep.mubr.bf16.mxu0 0
    %618 = vmatmul.mubr.bf16.gmra.mrb[0].mxu0 %v346
    %v619 = vpop.f32.mrb[0].mxu0
    %v620 = vadd.f32 %v98, %v619
    %v621 = vpop.f32.mrb[0].mxu0
    %v622 = vpop.f32.mrb[0].mxu0
    %v623 = vadd.f32 %v98, %v622
    %v624 = vpop.f32.mrb[0].mxu0
    %625 = vmatprep.mubr.bf16.mxu0 0
    %626 = vmatmul.mubr.bf16.gmra.mrb[0].mxu0 %v349
    %v627 = vpop.f32.mrb[0].mxu0
    %v628 = vadd.f32 %v98, %v627
    %v629 = vpop.f32.mrb[0].mxu0
    %v630 = vpop.f32.mrb[0].mxu0
    %v631 = vadd.f32 %v98, %v630
    %v632 = vpop.f32.mrb[0].mxu0
    %633 = vmatprep.mubr.bf16.mxu0 0
    %634 = vmatmul.mubr.bf16.gmra.mrb[0].mxu0 %v352
    %v635 = vpop.f32.mrb[0].mxu0
    %v636 = vadd.f32 %v98, %v635
    %v637 = vpop.f32.mrb[0].mxu0
    %v638 = vpop.f32.mrb[0].mxu0
    %v639 = vadd.f32 %v98, %v638
    %v640 = vpop.f32.mrb[0].mxu0
    %641 = vmatprep.mubr.bf16.mxu0 0
    %642 = vmatmul.mubr.bf16.gmra.mrb[0].mxu0 %v355
    %v643 = vpop.f32.mrb[0].mxu0
    %v644 = vadd.f32 %v98, %v643
    %v645 = vpop.f32.mrb[0].mxu0
    %v646 = vpop.f32.mrb[0].mxu0
    %v647 = vadd.f32 %v98, %v646
    %v648 = vpop.f32.mrb[0].mxu0
    %649 = vdwg.mxu0
    %v650 = vmax.f32 %v396, 0.0
    %v651 = vmax.f32 %v399, 0.0
    %v652 = vmax.f32 %v404, 0.0
    %v653 = vmax.f32 %v407, 0.0
    %v654 = vmax.f32 %v412, 0.0
    %v655 = vmax.f32 %v415, 0.0
    %v656 = vmax.f32 %v420, 0.0
    %v657 = vmax.f32 %v423, 0.0
    %v658 = vmax.f32 %v428, 0.0
    %v659 = vmax.f32 %v431, 0.0
    %v660 = vmax.f32 %v436, 0.0
    %v661 = vmax.f32 %v439, 0.0
    %v662 = vmax.f32 %v444, 0.0
    %v663 = vmax.f32 %v447, 0.0
    %v664 = vmax.f32 %v452, 0.0
    %v665 = vmax.f32 %v455, 0.0
    %v666 = vmax.f32 %v460, 0.0
    %v667 = vmax.f32 %v463, 0.0
    %v668 = vmax.f32 %v468, 0.0
    %v669 = vmax.f32 %v471, 0.0
    %v670 = vmax.f32 %v476, 0.0
    %v671 = vmax.f32 %v479, 0.0
    %v672 = vmax.f32 %v484, 0.0
    %v673 = vmax.f32 %v487, 0.0
    %v674 = vmax.f32 %v492, 0.0
    %v675 = vmax.f32 %v495, 0.0
    %v676 = vmax.f32 %v500, 0.0
    %v677 = vmax.f32 %v503, 0.0
    %v678 = vmax.f32 %v508, 0.0
    %v679 = vmax.f32 %v511, 0.0
    %v680 = vmax.f32 %v516, 0.0
    %v681 = vmax.f32 %v519, 0.0
    %v682 = vmax.f32 %v524, 0.0
    %v683 = vmax.f32 %v527, 0.0
    %v684 = vmax.f32 %v532, 0.0
    %v685 = vmax.f32 %v535, 0.0
    %v686 = vmax.f32 %v540, 0.0
    %v687 = vmax.f32 %v543, 0.0
    %v688 = vmax.f32 %v548, 0.0
    %v689 = vmax.f32 %v551, 0.0
    %v690 = vmax.f32 %v556, 0.0
    %v691 = vmax.f32 %v559, 0.0
    %v692 = vmax.f32 %v564, 0.0
    %v693 = vmax.f32 %v567, 0.0
    %v694 = vmax.f32 %v572, 0.0
    %v695 = vmax.f32 %v575, 0.0
    %v696 = vmax.f32 %v580, 0.0
    %v697 = vmax.f32 %v583, 0.0
    %v698 = vmax.f32 %v588, 0.0
    %v699 = vmax.f32 %v591, 0.0
    %v700 = vmax.f32 %v596, 0.0
    %v701 = vmax.f32 %v599, 0.0
    %v702 = vmax.f32 %v604, 0.0
    %v703 = vmax.f32 %v607, 0.0
    %v704 = vmax.f32 %v612, 0.0
    %v705 = vmax.f32 %v615, 0.0
    %v706 = vmax.f32 %v620, 0.0
    %v707 = vmax.f32 %v623, 0.0
    %v708 = vmax.f32 %v628, 0.0
    %v709 = vmax.f32 %v631, 0.0
    %v710 = vmax.f32 %v636, 0.0
    %v711 = vmax.f32 %v639, 0.0
    %v712 = vmax.f32 %v644, 0.0
    %v713 = vmax.f32 %v647, 0.0
    %v714 = vpack.c.bf16 %v651, %v650
    %v715 = vpack.c.bf16 %v653, %v652
    %v716 = vpack.c.bf16 %v655, %v654
    %v717 = vpack.c.bf16 %v657, %v656
    %v718 = vpack.c.bf16 %v659, %v658
    %v719 = vpack.c.bf16 %v661, %v660
    %v720 = vpack.c.bf16 %v663, %v662
    %v721 = vpack.c.bf16 %v665, %v664
    %v722 = vpack.c.bf16 %v667, %v666
    %v723 = vpack.c.bf16 %v669, %v668
    %v724 = vpack.c.bf16 %v671, %v670
    %v725 = vpack.c.bf16 %v673, %v672
    %v726 = vpack.c.bf16 %v675, %v674
    %v727 = vpack.c.bf16 %v677, %v676
    %v728 = vpack.c.bf16 %v679, %v678
    %v729 = vpack.c.bf16 %v681, %v680
    %v730 = vpack.c.bf16 %v683, %v682
    %v731 = vpack.c.bf16 %v685, %v684
    %v732 = vpack.c.bf16 %v687, %v686
    %v733 = vpack.c.bf16 %v689, %v688
    %v734 = vpack.c.bf16 %v691, %v690
    %v735 = vpack.c.bf16 %v693, %v692
    %v736 = vpack.c.bf16 %v695, %v694
    %v737 = vpack.c.bf16 %v697, %v696
    %v738 = vpack.c.bf16 %v699, %v698
    %v739 = vpack.c.bf16 %v701, %v700
    %v740 = vpack.c.bf16 %v703, %v702
    %v741 = vpack.c.bf16 %v705, %v704
    %v742 = vpack.c.bf16 %v707, %v706
    %v743 = vpack.c.bf16 %v709, %v708
    %v744 = vpack.c.bf16 %v711, %v710
    %v745 = vpack.c.bf16 %v713, %v712
    %v778 = vunpack.c.l.b16 %v714
    %v779 = vunpack.c.h.b16 %v714
    %v780 = vunpack.c.l.b16 %v715
    %v781 = vunpack.c.h.b16 %v715
    %v782 = vunpack.c.l.b16 %v716
    %v783 = vunpack.c.h.b16 %v716
    %v784 = vunpack.c.l.b16 %v717
    %v785 = vunpack.c.h.b16 %v717
    %v786 = vunpack.c.l.b16 %v718
    %v787 = vunpack.c.h.b16 %v718
    %v788 = vunpack.c.l.b16 %v719
    %v789 = vunpack.c.h.b16 %v719
    %v790 = vunpack.c.l.b16 %v720
    %v791 = vunpack.c.h.b16 %v720
    %v792 = vunpack.c.l.b16 %v721
    %v793 = vunpack.c.h.b16 %v721
    %v794 = vunpack.c.l.b16 %v722
    %v795 = vunpack.c.h.b16 %v722
    %v796 = vunpack.c.l.b16 %v723
    %v797 = vunpack.c.h.b16 %v723
    %v798 = vunpack.c.l.b16 %v724
    %v799 = vunpack.c.h.b16 %v724
    %v800 = vunpack.c.l.b16 %v725
    %v801 = vunpack.c.h.b16 %v725
    %v802 = vunpack.c.l.b16 %v726
    %v803 = vunpack.c.h.b16 %v726
    %v804 = vunpack.c.l.b16 %v727
    %v805 = vunpack.c.h.b16 %v727
    %v806 = vunpack.c.l.b16 %v728
    %v807 = vunpack.c.h.b16 %v728
    %v808 = vunpack.c.l.b16 %v729
    %v809 = vunpack.c.h.b16 %v729
    %v810 = vunpack.c.l.b16 %v730
    %v811 = vunpack.c.h.b16 %v730
    %v812 = vunpack.c.l.b16 %v731
    %v813 = vunpack.c.h.b16 %v731
    %v814 = vunpack.c.l.b16 %v732
    %v815 = vunpack.c.h.b16 %v732
    %v816 = vunpack.c.l.b16 %v733
    %v817 = vunpack.c.h.b16 %v733
    %v818 = vunpack.c.l.b16 %v734
    %v819 = vunpack.c.h.b16 %v734
    %v820 = vunpack.c.l.b16 %v735
    %v821 = vunpack.c.h.b16 %v735
    %v822 = vunpack.c.l.b16 %v736
    %v823 = vunpack.c.h.b16 %v736
    %v824 = vunpack.c.l.b16 %v737
    %v825 = vunpack.c.h.b16 %v737
    %v826 = vunpack.c.l.b16 %v738
    %v827 = vunpack.c.h.b16 %v738
    %v828 = vunpack.c.l.b16 %v739
    %v829 = vunpack.c.h.b16 %v739
    %v830 = vunpack.c.l.b16 %v740
    %v831 = vunpack.c.h.b16 %v740
    %v832 = vunpack.c.l.b16 %v741
    %v833 = vunpack.c.h.b16 %v741
    %v834 = vunpack.c.l.b16 %v742
    %v835 = vunpack.c.h.b16 %v742
    %v836 = vunpack.c.l.b16 %v743
    %v837 = vunpack.c.h.b16 %v743
    %v838 = vunpack.c.l.b16 %v744
    %v839 = vunpack.c.h.b16 %v744
    %v840 = vunpack.c.l.b16 %v745
    %v841 = vunpack.c.h.b16 %v745
    %v842 = vpack.c.b16 %v778, %v778
    %v843 = vpack.c.b16 %v779, %v779
    %v844 = vpack.c.b16 %v780, %v780
    %v845 = vpack.c.b16 %v781, %v781
    %v846 = vpack.c.b16 %v782, %v782
    %v847 = vpack.c.b16 %v783, %v783
    %v848 = vpack.c.b16 %v784, %v784
    %v849 = vpack.c.b16 %v785, %v785
    %v850 = vpack.c.b16 %v786, %v786
    %v851 = vpack.c.b16 %v787, %v787
    %v852 = vpack.c.b16 %v788, %v788
    %v853 = vpack.c.b16 %v789, %v789
    %v854 = vpack.c.b16 %v790, %v790
    %v855 = vpack.c.b16 %v791, %v791
    %v856 = vpack.c.b16 %v792, %v792
    %v857 = vpack.c.b16 %v793, %v793
    %v858 = vpack.c.b16 %v794, %v794
    %v859 = vpack.c.b16 %v795, %v795
    %v860 = vpack.c.b16 %v796, %v796
    %v861 = vpack.c.b16 %v797, %v797
    %v862 = vpack.c.b16 %v798, %v798
    %v863 = vpack.c.b16 %v799, %v799
    %v864 = vpack.c.b16 %v800, %v800
    %v865 = vpack.c.b16 %v801, %v801
    %v866 = vpack.c.b16 %v802, %v802
    %v867 = vpack.c.b16 %v803, %v803
    %v868 = vpack.c.b16 %v804, %v804
    %v869 = vpack.c.b16 %v805, %v805
    %v870 = vpack.c.b16 %v806, %v806
    %v871 = vpack.c.b16 %v807, %v807
    %v872 = vpack.c.b16 %v808, %v808
    %v873 = vpack.c.b16 %v809, %v809
    %v874 = vpack.c.b16 %v810, %v810
    %v875 = vpack.c.b16 %v811, %v811
    %v876 = vpack.c.b16 %v812, %v812
    %v877 = vpack.c.b16 %v813, %v813
    %v878 = vpack.c.b16 %v814, %v814
    %v879 = vpack.c.b16 %v815, %v815
    %v880 = vpack.c.b16 %v816, %v816
    %v881 = vpack.c.b16 %v817, %v817
    %v882 = vpack.c.b16 %v818, %v818
    %v883 = vpack.c.b16 %v819, %v819
    %v884 = vpack.c.b16 %v820, %v820
    %v885 = vpack.c.b16 %v821, %v821
    %v886 = vpack.c.b16 %v822, %v822
    %v887 = vpack.c.b16 %v823, %v823
    %v888 = vpack.c.b16 %v824, %v824
    %v889 = vpack.c.b16 %v825, %v825
    %v890 = vpack.c.b16 %v826, %v826
    %v891 = vpack.c.b16 %v827, %v827
    %v892 = vpack.c.b16 %v828, %v828
    %v893 = vpack.c.b16 %v829, %v829
    %v894 = vpack.c.b16 %v830, %v830
    %v895 = vpack.c.b16 %v831, %v831
    %v896 = vpack.c.b16 %v832, %v832
    %v897 = vpack.c.b16 %v833, %v833
    %v898 = vpack.c.b16 %v834, %v834
    %v899 = vpack.c.b16 %v835, %v835
    %v900 = vpack.c.b16 %v836, %v836
    %v901 = vpack.c.b16 %v837, %v837
    %v902 = vpack.c.b16 %v838, %v838
    %v903 = vpack.c.b16 %v839, %v839
    %v904 = vpack.c.b16 %v840, %v840
    %v905 = vpack.c.b16 %v841, %v841
    %s970 = scalar_lea.vmem [#allocation2], 16
    %vm971 = vcmask 27648
    %972 = vst.msk [vmem:[%s970 + $0x4] sm:$0xf] %vm971, %v842
    %973 = vst.msk [vmem:[%s970 + $0x8] sm:$0xf] %vm971, %v843
    %974 = vst.msk [vmem:[%s970 + $0x14] sm:$0xf] %vm971, %v844
    %975 = vst.msk [vmem:[%s970 + $0x18] sm:$0xf] %vm971, %v845
    %976 = vst.msk [vmem:[%s970 + $0x24] sm:$0xf] %vm971, %v846
    %977 = vst.msk [vmem:[%s970 + $0x28] sm:$0xf] %vm971, %v847
    %978 = vst.msk [vmem:[%s970 + $0x34] sm:$0xf] %vm971, %v848
    %979 = vst.msk [vmem:[%s970 + $0x38] sm:$0xf] %vm971, %v849
    %980 = vst.msk [vmem:[%s970 + $0x44] sm:$0xf] %vm971, %v850
    %981 = vst.msk [vmem:[%s970 + $0x48] sm:$0xf] %vm971, %v851
    %982 = vst.msk [vmem:[%s970 + $0x54] sm:$0xf] %vm971, %v852
    %983 = vst.msk [vmem:[%s970 + $0x58] sm:$0xf] %vm971, %v853
    %984 = vst.msk [vmem:[%s970 + $0x64] sm:$0xf] %vm971, %v854
    %985 = vst.msk [vmem:[%s970 + $0x68] sm:$0xf] %vm971, %v855
    %986 = vst.msk [vmem:[%s970 + $0x74] sm:$0xf] %vm971, %v856
    %987 = vst.msk [vmem:[%s970 + $0x78] sm:$0xf] %vm971, %v857
    %988 = vst.msk [vmem:[%s970 + $0x84] sm:$0xf] %vm971, %v858
    %989 = vst.msk [vmem:[%s970 + $0x88] sm:$0xf] %vm971, %v859
    %990 = vst.msk [vmem:[%s970 + $0x94] sm:$0xf] %vm971, %v860
    %991 = vst.msk [vmem:[%s970 + $0x98] sm:$0xf] %vm971, %v861
    %992 = vst.msk [vmem:[%s970 + $0xa4] sm:$0xf] %vm971, %v862
    %993 = vst.msk [vmem:[%s970 + $0xa8] sm:$0xf] %vm971, %v863
    %994 = vst.msk [vmem:[%s970 + $0xb4] sm:$0xf] %vm971, %v864
    %995 = vst.msk [vmem:[%s970 + $0xb8] sm:$0xf] %vm971, %v865
    %996 = vst.msk [vmem:[%s970 + $0xc4] sm:$0xf] %vm971, %v866
    %997 = vst.msk [vmem:[%s970 + $0xc8] sm:$0xf] %vm971, %v867
    %998 = vst.msk [vmem:[%s970 + $0xd4] sm:$0xf] %vm971, %v868
    %999 = vst.msk [vmem:[%s970 + $0xd8] sm:$0xf] %vm971, %v869
    %1000 = vst.msk [vmem:[%s970 + $0xe4] sm:$0xf] %vm971, %v870
    %1001 = vst.msk [vmem:[%s970 + $0xe8] sm:$0xf] %vm971, %v871
    %1002 = vst.msk [vmem:[%s970 + $0xf4] sm:$0xf] %vm971, %v872
    %1003 = vst.msk [vmem:[%s970 + $0xf8] sm:$0xf] %vm971, %v873
    %1004 = vst.msk [vmem:[%s970 + $0x124] sm:$0xf] %vm971, %v874
    %1005 = vst.msk [vmem:[%s970 + $0x128] sm:$0xf] %vm971, %v875
    %1006 = vst.msk [vmem:[%s970 + $0x134] sm:$0xf] %vm971, %v876
    %1007 = vst.msk [vmem:[%s970 + $0x138] sm:$0xf] %vm971, %v877
    %1008 = vst.msk [vmem:[%s970 + $0x144] sm:$0xf] %vm971, %v878
    %1009 = vst.msk [vmem:[%s970 + $0x148] sm:$0xf] %vm971, %v879
    %1010 = vst.msk [vmem:[%s970 + $0x154] sm:$0xf] %vm971, %v880
    %1011 = vst.msk [vmem:[%s970 + $0x158] sm:$0xf] %vm971, %v881
    %1012 = vst.msk [vmem:[%s970 + $0x164] sm:$0xf] %vm971, %v882
    %1013 = vst.msk [vmem:[%s970 + $0x168] sm:$0xf] %vm971, %v883
    %1014 = vst.msk [vmem:[%s970 + $0x174] sm:$0xf] %vm971, %v884
    %1015 = vst.msk [vmem:[%s970 + $0x178] sm:$0xf] %vm971, %v885
    %1016 = vst.msk [vmem:[%s970 + $0x184] sm:$0xf] %vm971, %v886
    %1017 = vst.msk [vmem:[%s970 + $0x188] sm:$0xf] %vm971, %v887
    %1018 = vst.msk [vmem:[%s970 + $0x194] sm:$0xf] %vm971, %v888
    %1019 = vst.msk [vmem:[%s970 + $0x198] sm:$0xf] %vm971, %v889
    %1020 = vst.msk [vmem:[%s970 + $0x1a4] sm:$0xf] %vm971, %v890
    %1021 = vst.msk [vmem:[%s970 + $0x1a8] sm:$0xf] %vm971, %v891
    %1022 = vst.msk [vmem:[%s970 + $0x1b4] sm:$0xf] %vm971, %v892
    %1023 = vst.msk [vmem:[%s970 + $0x1b8] sm:$0xf] %vm971, %v893
    %1024 = vst.msk [vmem:[%s970 + $0x1c4] sm:$0xf] %vm971, %v894
    %1025 = vst.msk [vmem:[%s970 + $0x1c8] sm:$0xf] %vm971, %v895
    %1026 = vst.msk [vmem:[%s970 + $0x1d4] sm:$0xf] %vm971, %v896
    %1027 = vst.msk [vmem:[%s970 + $0x1d8] sm:$0xf] %vm971, %v897
    %1028 = vst.msk [vmem:[%s970 + $0x1e4] sm:$0xf] %vm971, %v898
    %1029 = vst.msk [vmem:[%s970 + $0x1e8] sm:$0xf] %vm971, %v899
    %1030 = vst.msk [vmem:[%s970 + $0x1f4] sm:$0xf] %vm971, %v900
    %1031 = vst.msk [vmem:[%s970 + $0x1f8] sm:$0xf] %vm971, %v901
    %1032 = vst.msk [vmem:[%s970 + $0x204] sm:$0xf] %vm971, %v902
    %1033 = vst.msk [vmem:[%s970 + $0x208] sm:$0xf] %vm971, %v903
    %1034 = vst.msk [vmem:[%s970 + $0x214] sm:$0xf] %vm971, %v904
    %1035 = vst.msk [vmem:[%s970 + $0x218] sm:$0xf] %vm971, %v905
    %vm1036 = vcmask 27651
    %vm1037 = vsmask.f32 7950
    %vm1038 = vmand %vm1036, %vm1037
    %v1039 = vld [vmem:[#allocation2] sm:$0x8]
    %v1040 = vsel %vm1038, 0, %v1039
    %1041 = vst [vmem:[#allocation2] sm:$0x8] %v1040
    %1042 = vst.msk [vmem:[#allocation2 + $0x4] sm:$0xf] %vm971, 0
    %1043 = vst.msk [vmem:[#allocation2 + $0x8] sm:$0xf] %vm971, 0
    %vm1044 = vcmask 24576
    %vm1045 = vsmask.f32 256
    %vm1046 = vmand %vm1044, %vm1045
    %v1047 = vld [vmem:[#allocation2 + $0xc] sm:$0x1]
    %v1048 = vsel %vm1046, 0, %v1047
    %1049 = vst [vmem:[#allocation2 + $0xc] sm:$0x1] %v1048
    %v1050 = vld [vmem:[#allocation2 + $0x120] sm:$0x8]
    %v1051 = vsel %vm1038, 0, %v1050
    %1052 = vst [vmem:[#allocation2 + $0x120] sm:$0x8] %v1051
    %1053 = vst.msk [vmem:[#allocation2 + $0x124] sm:$0xf] %vm971, 0
    %1054 = vst.msk [vmem:[#allocation2 + $0x128] sm:$0xf] %vm971, 0
    %v1055 = vld [vmem:[#allocation2 + $0x12c] sm:$0x1]
    %v1056 = vsel %vm1046, 0, %v1055
    %1057 = vst [vmem:[#allocation2 + $0x12c] sm:$0x1] %v1056
    %s1058 = scalar_lea.vmem [#allocation2], 272
    %v1059 = vld [vmem:[%s1058] sm:$0x8]
    %v1060 = vsel %vm1038, 0, %v1059
    %1061 = vst [vmem:[%s1058] sm:$0x8] %v1060
    %1062 = vst.msk [vmem:[%s1058 + $0x4] sm:$0xf] %vm971, 0
    %1063 = vst.msk [vmem:[%s1058 + $0x8] sm:$0xf] %vm971, 0
    %v1064 = vld [vmem:[%s1058 + $0xc] sm:$0x1]
    %v1065 = vsel %vm1046, 0, %v1064
    %1066 = vst [vmem:[%s1058 + $0xc] sm:$0x1] %v1065
    %v1067 = vld [vmem:[%s1058 + $0x120] sm:$0x8]
    %v1068 = vsel %vm1038, 0, %v1067
    %1069 = vst [vmem:[%s1058 + $0x120] sm:$0x8] %v1068
    %1070 = vst.msk [vmem:[%s1058 + $0x124] sm:$0xf] %vm971, 0
    %1071 = vst.msk [vmem:[%s1058 + $0x128] sm:$0xf] %vm971, 0
    %v1072 = vld [vmem:[%s1058 + $0x12c] sm:$0x1]
    %v1073 = vsel %vm1046, 0, %v1072
    %1074 = vst [vmem:[%s1058 + $0x12c] sm:$0x1] %v1073
    %v1075 = vld [vmem:[%s970] sm:$0x8]
    %v1076 = vsel %vm1038, 0, %v1075
    %1077 = vst [vmem:[%s970] sm:$0x8] %v1076
    %v1078 = vld [vmem:[%s970 + $0x10] sm:$0x8]
    %v1079 = vsel %vm1038, 0, %v1078
    %1080 = vst [vmem:[%s970 + $0x10] sm:$0x8] %v1079
    %v1081 = vld [vmem:[%s970 + $0x20] sm:$0x8]
    %v1082 = vsel %vm1038, 0, %v1081
    %1083 = vst [vmem:[%s970 + $0x20] sm:$0x8] %v1082
    %v1084 = vld [vmem:[%s970 + $0x30] sm:$0x8]
    %v1085 = vsel %vm1038, 0, %v1084
    %1086 = vst [vmem:[%s970 + $0x30] sm:$0x8] %v1085
    %v1087 = vld [vmem:[%s970 + $0x40] sm:$0x8]
    %v1088 = vsel %vm1038, 0, %v1087
    %1089 = vst [vmem:[%s970 + $0x40] sm:$0x8] %v1088
    %v1090 = vld [vmem:[%s970 + $0x50] sm:$0x8]
    %v1091 = vsel %vm1038, 0, %v1090
    %1092 = vst [vmem:[%s970 + $0x50] sm:$0x8] %v1091
    %v1093 = vld [vmem:[%s970 + $0x60] sm:$0x8]
    %v1094 = vsel %vm1038, 0, %v1093
    %1095 = vst [vmem:[%s970 + $0x60] sm:$0x8] %v1094
    %v1096 = vld [vmem:[%s970 + $0x70] sm:$0x8]
    %v1097 = vsel %vm1038, 0, %v1096
    %1098 = vst [vmem:[%s970 + $0x70] sm:$0x8] %v1097
    %v1099 = vld [vmem:[%s970 + $0x80] sm:$0x8]
    %v1100 = vsel %vm1038, 0, %v1099
    %1101 = vst [vmem:[%s970 + $0x80] sm:$0x8] %v1100
    %v1102 = vld [vmem:[%s970 + $0x90] sm:$0x8]
    %v1103 = vsel %vm1038, 0, %v1102
    %1104 = vst [vmem:[%s970 + $0x90] sm:$0x8] %v1103
    %v1105 = vld [vmem:[%s970 + $0xa0] sm:$0x8]
    %v1106 = vsel %vm1038, 0, %v1105
    %1107 = vst [vmem:[%s970 + $0xa0] sm:$0x8] %v1106
    %v1108 = vld [vmem:[%s970 + $0xb0] sm:$0x8]
    %v1109 = vsel %vm1038, 0, %v1108
    %1110 = vst [vmem:[%s970 + $0xb0] sm:$0x8] %v1109
    %v1111 = vld [vmem:[%s970 + $0xc0] sm:$0x8]
    %v1112 = vsel %vm1038, 0, %v1111
    %1113 = vst [vmem:[%s970 + $0xc0] sm:$0x8] %v1112
    %v1114 = vld [vmem:[%s970 + $0xd0] sm:$0x8]
    %v1115 = vsel %vm1038, 0, %v1114
    %1116 = vst [vmem:[%s970 + $0xd0] sm:$0x8] %v1115
    %v1117 = vld [vmem:[%s970 + $0xe0] sm:$0x8]
    %v1118 = vsel %vm1038, 0, %v1117
    %1119 = vst [vmem:[%s970 + $0xe0] sm:$0x8] %v1118
    %v1120 = vld [vmem:[%s970 + $0xf0] sm:$0x8]
    %v1121 = vsel %vm1038, 0, %v1120
    %1122 = vst [vmem:[%s970 + $0xf0] sm:$0x8] %v1121
    %v1123 = vld [vmem:[%s970 + $0x120] sm:$0x8]
    %v1124 = vsel %vm1038, 0, %v1123
    %1125 = vst [vmem:[%s970 + $0x120] sm:$0x8] %v1124
    %v1126 = vld [vmem:[%s970 + $0x130] sm:$0x8]
    %v1127 = vsel %vm1038, 0, %v1126
    %1128 = vst [vmem:[%s970 + $0x130] sm:$0x8] %v1127
    %v1129 = vld [vmem:[%s970 + $0x140] sm:$0x8]
    %v1130 = vsel %vm1038, 0, %v1129
    %1131 = vst [vmem:[%s970 + $0x140] sm:$0x8] %v1130
    %v1132 = vld [vmem:[%s970 + $0x150] sm:$0x8]
    %v1133 = vsel %vm1038, 0, %v1132
    %1134 = vst [vmem:[%s970 + $0x150] sm:$0x8] %v1133
    %v1135 = vld [vmem:[%s970 + $0x160] sm:$0x8]
    %v1136 = vsel %vm1038, 0, %v1135
    %1137 = vst [vmem:[%s970 + $0x160] sm:$0x8] %v1136
    %v1138 = vld [vmem:[%s970 + $0x170] sm:$0x8]
    %v1139 = vsel %vm1038, 0, %v1138
    %1140 = vst [vmem:[%s970 + $0x170] sm:$0x8] %v1139
    %v1141 = vld [vmem:[%s970 + $0x180] sm:$0x8]
    %v1142 = vsel %vm1038, 0, %v1141
    %1143 = vst [vmem:[%s970 + $0x180] sm:$0x8] %v1142
    %v1144 = vld [vmem:[%s970 + $0x190] sm:$0x8]
    %v1145 = vsel %vm1038, 0, %v1144
    %1146 = vst [vmem:[%s970 + $0x190] sm:$0x8] %v1145
    %v1147 = vld [vmem:[%s970 + $0x1a0] sm:$0x8]
    %v1148 = vsel %vm1038, 0, %v1147
    %1149 = vst [vmem:[%s970 + $0x1a0] sm:$0x8] %v1148
    %v1150 = vld [vmem:[%s970 + $0x1b0] sm:$0x8]
    %v1151 = vsel %vm1038, 0, %v1150
    %1152 = vst [vmem:[%s970 + $0x1b0] sm:$0x8] %v1151
    %v1153 = vld [vmem:[%s970 + $0x1c0] sm:$0x8]
    %v1154 = vsel %vm1038, 0, %v1153
    %1155 = vst [vmem:[%s970 + $0x1c0] sm:$0x8] %v1154
    %v1156 = vld [vmem:[%s970 + $0x1d0] sm:$0x8]
    %v1157 = vsel %vm1038, 0, %v1156
    %1158 = vst [vmem:[%s970 + $0x1d0] sm:$0x8] %v1157
    %v1159 = vld [vmem:[%s970 + $0x1e0] sm:$0x8]
    %v1160 = vsel %vm1038, 0, %v1159
    %1161 = vst [vmem:[%s970 + $0x1e0] sm:$0x8] %v1160
    %v1162 = vld [vmem:[%s970 + $0x1f0] sm:$0x8]
    %v1163 = vsel %vm1038, 0, %v1162
    %1164 = vst [vmem:[%s970 + $0x1f0] sm:$0x8] %v1163
    %v1165 = vld [vmem:[%s970 + $0x200] sm:$0x8]
    %v1166 = vsel %vm1038, 0, %v1165
    %1167 = vst [vmem:[%s970 + $0x200] sm:$0x8] %v1166
    %v1168 = vld [vmem:[%s970 + $0x210] sm:$0x8]
    %v1169 = vsel %vm1038, 0, %v1168
    %1170 = vst [vmem:[%s970 + $0x210] sm:$0x8] %v1169
    %v1171 = vld [vmem:[%s970 + $0xc] sm:$0x1]
    %v1172 = vsel %vm1046, 0, %v1171
    %1173 = vst [vmem:[%s970 + $0xc] sm:$0x1] %v1172
    %v1174 = vld [vmem:[%s970 + $0x1c] sm:$0x1]
    %v1175 = vsel %vm1046, 0, %v1174
    %1176 = vst [vmem:[%s970 + $0x1c] sm:$0x1] %v1175
    %v1177 = vld [vmem:[%s970 + $0x2c] sm:$0x1]
    %v1178 = vsel %vm1046, 0, %v1177
    %1179 = vst [vmem:[%s970 + $0x2c] sm:$0x1] %v1178
    %v1180 = vld [vmem:[%s970 + $0x3c] sm:$0x1]
    %v1181 = vsel %vm1046, 0, %v1180
    %1182 = vst [vmem:[%s970 + $0x3c] sm:$0x1] %v1181
    %v1183 = vld [vmem:[%s970 + $0x4c] sm:$0x1]
    %v1184 = vsel %vm1046, 0, %v1183
    %1185 = vst [vmem:[%s970 + $0x4c] sm:$0x1] %v1184
    %v1186 = vld [vmem:[%s970 + $0x5c] sm:$0x1]
    %v1187 = vsel %vm1046, 0, %v1186
    %1188 = vst [vmem:[%s970 + $0x5c] sm:$0x1] %v1187
    %v1189 = vld [vmem:[%s970 + $0x6c] sm:$0x1]
    %v1190 = vsel %vm1046, 0, %v1189
    %1191 = vst [vmem:[%s970 + $0x6c] sm:$0x1] %v1190
    %v1192 = vld [vmem:[%s970 + $0x7c] sm:$0x1]
    %v1193 = vsel %vm1046, 0, %v1192
    %1194 = vst [vmem:[%s970 + $0x7c] sm:$0x1] %v1193
    %v1195 = vld [vmem:[%s970 + $0x8c] sm:$0x1]
    %v1196 = vsel %vm1046, 0, %v1195
    %1197 = vst [vmem:[%s970 + $0x8c] sm:$0x1] %v1196
    %v1198 = vld [vmem:[%s970 + $0x9c] sm:$0x1]
    %v1199 = vsel %vm1046, 0, %v1198
    %1200 = vst [vmem:[%s970 + $0x9c] sm:$0x1] %v1199
    %v1201 = vld [vmem:[%s970 + $0xac] sm:$0x1]
    %v1202 = vsel %vm1046, 0, %v1201
    %1203 = vst [vmem:[%s970 + $0xac] sm:$0x1] %v1202
    %v1204 = vld [vmem:[%s970 + $0xbc] sm:$0x1]
    %v1205 = vsel %vm1046, 0, %v1204
    %1206 = vst [vmem:[%s970 + $0xbc] sm:$0x1] %v1205
    %v1207 = vld [vmem:[%s970 + $0xcc] sm:$0x1]
    %v1208 = vsel %vm1046, 0, %v1207
    %1209 = vst [vmem:[%s970 + $0xcc] sm:$0x1] %v1208
    %v1210 = vld [vmem:[%s970 + $0xdc] sm:$0x1]
    %v1211 = vsel %vm1046, 0, %v1210
    %1212 = vst [vmem:[%s970 + $0xdc] sm:$0x1] %v1211
    %v1213 = vld [vmem:[%s970 + $0xec] sm:$0x1]
    %v1214 = vsel %vm1046, 0, %v1213
    %1215 = vst [vmem:[%s970 + $0xec] sm:$0x1] %v1214
    %v1216 = vld [vmem:[%s970 + $0xfc] sm:$0x1]
    %v1217 = vsel %vm1046, 0, %v1216
    %1218 = vst [vmem:[%s970 + $0xfc] sm:$0x1] %v1217
    %v1219 = vld [vmem:[%s970 + $0x12c] sm:$0x1]
    %v1220 = vsel %vm1046, 0, %v1219
    %1221 = vst [vmem:[%s970 + $0x12c] sm:$0x1] %v1220
    %v1222 = vld [vmem:[%s970 + $0x13c] sm:$0x1]
    %v1223 = vsel %vm1046, 0, %v1222
    %1224 = vst [vmem:[%s970 + $0x13c] sm:$0x1] %v1223
    %v1225 = vld [vmem:[%s970 + $0x14c] sm:$0x1]
    %v1226 = vsel %vm1046, 0, %v1225
    %1227 = vst [vmem:[%s970 + $0x14c] sm:$0x1] %v1226
    %v1228 = vld [vmem:[%s970 + $0x15c] sm:$0x1]
    %v1229 = vsel %vm1046, 0, %v1228
    %1230 = vst [vmem:[%s970 + $0x15c] sm:$0x1] %v1229
    %v1231 = vld [vmem:[%s970 + $0x16c] sm:$0x1]
    %v1232 = vsel %vm1046, 0, %v1231
    %1233 = vst [vmem:[%s970 + $0x16c] sm:$0x1] %v1232
    %v1234 = vld [vmem:[%s970 + $0x17c] sm:$0x1]
    %v1235 = vsel %vm1046, 0, %v1234
    %1236 = vst [vmem:[%s970 + $0x17c] sm:$0x1] %v1235
    %v1237 = vld [vmem:[%s970 + $0x18c] sm:$0x1]
    %v1238 = vsel %vm1046, 0, %v1237
    %1239 = vst [vmem:[%s970 + $0x18c] sm:$0x1] %v1238
    %v1240 = vld [vmem:[%s970 + $0x19c] sm:$0x1]
    %v1241 = vsel %vm1046, 0, %v1240
    %1242 = vst [vmem:[%s970 + $0x19c] sm:$0x1] %v1241
    %v1243 = vld [vmem:[%s970 + $0x1ac] sm:$0x1]
    %v1244 = vsel %vm1046, 0, %v1243
    %1245 = vst [vmem:[%s970 + $0x1ac] sm:$0x1] %v1244
    %v1246 = vld [vmem:[%s970 + $0x1bc] sm:$0x1]
    %v1247 = vsel %vm1046, 0, %v1246
    %1248 = vst [vmem:[%s970 + $0x1bc] sm:$0x1] %v1247
    %v1249 = vld [vmem:[%s970 + $0x1cc] sm:$0x1]
    %v1250 = vsel %vm1046, 0, %v1249
    %1251 = vst [vmem:[%s970 + $0x1cc] sm:$0x1] %v1250
    %v1252 = vld [vmem:[%s970 + $0x1dc] sm:$0x1]
    %v1253 = vsel %vm1046, 0, %v1252
    %1254 = vst [vmem:[%s970 + $0x1dc] sm:$0x1] %v1253
    %v1255 = vld [vmem:[%s970 + $0x1ec] sm:$0x1]
    %v1256 = vsel %vm1046, 0, %v1255
    %1257 = vst [vmem:[%s970 + $0x1ec] sm:$0x1] %v1256
    %v1258 = vld [vmem:[%s970 + $0x1fc] sm:$0x1]
    %v1259 = vsel %vm1046, 0, %v1258
    %1260 = vst [vmem:[%s970 + $0x1fc] sm:$0x1] %v1259
    %v1261 = vld [vmem:[%s970 + $0x20c] sm:$0x1]
    %v1262 = vsel %vm1046, 0, %v1261
    %1263 = vst [vmem:[%s970 + $0x20c] sm:$0x1] %v1262
    %v1264 = vld [vmem:[%s970 + $0x21c] sm:$0x1]
    %v1265 = vsel %vm1046, 0, %v1264
    %1266 = vst [vmem:[%s970 + $0x21c] sm:$0x1] %v1265
    %v1267 = vld [vmem:[#allocation2] sm:$0x8]
    %v1268 = vld [vmem:[#allocation2 + $0x4] sm:$0xf]
    %v1269 = vld [vmem:[#allocation2 + $0x8] sm:$0xf]
    %v1270 = vld [vmem:[#allocation2 + $0x10] sm:$0x8]
    %v1271 = vld [vmem:[#allocation2 + $0x14] sm:$0xf]
    %v1272 = vld [vmem:[#allocation2 + $0x18] sm:$0xf]
    %v1273 = vld [vmem:[#allocation2 + $0x20] sm:$0x8]
    %v1274 = vld [vmem:[#allocation2 + $0x24] sm:$0xf]
    %v1275 = vld [vmem:[#allocation2 + $0x28] sm:$0xf]
    %v1276 = vld [vmem:[#allocation2 + $0x30] sm:$0x8]
    %v1277 = vld [vmem:[#allocation2 + $0x34] sm:$0xf]
    %v1278 = vld [vmem:[#allocation2 + $0x38] sm:$0xf]
    %v1279 = vld [vmem:[#allocation2 + $0x40] sm:$0x8]
    %v1280 = vld [vmem:[#allocation2 + $0x44] sm:$0xf]
    %v1281 = vld [vmem:[#allocation2 + $0x48] sm:$0xf]
    %v1282 = vld [vmem:[#allocation2 + $0x50] sm:$0x8]
    %v1283 = vld [vmem:[#allocation2 + $0x54] sm:$0xf]
    %v1284 = vld [vmem:[#allocation2 + $0x58] sm:$0xf]
    %v1285 = vld [vmem:[#allocation2 + $0x60] sm:$0x8]
    %v1286 = vld [vmem:[#allocation2 + $0x64] sm:$0xf]
    %v1287 = vld [vmem:[#allocation2 + $0x68] sm:$0xf]
    %v1288 = vld [vmem:[#allocation2 + $0x70] sm:$0x8]
    %v1289 = vld [vmem:[#allocation2 + $0x74] sm:$0xf]
    %v1290 = vld [vmem:[#allocation2 + $0x78] sm:$0xf]
    %v1291 = vld [vmem:[#allocation2 + $0x80] sm:$0x8]
    %v1292 = vld [vmem:[#allocation2 + $0x84] sm:$0xf]
    %v1293 = vld [vmem:[#allocation2 + $0x88] sm:$0xf]
    %v1294 = vld [vmem:[#allocation2 + $0x90] sm:$0x8]
    %v1295 = vld [vmem:[#allocation2 + $0x94] sm:$0xf]
    %v1296 = vld [vmem:[#allocation2 + $0x98] sm:$0xf]
    %v1297 = vld [vmem:[#allocation2 + $0xa0] sm:$0x8]
    %v1298 = vld [vmem:[#allocation2 + $0xa4] sm:$0xf]
    %v1299 = vld [vmem:[#allocation2 + $0xa8] sm:$0xf]
    %v1300 = vld [vmem:[#allocation2 + $0xb0] sm:$0x8]
    %v1301 = vld [vmem:[#allocation2 + $0xb4] sm:$0xf]
    %v1302 = vld [vmem:[#allocation2 + $0xb8] sm:$0xf]
    %v1303 = vld [vmem:[#allocation2 + $0xc0] sm:$0x8]
    %v1304 = vld [vmem:[#allocation2 + $0xc4] sm:$0xf]
    %v1305 = vld [vmem:[#allocation2 + $0xc8] sm:$0xf]
    %v1306 = vld [vmem:[#allocation2 + $0xd0] sm:$0x8]
    %v1307 = vld [vmem:[#allocation2 + $0xd4] sm:$0xf]
    %v1308 = vld [vmem:[#allocation2 + $0xd8] sm:$0xf]
    %v1309 = vld [vmem:[#allocation2 + $0xe0] sm:$0x8]
    %v1310 = vld [vmem:[#allocation2 + $0xe4] sm:$0xf]
    %v1311 = vld [vmem:[#allocation2 + $0xe8] sm:$0xf]
    %v1312 = vld [vmem:[#allocation2 + $0xf0] sm:$0x8]
    %v1313 = vld [vmem:[#allocation2 + $0xf4] sm:$0xf]
    %v1314 = vld [vmem:[#allocation2 + $0xf8] sm:$0xf]
    %v1315 = vld [vmem:[#allocation2 + $0x120] sm:$0x8]
    %v1316 = vld [vmem:[#allocation2 + $0x124] sm:$0xf]
    %v1317 = vld [vmem:[#allocation2 + $0x128] sm:$0xf]
    %v1318 = vld [vmem:[#allocation2 + $0x130] sm:$0x8]
    %v1319 = vld [vmem:[#allocation2 + $0x134] sm:$0xf]
    %v1320 = vld [vmem:[#allocation2 + $0x138] sm:$0xf]
    %v1321 = vld [vmem:[#allocation2 + $0x140] sm:$0x8]
    %v1322 = vld [vmem:[#allocation2 + $0x144] sm:$0xf]
    %v1323 = vld [vmem:[#allocation2 + $0x148] sm:$0xf]
    %v1324 = vld [vmem:[#allocation2 + $0x150] sm:$0x8]
    %v1325 = vld [vmem:[#allocation2 + $0x154] sm:$0xf]
    %v1326 = vld [vmem:[#allocation2 + $0x158] sm:$0xf]
    %v1327 = vld [vmem:[#allocation2 + $0x160] sm:$0x8]
    %v1328 = vld [vmem:[#allocation2 + $0x164] sm:$0xf]
    %v1329 = vld [vmem:[#allocation2 + $0x168] sm:$0xf]
    %v1330 = vld [vmem:[#allocation2 + $0x170] sm:$0x8]
    %v1331 = vld [vmem:[#allocation2 + $0x174] sm:$0xf]
    %v1332 = vld [vmem:[#allocation2 + $0x178] sm:$0xf]
    %v1333 = vld [vmem:[#allocation2 + $0x180] sm:$0x8]
    %v1334 = vld [vmem:[#allocation2 + $0x184] sm:$0xf]
    %v1335 = vld [vmem:[#allocation2 + $0x188] sm:$0xf]
    %v1336 = vld [vmem:[#allocation2 + $0x190] sm:$0x8]
    %v1337 = vld [vmem:[#allocation2 + $0x194] sm:$0xf]
    %v1338 = vld [vmem:[#allocation2 + $0x198] sm:$0xf]
    %v1339 = vld [vmem:[#allocation2 + $0x1a0] sm:$0x8]
    %v1340 = vld [vmem:[#allocation2 + $0x1a4] sm:$0xf]
    %v1341 = vld [vmem:[#allocation2 + $0x1a8] sm:$0xf]
    %v1342 = vld [vmem:[#allocation2 + $0x1b0] sm:$0x8]
    %v1343 = vld [vmem:[#allocation2 + $0x1b4] sm:$0xf]
    %v1344 = vld [vmem:[#allocation2 + $0x1b8] sm:$0xf]
    %v1345 = vld [vmem:[#allocation2 + $0x1c0] sm:$0x8]
    %v1346 = vld [vmem:[#allocation2 + $0x1c4] sm:$0xf]
    %v1347 = vld [vmem:[#allocation2 + $0x1c8] sm:$0xf]
    %v1348 = vld [vmem:[#allocation2 + $0x1d0] sm:$0x8]
    %v1349 = vld [vmem:[#allocation2 + $0x1d4] sm:$0xf]
    %v1350 = vld [vmem:[#allocation2 + $0x1d8] sm:$0xf]
    %v1351 = vld [vmem:[#allocation2 + $0x1e0] sm:$0x8]
    %v1352 = vld [vmem:[#allocation2 + $0x1e4] sm:$0xf]
    %v1353 = vld [vmem:[#allocation2 + $0x1e8] sm:$0xf]
    %v1354 = vld [vmem:[#allocation2 + $0x1f0] sm:$0x8]
    %v1355 = vld [vmem:[#allocation2 + $0x1f4] sm:$0xf]
    %v1356 = vld [vmem:[#allocation2 + $0x1f8] sm:$0xf]
    %v1357 = vld [vmem:[#allocation2 + $0x200] sm:$0x8]
    %v1358 = vld [vmem:[#allocation2 + $0x204] sm:$0xf]
    %v1359 = vld [vmem:[#allocation2 + $0x208] sm:$0xf]
    %v1360 = vld [vmem:[#allocation2 + $0x210] sm:$0x8]
    %v1361 = vld [vmem:[#allocation2 + $0x214] sm:$0xf]
    %v1362 = vld [vmem:[#allocation2 + $0x218] sm:$0xf]
    %v1459 = vunpack.c.l.b16 %v1267
    %v1460 = vunpack.c.l.b16 %v1268
    %v1461 = vunpack.c.l.b16 %v1269
    %v1462 = vunpack.c.l.b16 %v1270
    %v1463 = vunpack.c.l.b16 %v1271
    %v1464 = vunpack.c.l.b16 %v1272
    %v1465 = vunpack.c.l.b16 %v1273
    %v1466 = vunpack.c.l.b16 %v1274
    %v1467 = vunpack.c.l.b16 %v1275
    %v1468 = vunpack.c.l.b16 %v1276
    %v1469 = vunpack.c.l.b16 %v1277
    %v1470 = vunpack.c.l.b16 %v1278
    %v1471 = vunpack.c.l.b16 %v1279
    %v1472 = vunpack.c.l.b16 %v1280
    %v1473 = vunpack.c.l.b16 %v1281
    %v1474 = vunpack.c.l.b16 %v1282
    %v1475 = vunpack.c.l.b16 %v1283
    %v1476 = vunpack.c.l.b16 %v1284
    %v1477 = vunpack.c.l.b16 %v1285
    %v1478 = vunpack.c.l.b16 %v1286
    %v1479 = vunpack.c.l.b16 %v1287
    %v1480 = vunpack.c.l.b16 %v1288
    %v1481 = vunpack.c.l.b16 %v1289
    %v1482 = vunpack.c.l.b16 %v1290
    %v1483 = vunpack.c.l.b16 %v1291
    %v1484 = vunpack.c.l.b16 %v1292
    %v1485 = vunpack.c.l.b16 %v1293
    %v1486 = vunpack.c.l.b16 %v1294
    %v1487 = vunpack.c.l.b16 %v1295
    %v1488 = vunpack.c.l.b16 %v1296
    %v1489 = vunpack.c.l.b16 %v1297
    %v1490 = vunpack.c.l.b16 %v1298
    %v1491 = vunpack.c.l.b16 %v1299
    %v1492 = vunpack.c.l.b16 %v1300
    %v1493 = vunpack.c.l.b16 %v1301
    %v1494 = vunpack.c.l.b16 %v1302
    %v1495 = vunpack.c.l.b16 %v1303
    %v1496 = vunpack.c.l.b16 %v1304
    %v1497 = vunpack.c.l.b16 %v1305
    %v1498 = vunpack.c.l.b16 %v1306
    %v1499 = vunpack.c.l.b16 %v1307
    %v1500 = vunpack.c.l.b16 %v1308
    %v1501 = vunpack.c.l.b16 %v1309
    %v1502 = vunpack.c.l.b16 %v1310
    %v1503 = vunpack.c.l.b16 %v1311
    %v1504 = vunpack.c.l.b16 %v1312
    %v1505 = vunpack.c.l.b16 %v1313
    %v1506 = vunpack.c.l.b16 %v1314
    %v1507 = vunpack.c.l.b16 %v1315
    %v1508 = vunpack.c.l.b16 %v1316
    %v1509 = vunpack.c.l.b16 %v1317
    %v1510 = vunpack.c.l.b16 %v1318
    %v1511 = vunpack.c.l.b16 %v1319
    %v1512 = vunpack.c.l.b16 %v1320
    %v1513 = vunpack.c.l.b16 %v1321
    %v1514 = vunpack.c.l.b16 %v1322
    %v1515 = vunpack.c.l.b16 %v1323
    %v1516 = vunpack.c.l.b16 %v1324
    %v1517 = vunpack.c.l.b16 %v1325
    %v1518 = vunpack.c.l.b16 %v1326
    %v1519 = vunpack.c.l.b16 %v1327
    %v1520 = vunpack.c.l.b16 %v1328
    %v1521 = vunpack.c.l.b16 %v1329
    %v1522 = vunpack.c.l.b16 %v1330
    %v1523 = vunpack.c.l.b16 %v1331
    %v1524 = vunpack.c.l.b16 %v1332
    %v1525 = vunpack.c.l.b16 %v1333
    %v1526 = vunpack.c.l.b16 %v1334
    %v1527 = vunpack.c.l.b16 %v1335
    %v1528 = vunpack.c.l.b16 %v1336
    %v1529 = vunpack.c.l.b16 %v1337
    %v1530 = vunpack.c.l.b16 %v1338
    %v1531 = vunpack.c.l.b16 %v1339
    %v1532 = vunpack.c.l.b16 %v1340
    %v1533 = vunpack.c.l.b16 %v1341
    %v1534 = vunpack.c.l.b16 %v1342
    %v1535 = vunpack.c.l.b16 %v1343
    %v1536 = vunpack.c.l.b16 %v1344
    %v1537 = vunpack.c.l.b16 %v1345
    %v1538 = vunpack.c.l.b16 %v1346
    %v1539 = vunpack.c.l.b16 %v1347
    %v1540 = vunpack.c.l.b16 %v1348
    %v1541 = vunpack.c.l.b16 %v1349
    %v1542 = vunpack.c.l.b16 %v1350
    %v1543 = vunpack.c.l.b16 %v1351
    %v1544 = vunpack.c.l.b16 %v1352
    %v1545 = vunpack.c.l.b16 %v1353
    %v1546 = vunpack.c.l.b16 %v1354
    %v1547 = vunpack.c.l.b16 %v1355
    %v1548 = vunpack.c.l.b16 %v1356
    %v1549 = vunpack.c.l.b16 %v1357
    %v1550 = vunpack.c.l.b16 %v1358
    %v1551 = vunpack.c.l.b16 %v1359
    %v1552 = vunpack.c.l.b16 %v1360
    %v1553 = vunpack.c.l.b16 %v1361
    %v1554 = vunpack.c.l.b16 %v1362
    %v1555 = vpack.c.b16 %v1460, %v1459
    %v1556 = vpack.c.b16 %v1461, %v1461
    %v1557 = vpack.c.b16 %v1463, %v1462
    %v1558 = vpack.c.b16 %v1464, %v1464
    %v1559 = vpack.c.b16 %v1466, %v1465
    %v1560 = vpack.c.b16 %v1467, %v1467
    %v1561 = vpack.c.b16 %v1469, %v1468
    %v1562 = vpack.c.b16 %v1470, %v1470
    %v1563 = vpack.c.b16 %v1472, %v1471
    %v1564 = vpack.c.b16 %v1473, %v1473
    %v1565 = vpack.c.b16 %v1475, %v1474
    %v1566 = vpack.c.b16 %v1476, %v1476
    %v1567 = vpack.c.b16 %v1478, %v1477
    %v1568 = vpack.c.b16 %v1479, %v1479
    %v1569 = vpack.c.b16 %v1481, %v1480
    %v1570 = vpack.c.b16 %v1482, %v1482
    %v1571 = vpack.c.b16 %v1484, %v1483
    %v1572 = vpack.c.b16 %v1485, %v1485
    %v1573 = vpack.c.b16 %v1487, %v1486
    %v1574 = vpack.c.b16 %v1488, %v1488
    %v1575 = vpack.c.b16 %v1490, %v1489
    %v1576 = vpack.c.b16 %v1491, %v1491
    %v1577 = vpack.c.b16 %v1493, %v1492
    %v1578 = vpack.c.b16 %v1494, %v1494
    %v1579 = vpack.c.b16 %v1496, %v1495
    %v1580 = vpack.c.b16 %v1497, %v1497
    %v1581 = vpack.c.b16 %v1499, %v1498
    %v1582 = vpack.c.b16 %v1500, %v1500
    %v1583 = vpack.c.b16 %v1502, %v1501
    %v1584 = vpack.c.b16 %v1503, %v1503
    %v1585 = vpack.c.b16 %v1505, %v1504
    %v1586 = vpack.c.b16 %v1506, %v1506
    %v1587 = vpack.c.b16 %v1508, %v1507
    %v1588 = vpack.c.b16 %v1509, %v1509
    %v1589 = vpack.c.b16 %v1511, %v1510
    %v1590 = vpack.c.b16 %v1512, %v1512
    %v1591 = vpack.c.b16 %v1514, %v1513
    %v1592 = vpack.c.b16 %v1515, %v1515
    %v1593 = vpack.c.b16 %v1517, %v1516
    %v1594 = vpack.c.b16 %v1518, %v1518
    %v1595 = vpack.c.b16 %v1520, %v1519
    %v1596 = vpack.c.b16 %v1521, %v1521
    %v1597 = vpack.c.b16 %v1523, %v1522
    %v1598 = vpack.c.b16 %v1524, %v1524
    %v1599 = vpack.c.b16 %v1526, %v1525
    %v1600 = vpack.c.b16 %v1527, %v1527
    %v1601 = vpack.c.b16 %v1529, %v1528
    %v1602 = vpack.c.b16 %v1530, %v1530
    %v1603 = vpack.c.b16 %v1532, %v1531
    %v1604 = vpack.c.b16 %v1533, %v1533
    %v1605 = vpack.c.b16 %v1535, %v1534
    %v1606 = vpack.c.b16 %v1536, %v1536
    %v1607 = vpack.c.b16 %v1538, %v1537
    %v1608 = vpack.c.b16 %v1539, %v1539
    %v1609 = vpack.c.b16 %v1541, %v1540
    %v1610 = vpack.c.b16 %v1542, %v1542
    %v1611 = vpack.c.b16 %v1544, %v1543
    %v1612 = vpack.c.b16 %v1545, %v1545
    %v1613 = vpack.c.b16 %v1547, %v1546
    %v1614 = vpack.c.b16 %v1548, %v1548
    %v1615 = vpack.c.b16 %v1550, %v1549
    %v1616 = vpack.c.b16 %v1551, %v1551
    %v1617 = vpack.c.b16 %v1553, %v1552
    %v1618 = vpack.c.b16 %v1554, %v1554
    %vm1619 = vsmask.f32 4352
    %v1621 = vshrl.u32 %v1555, 16
    %v1623 = vrot.slane %v1621, 3
    %v1624 = vshll.u32 %v1555, 16
    %v1626 = vrot.slane %v1624, 4
    %v1627 = vor.u32 %v1623, %v1626
    %v1629 = vshrl.u32 %v1556, 16
    %v1631 = vrot.slane %v1629, 3
    %v1632 = vshll.u32 %v1556, 16
    %v1634 = vrot.slane %v1632, 4
    %v1635 = vor.u32 %v1631, %v1634
    %v1636 = vsel %vm1619, %v1627, %v1635
    %v1638 = vshrl.u32 %v1557, 16
    %v1640 = vrot.slane %v1638, 3
    %v1641 = vshll.u32 %v1557, 16
    %v1643 = vrot.slane %v1641, 4
    %v1644 = vor.u32 %v1640, %v1643
    %v1646 = vshrl.u32 %v1558, 16
    %v1648 = vrot.slane %v1646, 3
    %v1649 = vshll.u32 %v1558, 16
    %v1651 = vrot.slane %v1649, 4
    %v1652 = vor.u32 %v1648, %v1651
    %v1653 = vsel %vm1619, %v1644, %v1652
    %v1655 = vshrl.u32 %v1559, 16
    %v1657 = vrot.slane %v1655, 3
    %v1658 = vshll.u32 %v1559, 16
    %v1660 = vrot.slane %v1658, 4
    %v1661 = vor.u32 %v1657, %v1660
    %v1663 = vshrl.u32 %v1560, 16
    %v1665 = vrot.slane %v1663, 3
    %v1666 = vshll.u32 %v1560, 16
    %v1668 = vrot.slane %v1666, 4
    %v1669 = vor.u32 %v1665, %v1668
    %v1670 = vsel %vm1619, %v1661, %v1669
    %v1672 = vshrl.u32 %v1561, 16
    %v1674 = vrot.slane %v1672, 3
    %v1675 = vshll.u32 %v1561, 16
    %v1677 = vrot.slane %v1675, 4
    %v1678 = vor.u32 %v1674, %v1677
    %v1680 = vshrl.u32 %v1562, 16
    %v1682 = vrot.slane %v1680, 3
    %v1683 = vshll.u32 %v1562, 16
    %v1685 = vrot.slane %v1683, 4
    %v1686 = vor.u32 %v1682, %v1685
    %v1687 = vsel %vm1619, %v1678, %v1686
    %v1689 = vshrl.u32 %v1563, 16
    %v1691 = vrot.slane %v1689, 3
    %v1692 = vshll.u32 %v1563, 16
    %v1694 = vrot.slane %v1692, 4
    %v1695 = vor.u32 %v1691, %v1694
    %v1697 = vshrl.u32 %v1564, 16
    %v1699 = vrot.slane %v1697, 3
    %v1700 = vshll.u32 %v1564, 16
    %v1702 = vrot.slane %v1700, 4
    %v1703 = vor.u32 %v1699, %v1702
    %v1704 = vsel %vm1619, %v1695, %v1703
    %v1706 = vshrl.u32 %v1565, 16
    %v1708 = vrot.slane %v1706, 3
    %v1709 = vshll.u32 %v1565, 16
    %v1711 = vrot.slane %v1709, 4
    %v1712 = vor.u32 %v1708, %v1711
    %v1714 = vshrl.u32 %v1566, 16
    %v1716 = vrot.slane %v1714, 3
    %v1717 = vshll.u32 %v1566, 16
    %v1719 = vrot.slane %v1717, 4
    %v1720 = vor.u32 %v1716, %v1719
    %v1721 = vsel %vm1619, %v1712, %v1720
    %v1723 = vshrl.u32 %v1567, 16
    %v1725 = vrot.slane %v1723, 3
    %v1726 = vshll.u32 %v1567, 16
    %v1728 = vrot.slane %v1726, 4
    %v1729 = vor.u32 %v1725, %v1728
    %v1731 = vshrl.u32 %v1568, 16
    %v1733 = vrot.slane %v1731, 3
    %v1734 = vshll.u32 %v1568, 16
    %v1736 = vrot.slane %v1734, 4
    %v1737 = vor.u32 %v1733, %v1736
    %v1738 = vsel %vm1619, %v1729, %v1737
    %v1740 = vshrl.u32 %v1569, 16
    %v1742 = vrot.slane %v1740, 3
    %v1743 = vshll.u32 %v1569, 16
    %v1745 = vrot.slane %v1743, 4
    %v1746 = vor.u32 %v1742, %v1745
    %v1748 = vshrl.u32 %v1570, 16
    %v1750 = vrot.slane %v1748, 3
    %v1751 = vshll.u32 %v1570, 16
    %v1753 = vrot.slane %v1751, 4
    %v1754 = vor.u32 %v1750, %v1753
    %v1755 = vsel %vm1619, %v1746, %v1754
    %v1757 = vshrl.u32 %v1571, 16
    %v1759 = vrot.slane %v1757, 3
    %v1760 = vshll.u32 %v1571, 16
    %v1762 = vrot.slane %v1760, 4
    %v1763 = vor.u32 %v1759, %v1762
    %v1765 = vshrl.u32 %v1572, 16
    %v1767 = vrot.slane %v1765, 3
    %v1768 = vshll.u32 %v1572, 16
    %v1770 = vrot.slane %v1768, 4
    %v1771 = vor.u32 %v1767, %v1770
    %v1772 = vsel %vm1619, %v1763, %v1771
    %v1774 = vshrl.u32 %v1573, 16
    %v1776 = vrot.slane %v1774, 3
    %v1777 = vshll.u32 %v1573, 16
    %v1779 = vrot.slane %v1777, 4
    %v1780 = vor.u32 %v1776, %v1779
    %v1782 = vshrl.u32 %v1574, 16
    %v1784 = vrot.slane %v1782, 3
    %v1785 = vshll.u32 %v1574, 16
    %v1787 = vrot.slane %v1785, 4
    %v1788 = vor.u32 %v1784, %v1787
    %v1789 = vsel %vm1619, %v1780, %v1788
    %v1791 = vshrl.u32 %v1575, 16
    %v1793 = vrot.slane %v1791, 3
    %v1794 = vshll.u32 %v1575, 16
    %v1796 = vrot.slane %v1794, 4
    %v1797 = vor.u32 %v1793, %v1796
    %v1799 = vshrl.u32 %v1576, 16
    %v1801 = vrot.slane %v1799, 3
    %v1802 = vshll.u32 %v1576, 16
    %v1804 = vrot.slane %v1802, 4
    %v1805 = vor.u32 %v1801, %v1804
    %v1806 = vsel %vm1619, %v1797, %v1805
    %v1808 = vshrl.u32 %v1577, 16
    %v1810 = vrot.slane %v1808, 3
    %v1811 = vshll.u32 %v1577, 16
    %v1813 = vrot.slane %v1811, 4
    %v1814 = vor.u32 %v1810, %v1813
    %v1816 = vshrl.u32 %v1578, 16
    %v1818 = vrot.slane %v1816, 3
    %v1819 = vshll.u32 %v1578, 16
    %v1821 = vrot.slane %v1819, 4
    %v1822 = vor.u32 %v1818, %v1821
    %v1823 = vsel %vm1619, %v1814, %v1822
    %v1825 = vshrl.u32 %v1579, 16
    %v1827 = vrot.slane %v1825, 3
    %v1828 = vshll.u32 %v1579, 16
    %v1830 = vrot.slane %v1828, 4
    %v1831 = vor.u32 %v1827, %v1830
    %v1833 = vshrl.u32 %v1580, 16
    %v1835 = vrot.slane %v1833, 3
    %v1836 = vshll.u32 %v1580, 16
    %v1838 = vrot.slane %v1836, 4
    %v1839 = vor.u32 %v1835, %v1838
    %v1840 = vsel %vm1619, %v1831, %v1839
    %v1842 = vshrl.u32 %v1581, 16
    %v1844 = vrot.slane %v1842, 3
    %v1845 = vshll.u32 %v1581, 16
    %v1847 = vrot.slane %v1845, 4
    %v1848 = vor.u32 %v1844, %v1847
    %v1850 = vshrl.u32 %v1582, 16
    %v1852 = vrot.slane %v1850, 3
    %v1853 = vshll.u32 %v1582, 16
    %v1855 = vrot.slane %v1853, 4
    %v1856 = vor.u32 %v1852, %v1855
    %v1857 = vsel %vm1619, %v1848, %v1856
    %v1859 = vshrl.u32 %v1583, 16
    %v1861 = vrot.slane %v1859, 3
    %v1862 = vshll.u32 %v1583, 16
    %v1864 = vrot.slane %v1862, 4
    %v1865 = vor.u32 %v1861, %v1864
    %v1867 = vshrl.u32 %v1584, 16
    %v1869 = vrot.slane %v1867, 3
    %v1870 = vshll.u32 %v1584, 16
    %v1872 = vrot.slane %v1870, 4
    %v1873 = vor.u32 %v1869, %v1872
    %v1874 = vsel %vm1619, %v1865, %v1873
    %v1876 = vshrl.u32 %v1585, 16
    %v1878 = vrot.slane %v1876, 3
    %v1879 = vshll.u32 %v1585, 16
    %v1881 = vrot.slane %v1879, 4
    %v1882 = vor.u32 %v1878, %v1881
    %v1884 = vshrl.u32 %v1586, 16
    %v1886 = vrot.slane %v1884, 3
    %v1887 = vshll.u32 %v1586, 16
    %v1889 = vrot.slane %v1887, 4
    %v1890 = vor.u32 %v1886, %v1889
    %v1891 = vsel %vm1619, %v1882, %v1890
    %v1893 = vshrl.u32 %v1587, 16
    %v1895 = vrot.slane %v1893, 3
    %v1896 = vshll.u32 %v1587, 16
    %v1898 = vrot.slane %v1896, 4
    %v1899 = vor.u32 %v1895, %v1898
    %v1901 = vshrl.u32 %v1588, 16
    %v1903 = vrot.slane %v1901, 3
    %v1904 = vshll.u32 %v1588, 16
    %v1906 = vrot.slane %v1904, 4
    %v1907 = vor.u32 %v1903, %v1906
    %v1908 = vsel %vm1619, %v1899, %v1907
    %v1910 = vshrl.u32 %v1589, 16
    %v1912 = vrot.slane %v1910, 3
    %v1913 = vshll.u32 %v1589, 16
    %v1915 = vrot.slane %v1913, 4
    %v1916 = vor.u32 %v1912, %v1915
    %v1918 = vshrl.u32 %v1590, 16
    %v1920 = vrot.slane %v1918, 3
    %v1921 = vshll.u32 %v1590, 16
    %v1923 = vrot.slane %v1921, 4
    %v1924 = vor.u32 %v1920, %v1923
    %v1925 = vsel %vm1619, %v1916, %v1924
    %v1927 = vshrl.u32 %v1591, 16
    %v1929 = vrot.slane %v1927, 3
    %v1930 = vshll.u32 %v1591, 16
    %v1932 = vrot.slane %v1930, 4
    %v1933 = vor.u32 %v1929, %v1932
    %v1935 = vshrl.u32 %v1592, 16
    %v1937 = vrot.slane %v1935, 3
    %v1938 = vshll.u32 %v1592, 16
    %v1940 = vrot.slane %v1938, 4
    %v1941 = vor.u32 %v1937, %v1940
    %v1942 = vsel %vm1619, %v1933, %v1941
    %v1944 = vshrl.u32 %v1593, 16
    %v1946 = vrot.slane %v1944, 3
    %v1947 = vshll.u32 %v1593, 16
    %v1949 = vrot.slane %v1947, 4
    %v1950 = vor.u32 %v1946, %v1949
    %v1952 = vshrl.u32 %v1594, 16
    %v1954 = vrot.slane %v1952, 3
    %v1955 = vshll.u32 %v1594, 16
    %v1957 = vrot.slane %v1955, 4
    %v1958 = vor.u32 %v1954, %v1957
    %v1959 = vsel %vm1619, %v1950, %v1958
    %v1961 = vshrl.u32 %v1595, 16
    %v1963 = vrot.slane %v1961, 3
    %v1964 = vshll.u32 %v1595, 16
    %v1966 = vrot.slane %v1964, 4
    %v1967 = vor.u32 %v1963, %v1966
    %v1969 = vshrl.u32 %v1596, 16
    %v1971 = vrot.slane %v1969, 3
    %v1972 = vshll.u32 %v1596, 16
    %v1974 = vrot.slane %v1972, 4
    %v1975 = vor.u32 %v1971, %v1974
    %v1976 = vsel %vm1619, %v1967, %v1975
    %v1978 = vshrl.u32 %v1597, 16
    %v1980 = vrot.slane %v1978, 3
    %v1981 = vshll.u32 %v1597, 16
    %v1983 = vrot.slane %v1981, 4
    %v1984 = vor.u32 %v1980, %v1983
    %v1986 = vshrl.u32 %v1598, 16
    %v1988 = vrot.slane %v1986, 3
    %v1989 = vshll.u32 %v1598, 16
    %v1991 = vrot.slane %v1989, 4
    %v1992 = vor.u32 %v1988, %v1991
    %v1993 = vsel %vm1619, %v1984, %v1992
    %v1995 = vshrl.u32 %v1599, 16
    %v1997 = vrot.slane %v1995, 3
    %v1998 = vshll.u32 %v1599, 16
    %v2000 = vrot.slane %v1998, 4
    %v2001 = vor.u32 %v1997, %v2000
    %v2003 = vshrl.u32 %v1600, 16
    %v2005 = vrot.slane %v2003, 3
    %v2006 = vshll.u32 %v1600, 16
    %v2008 = vrot.slane %v2006, 4
    %v2009 = vor.u32 %v2005, %v2008
    %v2010 = vsel %vm1619, %v2001, %v2009
    %v2012 = vshrl.u32 %v1601, 16
    %v2014 = vrot.slane %v2012, 3
    %v2015 = vshll.u32 %v1601, 16
    %v2017 = vrot.slane %v2015, 4
    %v2018 = vor.u32 %v2014, %v2017
    %v2020 = vshrl.u32 %v1602, 16
    %v2022 = vrot.slane %v2020, 3
    %v2023 = vshll.u32 %v1602, 16
    %v2025 = vrot.slane %v2023, 4
    %v2026 = vor.u32 %v2022, %v2025
    %v2027 = vsel %vm1619, %v2018, %v2026
    %v2029 = vshrl.u32 %v1603, 16
    %v2031 = vrot.slane %v2029, 3
    %v2032 = vshll.u32 %v1603, 16
    %v2034 = vrot.slane %v2032, 4
    %v2035 = vor.u32 %v2031, %v2034
    %v2037 = vshrl.u32 %v1604, 16
    %v2039 = vrot.slane %v2037, 3
    %v2040 = vshll.u32 %v1604, 16
    %v2042 = vrot.slane %v2040, 4
    %v2043 = vor.u32 %v2039, %v2042
    %v2044 = vsel %vm1619, %v2035, %v2043
    %v2046 = vshrl.u32 %v1605, 16
    %v2048 = vrot.slane %v2046, 3
    %v2049 = vshll.u32 %v1605, 16
    %v2051 = vrot.slane %v2049, 4
    %v2052 = vor.u32 %v2048, %v2051
    %v2054 = vshrl.u32 %v1606, 16
    %v2056 = vrot.slane %v2054, 3
    %v2057 = vshll.u32 %v1606, 16
    %v2059 = vrot.slane %v2057, 4
    %v2060 = vor.u32 %v2056, %v2059
    %v2061 = vsel %vm1619, %v2052, %v2060
    %v2063 = vshrl.u32 %v1607, 16
    %v2065 = vrot.slane %v2063, 3
    %v2066 = vshll.u32 %v1607, 16
    %v2068 = vrot.slane %v2066, 4
    %v2069 = vor.u32 %v2065, %v2068
    %v2071 = vshrl.u32 %v1608, 16
    %v2073 = vrot.slane %v2071, 3
    %v2074 = vshll.u32 %v1608, 16
    %v2076 = vrot.slane %v2074, 4
    %v2077 = vor.u32 %v2073, %v2076
    %v2078 = vsel %vm1619, %v2069, %v2077
    %v2080 = vshrl.u32 %v1609, 16
    %v2082 = vrot.slane %v2080, 3
    %v2083 = vshll.u32 %v1609, 16
    %v2085 = vrot.slane %v2083, 4
    %v2086 = vor.u32 %v2082, %v2085
    %v2088 = vshrl.u32 %v1610, 16
    %v2090 = vrot.slane %v2088, 3
    %v2091 = vshll.u32 %v1610, 16
    %v2093 = vrot.slane %v2091, 4
    %v2094 = vor.u32 %v2090, %v2093
    %v2095 = vsel %vm1619, %v2086, %v2094
    %v2097 = vshrl.u32 %v1611, 16
    %v2099 = vrot.slane %v2097, 3
    %v2100 = vshll.u32 %v1611, 16
    %v2102 = vrot.slane %v2100, 4
    %v2103 = vor.u32 %v2099, %v2102
    %v2105 = vshrl.u32 %v1612, 16
    %v2107 = vrot.slane %v2105, 3
    %v2108 = vshll.u32 %v1612, 16
    %v2110 = vrot.slane %v2108, 4
    %v2111 = vor.u32 %v2107, %v2110
    %v2112 = vsel %vm1619, %v2103, %v2111
    %v2114 = vshrl.u32 %v1613, 16
    %v2116 = vrot.slane %v2114, 3
    %v2117 = vshll.u32 %v1613, 16
    %v2119 = vrot.slane %v2117, 4
    %v2120 = vor.u32 %v2116, %v2119
    %v2122 = vshrl.u32 %v1614, 16
    %v2124 = vrot.slane %v2122, 3
    %v2125 = vshll.u32 %v1614, 16
    %v2127 = vrot.slane %v2125, 4
    %v2128 = vor.u32 %v2124, %v2127
    %v2129 = vsel %vm1619, %v2120, %v2128
    %v2131 = vshrl.u32 %v1615, 16
    %v2133 = vrot.slane %v2131, 3
    %v2134 = vshll.u32 %v1615, 16
    %v2136 = vrot.slane %v2134, 4
    %v2137 = vor.u32 %v2133, %v2136
    %v2139 = vshrl.u32 %v1616, 16
    %v2141 = vrot.slane %v2139, 3
    %v2142 = vshll.u32 %v1616, 16
    %v2144 = vrot.slane %v2142, 4
    %v2145 = vor.u32 %v2141, %v2144
    %v2146 = vsel %vm1619, %v2137, %v2145
    %v2148 = vshrl.u32 %v1617, 16
    %v2150 = vrot.slane %v2148, 3
    %v2151 = vshll.u32 %v1617, 16
    %v2153 = vrot.slane %v2151, 4
    %v2154 = vor.u32 %v2150, %v2153
    %v2156 = vshrl.u32 %v1618, 16
    %v2158 = vrot.slane %v2156, 3
    %v2159 = vshll.u32 %v1618, 16
    %v2161 = vrot.slane %v2159, 4
    %v2162 = vor.u32 %v2158, %v2161
    %v2163 = vsel %vm1619, %v2154, %v2162
    %vm2196 = vcmask 31744
    %2197 = vst.msk [vmem:[#allocation3] sm:$0xff] %vm2196, %v1636
    %2198 = vst.msk [vmem:[#allocation3 + $0x8] sm:$0xff] %vm2196, %v1653
    %2199 = vst.msk [vmem:[#allocation3 + $0x10] sm:$0xff] %vm2196, %v1670
    %2200 = vst.msk [vmem:[#allocation3 + $0x18] sm:$0xff] %vm2196, %v1687
    %2201 = vst.msk [vmem:[#allocation3 + $0x20] sm:$0xff] %vm2196, %v1704
    %2202 = vst.msk [vmem:[#allocation3 + $0x28] sm:$0xff] %vm2196, %v1721
    %2203 = vst.msk [vmem:[#allocation3 + $0x30] sm:$0xff] %vm2196, %v1738
    %2204 = vst.msk [vmem:[#allocation3 + $0x38] sm:$0xff] %vm2196, %v1755
    %2205 = vst.msk [vmem:[#allocation3 + $0x40] sm:$0xff] %vm2196, %v1772
    %2206 = vst.msk [vmem:[#allocation3 + $0x48] sm:$0xff] %vm2196, %v1789
    %2207 = vst.msk [vmem:[#allocation3 + $0x50] sm:$0xff] %vm2196, %v1806
    %2208 = vst.msk [vmem:[#allocation3 + $0x58] sm:$0xff] %vm2196, %v1823
    %2209 = vst.msk [vmem:[#allocation3 + $0x60] sm:$0xff] %vm2196, %v1840
    %2210 = vst.msk [vmem:[#allocation3 + $0x68] sm:$0xff] %vm2196, %v1857
    %2211 = vst.msk [vmem:[#allocation3 + $0x70] sm:$0xff] %vm2196, %v1874
    %2212 = vst.msk [vmem:[#allocation3 + $0x78] sm:$0xff] %vm2196, %v1891
    %2213 = vst.msk [vmem:[#allocation3 + $0x80] sm:$0xff] %vm2196, %v1908
    %2214 = vst.msk [vmem:[#allocation3 + $0x88] sm:$0xff] %vm2196, %v1925
    %2215 = vst.msk [vmem:[#allocation3 + $0x90] sm:$0xff] %vm2196, %v1942
    %2216 = vst.msk [vmem:[#allocation3 + $0x98] sm:$0xff] %vm2196, %v1959
    %2217 = vst.msk [vmem:[#allocation3 + $0xa0] sm:$0xff] %vm2196, %v1976
    %2218 = vst.msk [vmem:[#allocation3 + $0xa8] sm:$0xff] %vm2196, %v1993
    %2219 = vst.msk [vmem:[#allocation3 + $0xb0] sm:$0xff] %vm2196, %v2010
    %2220 = vst.msk [vmem:[#allocation3 + $0xb8] sm:$0xff] %vm2196, %v2027
    %2221 = vst.msk [vmem:[#allocation3 + $0xc0] sm:$0xff] %vm2196, %v2044
    %2222 = vst.msk [vmem:[#allocation3 + $0xc8] sm:$0xff] %vm2196, %v2061
    %2223 = vst.msk [vmem:[#allocation3 + $0xd0] sm:$0xff] %vm2196, %v2078
    %2224 = vst.msk [vmem:[#allocation3 + $0xd8] sm:$0xff] %vm2196, %v2095
    %2225 = vst.msk [vmem:[#allocation3 + $0xe0] sm:$0xff] %vm2196, %v2112
    %2226 = vst.msk [vmem:[#allocation3 + $0xe8] sm:$0xff] %vm2196, %v2129
    %2227 = vst.msk [vmem:[#allocation3 + $0xf0] sm:$0xff] %vm2196, %v2146
    %2228 = vst.msk [vmem:[#allocation3 + $0xf8] sm:$0xff] %vm2196, %v2163
    %v2229 = vld [vmem:[#allocation2 + $0x4] sm:$0xf]
    %v2230 = vld [vmem:[#allocation2 + $0x8] sm:$0xf]
    %v2231 = vld [vmem:[#allocation2 + $0x14] sm:$0xf]
    %v2232 = vld [vmem:[#allocation2 + $0x18] sm:$0xf]
    %v2233 = vld [vmem:[#allocation2 + $0x24] sm:$0xf]
    %v2234 = vld [vmem:[#allocation2 + $0x28] sm:$0xf]
    %v2235 = vld [vmem:[#allocation2 + $0x34] sm:$0xf]
    %v2236 = vld [vmem:[#allocation2 + $0x38] sm:$0xf]
    %v2237 = vld [vmem:[#allocation2 + $0x44] sm:$0xf]
    %v2238 = vld [vmem:[#allocation2 + $0x48] sm:$0xf]
    %v2239 = vld [vmem:[#allocation2 + $0x54] sm:$0xf]
    %v2240 = vld [vmem:[#allocation2 + $0x58] sm:$0xf]
    %v2241 = vld [vmem:[#allocation2 + $0x64] sm:$0xf]
    %v2242 = vld [vmem:[#allocation2 + $0x68] sm:$0xf]
    %v2243 = vld [vmem:[#allocation2 + $0x74] sm:$0xf]
    %v2244 = vld [vmem:[#allocation2 + $0x78] sm:$0xf]
    %v2245 = vld [vmem:[#allocation2 + $0x84] sm:$0xf]
    %v2246 = vld [vmem:[#allocation2 + $0x88] sm:$0xf]
    %v2247 = vld [vmem:[#allocation2 + $0x94] sm:$0xf]
    %v2248 = vld [vmem:[#allocation2 + $0x98] sm:$0xf]
    %v2249 = vld [vmem:[#allocation2 + $0xa4] sm:$0xf]
    %v2250 = vld [vmem:[#allocation2 + $0xa8] sm:$0xf]
    %v2251 = vld [vmem:[#allocation2 + $0xb4] sm:$0xf]
    %v2252 = vld [vmem:[#allocation2 + $0xb8] sm:$0xf]
    %v2253 = vld [vmem:[#allocation2 + $0xc4] sm:$0xf]
    %v2254 = vld [vmem:[#allocation2 + $0xc8] sm:$0xf]
    %v2255 = vld [vmem:[#allocation2 + $0xd4] sm:$0xf]
    %v2256 = vld [vmem:[#allocation2 + $0xd8] sm:$0xf]
    %v2257 = vld [vmem:[#allocation2 + $0xe4] sm:$0xf]
    %v2258 = vld [vmem:[#allocation2 + $0xe8] sm:$0xf]
    %v2259 = vld [vmem:[#allocation2 + $0xf4] sm:$0xf]
    %v2260 = vld [vmem:[#allocation2 + $0xf8] sm:$0xf]
    %v2261 = vld [vmem:[#allocation2 + $0x124] sm:$0xf]
    %v2262 = vld [vmem:[#allocation2 + $0x128] sm:$0xf]
    %v2263 = vld [vmem:[#allocation2 + $0x134] sm:$0xf]
    %v2264 = vld [vmem:[#allocation2 + $0x138] sm:$0xf]
    %v2265 = vld [vmem:[#allocation2 + $0x144] sm:$0xf]
    %v2266 = vld [vmem:[#allocation2 + $0x148] sm:$0xf]
    %v2267 = vld [vmem:[#allocation2 + $0x154] sm:$0xf]
    %v2268 = vld [vmem:[#allocation2 + $0x158] sm:$0xf]
    %v2269 = vld [vmem:[#allocation2 + $0x164] sm:$0xf]
    %v2270 = vld [vmem:[#allocation2 + $0x168] sm:$0xf]
    %v2271 = vld [vmem:[#allocation2 + $0x174] sm:$0xf]
    %v2272 = vld [vmem:[#allocation2 + $0x178] sm:$0xf]
    %v2273 = vld [vmem:[#allocation2 + $0x184] sm:$0xf]
    %v2274 = vld [vmem:[#allocation2 + $0x188] sm:$0xf]
    %v2275 = vld [vmem:[#allocation2 + $0x194] sm:$0xf]
    %v2276 = vld [vmem:[#allocation2 + $0x198] sm:$0xf]
    %v2277 = vld [vmem:[#allocation2 + $0x1a4] sm:$0xf]
    %v2278 = vld [vmem:[#allocation2 + $0x1a8] sm:$0xf]
    %v2279 = vld [vmem:[#allocation2 + $0x1b4] sm:$0xf]
    %v2280 = vld [vmem:[#allocation2 + $0x1b8] sm:$0xf]
    %v2281 = vld [vmem:[#allocation2 + $0x1c4] sm:$0xf]
    %v2282 = vld [vmem:[#allocation2 + $0x1c8] sm:$0xf]
    %v2283 = vld [vmem:[#allocation2 + $0x1d4] sm:$0xf]
    %v2284 = vld [vmem:[#allocation2 + $0x1d8] sm:$0xf]
    %v2285 = vld [vmem:[#allocation2 + $0x1e4] sm:$0xf]
    %v2286 = vld [vmem:[#allocation2 + $0x1e8] sm:$0xf]
    %v2287 = vld [vmem:[#allocation2 + $0x1f4] sm:$0xf]
    %v2288 = vld [vmem:[#allocation2 + $0x1f8] sm:$0xf]
    %v2289 = vld [vmem:[#allocation2 + $0x204] sm:$0xf]
    %v2290 = vld [vmem:[#allocation2 + $0x208] sm:$0xf]
    %v2291 = vld [vmem:[#allocation2 + $0x214] sm:$0xf]
    %v2292 = vld [vmem:[#allocation2 + $0x218] sm:$0xf]
    %v2357 = vunpack.c.l.b16 %v2229
    %v2358 = vunpack.c.l.b16 %v2230
    %v2359 = vunpack.c.l.b16 %v2231
    %v2360 = vunpack.c.l.b16 %v2232
    %v2361 = vunpack.c.l.b16 %v2233
    %v2362 = vunpack.c.l.b16 %v2234
    %v2363 = vunpack.c.l.b16 %v2235
    %v2364 = vunpack.c.l.b16 %v2236
    %v2365 = vunpack.c.l.b16 %v2237
    %v2366 = vunpack.c.l.b16 %v2238
    %v2367 = vunpack.c.l.b16 %v2239
    %v2368 = vunpack.c.l.b16 %v2240
    %v2369 = vunpack.c.l.b16 %v2241
    %v2370 = vunpack.c.l.b16 %v2242
    %v2371 = vunpack.c.l.b16 %v2243
    %v2372 = vunpack.c.l.b16 %v2244
    %v2373 = vunpack.c.l.b16 %v2245
    %v2374 = vunpack.c.l.b16 %v2246
    %v2375 = vunpack.c.l.b16 %v2247
    %v2376 = vunpack.c.l.b16 %v2248
    %v2377 = vunpack.c.l.b16 %v2249
    %v2378 = vunpack.c.l.b16 %v2250
    %v2379 = vunpack.c.l.b16 %v2251
    %v2380 = vunpack.c.l.b16 %v2252
    %v2381 = vunpack.c.l.b16 %v2253
    %v2382 = vunpack.c.l.b16 %v2254
    %v2383 = vunpack.c.l.b16 %v2255
    %v2384 = vunpack.c.l.b16 %v2256
    %v2385 = vunpack.c.l.b16 %v2257
    %v2386 = vunpack.c.l.b16 %v2258
    %v2387 = vunpack.c.l.b16 %v2259
    %v2388 = vunpack.c.l.b16 %v2260
    %v2389 = vunpack.c.l.b16 %v2261
    %v2390 = vunpack.c.l.b16 %v2262
    %v2391 = vunpack.c.l.b16 %v2263
    %v2392 = vunpack.c.l.b16 %v2264
    %v2393 = vunpack.c.l.b16 %v2265
    %v2394 = vunpack.c.l.b16 %v2266
    %v2395 = vunpack.c.l.b16 %v2267
    %v2396 = vunpack.c.l.b16 %v2268
    %v2397 = vunpack.c.l.b16 %v2269
    %v2398 = vunpack.c.l.b16 %v2270
    %v2399 = vunpack.c.l.b16 %v2271
    %v2400 = vunpack.c.l.b16 %v2272
    %v2401 = vunpack.c.l.b16 %v2273
    %v2402 = vunpack.c.l.b16 %v2274
    %v2403 = vunpack.c.l.b16 %v2275
    %v2404 = vunpack.c.l.b16 %v2276
    %v2405 = vunpack.c.l.b16 %v2277
    %v2406 = vunpack.c.l.b16 %v2278
    %v2407 = vunpack.c.l.b16 %v2279
    %v2408 = vunpack.c.l.b16 %v2280
    %v2409 = vunpack.c.l.b16 %v2281
    %v2410 = vunpack.c.l.b16 %v2282
    %v2411 = vunpack.c.l.b16 %v2283
    %v2412 = vunpack.c.l.b16 %v2284
    %v2413 = vunpack.c.l.b16 %v2285
    %v2414 = vunpack.c.l.b16 %v2286
    %v2415 = vunpack.c.l.b16 %v2287
    %v2416 = vunpack.c.l.b16 %v2288
    %v2417 = vunpack.c.l.b16 %v2289
    %v2418 = vunpack.c.l.b16 %v2290
    %v2419 = vunpack.c.l.b16 %v2291
    %v2420 = vunpack.c.l.b16 %v2292
    %v2421 = vpack.c.b16 %v2358, %v2357
    %v2422 = vpack.c.b16 %v2360, %v2359
    %v2423 = vpack.c.b16 %v2362, %v2361
    %v2424 = vpack.c.b16 %v2364, %v2363
    %v2425 = vpack.c.b16 %v2366, %v2365
    %v2426 = vpack.c.b16 %v2368, %v2367
    %v2427 = vpack.c.b16 %v2370, %v2369
    %v2428 = vpack.c.b16 %v2372, %v2371
    %v2429 = vpack.c.b16 %v2374, %v2373
    %v2430 = vpack.c.b16 %v2376, %v2375
    %v2431 = vpack.c.b16 %v2378, %v2377
    %v2432 = vpack.c.b16 %v2380, %v2379
    %v2433 = vpack.c.b16 %v2382, %v2381
    %v2434 = vpack.c.b16 %v2384, %v2383
    %v2435 = vpack.c.b16 %v2386, %v2385
    %v2436 = vpack.c.b16 %v2388, %v2387
    %v2437 = vpack.c.b16 %v2390, %v2389
    %v2438 = vpack.c.b16 %v2392, %v2391
    %v2439 = vpack.c.b16 %v2394, %v2393
    %v2440 = vpack.c.b16 %v2396, %v2395
    %v2441 = vpack.c.b16 %v2398, %v2397
    %v2442 = vpack.c.b16 %v2400, %v2399
    %v2443 = vpack.c.b16 %v2402, %v2401
    %v2444 = vpack.c.b16 %v2404, %v2403
    %v2445 = vpack.c.b16 %v2406, %v2405
    %v2446 = vpack.c.b16 %v2408, %v2407
    %v2447 = vpack.c.b16 %v2410, %v2409
    %v2448 = vpack.c.b16 %v2412, %v2411
    %v2449 = vpack.c.b16 %v2414, %v2413
    %v2450 = vpack.c.b16 %v2416, %v2415
    %v2451 = vpack.c.b16 %v2418, %v2417
    %v2452 = vpack.c.b16 %v2420, %v2419
    %2453 = vrot.lane.b32.xlu0 %v2421, 4
    %v2454 = vpop.permute.xlu0 %2453
    %2455 = vrot.lane.b32.xlu0 %v2422, 4
    %v2456 = vpop.permute.xlu0 %2455
    %2457 = vrot.lane.b32.xlu0 %v2423, 4
    %v2458 = vpop.permute.xlu0 %2457
    %2459 = vrot.lane.b32.xlu0 %v2424, 4
    %v2460 = vpop.permute.xlu0 %2459
    %2461 = vrot.lane.b32.xlu0 %v2425, 4
    %v2462 = vpop.permute.xlu0 %2461
    %2463 = vrot.lane.b32.xlu0 %v2426, 4
    %v2464 = vpop.permute.xlu0 %2463
    %2465 = vrot.lane.b32.xlu0 %v2427, 4
    %v2466 = vpop.permute.xlu0 %2465
    %2467 = vrot.lane.b32.xlu0 %v2428, 4
    %v2468 = vpop.permute.xlu0 %2467
    %2469 = vrot.lane.b32.xlu0 %v2429, 4
    %v2470 = vpop.permute.xlu0 %2469
    %2471 = vrot.lane.b32.xlu0 %v2430, 4
    %v2472 = vpop.permute.xlu0 %2471
    %2473 = vrot.lane.b32.xlu0 %v2431, 4
    %v2474 = vpop.permute.xlu0 %2473
    %2475 = vrot.lane.b32.xlu0 %v2432, 4
    %v2476 = vpop.permute.xlu0 %2475
    %2477 = vrot.lane.b32.xlu0 %v2433, 4
    %v2478 = vpop.permute.xlu0 %2477
    %2479 = vrot.lane.b32.xlu0 %v2434, 4
    %v2480 = vpop.permute.xlu0 %2479
    %2481 = vrot.lane.b32.xlu0 %v2435, 4
    %v2482 = vpop.permute.xlu0 %2481
    %2483 = vrot.lane.b32.xlu0 %v2436, 4
    %v2484 = vpop.permute.xlu0 %2483
    %2485 = vrot.lane.b32.xlu0 %v2437, 4
    %v2486 = vpop.permute.xlu0 %2485
    %2487 = vrot.lane.b32.xlu0 %v2438, 4
    %v2488 = vpop.permute.xlu0 %2487
    %2489 = vrot.lane.b32.xlu0 %v2439, 4
    %v2490 = vpop.permute.xlu0 %2489
    %2491 = vrot.lane.b32.xlu0 %v2440, 4
    %v2492 = vpop.permute.xlu0 %2491
    %2493 = vrot.lane.b32.xlu0 %v2441, 4
    %v2494 = vpop.permute.xlu0 %2493
    %2495 = vrot.lane.b32.xlu0 %v2442, 4
    %v2496 = vpop.permute.xlu0 %2495
    %2497 = vrot.lane.b32.xlu0 %v2443, 4
    %v2498 = vpop.permute.xlu0 %2497
    %2499 = vrot.lane.b32.xlu0 %v2444, 4
    %v2500 = vpop.permute.xlu0 %2499
    %2501 = vrot.lane.b32.xlu0 %v2445, 4
    %v2502 = vpop.permute.xlu0 %2501
    %2503 = vrot.lane.b32.xlu0 %v2446, 4
    %v2504 = vpop.permute.xlu0 %2503
    %2505 = vrot.lane.b32.xlu0 %v2447, 4
    %v2506 = vpop.permute.xlu0 %2505
    %2507 = vrot.lane.b32.xlu0 %v2448, 4
    %v2508 = vpop.permute.xlu0 %2507
    %2509 = vrot.lane.b32.xlu0 %v2449, 4
    %v2510 = vpop.permute.xlu0 %2509
    %2511 = vrot.lane.b32.xlu0 %v2450, 4
    %v2512 = vpop.permute.xlu0 %2511
    %2513 = vrot.lane.b32.xlu0 %v2451, 4
    %v2514 = vpop.permute.xlu0 %2513
    %2515 = vrot.lane.b32.xlu0 %v2452, 4
    %v2516 = vpop.permute.xlu0 %2515
    %vm2549 = vcmask 64544
    %2550 = vst.msk [vmem:[#allocation3] sm:$0xff] %vm2549, %v2454
    %2551 = vst.msk [vmem:[#allocation3 + $0x8] sm:$0xff] %vm2549, %v2456
    %2552 = vst.msk [vmem:[#allocation3 + $0x10] sm:$0xff] %vm2549, %v2458
    %2553 = vst.msk [vmem:[#allocation3 + $0x18] sm:$0xff] %vm2549, %v2460
    %2554 = vst.msk [vmem:[#allocation3 + $0x20] sm:$0xff] %vm2549, %v2462
    %2555 = vst.msk [vmem:[#allocation3 + $0x28] sm:$0xff] %vm2549, %v2464
    %2556 = vst.msk [vmem:[#allocation3 + $0x30] sm:$0xff] %vm2549, %v2466
    %2557 = vst.msk [vmem:[#allocation3 + $0x38] sm:$0xff] %vm2549, %v2468
    %2558 = vst.msk [vmem:[#allocation3 + $0x40] sm:$0xff] %vm2549, %v2470
    %2559 = vst.msk [vmem:[#allocation3 + $0x48] sm:$0xff] %vm2549, %v2472
    %2560 = vst.msk [vmem:[#allocation3 + $0x50] sm:$0xff] %vm2549, %v2474
    %2561 = vst.msk [vmem:[#allocation3 + $0x58] sm:$0xff] %vm2549, %v2476
    %2562 = vst.msk [vmem:[#allocation3 + $0x60] sm:$0xff] %vm2549, %v2478
    %2563 = vst.msk [vmem:[#allocation3 + $0x68] sm:$0xff] %vm2549, %v2480
    %2564 = vst.msk [vmem:[#allocation3 + $0x70] sm:$0xff] %vm2549, %v2482
    %2565 = vst.msk [vmem:[#allocation3 + $0x78] sm:$0xff] %vm2549, %v2484
    %2566 = vst.msk [vmem:[#allocation3 + $0x80] sm:$0xff] %vm2549, %v2486
    %2567 = vst.msk [vmem:[#allocation3 + $0x88] sm:$0xff] %vm2549, %v2488
    %2568 = vst.msk [vmem:[#allocation3 + $0x90] sm:$0xff] %vm2549, %v2490
    %2569 = vst.msk [vmem:[#allocation3 + $0x98] sm:$0xff] %vm2549, %v2492
    %2570 = vst.msk [vmem:[#allocation3 + $0xa0] sm:$0xff] %vm2549, %v2494
    %2571 = vst.msk [vmem:[#allocation3 + $0xa8] sm:$0xff] %vm2549, %v2496
    %2572 = vst.msk [vmem:[#allocation3 + $0xb0] sm:$0xff] %vm2549, %v2498
    %2573 = vst.msk [vmem:[#allocation3 + $0xb8] sm:$0xff] %vm2549, %v2500
    %2574 = vst.msk [vmem:[#allocation3 + $0xc0] sm:$0xff] %vm2549, %v2502
    %2575 = vst.msk [vmem:[#allocation3 + $0xc8] sm:$0xff] %vm2549, %v2504
    %2576 = vst.msk [vmem:[#allocation3 + $0xd0] sm:$0xff] %vm2549, %v2506
    %2577 = vst.msk [vmem:[#allocation3 + $0xd8] sm:$0xff] %vm2549, %v2508
    %2578 = vst.msk [vmem:[#allocation3 + $0xe0] sm:$0xff] %vm2549, %v2510
    %2579 = vst.msk [vmem:[#allocation3 + $0xe8] sm:$0xff] %vm2549, %v2512
    %2580 = vst.msk [vmem:[#allocation3 + $0xf0] sm:$0xff] %vm2549, %v2514
    %2581 = vst.msk [vmem:[#allocation3 + $0xf8] sm:$0xff] %vm2549, %v2516
    %v2582 = vld [vmem:[#allocation2 + $0x4] sm:$0xf]
    %v2583 = vld [vmem:[#allocation2 + $0x8] sm:$0xf]
    %v2584 = vld [vmem:[#allocation2 + $0xc] sm:$0x1]
    %v2585 = vld [vmem:[#allocation2 + $0x14] sm:$0xf]
    %v2586 = vld [vmem:[#allocation2 + $0x18] sm:$0xf]
    %v2587 = vld [vmem:[#allocation2 + $0x1c] sm:$0x1]
    %v2588 = vld [vmem:[#allocation2 + $0x24] sm:$0xf]
    %v2589 = vld [vmem:[#allocation2 + $0x28] sm:$0xf]
    %v2590 = vld [vmem:[#allocation2 + $0x2c] sm:$0x1]
    %v2591 = vld [vmem:[#allocation2 + $0x34] sm:$0xf]
    %v2592 = vld [vmem:[#allocation2 + $0x38] sm:$0xf]
    %v2593 = vld [vmem:[#allocation2 + $0x3c] sm:$0x1]
    %v2594 = vld [vmem:[#allocation2 + $0x44] sm:$0xf]
    %v2595 = vld [vmem:[#allocation2 + $0x48] sm:$0xf]
    %v2596 = vld [vmem:[#allocation2 + $0x4c] sm:$0x1]
    %v2597 = vld [vmem:[#allocation2 + $0x54] sm:$0xf]
    %v2598 = vld [vmem:[#allocation2 + $0x58] sm:$0xf]
    %v2599 = vld [vmem:[#allocation2 + $0x5c] sm:$0x1]
    %v2600 = vld [vmem:[#allocation2 + $0x64] sm:$0xf]
    %v2601 = vld [vmem:[#allocation2 + $0x68] sm:$0xf]
    %v2602 = vld [vmem:[#allocation2 + $0x6c] sm:$0x1]
    %v2603 = vld [vmem:[#allocation2 + $0x74] sm:$0xf]
    %v2604 = vld [vmem:[#allocation2 + $0x78] sm:$0xf]
    %v2605 = vld [vmem:[#allocation2 + $0x7c] sm:$0x1]
    %v2606 = vld [vmem:[#allocation2 + $0x84] sm:$0xf]
    %v2607 = vld [vmem:[#allocation2 + $0x88] sm:$0xf]
    %v2608 = vld [vmem:[#allocation2 + $0x8c] sm:$0x1]
    %v2609 = vld [vmem:[#allocation2 + $0x94] sm:$0xf]
    %v2610 = vld [vmem:[#allocation2 + $0x98] sm:$0xf]
    %v2611 = vld [vmem:[#allocation2 + $0x9c] sm:$0x1]
    %v2612 = vld [vmem:[#allocation2 + $0xa4] sm:$0xf]
    %v2613 = vld [vmem:[#allocation2 + $0xa8] sm:$0xf]
    %v2614 = vld [vmem:[#allocation2 + $0xac] sm:$0x1]
    %v2615 = vld [vmem:[#allocation2 + $0xb4] sm:$0xf]
    %v2616 = vld [vmem:[#allocation2 + $0xb8] sm:$0xf]
    %v2617 = vld [vmem:[#allocation2 + $0xbc] sm:$0x1]
    %v2618 = vld [vmem:[#allocation2 + $0xc4] sm:$0xf]
    %v2619 = vld [vmem:[#allocation2 + $0xc8] sm:$0xf]
    %v2620 = vld [vmem:[#allocation2 + $0xcc] sm:$0x1]
    %v2621 = vld [vmem:[#allocation2 + $0xd4] sm:$0xf]
    %v2622 = vld [vmem:[#allocation2 + $0xd8] sm:$0xf]
    %v2623 = vld [vmem:[#allocation2 + $0xdc] sm:$0x1]
    %v2624 = vld [vmem:[#allocation2 + $0xe4] sm:$0xf]
    %v2625 = vld [vmem:[#allocation2 + $0xe8] sm:$0xf]
    %v2626 = vld [vmem:[#allocation2 + $0xec] sm:$0x1]
    %v2627 = vld [vmem:[#allocation2 + $0xf4] sm:$0xf]
    %v2628 = vld [vmem:[#allocation2 + $0xf8] sm:$0xf]
    %v2629 = vld [vmem:[#allocation2 + $0xfc] sm:$0x1]
    %v2630 = vld [vmem:[#allocation2 + $0x124] sm:$0xf]
    %v2631 = vld [vmem:[#allocation2 + $0x128] sm:$0xf]
    %v2632 = vld [vmem:[#allocation2 + $0x12c] sm:$0x1]
    %v2633 = vld [vmem:[#allocation2 + $0x134] sm:$0xf]
    %v2634 = vld [vmem:[#allocation2 + $0x138] sm:$0xf]
    %v2635 = vld [vmem:[#allocation2 + $0x13c] sm:$0x1]
    %v2636 = vld [vmem:[#allocation2 + $0x144] sm:$0xf]
    %v2637 = vld [vmem:[#allocation2 + $0x148] sm:$0xf]
    %v2638 = vld [vmem:[#allocation2 + $0x14c] sm:$0x1]
    %v2639 = vld [vmem:[#allocation2 + $0x154] sm:$0xf]
    %v2640 = vld [vmem:[#allocation2 + $0x158] sm:$0xf]
    %v2641 = vld [vmem:[#allocation2 + $0x15c] sm:$0x1]
    %v2642 = vld [vmem:[#allocation2 + $0x164] sm:$0xf]
    %v2643 = vld [vmem:[#allocation2 + $0x168] sm:$0xf]
    %v2644 = vld [vmem:[#allocation2 + $0x16c] sm:$0x1]
    %v2645 = vld [vmem:[#allocation2 + $0x174] sm:$0xf]
    %v2646 = vld [vmem:[#allocation2 + $0x178] sm:$0xf]
    %v2647 = vld [vmem:[#allocation2 + $0x17c] sm:$0x1]
    %v2648 = vld [vmem:[#allocation2 + $0x184] sm:$0xf]
    %v2649 = vld [vmem:[#allocation2 + $0x188] sm:$0xf]
    %v2650 = vld [vmem:[#allocation2 + $0x18c] sm:$0x1]
    %v2651 = vld [vmem:[#allocation2 + $0x194] sm:$0xf]
    %v2652 = vld [vmem:[#allocation2 + $0x198] sm:$0xf]
    %v2653 = vld [vmem:[#allocation2 + $0x19c] sm:$0x1]
    %v2654 = vld [vmem:[#allocation2 + $0x1a4] sm:$0xf]
    %v2655 = vld [vmem:[#allocation2 + $0x1a8] sm:$0xf]
    %v2656 = vld [vmem:[#allocation2 + $0x1ac] sm:$0x1]
    %v2657 = vld [vmem:[#allocation2 + $0x1b4] sm:$0xf]
    %v2658 = vld [vmem:[#allocation2 + $0x1b8] sm:$0xf]
    %v2659 = vld [vmem:[#allocation2 + $0x1bc] sm:$0x1]
    %v2660 = vld [vmem:[#allocation2 + $0x1c4] sm:$0xf]
    %v2661 = vld [vmem:[#allocation2 + $0x1c8] sm:$0xf]
    %v2662 = vld [vmem:[#allocation2 + $0x1cc] sm:$0x1]
    %v2663 = vld [vmem:[#allocation2 + $0x1d4] sm:$0xf]
    %v2664 = vld [vmem:[#allocation2 + $0x1d8] sm:$0xf]
    %v2665 = vld [vmem:[#allocation2 + $0x1dc] sm:$0x1]
    %v2666 = vld [vmem:[#allocation2 + $0x1e4] sm:$0xf]
    %v2667 = vld [vmem:[#allocation2 + $0x1e8] sm:$0xf]
    %v2668 = vld [vmem:[#allocation2 + $0x1ec] sm:$0x1]
    %v2669 = vld [vmem:[#allocation2 + $0x1f4] sm:$0xf]
    %v2670 = vld [vmem:[#allocation2 + $0x1f8] sm:$0xf]
    %v2671 = vld [vmem:[#allocation2 + $0x1fc] sm:$0x1]
    %v2672 = vld [vmem:[#allocation2 + $0x204] sm:$0xf]
    %v2673 = vld [vmem:[#allocation2 + $0x208] sm:$0xf]
    %v2674 = vld [vmem:[#allocation2 + $0x20c] sm:$0x1]
    %v2675 = vld [vmem:[#allocation2 + $0x214] sm:$0xf]
    %v2676 = vld [vmem:[#allocation2 + $0x218] sm:$0xf]
    %v2677 = vld [vmem:[#allocation2 + $0x21c] sm:$0x1]
    %v2774 = vunpack.c.l.b16 %v2582
    %v2775 = vunpack.c.l.b16 %v2583
    %v2776 = vunpack.c.l.b16 %v2584
    %v2777 = vunpack.c.l.b16 %v2585
    %v2778 = vunpack.c.l.b16 %v2586
    %v2779 = vunpack.c.l.b16 %v2587
    %v2780 = vunpack.c.l.b16 %v2588
    %v2781 = vunpack.c.l.b16 %v2589
    %v2782 = vunpack.c.l.b16 %v2590
    %v2783 = vunpack.c.l.b16 %v2591
    %v2784 = vunpack.c.l.b16 %v2592
    %v2785 = vunpack.c.l.b16 %v2593
    %v2786 = vunpack.c.l.b16 %v2594
    %v2787 = vunpack.c.l.b16 %v2595
    %v2788 = vunpack.c.l.b16 %v2596
    %v2789 = vunpack.c.l.b16 %v2597
    %v2790 = vunpack.c.l.b16 %v2598
    %v2791 = vunpack.c.l.b16 %v2599
    %v2792 = vunpack.c.l.b16 %v2600
    %v2793 = vunpack.c.l.b16 %v2601
    %v2794 = vunpack.c.l.b16 %v2602
    %v2795 = vunpack.c.l.b16 %v2603
    %v2796 = vunpack.c.l.b16 %v2604
    %v2797 = vunpack.c.l.b16 %v2605
    %v2798 = vunpack.c.l.b16 %v2606
    %v2799 = vunpack.c.l.b16 %v2607
    %v2800 = vunpack.c.l.b16 %v2608
    %v2801 = vunpack.c.l.b16 %v2609
    %v2802 = vunpack.c.l.b16 %v2610
    %v2803 = vunpack.c.l.b16 %v2611
    %v2804 = vunpack.c.l.b16 %v2612
    %v2805 = vunpack.c.l.b16 %v2613
    %v2806 = vunpack.c.l.b16 %v2614
    %v2807 = vunpack.c.l.b16 %v2615
    %v2808 = vunpack.c.l.b16 %v2616
    %v2809 = vunpack.c.l.b16 %v2617
    %v2810 = vunpack.c.l.b16 %v2618
    %v2811 = vunpack.c.l.b16 %v2619
    %v2812 = vunpack.c.l.b16 %v2620
    %v2813 = vunpack.c.l.b16 %v2621
    %v2814 = vunpack.c.l.b16 %v2622
    %v2815 = vunpack.c.l.b16 %v2623
    %v2816 = vunpack.c.l.b16 %v2624
    %v2817 = vunpack.c.l.b16 %v2625
    %v2818 = vunpack.c.l.b16 %v2626
    %v2819 = vunpack.c.l.b16 %v2627
    %v2820 = vunpack.c.l.b16 %v2628
    %v2821 = vunpack.c.l.b16 %v2629
    %v2822 = vunpack.c.l.b16 %v2630
    %v2823 = vunpack.c.l.b16 %v2631
    %v2824 = vunpack.c.l.b16 %v2632
    %v2825 = vunpack.c.l.b16 %v2633
    %v2826 = vunpack.c.l.b16 %v2634
    %v2827 = vunpack.c.l.b16 %v2635
    %v2828 = vunpack.c.l.b16 %v2636
    %v2829 = vunpack.c.l.b16 %v2637
    %v2830 = vunpack.c.l.b16 %v2638
    %v2831 = vunpack.c.l.b16 %v2639
    %v2832 = vunpack.c.l.b16 %v2640
    %v2833 = vunpack.c.l.b16 %v2641
    %v2834 = vunpack.c.l.b16 %v2642
    %v2835 = vunpack.c.l.b16 %v2643
    %v2836 = vunpack.c.l.b16 %v2644
    %v2837 = vunpack.c.l.b16 %v2645
    %v2838 = vunpack.c.l.b16 %v2646
    %v2839 = vunpack.c.l.b16 %v2647
    %v2840 = vunpack.c.l.b16 %v2648
    %v2841 = vunpack.c.l.b16 %v2649
    %v2842 = vunpack.c.l.b16 %v2650
    %v2843 = vunpack.c.l.b16 %v2651
    %v2844 = vunpack.c.l.b16 %v2652
    %v2845 = vunpack.c.l.b16 %v2653
    %v2846 = vunpack.c.l.b16 %v2654
    %v2847 = vunpack.c.l.b16 %v2655
    %v2848 = vunpack.c.l.b16 %v2656
    %v2849 = vunpack.c.l.b16 %v2657
    %v2850 = vunpack.c.l.b16 %v2658
    %v2851 = vunpack.c.l.b16 %v2659
    %v2852 = vunpack.c.l.b16 %v2660
    %v2853 = vunpack.c.l.b16 %v2661
    %v2854 = vunpack.c.l.b16 %v2662
    %v2855 = vunpack.c.l.b16 %v2663
    %v2856 = vunpack.c.l.b16 %v2664
    %v2857 = vunpack.c.l.b16 %v2665
    %v2858 = vunpack.c.l.b16 %v2666
    %v2859 = vunpack.c.l.b16 %v2667
    %v2860 = vunpack.c.l.b16 %v2668
    %v2861 = vunpack.c.l.b16 %v2669
    %v2862 = vunpack.c.l.b16 %v2670
    %v2863 = vunpack.c.l.b16 %v2671
    %v2864 = vunpack.c.l.b16 %v2672
    %v2865 = vunpack.c.l.b16 %v2673
    %v2866 = vunpack.c.l.b16 %v2674
    %v2867 = vunpack.c.l.b16 %v2675
    %v2868 = vunpack.c.l.b16 %v2676
    %v2869 = vunpack.c.l.b16 %v2677
    %v2870 = vpack.c.b16 %v2775, %v2774
    %v2871 = vpack.c.b16 %v2776, %v2776
    %v2872 = vpack.c.b16 %v2778, %v2777
    %v2873 = vpack.c.b16 %v2779, %v2779
    %v2874 = vpack.c.b16 %v2781, %v2780
    %v2875 = vpack.c.b16 %v2782, %v2782
    %v2876 = vpack.c.b16 %v2784, %v2783
    %v2877 = vpack.c.b16 %v2785, %v2785
    %v2878 = vpack.c.b16 %v2787, %v2786
    %v2879 = vpack.c.b16 %v2788, %v2788
    %v2880 = vpack.c.b16 %v2790, %v2789
    %v2881 = vpack.c.b16 %v2791, %v2791
    %v2882 = vpack.c.b16 %v2793, %v2792
    %v2883 = vpack.c.b16 %v2794, %v2794
    %v2884 = vpack.c.b16 %v2796, %v2795
    %v2885 = vpack.c.b16 %v2797, %v2797
    %v2886 = vpack.c.b16 %v2799, %v2798
    %v2887 = vpack.c.b16 %v2800, %v2800
    %v2888 = vpack.c.b16 %v2802, %v2801
    %v2889 = vpack.c.b16 %v2803, %v2803
    %v2890 = vpack.c.b16 %v2805, %v2804
    %v2891 = vpack.c.b16 %v2806, %v2806
    %v2892 = vpack.c.b16 %v2808, %v2807
    %v2893 = vpack.c.b16 %v2809, %v2809
    %v2894 = vpack.c.b16 %v2811, %v2810
    %v2895 = vpack.c.b16 %v2812, %v2812
    %v2896 = vpack.c.b16 %v2814, %v2813
    %v2897 = vpack.c.b16 %v2815, %v2815
    %v2898 = vpack.c.b16 %v2817, %v2816
    %v2899 = vpack.c.b16 %v2818, %v2818
    %v2900 = vpack.c.b16 %v2820, %v2819
    %v2901 = vpack.c.b16 %v2821, %v2821
    %v2902 = vpack.c.b16 %v2823, %v2822
    %v2903 = vpack.c.b16 %v2824, %v2824
    %v2904 = vpack.c.b16 %v2826, %v2825
    %v2905 = vpack.c.b16 %v2827, %v2827
    %v2906 = vpack.c.b16 %v2829, %v2828
    %v2907 = vpack.c.b16 %v2830, %v2830
    %v2908 = vpack.c.b16 %v2832, %v2831
    %v2909 = vpack.c.b16 %v2833, %v2833
    %v2910 = vpack.c.b16 %v2835, %v2834
    %v2911 = vpack.c.b16 %v2836, %v2836
    %v2912 = vpack.c.b16 %v2838, %v2837
    %v2913 = vpack.c.b16 %v2839, %v2839
    %v2914 = vpack.c.b16 %v2841, %v2840
    %v2915 = vpack.c.b16 %v2842, %v2842
    %v2916 = vpack.c.b16 %v2844, %v2843
    %v2917 = vpack.c.b16 %v2845, %v2845
    %v2918 = vpack.c.b16 %v2847, %v2846
    %v2919 = vpack.c.b16 %v2848, %v2848
    %v2920 = vpack.c.b16 %v2850, %v2849
    %v2921 = vpack.c.b16 %v2851, %v2851
    %v2922 = vpack.c.b16 %v2853, %v2852
    %v2923 = vpack.c.b16 %v2854, %v2854
    %v2924 = vpack.c.b16 %v2856, %v2855
    %v2925 = vpack.c.b16 %v2857, %v2857
    %v2926 = vpack.c.b16 %v2859, %v2858
    %v2927 = vpack.c.b16 %v2860, %v2860
    %v2928 = vpack.c.b16 %v2862, %v2861
    %v2929 = vpack.c.b16 %v2863, %v2863
    %v2930 = vpack.c.b16 %v2865, %v2864
    %v2931 = vpack.c.b16 %v2866, %v2866
    %v2932 = vpack.c.b16 %v2868, %v2867
    %v2933 = vpack.c.b16 %v2869, %v2869
    %vm2934 = vsmask.f32 7424
    %v2936 = vshrl.u32 %v2870, 16
    %v2938 = vshll.u32 %v2870, 16
    %v2940 = vrot.slane %v2938, 1
    %v2941 = vor.u32 %v2936, %v2940
    %v2943 = vshll.u32 %v2871, 16
    %v2945 = vrot.slane %v2943, 1
    %v2946 = vsel %vm2934, %v2941, %v2945
    %v2948 = vshrl.u32 %v2872, 16
    %v2950 = vshll.u32 %v2872, 16
    %v2952 = vrot.slane %v2950, 1
    %v2953 = vor.u32 %v2948, %v2952
    %v2955 = vshll.u32 %v2873, 16
    %v2957 = vrot.slane %v2955, 1
    %v2958 = vsel %vm2934, %v2953, %v2957
    %v2960 = vshrl.u32 %v2874, 16
    %v2962 = vshll.u32 %v2874, 16
    %v2964 = vrot.slane %v2962, 1
    %v2965 = vor.u32 %v2960, %v2964
    %v2967 = vshll.u32 %v2875, 16
    %v2969 = vrot.slane %v2967, 1
    %v2970 = vsel %vm2934, %v2965, %v2969
    %v2972 = vshrl.u32 %v2876, 16
    %v2974 = vshll.u32 %v2876, 16
    %v2976 = vrot.slane %v2974, 1
    %v2977 = vor.u32 %v2972, %v2976
    %v2979 = vshll.u32 %v2877, 16
    %v2981 = vrot.slane %v2979, 1
    %v2982 = vsel %vm2934, %v2977, %v2981
    %v2984 = vshrl.u32 %v2878, 16
    %v2986 = vshll.u32 %v2878, 16
    %v2988 = vrot.slane %v2986, 1
    %v2989 = vor.u32 %v2984, %v2988
    %v2991 = vshll.u32 %v2879, 16
    %v2993 = vrot.slane %v2991, 1
    %v2994 = vsel %vm2934, %v2989, %v2993
    %v2996 = vshrl.u32 %v2880, 16
    %v2998 = vshll.u32 %v2880, 16
    %v3000 = vrot.slane %v2998, 1
    %v3001 = vor.u32 %v2996, %v3000
    %v3003 = vshll.u32 %v2881, 16
    %v3005 = vrot.slane %v3003, 1
    %v3006 = vsel %vm2934, %v3001, %v3005
    %v3008 = vshrl.u32 %v2882, 16
    %v3010 = vshll.u32 %v2882, 16
    %v3012 = vrot.slane %v3010, 1
    %v3013 = vor.u32 %v3008, %v3012
    %v3015 = vshll.u32 %v2883, 16
    %v3017 = vrot.slane %v3015, 1
    %v3018 = vsel %vm2934, %v3013, %v3017
    %v3020 = vshrl.u32 %v2884, 16
    %v3022 = vshll.u32 %v2884, 16
    %v3024 = vrot.slane %v3022, 1
    %v3025 = vor.u32 %v3020, %v3024
    %v3027 = vshll.u32 %v2885, 16
    %v3029 = vrot.slane %v3027, 1
    %v3030 = vsel %vm2934, %v3025, %v3029
    %v3032 = vshrl.u32 %v2886, 16
    %v3034 = vshll.u32 %v2886, 16
    %v3036 = vrot.slane %v3034, 1
    %v3037 = vor.u32 %v3032, %v3036
    %v3039 = vshll.u32 %v2887, 16
    %v3041 = vrot.slane %v3039, 1
    %v3042 = vsel %vm2934, %v3037, %v3041
    %v3044 = vshrl.u32 %v2888, 16
    %v3046 = vshll.u32 %v2888, 16
    %v3048 = vrot.slane %v3046, 1
    %v3049 = vor.u32 %v3044, %v3048
    %v3051 = vshll.u32 %v2889, 16
    %v3053 = vrot.slane %v3051, 1
    %v3054 = vsel %vm2934, %v3049, %v3053
    %v3056 = vshrl.u32 %v2890, 16
    %v3058 = vshll.u32 %v2890, 16
    %v3060 = vrot.slane %v3058, 1
    %v3061 = vor.u32 %v3056, %v3060
    %v3063 = vshll.u32 %v2891, 16
    %v3065 = vrot.slane %v3063, 1
    %v3066 = vsel %vm2934, %v3061, %v3065
    %v3068 = vshrl.u32 %v2892, 16
    %v3070 = vshll.u32 %v2892, 16
    %v3072 = vrot.slane %v3070, 1
    %v3073 = vor.u32 %v3068, %v3072
    %v3075 = vshll.u32 %v2893, 16
    %v3077 = vrot.slane %v3075, 1
    %v3078 = vsel %vm2934, %v3073, %v3077
    %v3080 = vshrl.u32 %v2894, 16
    %v3082 = vshll.u32 %v2894, 16
    %v3084 = vrot.slane %v3082, 1
    %v3085 = vor.u32 %v3080, %v3084
    %v3087 = vshll.u32 %v2895, 16
    %v3089 = vrot.slane %v3087, 1
    %v3090 = vsel %vm2934, %v3085, %v3089
    %v3092 = vshrl.u32 %v2896, 16
    %v3094 = vshll.u32 %v2896, 16
    %v3096 = vrot.slane %v3094, 1
    %v3097 = vor.u32 %v3092, %v3096
    %v3099 = vshll.u32 %v2897, 16
    %v3101 = vrot.slane %v3099, 1
    %v3102 = vsel %vm2934, %v3097, %v3101
    %v3104 = vshrl.u32 %v2898, 16
    %v3106 = vshll.u32 %v2898, 16
    %v3108 = vrot.slane %v3106, 1
    %v3109 = vor.u32 %v3104, %v3108
    %v3111 = vshll.u32 %v2899, 16
    %v3113 = vrot.slane %v3111, 1
    %v3114 = vsel %vm2934, %v3109, %v3113
    %v3116 = vshrl.u32 %v2900, 16
    %v3118 = vshll.u32 %v2900, 16
    %v3120 = vrot.slane %v3118, 1
    %v3121 = vor.u32 %v3116, %v3120
    %v3123 = vshll.u32 %v2901, 16
    %v3125 = vrot.slane %v3123, 1
    %v3126 = vsel %vm2934, %v3121, %v3125
    %v3128 = vshrl.u32 %v2902, 16
    %v3130 = vshll.u32 %v2902, 16
    %v3132 = vrot.slane %v3130, 1
    %v3133 = vor.u32 %v3128, %v3132
    %v3135 = vshll.u32 %v2903, 16
    %v3137 = vrot.slane %v3135, 1
    %v3138 = vsel %vm2934, %v3133, %v3137
    %v3140 = vshrl.u32 %v2904, 16
    %v3142 = vshll.u32 %v2904, 16
    %v3144 = vrot.slane %v3142, 1
    %v3145 = vor.u32 %v3140, %v3144
    %v3147 = vshll.u32 %v2905, 16
    %v3149 = vrot.slane %v3147, 1
    %v3150 = vsel %vm2934, %v3145, %v3149
    %v3152 = vshrl.u32 %v2906, 16
    %v3154 = vshll.u32 %v2906, 16
    %v3156 = vrot.slane %v3154, 1
    %v3157 = vor.u32 %v3152, %v3156
    %v3159 = vshll.u32 %v2907, 16
    %v3161 = vrot.slane %v3159, 1
    %v3162 = vsel %vm2934, %v3157, %v3161
    %v3164 = vshrl.u32 %v2908, 16
    %v3166 = vshll.u32 %v2908, 16
    %v3168 = vrot.slane %v3166, 1
    %v3169 = vor.u32 %v3164, %v3168
    %v3171 = vshll.u32 %v2909, 16
    %v3173 = vrot.slane %v3171, 1
    %v3174 = vsel %vm2934, %v3169, %v3173
    %v3176 = vshrl.u32 %v2910, 16
    %v3178 = vshll.u32 %v2910, 16
    %v3180 = vrot.slane %v3178, 1
    %v3181 = vor.u32 %v3176, %v3180
    %v3183 = vshll.u32 %v2911, 16
    %v3185 = vrot.slane %v3183, 1
    %v3186 = vsel %vm2934, %v3181, %v3185
    %v3188 = vshrl.u32 %v2912, 16
    %v3190 = vshll.u32 %v2912, 16
    %v3192 = vrot.slane %v3190, 1
    %v3193 = vor.u32 %v3188, %v3192
    %v3195 = vshll.u32 %v2913, 16
    %v3197 = vrot.slane %v3195, 1
    %v3198 = vsel %vm2934, %v3193, %v3197
    %v3200 = vshrl.u32 %v2914, 16
    %v3202 = vshll.u32 %v2914, 16
    %v3204 = vrot.slane %v3202, 1
    %v3205 = vor.u32 %v3200, %v3204
    %v3207 = vshll.u32 %v2915, 16
    %v3209 = vrot.slane %v3207, 1
    %v3210 = vsel %vm2934, %v3205, %v3209
    %v3212 = vshrl.u32 %v2916, 16
    %v3214 = vshll.u32 %v2916, 16
    %v3216 = vrot.slane %v3214, 1
    %v3217 = vor.u32 %v3212, %v3216
    %v3219 = vshll.u32 %v2917, 16
    %v3221 = vrot.slane %v3219, 1
    %v3222 = vsel %vm2934, %v3217, %v3221
    %v3224 = vshrl.u32 %v2918, 16
    %v3226 = vshll.u32 %v2918, 16
    %v3228 = vrot.slane %v3226, 1
    %v3229 = vor.u32 %v3224, %v3228
    %v3231 = vshll.u32 %v2919, 16
    %v3233 = vrot.slane %v3231, 1
    %v3234 = vsel %vm2934, %v3229, %v3233
    %v3236 = vshrl.u32 %v2920, 16
    %v3238 = vshll.u32 %v2920, 16
    %v3240 = vrot.slane %v3238, 1
    %v3241 = vor.u32 %v3236, %v3240
    %v3243 = vshll.u32 %v2921, 16
    %v3245 = vrot.slane %v3243, 1
    %v3246 = vsel %vm2934, %v3241, %v3245
    %v3248 = vshrl.u32 %v2922, 16
    %v3250 = vshll.u32 %v2922, 16
    %v3252 = vrot.slane %v3250, 1
    %v3253 = vor.u32 %v3248, %v3252
    %v3255 = vshll.u32 %v2923, 16
    %v3257 = vrot.slane %v3255, 1
    %v3258 = vsel %vm2934, %v3253, %v3257
    %v3260 = vshrl.u32 %v2924, 16
    %v3262 = vshll.u32 %v2924, 16
    %v3264 = vrot.slane %v3262, 1
    %v3265 = vor.u32 %v3260, %v3264
    %v3267 = vshll.u32 %v2925, 16
    %v3269 = vrot.slane %v3267, 1
    %v3270 = vsel %vm2934, %v3265, %v3269
    %v3272 = vshrl.u32 %v2926, 16
    %v3274 = vshll.u32 %v2926, 16
    %v3276 = vrot.slane %v3274, 1
    %v3277 = vor.u32 %v3272, %v3276
    %v3279 = vshll.u32 %v2927, 16
    %v3281 = vrot.slane %v3279, 1
    %v3282 = vsel %vm2934, %v3277, %v3281
    %v3284 = vshrl.u32 %v2928, 16
    %v3286 = vshll.u32 %v2928, 16
    %v3288 = vrot.slane %v3286, 1
    %v3289 = vor.u32 %v3284, %v3288
    %v3291 = vshll.u32 %v2929, 16
    %v3293 = vrot.slane %v3291, 1
    %v3294 = vsel %vm2934, %v3289, %v3293
    %v3296 = vshrl.u32 %v2930, 16
    %v3298 = vshll.u32 %v2930, 16
    %v3300 = vrot.slane %v3298, 1
    %v3301 = vor.u32 %v3296, %v3300
    %v3303 = vshll.u32 %v2931, 16
    %v3305 = vrot.slane %v3303, 1
    %v3306 = vsel %vm2934, %v3301, %v3305
    %v3308 = vshrl.u32 %v2932, 16
    %v3310 = vshll.u32 %v2932, 16
    %v3312 = vrot.slane %v3310, 1
    %v3313 = vor.u32 %v3308, %v3312
    %v3315 = vshll.u32 %v2933, 16
    %v3317 = vrot.slane %v3315, 1
    %v3318 = vsel %vm2934, %v3313, %v3317
    %3319 = vrot.lane.b32.xlu0 %v2946, 8
    %v3320 = vpop.permute.xlu0 %3319
    %3321 = vrot.lane.b32.xlu0 %v2958, 8
    %v3322 = vpop.permute.xlu0 %3321
    %3323 = vrot.lane.b32.xlu0 %v2970, 8
    %v3324 = vpop.permute.xlu0 %3323
    %3325 = vrot.lane.b32.xlu0 %v2982, 8
    %v3326 = vpop.permute.xlu0 %3325
    %3327 = vrot.lane.b32.xlu0 %v2994, 8
    %v3328 = vpop.permute.xlu0 %3327
    %3329 = vrot.lane.b32.xlu0 %v3006, 8
    %v3330 = vpop.permute.xlu0 %3329
    %3331 = vrot.lane.b32.xlu0 %v3018, 8
    %v3332 = vpop.permute.xlu0 %3331
    %3333 = vrot.lane.b32.xlu0 %v3030, 8
    %v3334 = vpop.permute.xlu0 %3333
    %3335 = vrot.lane.b32.xlu0 %v3042, 8
    %v3336 = vpop.permute.xlu0 %3335
    %3337 = vrot.lane.b32.xlu0 %v3054, 8
    %v3338 = vpop.permute.xlu0 %3337
    %3339 = vrot.lane.b32.xlu0 %v3066, 8
    %v3340 = vpop.permute.xlu0 %3339
    %3341 = vrot.lane.b32.xlu0 %v3078, 8
    %v3342 = vpop.permute.xlu0 %3341
    %3343 = vrot.lane.b32.xlu0 %v3090, 8
    %v3344 = vpop.permute.xlu0 %3343
    %3345 = vrot.lane.b32.xlu0 %v3102, 8
    %v3346 = vpop.permute.xlu0 %3345
    %3347 = vrot.lane.b32.xlu0 %v3114, 8
    %v3348 = vpop.permute.xlu0 %3347
    %3349 = vrot.lane.b32.xlu0 %v3126, 8
    %v3350 = vpop.permute.xlu0 %3349
    %3351 = vrot.lane.b32.xlu0 %v3138, 8
    %v3352 = vpop.permute.xlu0 %3351
    %3353 = vrot.lane.b32.xlu0 %v3150, 8
    %v3354 = vpop.permute.xlu0 %3353
    %3355 = vrot.lane.b32.xlu0 %v3162, 8
    %v3356 = vpop.permute.xlu0 %3355
    %3357 = vrot.lane.b32.xlu0 %v3174, 8
    %v3358 = vpop.permute.xlu0 %3357
    %3359 = vrot.lane.b32.xlu0 %v3186, 8
    %v3360 = vpop.permute.xlu0 %3359
    %3361 = vrot.lane.b32.xlu0 %v3198, 8
    %v3362 = vpop.permute.xlu0 %3361
    %3363 = vrot.lane.b32.xlu0 %v3210, 8
    %v3364 = vpop.permute.xlu0 %3363
    %3365 = vrot.lane.b32.xlu0 %v3222, 8
    %v3366 = vpop.permute.xlu0 %3365
    %3367 = vrot.lane.b32.xlu0 %v3234, 8
    %v3368 = vpop.permute.xlu0 %3367
    %3369 = vrot.lane.b32.xlu0 %v3246, 8
    %v3370 = vpop.permute.xlu0 %3369
    %3371 = vrot.lane.b32.xlu0 %v3258, 8
    %v3372 = vpop.permute.xlu0 %3371
    %3373 = vrot.lane.b32.xlu0 %v3270, 8
    %v3374 = vpop.permute.xlu0 %3373
    %3375 = vrot.lane.b32.xlu0 %v3282, 8
    %v3376 = vpop.permute.xlu0 %3375
    %3377 = vrot.lane.b32.xlu0 %v3294, 8
    %v3378 = vpop.permute.xlu0 %3377
    %3379 = vrot.lane.b32.xlu0 %v3306, 8
    %v3380 = vpop.permute.xlu0 %3379
    %3381 = vrot.lane.b32.xlu0 %v3318, 8
    %v3382 = vpop.permute.xlu0 %3381
    %vm3415 = vcmask 97344
    %3416 = vst.msk [vmem:[#allocation3] sm:$0xff] %vm3415, %v3320
    %3417 = vst.msk [vmem:[#allocation3 + $0x8] sm:$0xff] %vm3415, %v3322
    %3418 = vst.msk [vmem:[#allocation3 + $0x10] sm:$0xff] %vm3415, %v3324
    %3419 = vst.msk [vmem:[#allocation3 + $0x18] sm:$0xff] %vm3415, %v3326
    %3420 = vst.msk [vmem:[#allocation3 + $0x20] sm:$0xff] %vm3415, %v3328
    %3421 = vst.msk [vmem:[#allocation3 + $0x28] sm:$0xff] %vm3415, %v3330
    %3422 = vst.msk [vmem:[#allocation3 + $0x30] sm:$0xff] %vm3415, %v3332
    %3423 = vst.msk [vmem:[#allocation3 + $0x38] sm:$0xff] %vm3415, %v3334
    %3424 = vst.msk [vmem:[#allocation3 + $0x40] sm:$0xff] %vm3415, %v3336
    %3425 = vst.msk [vmem:[#allocation3 + $0x48] sm:$0xff] %vm3415, %v3338
    %3426 = vst.msk [vmem:[#allocation3 + $0x50] sm:$0xff] %vm3415, %v3340
    %3427 = vst.msk [vmem:[#allocation3 + $0x58] sm:$0xff] %vm3415, %v3342
    %3428 = vst.msk [vmem:[#allocation3 + $0x60] sm:$0xff] %vm3415, %v3344
    %3429 = vst.msk [vmem:[#allocation3 + $0x68] sm:$0xff] %vm3415, %v3346
    %3430 = vst.msk [vmem:[#allocation3 + $0x70] sm:$0xff] %vm3415, %v3348
    %3431 = vst.msk [vmem:[#allocation3 + $0x78] sm:$0xff] %vm3415, %v3350
    %3432 = vst.msk [vmem:[#allocation3 + $0x80] sm:$0xff] %vm3415, %v3352
    %3433 = vst.msk [vmem:[#allocation3 + $0x88] sm:$0xff] %vm3415, %v3354
    %3434 = vst.msk [vmem:[#allocation3 + $0x90] sm:$0xff] %vm3415, %v3356
    %3435 = vst.msk [vmem:[#allocation3 + $0x98] sm:$0xff] %vm3415, %v3358
    %3436 = vst.msk [vmem:[#allocation3 + $0xa0] sm:$0xff] %vm3415, %v3360
    %3437 = vst.msk [vmem:[#allocation3 + $0xa8] sm:$0xff] %vm3415, %v3362
    %3438 = vst.msk [vmem:[#allocation3 + $0xb0] sm:$0xff] %vm3415, %v3364
    %3439 = vst.msk [vmem:[#allocation3 + $0xb8] sm:$0xff] %vm3415, %v3366
    %3440 = vst.msk [vmem:[#allocation3 + $0xc0] sm:$0xff] %vm3415, %v3368
    %3441 = vst.msk [vmem:[#allocation3 + $0xc8] sm:$0xff] %vm3415, %v3370
    %3442 = vst.msk [vmem:[#allocation3 + $0xd0] sm:$0xff] %vm3415, %v3372
    %3443 = vst.msk [vmem:[#allocation3 + $0xd8] sm:$0xff] %vm3415, %v3374
    %3444 = vst.msk [vmem:[#allocation3 + $0xe0] sm:$0xff] %vm3415, %v3376
    %3445 = vst.msk [vmem:[#allocation3 + $0xe8] sm:$0xff] %vm3415, %v3378
    %3446 = vst.msk [vmem:[#allocation3 + $0xf0] sm:$0xff] %vm3415, %v3380
    %3447 = vst.msk [vmem:[#allocation3 + $0xf8] sm:$0xff] %vm3415, %v3382
    %v3448 = vld [vmem:[%s970] sm:$0x8]
    %v3449 = vld [vmem:[%s970 + $0x4] sm:$0xf]
    %v3450 = vld [vmem:[%s970 + $0x8] sm:$0xf]
    %v3451 = vld [vmem:[%s970 + $0x10] sm:$0x8]
    %v3452 = vld [vmem:[%s970 + $0x14] sm:$0xf]
    %v3453 = vld [vmem:[%s970 + $0x18] sm:$0xf]
    %v3454 = vld [vmem:[%s970 + $0x20] sm:$0x8]
    %v3455 = vld [vmem:[%s970 + $0x24] sm:$0xf]
    %v3456 = vld [vmem:[%s970 + $0x28] sm:$0xf]
    %v3457 = vld [vmem:[%s970 + $0x30] sm:$0x8]
    %v3458 = vld [vmem:[%s970 + $0x34] sm:$0xf]
    %v3459 = vld [vmem:[%s970 + $0x38] sm:$0xf]
    %v3460 = vld [vmem:[%s970 + $0x40] sm:$0x8]
    %v3461 = vld [vmem:[%s970 + $0x44] sm:$0xf]
    %v3462 = vld [vmem:[%s970 + $0x48] sm:$0xf]
    %v3463 = vld [vmem:[%s970 + $0x50] sm:$0x8]
    %v3464 = vld [vmem:[%s970 + $0x54] sm:$0xf]
    %v3465 = vld [vmem:[%s970 + $0x58] sm:$0xf]
    %v3466 = vld [vmem:[%s970 + $0x60] sm:$0x8]
    %v3467 = vld [vmem:[%s970 + $0x64] sm:$0xf]
    %v3468 = vld [vmem:[%s970 + $0x68] sm:$0xf]
    %v3469 = vld [vmem:[%s970 + $0x70] sm:$0x8]
    %v3470 = vld [vmem:[%s970 + $0x74] sm:$0xf]
    %v3471 = vld [vmem:[%s970 + $0x78] sm:$0xf]
    %v3472 = vld [vmem:[%s970 + $0x80] sm:$0x8]
    %v3473 = vld [vmem:[%s970 + $0x84] sm:$0xf]
    %v3474 = vld [vmem:[%s970 + $0x88] sm:$0xf]
    %v3475 = vld [vmem:[%s970 + $0x90] sm:$0x8]
    %v3476 = vld [vmem:[%s970 + $0x94] sm:$0xf]
    %v3477 = vld [vmem:[%s970 + $0x98] sm:$0xf]
    %v3478 = vld [vmem:[%s970 + $0xa0] sm:$0x8]
    %v3479 = vld [vmem:[%s970 + $0xa4] sm:$0xf]
    %v3480 = vld [vmem:[%s970 + $0xa8] sm:$0xf]
    %v3481 = vld [vmem:[%s970 + $0xb0] sm:$0x8]
    %v3482 = vld [vmem:[%s970 + $0xb4] sm:$0xf]
    %v3483 = vld [vmem:[%s970 + $0xb8] sm:$0xf]
    %v3484 = vld [vmem:[%s970 + $0xc0] sm:$0x8]
    %v3485 = vld [vmem:[%s970 + $0xc4] sm:$0xf]
    %v3486 = vld [vmem:[%s970 + $0xc8] sm:$0xf]
    %v3487 = vld [vmem:[%s970 + $0xd0] sm:$0x8]
    %v3488 = vld [vmem:[%s970 + $0xd4] sm:$0xf]
    %v3489 = vld [vmem:[%s970 + $0xd8] sm:$0xf]
    %v3490 = vld [vmem:[%s970 + $0xe0] sm:$0x8]
    %v3491 = vld [vmem:[%s970 + $0xe4] sm:$0xf]
    %v3492 = vld [vmem:[%s970 + $0xe8] sm:$0xf]
    %v3493 = vld [vmem:[%s970 + $0xf0] sm:$0x8]
    %v3494 = vld [vmem:[%s970 + $0xf4] sm:$0xf]
    %v3495 = vld [vmem:[%s970 + $0xf8] sm:$0xf]
    %v3496 = vld [vmem:[%s970 + $0x120] sm:$0x8]
    %v3497 = vld [vmem:[%s970 + $0x124] sm:$0xf]
    %v3498 = vld [vmem:[%s970 + $0x128] sm:$0xf]
    %v3499 = vld [vmem:[%s970 + $0x130] sm:$0x8]
    %v3500 = vld [vmem:[%s970 + $0x134] sm:$0xf]
    %v3501 = vld [vmem:[%s970 + $0x138] sm:$0xf]
    %v3502 = vld [vmem:[%s970 + $0x140] sm:$0x8]
    %v3503 = vld [vmem:[%s970 + $0x144] sm:$0xf]
    %v3504 = vld [vmem:[%s970 + $0x148] sm:$0xf]
    %v3505 = vld [vmem:[%s970 + $0x150] sm:$0x8]
    %v3506 = vld [vmem:[%s970 + $0x154] sm:$0xf]
    %v3507 = vld [vmem:[%s970 + $0x158] sm:$0xf]
    %v3508 = vld [vmem:[%s970 + $0x160] sm:$0x8]
    %v3509 = vld [vmem:[%s970 + $0x164] sm:$0xf]
    %v3510 = vld [vmem:[%s970 + $0x168] sm:$0xf]
    %v3511 = vld [vmem:[%s970 + $0x170] sm:$0x8]
    %v3512 = vld [vmem:[%s970 + $0x174] sm:$0xf]
    %v3513 = vld [vmem:[%s970 + $0x178] sm:$0xf]
    %v3514 = vld [vmem:[%s970 + $0x180] sm:$0x8]
    %v3515 = vld [vmem:[%s970 + $0x184] sm:$0xf]
    %v3516 = vld [vmem:[%s970 + $0x188] sm:$0xf]
    %v3517 = vld [vmem:[%s970 + $0x190] sm:$0x8]
    %v3518 = vld [vmem:[%s970 + $0x194] sm:$0xf]
    %v3519 = vld [vmem:[%s970 + $0x198] sm:$0xf]
    %v3520 = vld [vmem:[%s970 + $0x1a0] sm:$0x8]
    %v3521 = vld [vmem:[%s970 + $0x1a4] sm:$0xf]
    %v3522 = vld [vmem:[%s970 + $0x1a8] sm:$0xf]
    %v3523 = vld [vmem:[%s970 + $0x1b0] sm:$0x8]
    %v3524 = vld [vmem:[%s970 + $0x1b4] sm:$0xf]
    %v3525 = vld [vmem:[%s970 + $0x1b8] sm:$0xf]
    %v3526 = vld [vmem:[%s970 + $0x1c0] sm:$0x8]
    %v3527 = vld [vmem:[%s970 + $0x1c4] sm:$0xf]
    %v3528 = vld [vmem:[%s970 + $0x1c8] sm:$0xf]
    %v3529 = vld [vmem:[%s970 + $0x1d0] sm:$0x8]
    %v3530 = vld [vmem:[%s970 + $0x1d4] sm:$0xf]
    %v3531 = vld [vmem:[%s970 + $0x1d8] sm:$0xf]
    %v3532 = vld [vmem:[%s970 + $0x1e0] sm:$0x8]
    %v3533 = vld [vmem:[%s970 + $0x1e4] sm:$0xf]
    %v3534 = vld [vmem:[%s970 + $0x1e8] sm:$0xf]
    %v3535 = vld [vmem:[%s970 + $0x1f0] sm:$0x8]
    %v3536 = vld [vmem:[%s970 + $0x1f4] sm:$0xf]
    %v3537 = vld [vmem:[%s970 + $0x1f8] sm:$0xf]
    %v3538 = vld [vmem:[%s970 + $0x200] sm:$0x8]
    %v3539 = vld [vmem:[%s970 + $0x204] sm:$0xf]
    %v3540 = vld [vmem:[%s970 + $0x208] sm:$0xf]
    %v3541 = vld [vmem:[%s970 + $0x210] sm:$0x8]
    %v3542 = vld [vmem:[%s970 + $0x214] sm:$0xf]
    %v3543 = vld [vmem:[%s970 + $0x218] sm:$0xf]
    %v3640 = vunpack.c.l.b16 %v3448
    %v3641 = vunpack.c.l.b16 %v3449
    %v3642 = vunpack.c.l.b16 %v3450
    %v3643 = vunpack.c.l.b16 %v3451
    %v3644 = vunpack.c.l.b16 %v3452
    %v3645 = vunpack.c.l.b16 %v3453
    %v3646 = vunpack.c.l.b16 %v3454
    %v3647 = vunpack.c.l.b16 %v3455
    %v3648 = vunpack.c.l.b16 %v3456
    %v3649 = vunpack.c.l.b16 %v3457
    %v3650 = vunpack.c.l.b16 %v3458
    %v3651 = vunpack.c.l.b16 %v3459
    %v3652 = vunpack.c.l.b16 %v3460
    %v3653 = vunpack.c.l.b16 %v3461
    %v3654 = vunpack.c.l.b16 %v3462
    %v3655 = vunpack.c.l.b16 %v3463
    %v3656 = vunpack.c.l.b16 %v3464
    %v3657 = vunpack.c.l.b16 %v3465
    %v3658 = vunpack.c.l.b16 %v3466
    %v3659 = vunpack.c.l.b16 %v3467
    %v3660 = vunpack.c.l.b16 %v3468
    %v3661 = vunpack.c.l.b16 %v3469
    %v3662 = vunpack.c.l.b16 %v3470
    %v3663 = vunpack.c.l.b16 %v3471
    %v3664 = vunpack.c.l.b16 %v3472
    %v3665 = vunpack.c.l.b16 %v3473
    %v3666 = vunpack.c.l.b16 %v3474
    %v3667 = vunpack.c.l.b16 %v3475
    %v3668 = vunpack.c.l.b16 %v3476
    %v3669 = vunpack.c.l.b16 %v3477
    %v3670 = vunpack.c.l.b16 %v3478
    %v3671 = vunpack.c.l.b16 %v3479
    %v3672 = vunpack.c.l.b16 %v3480
    %v3673 = vunpack.c.l.b16 %v3481
    %v3674 = vunpack.c.l.b16 %v3482
    %v3675 = vunpack.c.l.b16 %v3483
    %v3676 = vunpack.c.l.b16 %v3484
    %v3677 = vunpack.c.l.b16 %v3485
    %v3678 = vunpack.c.l.b16 %v3486
    %v3679 = vunpack.c.l.b16 %v3487
    %v3680 = vunpack.c.l.b16 %v3488
    %v3681 = vunpack.c.l.b16 %v3489
    %v3682 = vunpack.c.l.b16 %v3490
    %v3683 = vunpack.c.l.b16 %v3491
    %v3684 = vunpack.c.l.b16 %v3492
    %v3685 = vunpack.c.l.b16 %v3493
    %v3686 = vunpack.c.l.b16 %v3494
    %v3687 = vunpack.c.l.b16 %v3495
    %v3688 = vunpack.c.l.b16 %v3496
    %v3689 = vunpack.c.l.b16 %v3497
    %v3690 = vunpack.c.l.b16 %v3498
    %v3691 = vunpack.c.l.b16 %v3499
    %v3692 = vunpack.c.l.b16 %v3500
    %v3693 = vunpack.c.l.b16 %v3501
    %v3694 = vunpack.c.l.b16 %v3502
    %v3695 = vunpack.c.l.b16 %v3503
    %v3696 = vunpack.c.l.b16 %v3504
    %v3697 = vunpack.c.l.b16 %v3505
    %v3698 = vunpack.c.l.b16 %v3506
    %v3699 = vunpack.c.l.b16 %v3507
    %v3700 = vunpack.c.l.b16 %v3508
    %v3701 = vunpack.c.l.b16 %v3509
    %v3702 = vunpack.c.l.b16 %v3510
    %v3703 = vunpack.c.l.b16 %v3511
    %v3704 = vunpack.c.l.b16 %v3512
    %v3705 = vunpack.c.l.b16 %v3513
    %v3706 = vunpack.c.l.b16 %v3514
    %v3707 = vunpack.c.l.b16 %v3515
    %v3708 = vunpack.c.l.b16 %v3516
    %v3709 = vunpack.c.l.b16 %v3517
    %v3710 = vunpack.c.l.b16 %v3518
    %v3711 = vunpack.c.l.b16 %v3519
    %v3712 = vunpack.c.l.b16 %v3520
    %v3713 = vunpack.c.l.b16 %v3521
    %v3714 = vunpack.c.l.b16 %v3522
    %v3715 = vunpack.c.l.b16 %v3523
    %v3716 = vunpack.c.l.b16 %v3524
    %v3717 = vunpack.c.l.b16 %v3525
    %v3718 = vunpack.c.l.b16 %v3526
    %v3719 = vunpack.c.l.b16 %v3527
    %v3720 = vunpack.c.l.b16 %v3528
    %v3721 = vunpack.c.l.b16 %v3529
    %v3722 = vunpack.c.l.b16 %v3530
    %v3723 = vunpack.c.l.b16 %v3531
    %v3724 = vunpack.c.l.b16 %v3532
    %v3725 = vunpack.c.l.b16 %v3533
    %v3726 = vunpack.c.l.b16 %v3534
    %v3727 = vunpack.c.l.b16 %v3535
    %v3728 = vunpack.c.l.b16 %v3536
    %v3729 = vunpack.c.l.b16 %v3537
    %v3730 = vunpack.c.l.b16 %v3538
    %v3731 = vunpack.c.l.b16 %v3539
    %v3732 = vunpack.c.l.b16 %v3540
    %v3733 = vunpack.c.l.b16 %v3541
    %v3734 = vunpack.c.l.b16 %v3542
    %v3735 = vunpack.c.l.b16 %v3543
    %v3736 = vpack.c.b16 %v3641, %v3640
    %v3737 = vpack.c.b16 %v3642, %v3642
    %v3738 = vpack.c.b16 %v3644, %v3643
    %v3739 = vpack.c.b16 %v3645, %v3645
    %v3740 = vpack.c.b16 %v3647, %v3646
    %v3741 = vpack.c.b16 %v3648, %v3648
    %v3742 = vpack.c.b16 %v3650, %v3649
    %v3743 = vpack.c.b16 %v3651, %v3651
    %v3744 = vpack.c.b16 %v3653, %v3652
    %v3745 = vpack.c.b16 %v3654, %v3654
    %v3746 = vpack.c.b16 %v3656, %v3655
    %v3747 = vpack.c.b16 %v3657, %v3657
    %v3748 = vpack.c.b16 %v3659, %v3658
    %v3749 = vpack.c.b16 %v3660, %v3660
    %v3750 = vpack.c.b16 %v3662, %v3661
    %v3751 = vpack.c.b16 %v3663, %v3663
    %v3752 = vpack.c.b16 %v3665, %v3664
    %v3753 = vpack.c.b16 %v3666, %v3666
    %v3754 = vpack.c.b16 %v3668, %v3667
    %v3755 = vpack.c.b16 %v3669, %v3669
    %v3756 = vpack.c.b16 %v3671, %v3670
    %v3757 = vpack.c.b16 %v3672, %v3672
    %v3758 = vpack.c.b16 %v3674, %v3673
    %v3759 = vpack.c.b16 %v3675, %v3675
    %v3760 = vpack.c.b16 %v3677, %v3676
    %v3761 = vpack.c.b16 %v3678, %v3678
    %v3762 = vpack.c.b16 %v3680, %v3679
    %v3763 = vpack.c.b16 %v3681, %v3681
    %v3764 = vpack.c.b16 %v3683, %v3682
    %v3765 = vpack.c.b16 %v3684, %v3684
    %v3766 = vpack.c.b16 %v3686, %v3685
    %v3767 = vpack.c.b16 %v3687, %v3687
    %v3768 = vpack.c.b16 %v3689, %v3688
    %v3769 = vpack.c.b16 %v3690, %v3690
    %v3770 = vpack.c.b16 %v3692, %v3691
    %v3771 = vpack.c.b16 %v3693, %v3693
    %v3772 = vpack.c.b16 %v3695, %v3694
    %v3773 = vpack.c.b16 %v3696, %v3696
    %v3774 = vpack.c.b16 %v3698, %v3697
    %v3775 = vpack.c.b16 %v3699, %v3699
    %v3776 = vpack.c.b16 %v3701, %v3700
    %v3777 = vpack.c.b16 %v3702, %v3702
    %v3778 = vpack.c.b16 %v3704, %v3703
    %v3779 = vpack.c.b16 %v3705, %v3705
    %v3780 = vpack.c.b16 %v3707, %v3706
    %v3781 = vpack.c.b16 %v3708, %v3708
    %v3782 = vpack.c.b16 %v3710, %v3709
    %v3783 = vpack.c.b16 %v3711, %v3711
    %v3784 = vpack.c.b16 %v3713, %v3712
    %v3785 = vpack.c.b16 %v3714, %v3714
    %v3786 = vpack.c.b16 %v3716, %v3715
    %v3787 = vpack.c.b16 %v3717, %v3717
    %v3788 = vpack.c.b16 %v3719, %v3718
    %v3789 = vpack.c.b16 %v3720, %v3720
    %v3790 = vpack.c.b16 %v3722, %v3721
    %v3791 = vpack.c.b16 %v3723, %v3723
    %v3792 = vpack.c.b16 %v3725, %v3724
    %v3793 = vpack.c.b16 %v3726, %v3726
    %v3794 = vpack.c.b16 %v3728, %v3727
    %v3795 = vpack.c.b16 %v3729, %v3729
    %v3796 = vpack.c.b16 %v3731, %v3730
    %v3797 = vpack.c.b16 %v3732, %v3732
    %v3798 = vpack.c.b16 %v3734, %v3733
    %v3799 = vpack.c.b16 %v3735, %v3735
    %v3801 = vshrl.u32 %v3736, 16
    %v3803 = vrot.slane %v3801, 3
    %v3804 = vshll.u32 %v3736, 16
    %v3806 = vrot.slane %v3804, 4
    %v3807 = vor.u32 %v3803, %v3806
    %v3809 = vshrl.u32 %v3737, 16
    %v3811 = vrot.slane %v3809, 3
    %v3812 = vshll.u32 %v3737, 16
    %v3814 = vrot.slane %v3812, 4
    %v3815 = vor.u32 %v3811, %v3814
    %v3816 = vsel %vm1619, %v3807, %v3815
    %v3818 = vshrl.u32 %v3738, 16
    %v3820 = vrot.slane %v3818, 3
    %v3821 = vshll.u32 %v3738, 16
    %v3823 = vrot.slane %v3821, 4
    %v3824 = vor.u32 %v3820, %v3823
    %v3826 = vshrl.u32 %v3739, 16
    %v3828 = vrot.slane %v3826, 3
    %v3829 = vshll.u32 %v3739, 16
    %v3831 = vrot.slane %v3829, 4
    %v3832 = vor.u32 %v3828, %v3831
    %v3833 = vsel %vm1619, %v3824, %v3832
    %v3835 = vshrl.u32 %v3740, 16
    %v3837 = vrot.slane %v3835, 3
    %v3838 = vshll.u32 %v3740, 16
    %v3840 = vrot.slane %v3838, 4
    %v3841 = vor.u32 %v3837, %v3840
    %v3843 = vshrl.u32 %v3741, 16
    %v3845 = vrot.slane %v3843, 3
    %v3846 = vshll.u32 %v3741, 16
    %v3848 = vrot.slane %v3846, 4
    %v3849 = vor.u32 %v3845, %v3848
    %v3850 = vsel %vm1619, %v3841, %v3849
    %v3852 = vshrl.u32 %v3742, 16
    %v3854 = vrot.slane %v3852, 3
    %v3855 = vshll.u32 %v3742, 16
    %v3857 = vrot.slane %v3855, 4
    %v3858 = vor.u32 %v3854, %v3857
    %v3860 = vshrl.u32 %v3743, 16
    %v3862 = vrot.slane %v3860, 3
    %v3863 = vshll.u32 %v3743, 16
    %v3865 = vrot.slane %v3863, 4
    %v3866 = vor.u32 %v3862, %v3865
    %v3867 = vsel %vm1619, %v3858, %v3866
    %v3869 = vshrl.u32 %v3744, 16
    %v3871 = vrot.slane %v3869, 3
    %v3872 = vshll.u32 %v3744, 16
    %v3874 = vrot.slane %v3872, 4
    %v3875 = vor.u32 %v3871, %v3874
    %v3877 = vshrl.u32 %v3745, 16
    %v3879 = vrot.slane %v3877, 3
    %v3880 = vshll.u32 %v3745, 16
    %v3882 = vrot.slane %v3880, 4
    %v3883 = vor.u32 %v3879, %v3882
    %v3884 = vsel %vm1619, %v3875, %v3883
    %v3886 = vshrl.u32 %v3746, 16
    %v3888 = vrot.slane %v3886, 3
    %v3889 = vshll.u32 %v3746, 16
    %v3891 = vrot.slane %v3889, 4
    %v3892 = vor.u32 %v3888, %v3891
    %v3894 = vshrl.u32 %v3747, 16
    %v3896 = vrot.slane %v3894, 3
    %v3897 = vshll.u32 %v3747, 16
    %v3899 = vrot.slane %v3897, 4
    %v3900 = vor.u32 %v3896, %v3899
    %v3901 = vsel %vm1619, %v3892, %v3900
    %v3903 = vshrl.u32 %v3748, 16
    %v3905 = vrot.slane %v3903, 3
    %v3906 = vshll.u32 %v3748, 16
    %v3908 = vrot.slane %v3906, 4
    %v3909 = vor.u32 %v3905, %v3908
    %v3911 = vshrl.u32 %v3749, 16
    %v3913 = vrot.slane %v3911, 3
    %v3914 = vshll.u32 %v3749, 16
    %v3916 = vrot.slane %v3914, 4
    %v3917 = vor.u32 %v3913, %v3916
    %v3918 = vsel %vm1619, %v3909, %v3917
    %v3920 = vshrl.u32 %v3750, 16
    %v3922 = vrot.slane %v3920, 3
    %v3923 = vshll.u32 %v3750, 16
    %v3925 = vrot.slane %v3923, 4
    %v3926 = vor.u32 %v3922, %v3925
    %v3928 = vshrl.u32 %v3751, 16
    %v3930 = vrot.slane %v3928, 3
    %v3931 = vshll.u32 %v3751, 16
    %v3933 = vrot.slane %v3931, 4
    %v3934 = vor.u32 %v3930, %v3933
    %v3935 = vsel %vm1619, %v3926, %v3934
    %v3937 = vshrl.u32 %v3752, 16
    %v3939 = vrot.slane %v3937, 3
    %v3940 = vshll.u32 %v3752, 16
    %v3942 = vrot.slane %v3940, 4
    %v3943 = vor.u32 %v3939, %v3942
    %v3945 = vshrl.u32 %v3753, 16
    %v3947 = vrot.slane %v3945, 3
    %v3948 = vshll.u32 %v3753, 16
    %v3950 = vrot.slane %v3948, 4
    %v3951 = vor.u32 %v3947, %v3950
    %v3952 = vsel %vm1619, %v3943, %v3951
    %v3954 = vshrl.u32 %v3754, 16
    %v3956 = vrot.slane %v3954, 3
    %v3957 = vshll.u32 %v3754, 16
    %v3959 = vrot.slane %v3957, 4
    %v3960 = vor.u32 %v3956, %v3959
    %v3962 = vshrl.u32 %v3755, 16
    %v3964 = vrot.slane %v3962, 3
    %v3965 = vshll.u32 %v3755, 16
    %v3967 = vrot.slane %v3965, 4
    %v3968 = vor.u32 %v3964, %v3967
    %v3969 = vsel %vm1619, %v3960, %v3968
    %v3971 = vshrl.u32 %v3756, 16
    %v3973 = vrot.slane %v3971, 3
    %v3974 = vshll.u32 %v3756, 16
    %v3976 = vrot.slane %v3974, 4
    %v3977 = vor.u32 %v3973, %v3976
    %v3979 = vshrl.u32 %v3757, 16
    %v3981 = vrot.slane %v3979, 3
    %v3982 = vshll.u32 %v3757, 16
    %v3984 = vrot.slane %v3982, 4
    %v3985 = vor.u32 %v3981, %v3984
    %v3986 = vsel %vm1619, %v3977, %v3985
    %v3988 = vshrl.u32 %v3758, 16
    %v3990 = vrot.slane %v3988, 3
    %v3991 = vshll.u32 %v3758, 16
    %v3993 = vrot.slane %v3991, 4
    %v3994 = vor.u32 %v3990, %v3993
    %v3996 = vshrl.u32 %v3759, 16
    %v3998 = vrot.slane %v3996, 3
    %v3999 = vshll.u32 %v3759, 16
    %v4001 = vrot.slane %v3999, 4
    %v4002 = vor.u32 %v3998, %v4001
    %v4003 = vsel %vm1619, %v3994, %v4002
    %v4005 = vshrl.u32 %v3760, 16
    %v4007 = vrot.slane %v4005, 3
    %v4008 = vshll.u32 %v3760, 16
    %v4010 = vrot.slane %v4008, 4
    %v4011 = vor.u32 %v4007, %v4010
    %v4013 = vshrl.u32 %v3761, 16
    %v4015 = vrot.slane %v4013, 3
    %v4016 = vshll.u32 %v3761, 16
    %v4018 = vrot.slane %v4016, 4
    %v4019 = vor.u32 %v4015, %v4018
    %v4020 = vsel %vm1619, %v4011, %v4019
    %v4022 = vshrl.u32 %v3762, 16
    %v4024 = vrot.slane %v4022, 3
    %v4025 = vshll.u32 %v3762, 16
    %v4027 = vrot.slane %v4025, 4
    %v4028 = vor.u32 %v4024, %v4027
    %v4030 = vshrl.u32 %v3763, 16
    %v4032 = vrot.slane %v4030, 3
    %v4033 = vshll.u32 %v3763, 16
    %v4035 = vrot.slane %v4033, 4
    %v4036 = vor.u32 %v4032, %v4035
    %v4037 = vsel %vm1619, %v4028, %v4036
    %v4039 = vshrl.u32 %v3764, 16
    %v4041 = vrot.slane %v4039, 3
    %v4042 = vshll.u32 %v3764, 16
    %v4044 = vrot.slane %v4042, 4
    %v4045 = vor.u32 %v4041, %v4044
    %v4047 = vshrl.u32 %v3765, 16
    %v4049 = vrot.slane %v4047, 3
    %v4050 = vshll.u32 %v3765, 16
    %v4052 = vrot.slane %v4050, 4
    %v4053 = vor.u32 %v4049, %v4052
    %v4054 = vsel %vm1619, %v4045, %v4053
    %v4056 = vshrl.u32 %v3766, 16
    %v4058 = vrot.slane %v4056, 3
    %v4059 = vshll.u32 %v3766, 16
    %v4061 = vrot.slane %v4059, 4
    %v4062 = vor.u32 %v4058, %v4061
    %v4064 = vshrl.u32 %v3767, 16
    %v4066 = vrot.slane %v4064, 3
    %v4067 = vshll.u32 %v3767, 16
    %v4069 = vrot.slane %v4067, 4
    %v4070 = vor.u32 %v4066, %v4069
    %v4071 = vsel %vm1619, %v4062, %v4070
    %v4073 = vshrl.u32 %v3768, 16
    %v4075 = vrot.slane %v4073, 3
    %v4076 = vshll.u32 %v3768, 16
    %v4078 = vrot.slane %v4076, 4
    %v4079 = vor.u32 %v4075, %v4078
    %v4081 = vshrl.u32 %v3769, 16
    %v4083 = vrot.slane %v4081, 3
    %v4084 = vshll.u32 %v3769, 16
    %v4086 = vrot.slane %v4084, 4
    %v4087 = vor.u32 %v4083, %v4086
    %v4088 = vsel %vm1619, %v4079, %v4087
    %v4090 = vshrl.u32 %v3770, 16
    %v4092 = vrot.slane %v4090, 3
    %v4093 = vshll.u32 %v3770, 16
    %v4095 = vrot.slane %v4093, 4
    %v4096 = vor.u32 %v4092, %v4095
    %v4098 = vshrl.u32 %v3771, 16
    %v4100 = vrot.slane %v4098, 3
    %v4101 = vshll.u32 %v3771, 16
    %v4103 = vrot.slane %v4101, 4
    %v4104 = vor.u32 %v4100, %v4103
    %v4105 = vsel %vm1619, %v4096, %v4104
    %v4107 = vshrl.u32 %v3772, 16
    %v4109 = vrot.slane %v4107, 3
    %v4110 = vshll.u32 %v3772, 16
    %v4112 = vrot.slane %v4110, 4
    %v4113 = vor.u32 %v4109, %v4112
    %v4115 = vshrl.u32 %v3773, 16
    %v4117 = vrot.slane %v4115, 3
    %v4118 = vshll.u32 %v3773, 16
    %v4120 = vrot.slane %v4118, 4
    %v4121 = vor.u32 %v4117, %v4120
    %v4122 = vsel %vm1619, %v4113, %v4121
    %v4124 = vshrl.u32 %v3774, 16
    %v4126 = vrot.slane %v4124, 3
    %v4127 = vshll.u32 %v3774, 16
    %v4129 = vrot.slane %v4127, 4
    %v4130 = vor.u32 %v4126, %v4129
    %v4132 = vshrl.u32 %v3775, 16
    %v4134 = vrot.slane %v4132, 3
    %v4135 = vshll.u32 %v3775, 16
    %v4137 = vrot.slane %v4135, 4
    %v4138 = vor.u32 %v4134, %v4137
    %v4139 = vsel %vm1619, %v4130, %v4138
    %v4141 = vshrl.u32 %v3776, 16
    %v4143 = vrot.slane %v4141, 3
    %v4144 = vshll.u32 %v3776, 16
    %v4146 = vrot.slane %v4144, 4
    %v4147 = vor.u32 %v4143, %v4146
    %v4149 = vshrl.u32 %v3777, 16
    %v4151 = vrot.slane %v4149, 3
    %v4152 = vshll.u32 %v3777, 16
    %v4154 = vrot.slane %v4152, 4
    %v4155 = vor.u32 %v4151, %v4154
    %v4156 = vsel %vm1619, %v4147, %v4155
    %v4158 = vshrl.u32 %v3778, 16
    %v4160 = vrot.slane %v4158, 3
    %v4161 = vshll.u32 %v3778, 16
    %v4163 = vrot.slane %v4161, 4
    %v4164 = vor.u32 %v4160, %v4163
    %v4166 = vshrl.u32 %v3779, 16
    %v4168 = vrot.slane %v4166, 3
    %v4169 = vshll.u32 %v3779, 16
    %v4171 = vrot.slane %v4169, 4
    %v4172 = vor.u32 %v4168, %v4171
    %v4173 = vsel %vm1619, %v4164, %v4172
    %v4175 = vshrl.u32 %v3780, 16
    %v4177 = vrot.slane %v4175, 3
    %v4178 = vshll.u32 %v3780, 16
    %v4180 = vrot.slane %v4178, 4
    %v4181 = vor.u32 %v4177, %v4180
    %v4183 = vshrl.u32 %v3781, 16
    %v4185 = vrot.slane %v4183, 3
    %v4186 = vshll.u32 %v3781, 16
    %v4188 = vrot.slane %v4186, 4
    %v4189 = vor.u32 %v4185, %v4188
    %v4190 = vsel %vm1619, %v4181, %v4189
    %v4192 = vshrl.u32 %v3782, 16
    %v4194 = vrot.slane %v4192, 3
    %v4195 = vshll.u32 %v3782, 16
    %v4197 = vrot.slane %v4195, 4
    %v4198 = vor.u32 %v4194, %v4197
    %v4200 = vshrl.u32 %v3783, 16
    %v4202 = vrot.slane %v4200, 3
    %v4203 = vshll.u32 %v3783, 16
    %v4205 = vrot.slane %v4203, 4
    %v4206 = vor.u32 %v4202, %v4205
    %v4207 = vsel %vm1619, %v4198, %v4206
    %v4209 = vshrl.u32 %v3784, 16
    %v4211 = vrot.slane %v4209, 3
    %v4212 = vshll.u32 %v3784, 16
    %v4214 = vrot.slane %v4212, 4
    %v4215 = vor.u32 %v4211, %v4214
    %v4217 = vshrl.u32 %v3785, 16
    %v4219 = vrot.slane %v4217, 3
    %v4220 = vshll.u32 %v3785, 16
    %v4222 = vrot.slane %v4220, 4
    %v4223 = vor.u32 %v4219, %v4222
    %v4224 = vsel %vm1619, %v4215, %v4223
    %v4226 = vshrl.u32 %v3786, 16
    %v4228 = vrot.slane %v4226, 3
    %v4229 = vshll.u32 %v3786, 16
    %v4231 = vrot.slane %v4229, 4
    %v4232 = vor.u32 %v4228, %v4231
    %v4234 = vshrl.u32 %v3787, 16
    %v4236 = vrot.slane %v4234, 3
    %v4237 = vshll.u32 %v3787, 16
    %v4239 = vrot.slane %v4237, 4
    %v4240 = vor.u32 %v4236, %v4239
    %v4241 = vsel %vm1619, %v4232, %v4240
    %v4243 = vshrl.u32 %v3788, 16
    %v4245 = vrot.slane %v4243, 3
    %v4246 = vshll.u32 %v3788, 16
    %v4248 = vrot.slane %v4246, 4
    %v4249 = vor.u32 %v4245, %v4248
    %v4251 = vshrl.u32 %v3789, 16
    %v4253 = vrot.slane %v4251, 3
    %v4254 = vshll.u32 %v3789, 16
    %v4256 = vrot.slane %v4254, 4
    %v4257 = vor.u32 %v4253, %v4256
    %v4258 = vsel %vm1619, %v4249, %v4257
    %v4260 = vshrl.u32 %v3790, 16
    %v4262 = vrot.slane %v4260, 3
    %v4263 = vshll.u32 %v3790, 16
    %v4265 = vrot.slane %v4263, 4
    %v4266 = vor.u32 %v4262, %v4265
    %v4268 = vshrl.u32 %v3791, 16
    %v4270 = vrot.slane %v4268, 3
    %v4271 = vshll.u32 %v3791, 16
    %v4273 = vrot.slane %v4271, 4
    %v4274 = vor.u32 %v4270, %v4273
    %v4275 = vsel %vm1619, %v4266, %v4274
    %v4277 = vshrl.u32 %v3792, 16
    %v4279 = vrot.slane %v4277, 3
    %v4280 = vshll.u32 %v3792, 16
    %v4282 = vrot.slane %v4280, 4
    %v4283 = vor.u32 %v4279, %v4282
    %v4285 = vshrl.u32 %v3793, 16
    %v4287 = vrot.slane %v4285, 3
    %v4288 = vshll.u32 %v3793, 16
    %v4290 = vrot.slane %v4288, 4
    %v4291 = vor.u32 %v4287, %v4290
    %v4292 = vsel %vm1619, %v4283, %v4291
    %v4294 = vshrl.u32 %v3794, 16
    %v4296 = vrot.slane %v4294, 3
    %v4297 = vshll.u32 %v3794, 16
    %v4299 = vrot.slane %v4297, 4
    %v4300 = vor.u32 %v4296, %v4299
    %v4302 = vshrl.u32 %v3795, 16
    %v4304 = vrot.slane %v4302, 3
    %v4305 = vshll.u32 %v3795, 16
    %v4307 = vrot.slane %v4305, 4
    %v4308 = vor.u32 %v4304, %v4307
    %v4309 = vsel %vm1619, %v4300, %v4308
    %v4311 = vshrl.u32 %v3796, 16
    %v4313 = vrot.slane %v4311, 3
    %v4314 = vshll.u32 %v3796, 16
    %v4316 = vrot.slane %v4314, 4
    %v4317 = vor.u32 %v4313, %v4316
    %v4319 = vshrl.u32 %v3797, 16
    %v4321 = vrot.slane %v4319, 3
    %v4322 = vshll.u32 %v3797, 16
    %v4324 = vrot.slane %v4322, 4
    %v4325 = vor.u32 %v4321, %v4324
    %v4326 = vsel %vm1619, %v4317, %v4325
    %v4328 = vshrl.u32 %v3798, 16
    %v4330 = vrot.slane %v4328, 3
    %v4331 = vshll.u32 %v3798, 16
    %v4333 = vrot.slane %v4331, 4
    %v4334 = vor.u32 %v4330, %v4333
    %v4336 = vshrl.u32 %v3799, 16
    %v4338 = vrot.slane %v4336, 3
    %v4339 = vshll.u32 %v3799, 16
    %v4341 = vrot.slane %v4339, 4
    %v4342 = vor.u32 %v4338, %v4341
    %v4343 = vsel %vm1619, %v4334, %v4342
    %4344 = vrot.lane.b32.xlu0 %v3816, 12
    %v4345 = vpop.permute.xlu0 %4344
    %4346 = vrot.lane.b32.xlu0 %v3833, 12
    %v4347 = vpop.permute.xlu0 %4346
    %4348 = vrot.lane.b32.xlu0 %v3850, 12
    %v4349 = vpop.permute.xlu0 %4348
    %4350 = vrot.lane.b32.xlu0 %v3867, 12
    %v4351 = vpop.permute.xlu0 %4350
    %4352 = vrot.lane.b32.xlu0 %v3884, 12
    %v4353 = vpop.permute.xlu0 %4352
    %4354 = vrot.lane.b32.xlu0 %v3901, 12
    %v4355 = vpop.permute.xlu0 %4354
    %4356 = vrot.lane.b32.xlu0 %v3918, 12
    %v4357 = vpop.permute.xlu0 %4356
    %4358 = vrot.lane.b32.xlu0 %v3935, 12
    %v4359 = vpop.permute.xlu0 %4358
    %4360 = vrot.lane.b32.xlu0 %v3952, 12
    %v4361 = vpop.permute.xlu0 %4360
    %4362 = vrot.lane.b32.xlu0 %v3969, 12
    %v4363 = vpop.permute.xlu0 %4362
    %4364 = vrot.lane.b32.xlu0 %v3986, 12
    %v4365 = vpop.permute.xlu0 %4364
    %4366 = vrot.lane.b32.xlu0 %v4003, 12
    %v4367 = vpop.permute.xlu0 %4366
    %4368 = vrot.lane.b32.xlu0 %v4020, 12
    %v4369 = vpop.permute.xlu0 %4368
    %4370 = vrot.lane.b32.xlu0 %v4037, 12
    %v4371 = vpop.permute.xlu0 %4370
    %4372 = vrot.lane.b32.xlu0 %v4054, 12
    %v4373 = vpop.permute.xlu0 %4372
    %4374 = vrot.lane.b32.xlu0 %v4071, 12
    %v4375 = vpop.permute.xlu0 %4374
    %4376 = vrot.lane.b32.xlu0 %v4088, 12
    %v4377 = vpop.permute.xlu0 %4376
    %4378 = vrot.lane.b32.xlu0 %v4105, 12
    %v4379 = vpop.permute.xlu0 %4378
    %4380 = vrot.lane.b32.xlu0 %v4122, 12
    %v4381 = vpop.permute.xlu0 %4380
    %4382 = vrot.lane.b32.xlu0 %v4139, 12
    %v4383 = vpop.permute.xlu0 %4382
    %4384 = vrot.lane.b32.xlu0 %v4156, 12
    %v4385 = vpop.permute.xlu0 %4384
    %4386 = vrot.lane.b32.xlu0 %v4173, 12
    %v4387 = vpop.permute.xlu0 %4386
    %4388 = vrot.lane.b32.xlu0 %v4190, 12
    %v4389 = vpop.permute.xlu0 %4388
    %4390 = vrot.lane.b32.xlu0 %v4207, 12
    %v4391 = vpop.permute.xlu0 %4390
    %4392 = vrot.lane.b32.xlu0 %v4224, 12
    %v4393 = vpop.permute.xlu0 %4392
    %4394 = vrot.lane.b32.xlu0 %v4241, 12
    %v4395 = vpop.permute.xlu0 %4394
    %4396 = vrot.lane.b32.xlu0 %v4258, 12
    %v4397 = vpop.permute.xlu0 %4396
    %4398 = vrot.lane.b32.xlu0 %v4275, 12
    %v4399 = vpop.permute.xlu0 %4398
    %4400 = vrot.lane.b32.xlu0 %v4292, 12
    %v4401 = vpop.permute.xlu0 %4400
    %4402 = vrot.lane.b32.xlu0 %v4309, 12
    %v4403 = vpop.permute.xlu0 %4402
    %4404 = vrot.lane.b32.xlu0 %v4326, 12
    %v4405 = vpop.permute.xlu0 %4404
    %4406 = vrot.lane.b32.xlu0 %v4343, 12
    %v4407 = vpop.permute.xlu0 %4406
    %vm4440 = vcmask 130144
    %4441 = vst.msk [vmem:[#allocation3] sm:$0xff] %vm4440, %v4345
    %4442 = vst.msk [vmem:[#allocation3 + $0x8] sm:$0xff] %vm4440, %v4347
    %4443 = vst.msk [vmem:[#allocation3 + $0x10] sm:$0xff] %vm4440, %v4349
    %4444 = vst.msk [vmem:[#allocation3 + $0x18] sm:$0xff] %vm4440, %v4351
    %4445 = vst.msk [vmem:[#allocation3 + $0x20] sm:$0xff] %vm4440, %v4353
    %4446 = vst.msk [vmem:[#allocation3 + $0x28] sm:$0xff] %vm4440, %v4355
    %4447 = vst.msk [vmem:[#allocation3 + $0x30] sm:$0xff] %vm4440, %v4357
    %4448 = vst.msk [vmem:[#allocation3 + $0x38] sm:$0xff] %vm4440, %v4359
    %4449 = vst.msk [vmem:[#allocation3 + $0x40] sm:$0xff] %vm4440, %v4361
    %4450 = vst.msk [vmem:[#allocation3 + $0x48] sm:$0xff] %vm4440, %v4363
    %4451 = vst.msk [vmem:[#allocation3 + $0x50] sm:$0xff] %vm4440, %v4365
    %4452 = vst.msk [vmem:[#allocation3 + $0x58] sm:$0xff] %vm4440, %v4367
    %4453 = vst.msk [vmem:[#allocation3 + $0x60] sm:$0xff] %vm4440, %v4369
    %4454 = vst.msk [vmem:[#allocation3 + $0x68] sm:$0xff] %vm4440, %v4371
    %4455 = vst.msk [vmem:[#allocation3 + $0x70] sm:$0xff] %vm4440, %v4373
    %4456 = vst.msk [vmem:[#allocation3 + $0x78] sm:$0xff] %vm4440, %v4375
    %4457 = vst.msk [vmem:[#allocation3 + $0x80] sm:$0xff] %vm4440, %v4377
    %4458 = vst.msk [vmem:[#allocation3 + $0x88] sm:$0xff] %vm4440, %v4379
    %4459 = vst.msk [vmem:[#allocation3 + $0x90] sm:$0xff] %vm4440, %v4381
    %4460 = vst.msk [vmem:[#allocation3 + $0x98] sm:$0xff] %vm4440, %v4383
    %4461 = vst.msk [vmem:[#allocation3 + $0xa0] sm:$0xff] %vm4440, %v4385
    %4462 = vst.msk [vmem:[#allocation3 + $0xa8] sm:$0xff] %vm4440, %v4387
    %4463 = vst.msk [vmem:[#allocation3 + $0xb0] sm:$0xff] %vm4440, %v4389
    %4464 = vst.msk [vmem:[#allocation3 + $0xb8] sm:$0xff] %vm4440, %v4391
    %4465 = vst.msk [vmem:[#allocation3 + $0xc0] sm:$0xff] %vm4440, %v4393
    %4466 = vst.msk [vmem:[#allocation3 + $0xc8] sm:$0xff] %vm4440, %v4395
    %4467 = vst.msk [vmem:[#allocation3 + $0xd0] sm:$0xff] %vm4440, %v4397
    %4468 = vst.msk [vmem:[#allocation3 + $0xd8] sm:$0xff] %vm4440, %v4399
    %4469 = vst.msk [vmem:[#allocation3 + $0xe0] sm:$0xff] %vm4440, %v4401
    %4470 = vst.msk [vmem:[#allocation3 + $0xe8] sm:$0xff] %vm4440, %v4403
    %4471 = vst.msk [vmem:[#allocation3 + $0xf0] sm:$0xff] %vm4440, %v4405
    %4472 = vst.msk [vmem:[#allocation3 + $0xf8] sm:$0xff] %vm4440, %v4407
    %v4473 = vld [vmem:[%s970 + $0x4] sm:$0xf]
    %v4474 = vld [vmem:[%s970 + $0x8] sm:$0xf]
    %v4475 = vld [vmem:[%s970 + $0x14] sm:$0xf]
    %v4476 = vld [vmem:[%s970 + $0x18] sm:$0xf]
    %v4477 = vld [vmem:[%s970 + $0x24] sm:$0xf]
    %v4478 = vld [vmem:[%s970 + $0x28] sm:$0xf]
    %v4479 = vld [vmem:[%s970 + $0x34] sm:$0xf]
    %v4480 = vld [vmem:[%s970 + $0x38] sm:$0xf]
    %v4481 = vld [vmem:[%s970 + $0x44] sm:$0xf]
    %v4482 = vld [vmem:[%s970 + $0x48] sm:$0xf]
    %v4483 = vld [vmem:[%s970 + $0x54] sm:$0xf]
    %v4484 = vld [vmem:[%s970 + $0x58] sm:$0xf]
    %v4485 = vld [vmem:[%s970 + $0x64] sm:$0xf]
    %v4486 = vld [vmem:[%s970 + $0x68] sm:$0xf]
    %v4487 = vld [vmem:[%s970 + $0x74] sm:$0xf]
    %v4488 = vld [vmem:[%s970 + $0x78] sm:$0xf]
    %v4489 = vld [vmem:[%s970 + $0x84] sm:$0xf]
    %v4490 = vld [vmem:[%s970 + $0x88] sm:$0xf]
    %v4491 = vld [vmem:[%s970 + $0x94] sm:$0xf]
    %v4492 = vld [vmem:[%s970 + $0x98] sm:$0xf]
    %v4493 = vld [vmem:[%s970 + $0xa4] sm:$0xf]
    %v4494 = vld [vmem:[%s970 + $0xa8] sm:$0xf]
    %v4495 = vld [vmem:[%s970 + $0xb4] sm:$0xf]
    %v4496 = vld [vmem:[%s970 + $0xb8] sm:$0xf]
    %v4497 = vld [vmem:[%s970 + $0xc4] sm:$0xf]
    %v4498 = vld [vmem:[%s970 + $0xc8] sm:$0xf]
    %v4499 = vld [vmem:[%s970 + $0xd4] sm:$0xf]
    %v4500 = vld [vmem:[%s970 + $0xd8] sm:$0xf]
    %v4501 = vld [vmem:[%s970 + $0xe4] sm:$0xf]
    %v4502 = vld [vmem:[%s970 + $0xe8] sm:$0xf]
    %v4503 = vld [vmem:[%s970 + $0xf4] sm:$0xf]
    %v4504 = vld [vmem:[%s970 + $0xf8] sm:$0xf]
    %v4505 = vld [vmem:[%s970 + $0x124] sm:$0xf]
    %v4506 = vld [vmem:[%s970 + $0x128] sm:$0xf]
    %v4507 = vld [vmem:[%s970 + $0x134] sm:$0xf]
    %v4508 = vld [vmem:[%s970 + $0x138] sm:$0xf]
    %v4509 = vld [vmem:[%s970 + $0x144] sm:$0xf]
    %v4510 = vld [vmem:[%s970 + $0x148] sm:$0xf]
    %v4511 = vld [vmem:[%s970 + $0x154] sm:$0xf]
    %v4512 = vld [vmem:[%s970 + $0x158] sm:$0xf]
    %v4513 = vld [vmem:[%s970 + $0x164] sm:$0xf]
    %v4514 = vld [vmem:[%s970 + $0x168] sm:$0xf]
    %v4515 = vld [vmem:[%s970 + $0x174] sm:$0xf]
    %v4516 = vld [vmem:[%s970 + $0x178] sm:$0xf]
    %v4517 = vld [vmem:[%s970 + $0x184] sm:$0xf]
    %v4518 = vld [vmem:[%s970 + $0x188] sm:$0xf]
    %v4519 = vld [vmem:[%s970 + $0x194] sm:$0xf]
    %v4520 = vld [vmem:[%s970 + $0x198] sm:$0xf]
    %v4521 = vld [vmem:[%s970 + $0x1a4] sm:$0xf]
    %v4522 = vld [vmem:[%s970 + $0x1a8] sm:$0xf]
    %v4523 = vld [vmem:[%s970 + $0x1b4] sm:$0xf]
    %v4524 = vld [vmem:[%s970 + $0x1b8] sm:$0xf]
    %v4525 = vld [vmem:[%s970 + $0x1c4] sm:$0xf]
    %v4526 = vld [vmem:[%s970 + $0x1c8] sm:$0xf]
    %v4527 = vld [vmem:[%s970 + $0x1d4] sm:$0xf]
    %v4528 = vld [vmem:[%s970 + $0x1d8] sm:$0xf]
    %v4529 = vld [vmem:[%s970 + $0x1e4] sm:$0xf]
    %v4530 = vld [vmem:[%s970 + $0x1e8] sm:$0xf]
    %v4531 = vld [vmem:[%s970 + $0x1f4] sm:$0xf]
    %v4532 = vld [vmem:[%s970 + $0x1f8] sm:$0xf]
    %v4533 = vld [vmem:[%s970 + $0x204] sm:$0xf]
    %v4534 = vld [vmem:[%s970 + $0x208] sm:$0xf]
    %v4535 = vld [vmem:[%s970 + $0x214] sm:$0xf]
    %v4536 = vld [vmem:[%s970 + $0x218] sm:$0xf]
    %v4601 = vunpack.c.l.b16 %v4473
    %v4602 = vunpack.c.l.b16 %v4474
    %v4603 = vunpack.c.l.b16 %v4475
    %v4604 = vunpack.c.l.b16 %v4476
    %v4605 = vunpack.c.l.b16 %v4477
    %v4606 = vunpack.c.l.b16 %v4478
    %v4607 = vunpack.c.l.b16 %v4479
    %v4608 = vunpack.c.l.b16 %v4480
    %v4609 = vunpack.c.l.b16 %v4481
    %v4610 = vunpack.c.l.b16 %v4482
    %v4611 = vunpack.c.l.b16 %v4483
    %v4612 = vunpack.c.l.b16 %v4484
    %v4613 = vunpack.c.l.b16 %v4485
    %v4614 = vunpack.c.l.b16 %v4486
    %v4615 = vunpack.c.l.b16 %v4487
    %v4616 = vunpack.c.l.b16 %v4488
    %v4617 = vunpack.c.l.b16 %v4489
    %v4618 = vunpack.c.l.b16 %v4490
    %v4619 = vunpack.c.l.b16 %v4491
    %v4620 = vunpack.c.l.b16 %v4492
    %v4621 = vunpack.c.l.b16 %v4493
    %v4622 = vunpack.c.l.b16 %v4494
    %v4623 = vunpack.c.l.b16 %v4495
    %v4624 = vunpack.c.l.b16 %v4496
    %v4625 = vunpack.c.l.b16 %v4497
    %v4626 = vunpack.c.l.b16 %v4498
    %v4627 = vunpack.c.l.b16 %v4499
    %v4628 = vunpack.c.l.b16 %v4500
    %v4629 = vunpack.c.l.b16 %v4501
    %v4630 = vunpack.c.l.b16 %v4502
    %v4631 = vunpack.c.l.b16 %v4503
    %v4632 = vunpack.c.l.b16 %v4504
    %v4633 = vunpack.c.l.b16 %v4505
    %v4634 = vunpack.c.l.b16 %v4506
    %v4635 = vunpack.c.l.b16 %v4507
    %v4636 = vunpack.c.l.b16 %v4508
    %v4637 = vunpack.c.l.b16 %v4509
    %v4638 = vunpack.c.l.b16 %v4510
    %v4639 = vunpack.c.l.b16 %v4511
    %v4640 = vunpack.c.l.b16 %v4512
    %v4641 = vunpack.c.l.b16 %v4513
    %v4642 = vunpack.c.l.b16 %v4514
    %v4643 = vunpack.c.l.b16 %v4515
    %v4644 = vunpack.c.l.b16 %v4516
    %v4645 = vunpack.c.l.b16 %v4517
    %v4646 = vunpack.c.l.b16 %v4518
    %v4647 = vunpack.c.l.b16 %v4519
    %v4648 = vunpack.c.l.b16 %v4520
    %v4649 = vunpack.c.l.b16 %v4521
    %v4650 = vunpack.c.l.b16 %v4522
    %v4651 = vunpack.c.l.b16 %v4523
    %v4652 = vunpack.c.l.b16 %v4524
    %v4653 = vunpack.c.l.b16 %v4525
    %v4654 = vunpack.c.l.b16 %v4526
    %v4655 = vunpack.c.l.b16 %v4527
    %v4656 = vunpack.c.l.b16 %v4528
    %v4657 = vunpack.c.l.b16 %v4529
    %v4658 = vunpack.c.l.b16 %v4530
    %v4659 = vunpack.c.l.b16 %v4531
    %v4660 = vunpack.c.l.b16 %v4532
    %v4661 = vunpack.c.l.b16 %v4533
    %v4662 = vunpack.c.l.b16 %v4534
    %v4663 = vunpack.c.l.b16 %v4535
    %v4664 = vunpack.c.l.b16 %v4536
    %v4665 = vpack.c.b16 %v4602, %v4601
    %v4666 = vpack.c.b16 %v4604, %v4603
    %v4667 = vpack.c.b16 %v4606, %v4605
    %v4668 = vpack.c.b16 %v4608, %v4607
    %v4669 = vpack.c.b16 %v4610, %v4609
    %v4670 = vpack.c.b16 %v4612, %v4611
    %v4671 = vpack.c.b16 %v4614, %v4613
    %v4672 = vpack.c.b16 %v4616, %v4615
    %v4673 = vpack.c.b16 %v4618, %v4617
    %v4674 = vpack.c.b16 %v4620, %v4619
    %v4675 = vpack.c.b16 %v4622, %v4621
    %v4676 = vpack.c.b16 %v4624, %v4623
    %v4677 = vpack.c.b16 %v4626, %v4625
    %v4678 = vpack.c.b16 %v4628, %v4627
    %v4679 = vpack.c.b16 %v4630, %v4629
    %v4680 = vpack.c.b16 %v4632, %v4631
    %v4681 = vpack.c.b16 %v4634, %v4633
    %v4682 = vpack.c.b16 %v4636, %v4635
    %v4683 = vpack.c.b16 %v4638, %v4637
    %v4684 = vpack.c.b16 %v4640, %v4639
    %v4685 = vpack.c.b16 %v4642, %v4641
    %v4686 = vpack.c.b16 %v4644, %v4643
    %v4687 = vpack.c.b16 %v4646, %v4645
    %v4688 = vpack.c.b16 %v4648, %v4647
    %v4689 = vpack.c.b16 %v4650, %v4649
    %v4690 = vpack.c.b16 %v4652, %v4651
    %v4691 = vpack.c.b16 %v4654, %v4653
    %v4692 = vpack.c.b16 %v4656, %v4655
    %v4693 = vpack.c.b16 %v4658, %v4657
    %v4694 = vpack.c.b16 %v4660, %v4659
    %v4695 = vpack.c.b16 %v4662, %v4661
    %v4696 = vpack.c.b16 %v4664, %v4663
    %4697 = vrot.lane.b32.xlu0 %v4665, 16
    %v4698 = vpop.permute.xlu0 %4697
    %4699 = vrot.lane.b32.xlu0 %v4666, 16
    %v4700 = vpop.permute.xlu0 %4699
    %4701 = vrot.lane.b32.xlu0 %v4667, 16
    %v4702 = vpop.permute.xlu0 %4701
    %4703 = vrot.lane.b32.xlu0 %v4668, 16
    %v4704 = vpop.permute.xlu0 %4703
    %4705 = vrot.lane.b32.xlu0 %v4669, 16
    %v4706 = vpop.permute.xlu0 %4705
    %4707 = vrot.lane.b32.xlu0 %v4670, 16
    %v4708 = vpop.permute.xlu0 %4707
    %4709 = vrot.lane.b32.xlu0 %v4671, 16
    %v4710 = vpop.permute.xlu0 %4709
    %4711 = vrot.lane.b32.xlu0 %v4672, 16
    %v4712 = vpop.permute.xlu0 %4711
    %4713 = vrot.lane.b32.xlu0 %v4673, 16
    %v4714 = vpop.permute.xlu0 %4713
    %4715 = vrot.lane.b32.xlu0 %v4674, 16
    %v4716 = vpop.permute.xlu0 %4715
    %4717 = vrot.lane.b32.xlu0 %v4675, 16
    %v4718 = vpop.permute.xlu0 %4717
    %4719 = vrot.lane.b32.xlu0 %v4676, 16
    %v4720 = vpop.permute.xlu0 %4719
    %4721 = vrot.lane.b32.xlu0 %v4677, 16
    %v4722 = vpop.permute.xlu0 %4721
    %4723 = vrot.lane.b32.xlu0 %v4678, 16
    %v4724 = vpop.permute.xlu0 %4723
    %4725 = vrot.lane.b32.xlu0 %v4679, 16
    %v4726 = vpop.permute.xlu0 %4725
    %4727 = vrot.lane.b32.xlu0 %v4680, 16
    %v4728 = vpop.permute.xlu0 %4727
    %4729 = vrot.lane.b32.xlu0 %v4681, 16
    %v4730 = vpop.permute.xlu0 %4729
    %4731 = vrot.lane.b32.xlu0 %v4682, 16
    %v4732 = vpop.permute.xlu0 %4731
    %4733 = vrot.lane.b32.xlu0 %v4683, 16
    %v4734 = vpop.permute.xlu0 %4733
    %4735 = vrot.lane.b32.xlu0 %v4684, 16
    %v4736 = vpop.permute.xlu0 %4735
    %4737 = vrot.lane.b32.xlu0 %v4685, 16
    %v4738 = vpop.permute.xlu0 %4737
    %4739 = vrot.lane.b32.xlu0 %v4686, 16
    %v4740 = vpop.permute.xlu0 %4739
    %4741 = vrot.lane.b32.xlu0 %v4687, 16
    %v4742 = vpop.permute.xlu0 %4741
    %4743 = vrot.lane.b32.xlu0 %v4688, 16
    %v4744 = vpop.permute.xlu0 %4743
    %4745 = vrot.lane.b32.xlu0 %v4689, 16
    %v4746 = vpop.permute.xlu0 %4745
    %4747 = vrot.lane.b32.xlu0 %v4690, 16
    %v4748 = vpop.permute.xlu0 %4747
    %4749 = vrot.lane.b32.xlu0 %v4691, 16
    %v4750 = vpop.permute.xlu0 %4749
    %4751 = vrot.lane.b32.xlu0 %v4692, 16
    %v4752 = vpop.permute.xlu0 %4751
    %4753 = vrot.lane.b32.xlu0 %v4693, 16
    %v4754 = vpop.permute.xlu0 %4753
    %4755 = vrot.lane.b32.xlu0 %v4694, 16
    %v4756 = vpop.permute.xlu0 %4755
    %4757 = vrot.lane.b32.xlu0 %v4695, 16
    %v4758 = vpop.permute.xlu0 %4757
    %4759 = vrot.lane.b32.xlu0 %v4696, 16
    %v4760 = vpop.permute.xlu0 %4759
    %vm4793 = vcmask 162944
    %4794 = vst.msk [vmem:[#allocation3] sm:$0xff] %vm4793, %v4698
    %4795 = vst.msk [vmem:[#allocation3 + $0x8] sm:$0xff] %vm4793, %v4700
    %4796 = vst.msk [vmem:[#allocation3 + $0x10] sm:$0xff] %vm4793, %v4702
    %4797 = vst.msk [vmem:[#allocation3 + $0x18] sm:$0xff] %vm4793, %v4704
    %4798 = vst.msk [vmem:[#allocation3 + $0x20] sm:$0xff] %vm4793, %v4706
    %4799 = vst.msk [vmem:[#allocation3 + $0x28] sm:$0xff] %vm4793, %v4708
    %4800 = vst.msk [vmem:[#allocation3 + $0x30] sm:$0xff] %vm4793, %v4710
    %4801 = vst.msk [vmem:[#allocation3 + $0x38] sm:$0xff] %vm4793, %v4712
    %4802 = vst.msk [vmem:[#allocation3 + $0x40] sm:$0xff] %vm4793, %v4714
    %4803 = vst.msk [vmem:[#allocation3 + $0x48] sm:$0xff] %vm4793, %v4716
    %4804 = vst.msk [vmem:[#allocation3 + $0x50] sm:$0xff] %vm4793, %v4718
    %4805 = vst.msk [vmem:[#allocation3 + $0x58] sm:$0xff] %vm4793, %v4720
    %4806 = vst.msk [vmem:[#allocation3 + $0x60] sm:$0xff] %vm4793, %v4722
    %4807 = vst.msk [vmem:[#allocation3 + $0x68] sm:$0xff] %vm4793, %v4724
    %4808 = vst.msk [vmem:[#allocation3 + $0x70] sm:$0xff] %vm4793, %v4726
    %4809 = vst.msk [vmem:[#allocation3 + $0x78] sm:$0xff] %vm4793, %v4728
    %4810 = vst.msk [vmem:[#allocation3 + $0x80] sm:$0xff] %vm4793, %v4730
    %4811 = vst.msk [vmem:[#allocation3 + $0x88] sm:$0xff] %vm4793, %v4732
    %4812 = vst.msk [vmem:[#allocation3 + $0x90] sm:$0xff] %vm4793, %v4734
    %4813 = vst.msk [vmem:[#allocation3 + $0x98] sm:$0xff] %vm4793, %v4736
    %4814 = vst.msk [vmem:[#allocation3 + $0xa0] sm:$0xff] %vm4793, %v4738
    %4815 = vst.msk [vmem:[#allocation3 + $0xa8] sm:$0xff] %vm4793, %v4740
    %4816 = vst.msk [vmem:[#allocation3 + $0xb0] sm:$0xff] %vm4793, %v4742
    %4817 = vst.msk [vmem:[#allocation3 + $0xb8] sm:$0xff] %vm4793, %v4744
    %4818 = vst.msk [vmem:[#allocation3 + $0xc0] sm:$0xff] %vm4793, %v4746
    %4819 = vst.msk [vmem:[#allocation3 + $0xc8] sm:$0xff] %vm4793, %v4748
    %4820 = vst.msk [vmem:[#allocation3 + $0xd0] sm:$0xff] %vm4793, %v4750
    %4821 = vst.msk [vmem:[#allocation3 + $0xd8] sm:$0xff] %vm4793, %v4752
    %4822 = vst.msk [vmem:[#allocation3 + $0xe0] sm:$0xff] %vm4793, %v4754
    %4823 = vst.msk [vmem:[#allocation3 + $0xe8] sm:$0xff] %vm4793, %v4756
    %4824 = vst.msk [vmem:[#allocation3 + $0xf0] sm:$0xff] %vm4793, %v4758
    %4825 = vst.msk [vmem:[#allocation3 + $0xf8] sm:$0xff] %vm4793, %v4760
    %v4826 = vld [vmem:[%s970 + $0x4] sm:$0xf]
    %v4827 = vld [vmem:[%s970 + $0x8] sm:$0xf]
    %v4828 = vld [vmem:[%s970 + $0xc] sm:$0x1]
    %v4829 = vld [vmem:[%s970 + $0x14] sm:$0xf]
    %v4830 = vld [vmem:[%s970 + $0x18] sm:$0xf]
    %v4831 = vld [vmem:[%s970 + $0x1c] sm:$0x1]
    %v4832 = vld [vmem:[%s970 + $0x24] sm:$0xf]
    %v4833 = vld [vmem:[%s970 + $0x28] sm:$0xf]
    %v4834 = vld [vmem:[%s970 + $0x2c] sm:$0x1]
    %v4835 = vld [vmem:[%s970 + $0x34] sm:$0xf]
    %v4836 = vld [vmem:[%s970 + $0x38] sm:$0xf]
    %v4837 = vld [vmem:[%s970 + $0x3c] sm:$0x1]
    %v4838 = vld [vmem:[%s970 + $0x44] sm:$0xf]
    %v4839 = vld [vmem:[%s970 + $0x48] sm:$0xf]
    %v4840 = vld [vmem:[%s970 + $0x4c] sm:$0x1]
    %v4841 = vld [vmem:[%s970 + $0x54] sm:$0xf]
    %v4842 = vld [vmem:[%s970 + $0x58] sm:$0xf]
    %v4843 = vld [vmem:[%s970 + $0x5c] sm:$0x1]
    %v4844 = vld [vmem:[%s970 + $0x64] sm:$0xf]
    %v4845 = vld [vmem:[%s970 + $0x68] sm:$0xf]
    %v4846 = vld [vmem:[%s970 + $0x6c] sm:$0x1]
    %v4847 = vld [vmem:[%s970 + $0x74] sm:$0xf]
    %v4848 = vld [vmem:[%s970 + $0x78] sm:$0xf]
    %v4849 = vld [vmem:[%s970 + $0x7c] sm:$0x1]
    %v4850 = vld [vmem:[%s970 + $0x84] sm:$0xf]
    %v4851 = vld [vmem:[%s970 + $0x88] sm:$0xf]
    %v4852 = vld [vmem:[%s970 + $0x8c] sm:$0x1]
    %v4853 = vld [vmem:[%s970 + $0x94] sm:$0xf]
    %v4854 = vld [vmem:[%s970 + $0x98] sm:$0xf]
    %v4855 = vld [vmem:[%s970 + $0x9c] sm:$0x1]
    %v4856 = vld [vmem:[%s970 + $0xa4] sm:$0xf]
    %v4857 = vld [vmem:[%s970 + $0xa8] sm:$0xf]
    %v4858 = vld [vmem:[%s970 + $0xac] sm:$0x1]
    %v4859 = vld [vmem:[%s970 + $0xb4] sm:$0xf]
    %v4860 = vld [vmem:[%s970 + $0xb8] sm:$0xf]
    %v4861 = vld [vmem:[%s970 + $0xbc] sm:$0x1]
    %v4862 = vld [vmem:[%s970 + $0xc4] sm:$0xf]
    %v4863 = vld [vmem:[%s970 + $0xc8] sm:$0xf]
    %v4864 = vld [vmem:[%s970 + $0xcc] sm:$0x1]
    %v4865 = vld [vmem:[%s970 + $0xd4] sm:$0xf]
    %v4866 = vld [vmem:[%s970 + $0xd8] sm:$0xf]
    %v4867 = vld [vmem:[%s970 + $0xdc] sm:$0x1]
    %v4868 = vld [vmem:[%s970 + $0xe4] sm:$0xf]
    %v4869 = vld [vmem:[%s970 + $0xe8] sm:$0xf]
    %v4870 = vld [vmem:[%s970 + $0xec] sm:$0x1]
    %v4871 = vld [vmem:[%s970 + $0xf4] sm:$0xf]
    %v4872 = vld [vmem:[%s970 + $0xf8] sm:$0xf]
    %v4873 = vld [vmem:[%s970 + $0xfc] sm:$0x1]
    %v4874 = vld [vmem:[%s970 + $0x124] sm:$0xf]
    %v4875 = vld [vmem:[%s970 + $0x128] sm:$0xf]
    %v4876 = vld [vmem:[%s970 + $0x12c] sm:$0x1]
    %v4877 = vld [vmem:[%s970 + $0x134] sm:$0xf]
    %v4878 = vld [vmem:[%s970 + $0x138] sm:$0xf]
    %v4879 = vld [vmem:[%s970 + $0x13c] sm:$0x1]
    %v4880 = vld [vmem:[%s970 + $0x144] sm:$0xf]
    %v4881 = vld [vmem:[%s970 + $0x148] sm:$0xf]
    %v4882 = vld [vmem:[%s970 + $0x14c] sm:$0x1]
    %v4883 = vld [vmem:[%s970 + $0x154] sm:$0xf]
    %v4884 = vld [vmem:[%s970 + $0x158] sm:$0xf]
    %v4885 = vld [vmem:[%s970 + $0x15c] sm:$0x1]
    %v4886 = vld [vmem:[%s970 + $0x164] sm:$0xf]
    %v4887 = vld [vmem:[%s970 + $0x168] sm:$0xf]
    %v4888 = vld [vmem:[%s970 + $0x16c] sm:$0x1]
    %v4889 = vld [vmem:[%s970 + $0x174] sm:$0xf]
    %v4890 = vld [vmem:[%s970 + $0x178] sm:$0xf]
    %v4891 = vld [vmem:[%s970 + $0x17c] sm:$0x1]
    %v4892 = vld [vmem:[%s970 + $0x184] sm:$0xf]
    %v4893 = vld [vmem:[%s970 + $0x188] sm:$0xf]
    %v4894 = vld [vmem:[%s970 + $0x18c] sm:$0x1]
    %v4895 = vld [vmem:[%s970 + $0x194] sm:$0xf]
    %v4896 = vld [vmem:[%s970 + $0x198] sm:$0xf]
    %v4897 = vld [vmem:[%s970 + $0x19c] sm:$0x1]
    %v4898 = vld [vmem:[%s970 + $0x1a4] sm:$0xf]
    %v4899 = vld [vmem:[%s970 + $0x1a8] sm:$0xf]
    %v4900 = vld [vmem:[%s970 + $0x1ac] sm:$0x1]
    %v4901 = vld [vmem:[%s970 + $0x1b4] sm:$0xf]
    %v4902 = vld [vmem:[%s970 + $0x1b8] sm:$0xf]
    %v4903 = vld [vmem:[%s970 + $0x1bc] sm:$0x1]
    %v4904 = vld [vmem:[%s970 + $0x1c4] sm:$0xf]
    %v4905 = vld [vmem:[%s970 + $0x1c8] sm:$0xf]
    %v4906 = vld [vmem:[%s970 + $0x1cc] sm:$0x1]
    %v4907 = vld [vmem:[%s970 + $0x1d4] sm:$0xf]
    %v4908 = vld [vmem:[%s970 + $0x1d8] sm:$0xf]
    %v4909 = vld [vmem:[%s970 + $0x1dc] sm:$0x1]
    %v4910 = vld [vmem:[%s970 + $0x1e4] sm:$0xf]
    %v4911 = vld [vmem:[%s970 + $0x1e8] sm:$0xf]
    %v4912 = vld [vmem:[%s970 + $0x1ec] sm:$0x1]
    %v4913 = vld [vmem:[%s970 + $0x1f4] sm:$0xf]
    %v4914 = vld [vmem:[%s970 + $0x1f8] sm:$0xf]
    %v4915 = vld [vmem:[%s970 + $0x1fc] sm:$0x1]
    %v4916 = vld [vmem:[%s970 + $0x204] sm:$0xf]
    %v4917 = vld [vmem:[%s970 + $0x208] sm:$0xf]
    %v4918 = vld [vmem:[%s970 + $0x20c] sm:$0x1]
    %v4919 = vld [vmem:[%s970 + $0x214] sm:$0xf]
    %v4920 = vld [vmem:[%s970 + $0x218] sm:$0xf]
    %v4921 = vld [vmem:[%s970 + $0x21c] sm:$0x1]
    %v5018 = vunpack.c.l.b16 %v4826
    %v5019 = vunpack.c.l.b16 %v4827
    %v5020 = vunpack.c.l.b16 %v4828
    %v5021 = vunpack.c.l.b16 %v4829
    %v5022 = vunpack.c.l.b16 %v4830
    %v5023 = vunpack.c.l.b16 %v4831
    %v5024 = vunpack.c.l.b16 %v4832
    %v5025 = vunpack.c.l.b16 %v4833
    %v5026 = vunpack.c.l.b16 %v4834
    %v5027 = vunpack.c.l.b16 %v4835
    %v5028 = vunpack.c.l.b16 %v4836
    %v5029 = vunpack.c.l.b16 %v4837
    %v5030 = vunpack.c.l.b16 %v4838
    %v5031 = vunpack.c.l.b16 %v4839
    %v5032 = vunpack.c.l.b16 %v4840
    %v5033 = vunpack.c.l.b16 %v4841
    %v5034 = vunpack.c.l.b16 %v4842
    %v5035 = vunpack.c.l.b16 %v4843
    %v5036 = vunpack.c.l.b16 %v4844
    %v5037 = vunpack.c.l.b16 %v4845
    %v5038 = vunpack.c.l.b16 %v4846
    %v5039 = vunpack.c.l.b16 %v4847
    %v5040 = vunpack.c.l.b16 %v4848
    %v5041 = vunpack.c.l.b16 %v4849
    %v5042 = vunpack.c.l.b16 %v4850
    %v5043 = vunpack.c.l.b16 %v4851
    %v5044 = vunpack.c.l.b16 %v4852
    %v5045 = vunpack.c.l.b16 %v4853
    %v5046 = vunpack.c.l.b16 %v4854
    %v5047 = vunpack.c.l.b16 %v4855
    %v5048 = vunpack.c.l.b16 %v4856
    %v5049 = vunpack.c.l.b16 %v4857
    %v5050 = vunpack.c.l.b16 %v4858
    %v5051 = vunpack.c.l.b16 %v4859
    %v5052 = vunpack.c.l.b16 %v4860
    %v5053 = vunpack.c.l.b16 %v4861
    %v5054 = vunpack.c.l.b16 %v4862
    %v5055 = vunpack.c.l.b16 %v4863
    %v5056 = vunpack.c.l.b16 %v4864
    %v5057 = vunpack.c.l.b16 %v4865
    %v5058 = vunpack.c.l.b16 %v4866
    %v5059 = vunpack.c.l.b16 %v4867
    %v5060 = vunpack.c.l.b16 %v4868
    %v5061 = vunpack.c.l.b16 %v4869
    %v5062 = vunpack.c.l.b16 %v4870
    %v5063 = vunpack.c.l.b16 %v4871
    %v5064 = vunpack.c.l.b16 %v4872
    %v5065 = vunpack.c.l.b16 %v4873
    %v5066 = vunpack.c.l.b16 %v4874
    %v5067 = vunpack.c.l.b16 %v4875
    %v5068 = vunpack.c.l.b16 %v4876
    %v5069 = vunpack.c.l.b16 %v4877
    %v5070 = vunpack.c.l.b16 %v4878
    %v5071 = vunpack.c.l.b16 %v4879
    %v5072 = vunpack.c.l.b16 %v4880
    %v5073 = vunpack.c.l.b16 %v4881
    %v5074 = vunpack.c.l.b16 %v4882
    %v5075 = vunpack.c.l.b16 %v4883
    %v5076 = vunpack.c.l.b16 %v4884
    %v5077 = vunpack.c.l.b16 %v4885
    %v5078 = vunpack.c.l.b16 %v4886
    %v5079 = vunpack.c.l.b16 %v4887
    %v5080 = vunpack.c.l.b16 %v4888
    %v5081 = vunpack.c.l.b16 %v4889
    %v5082 = vunpack.c.l.b16 %v4890
    %v5083 = vunpack.c.l.b16 %v4891
    %v5084 = vunpack.c.l.b16 %v4892
    %v5085 = vunpack.c.l.b16 %v4893
    %v5086 = vunpack.c.l.b16 %v4894
    %v5087 = vunpack.c.l.b16 %v4895
    %v5088 = vunpack.c.l.b16 %v4896
    %v5089 = vunpack.c.l.b16 %v4897
    %v5090 = vunpack.c.l.b16 %v4898
    %v5091 = vunpack.c.l.b16 %v4899
    %v5092 = vunpack.c.l.b16 %v4900
    %v5093 = vunpack.c.l.b16 %v4901
    %v5094 = vunpack.c.l.b16 %v4902
    %v5095 = vunpack.c.l.b16 %v4903
    %v5096 = vunpack.c.l.b16 %v4904
    %v5097 = vunpack.c.l.b16 %v4905
    %v5098 = vunpack.c.l.b16 %v4906
    %v5099 = vunpack.c.l.b16 %v4907
    %v5100 = vunpack.c.l.b16 %v4908
    %v5101 = vunpack.c.l.b16 %v4909
    %v5102 = vunpack.c.l.b16 %v4910
    %v5103 = vunpack.c.l.b16 %v4911
    %v5104 = vunpack.c.l.b16 %v4912
    %v5105 = vunpack.c.l.b16 %v4913
    %v5106 = vunpack.c.l.b16 %v4914
    %v5107 = vunpack.c.l.b16 %v4915
    %v5108 = vunpack.c.l.b16 %v4916
    %v5109 = vunpack.c.l.b16 %v4917
    %v5110 = vunpack.c.l.b16 %v4918
    %v5111 = vunpack.c.l.b16 %v4919
    %v5112 = vunpack.c.l.b16 %v4920
    %v5113 = vunpack.c.l.b16 %v4921
    %v5114 = vpack.c.b16 %v5019, %v5018
    %v5115 = vpack.c.b16 %v5020, %v5020
    %v5116 = vpack.c.b16 %v5022, %v5021
    %v5117 = vpack.c.b16 %v5023, %v5023
    %v5118 = vpack.c.b16 %v5025, %v5024
    %v5119 = vpack.c.b16 %v5026, %v5026
    %v5120 = vpack.c.b16 %v5028, %v5027
    %v5121 = vpack.c.b16 %v5029, %v5029
    %v5122 = vpack.c.b16 %v5031, %v5030
    %v5123 = vpack.c.b16 %v5032, %v5032
    %v5124 = vpack.c.b16 %v5034, %v5033
    %v5125 = vpack.c.b16 %v5035, %v5035
    %v5126 = vpack.c.b16 %v5037, %v5036
    %v5127 = vpack.c.b16 %v5038, %v5038
    %v5128 = vpack.c.b16 %v5040, %v5039
    %v5129 = vpack.c.b16 %v5041, %v5041
    %v5130 = vpack.c.b16 %v5043, %v5042
    %v5131 = vpack.c.b16 %v5044, %v5044
    %v5132 = vpack.c.b16 %v5046, %v5045
    %v5133 = vpack.c.b16 %v5047, %v5047
    %v5134 = vpack.c.b16 %v5049, %v5048
    %v5135 = vpack.c.b16 %v5050, %v5050
    %v5136 = vpack.c.b16 %v5052, %v5051
    %v5137 = vpack.c.b16 %v5053, %v5053
    %v5138 = vpack.c.b16 %v5055, %v5054
    %v5139 = vpack.c.b16 %v5056, %v5056
    %v5140 = vpack.c.b16 %v5058, %v5057
    %v5141 = vpack.c.b16 %v5059, %v5059
    %v5142 = vpack.c.b16 %v5061, %v5060
    %v5143 = vpack.c.b16 %v5062, %v5062
    %v5144 = vpack.c.b16 %v5064, %v5063
    %v5145 = vpack.c.b16 %v5065, %v5065
    %v5146 = vpack.c.b16 %v5067, %v5066
    %v5147 = vpack.c.b16 %v5068, %v5068
    %v5148 = vpack.c.b16 %v5070, %v5069
    %v5149 = vpack.c.b16 %v5071, %v5071
    %v5150 = vpack.c.b16 %v5073, %v5072
    %v5151 = vpack.c.b16 %v5074, %v5074
    %v5152 = vpack.c.b16 %v5076, %v5075
    %v5153 = vpack.c.b16 %v5077, %v5077
    %v5154 = vpack.c.b16 %v5079, %v5078
    %v5155 = vpack.c.b16 %v5080, %v5080
    %v5156 = vpack.c.b16 %v5082, %v5081
    %v5157 = vpack.c.b16 %v5083, %v5083
    %v5158 = vpack.c.b16 %v5085, %v5084
    %v5159 = vpack.c.b16 %v5086, %v5086
    %v5160 = vpack.c.b16 %v5088, %v5087
    %v5161 = vpack.c.b16 %v5089, %v5089
    %v5162 = vpack.c.b16 %v5091, %v5090
    %v5163 = vpack.c.b16 %v5092, %v5092
    %v5164 = vpack.c.b16 %v5094, %v5093
    %v5165 = vpack.c.b16 %v5095, %v5095
    %v5166 = vpack.c.b16 %v5097, %v5096
    %v5167 = vpack.c.b16 %v5098, %v5098
    %v5168 = vpack.c.b16 %v5100, %v5099
    %v5169 = vpack.c.b16 %v5101, %v5101
    %v5170 = vpack.c.b16 %v5103, %v5102
    %v5171 = vpack.c.b16 %v5104, %v5104
    %v5172 = vpack.c.b16 %v5106, %v5105
    %v5173 = vpack.c.b16 %v5107, %v5107
    %v5174 = vpack.c.b16 %v5109, %v5108
    %v5175 = vpack.c.b16 %v5110, %v5110
    %v5176 = vpack.c.b16 %v5112, %v5111
    %v5177 = vpack.c.b16 %v5113, %v5113
    %v5179 = vshrl.u32 %v5114, 16
    %v5181 = vshll.u32 %v5114, 16
    %v5183 = vrot.slane %v5181, 1
    %v5184 = vor.u32 %v5179, %v5183
    %v5186 = vshll.u32 %v5115, 16
    %v5188 = vrot.slane %v5186, 1
    %v5189 = vsel %vm2934, %v5184, %v5188
    %v5191 = vshrl.u32 %v5116, 16
    %v5193 = vshll.u32 %v5116, 16
    %v5195 = vrot.slane %v5193, 1
    %v5196 = vor.u32 %v5191, %v5195
    %v5198 = vshll.u32 %v5117, 16
    %v5200 = vrot.slane %v5198, 1
    %v5201 = vsel %vm2934, %v5196, %v5200
    %v5203 = vshrl.u32 %v5118, 16
    %v5205 = vshll.u32 %v5118, 16
    %v5207 = vrot.slane %v5205, 1
    %v5208 = vor.u32 %v5203, %v5207
    %v5210 = vshll.u32 %v5119, 16
    %v5212 = vrot.slane %v5210, 1
    %v5213 = vsel %vm2934, %v5208, %v5212
    %v5215 = vshrl.u32 %v5120, 16
    %v5217 = vshll.u32 %v5120, 16
    %v5219 = vrot.slane %v5217, 1
    %v5220 = vor.u32 %v5215, %v5219
    %v5222 = vshll.u32 %v5121, 16
    %v5224 = vrot.slane %v5222, 1
    %v5225 = vsel %vm2934, %v5220, %v5224
    %v5227 = vshrl.u32 %v5122, 16
    %v5229 = vshll.u32 %v5122, 16
    %v5231 = vrot.slane %v5229, 1
    %v5232 = vor.u32 %v5227, %v5231
    %v5234 = vshll.u32 %v5123, 16
    %v5236 = vrot.slane %v5234, 1
    %v5237 = vsel %vm2934, %v5232, %v5236
    %v5239 = vshrl.u32 %v5124, 16
    %v5241 = vshll.u32 %v5124, 16
    %v5243 = vrot.slane %v5241, 1
    %v5244 = vor.u32 %v5239, %v5243
    %v5246 = vshll.u32 %v5125, 16
    %v5248 = vrot.slane %v5246, 1
    %v5249 = vsel %vm2934, %v5244, %v5248
    %v5251 = vshrl.u32 %v5126, 16
    %v5253 = vshll.u32 %v5126, 16
    %v5255 = vrot.slane %v5253, 1
    %v5256 = vor.u32 %v5251, %v5255
    %v5258 = vshll.u32 %v5127, 16
    %v5260 = vrot.slane %v5258, 1
    %v5261 = vsel %vm2934, %v5256, %v5260
    %v5263 = vshrl.u32 %v5128, 16
    %v5265 = vshll.u32 %v5128, 16
    %v5267 = vrot.slane %v5265, 1
    %v5268 = vor.u32 %v5263, %v5267
    %v5270 = vshll.u32 %v5129, 16
    %v5272 = vrot.slane %v5270, 1
    %v5273 = vsel %vm2934, %v5268, %v5272
    %v5275 = vshrl.u32 %v5130, 16
    %v5277 = vshll.u32 %v5130, 16
    %v5279 = vrot.slane %v5277, 1
    %v5280 = vor.u32 %v5275, %v5279
    %v5282 = vshll.u32 %v5131, 16
    %v5284 = vrot.slane %v5282, 1
    %v5285 = vsel %vm2934, %v5280, %v5284
    %v5287 = vshrl.u32 %v5132, 16
    %v5289 = vshll.u32 %v5132, 16
    %v5291 = vrot.slane %v5289, 1
    %v5292 = vor.u32 %v5287, %v5291
    %v5294 = vshll.u32 %v5133, 16
    %v5296 = vrot.slane %v5294, 1
    %v5297 = vsel %vm2934, %v5292, %v5296
    %v5299 = vshrl.u32 %v5134, 16
    %v5301 = vshll.u32 %v5134, 16
    %v5303 = vrot.slane %v5301, 1
    %v5304 = vor.u32 %v5299, %v5303
    %v5306 = vshll.u32 %v5135, 16
    %v5308 = vrot.slane %v5306, 1
    %v5309 = vsel %vm2934, %v5304, %v5308
    %v5311 = vshrl.u32 %v5136, 16
    %v5313 = vshll.u32 %v5136, 16
    %v5315 = vrot.slane %v5313, 1
    %v5316 = vor.u32 %v5311, %v5315
    %v5318 = vshll.u32 %v5137, 16
    %v5320 = vrot.slane %v5318, 1
    %v5321 = vsel %vm2934, %v5316, %v5320
    %v5323 = vshrl.u32 %v5138, 16
    %v5325 = vshll.u32 %v5138, 16
    %v5327 = vrot.slane %v5325, 1
    %v5328 = vor.u32 %v5323, %v5327
    %v5330 = vshll.u32 %v5139, 16
    %v5332 = vrot.slane %v5330, 1
    %v5333 = vsel %vm2934, %v5328, %v5332
    %v5335 = vshrl.u32 %v5140, 16
    %v5337 = vshll.u32 %v5140, 16
    %v5339 = vrot.slane %v5337, 1
    %v5340 = vor.u32 %v5335, %v5339
    %v5342 = vshll.u32 %v5141, 16
    %v5344 = vrot.slane %v5342, 1
    %v5345 = vsel %vm2934, %v5340, %v5344
    %v5347 = vshrl.u32 %v5142, 16
    %v5349 = vshll.u32 %v5142, 16
    %v5351 = vrot.slane %v5349, 1
    %v5352 = vor.u32 %v5347, %v5351
    %v5354 = vshll.u32 %v5143, 16
    %v5356 = vrot.slane %v5354, 1
    %v5357 = vsel %vm2934, %v5352, %v5356
    %v5359 = vshrl.u32 %v5144, 16
    %v5361 = vshll.u32 %v5144, 16
    %v5363 = vrot.slane %v5361, 1
    %v5364 = vor.u32 %v5359, %v5363
    %v5366 = vshll.u32 %v5145, 16
    %v5368 = vrot.slane %v5366, 1
    %v5369 = vsel %vm2934, %v5364, %v5368
    %v5371 = vshrl.u32 %v5146, 16
    %v5373 = vshll.u32 %v5146, 16
    %v5375 = vrot.slane %v5373, 1
    %v5376 = vor.u32 %v5371, %v5375
    %v5378 = vshll.u32 %v5147, 16
    %v5380 = vrot.slane %v5378, 1
    %v5381 = vsel %vm2934, %v5376, %v5380
    %v5383 = vshrl.u32 %v5148, 16
    %v5385 = vshll.u32 %v5148, 16
    %v5387 = vrot.slane %v5385, 1
    %v5388 = vor.u32 %v5383, %v5387
    %v5390 = vshll.u32 %v5149, 16
    %v5392 = vrot.slane %v5390, 1
    %v5393 = vsel %vm2934, %v5388, %v5392
    %v5395 = vshrl.u32 %v5150, 16
    %v5397 = vshll.u32 %v5150, 16
    %v5399 = vrot.slane %v5397, 1
    %v5400 = vor.u32 %v5395, %v5399
    %v5402 = vshll.u32 %v5151, 16
    %v5404 = vrot.slane %v5402, 1
    %v5405 = vsel %vm2934, %v5400, %v5404
    %v5407 = vshrl.u32 %v5152, 16
    %v5409 = vshll.u32 %v5152, 16
    %v5411 = vrot.slane %v5409, 1
    %v5412 = vor.u32 %v5407, %v5411
    %v5414 = vshll.u32 %v5153, 16
    %v5416 = vrot.slane %v5414, 1
    %v5417 = vsel %vm2934, %v5412, %v5416
    %v5419 = vshrl.u32 %v5154, 16
    %v5421 = vshll.u32 %v5154, 16
    %v5423 = vrot.slane %v5421, 1
    %v5424 = vor.u32 %v5419, %v5423
    %v5426 = vshll.u32 %v5155, 16
    %v5428 = vrot.slane %v5426, 1
    %v5429 = vsel %vm2934, %v5424, %v5428
    %v5431 = vshrl.u32 %v5156, 16
    %v5433 = vshll.u32 %v5156, 16
    %v5435 = vrot.slane %v5433, 1
    %v5436 = vor.u32 %v5431, %v5435
    %v5438 = vshll.u32 %v5157, 16
    %v5440 = vrot.slane %v5438, 1
    %v5441 = vsel %vm2934, %v5436, %v5440
    %v5443 = vshrl.u32 %v5158, 16
    %v5445 = vshll.u32 %v5158, 16
    %v5447 = vrot.slane %v5445, 1
    %v5448 = vor.u32 %v5443, %v5447
    %v5450 = vshll.u32 %v5159, 16
    %v5452 = vrot.slane %v5450, 1
    %v5453 = vsel %vm2934, %v5448, %v5452
    %v5455 = vshrl.u32 %v5160, 16
    %v5457 = vshll.u32 %v5160, 16
    %v5459 = vrot.slane %v5457, 1
    %v5460 = vor.u32 %v5455, %v5459
    %v5462 = vshll.u32 %v5161, 16
    %v5464 = vrot.slane %v5462, 1
    %v5465 = vsel %vm2934, %v5460, %v5464
    %v5467 = vshrl.u32 %v5162, 16
    %v5469 = vshll.u32 %v5162, 16
    %v5471 = vrot.slane %v5469, 1
    %v5472 = vor.u32 %v5467, %v5471
    %v5474 = vshll.u32 %v5163, 16
    %v5476 = vrot.slane %v5474, 1
    %v5477 = vsel %vm2934, %v5472, %v5476
    %v5479 = vshrl.u32 %v5164, 16
    %v5481 = vshll.u32 %v5164, 16
    %v5483 = vrot.slane %v5481, 1
    %v5484 = vor.u32 %v5479, %v5483
    %v5486 = vshll.u32 %v5165, 16
    %v5488 = vrot.slane %v5486, 1
    %v5489 = vsel %vm2934, %v5484, %v5488
    %v5491 = vshrl.u32 %v5166, 16
    %v5493 = vshll.u32 %v5166, 16
    %v5495 = vrot.slane %v5493, 1
    %v5496 = vor.u32 %v5491, %v5495
    %v5498 = vshll.u32 %v5167, 16
    %v5500 = vrot.slane %v5498, 1
    %v5501 = vsel %vm2934, %v5496, %v5500
    %v5503 = vshrl.u32 %v5168, 16
    %v5505 = vshll.u32 %v5168, 16
    %v5507 = vrot.slane %v5505, 1
    %v5508 = vor.u32 %v5503, %v5507
    %v5510 = vshll.u32 %v5169, 16
    %v5512 = vrot.slane %v5510, 1
    %v5513 = vsel %vm2934, %v5508, %v5512
    %v5515 = vshrl.u32 %v5170, 16
    %v5517 = vshll.u32 %v5170, 16
    %v5519 = vrot.slane %v5517, 1
    %v5520 = vor.u32 %v5515, %v5519
    %v5522 = vshll.u32 %v5171, 16
    %v5524 = vrot.slane %v5522, 1
    %v5525 = vsel %vm2934, %v5520, %v5524
    %v5527 = vshrl.u32 %v5172, 16
    %v5529 = vshll.u32 %v5172, 16
    %v5531 = vrot.slane %v5529, 1
    %v5532 = vor.u32 %v5527, %v5531
    %v5534 = vshll.u32 %v5173, 16
    %v5536 = vrot.slane %v5534, 1
    %v5537 = vsel %vm2934, %v5532, %v5536
    %v5539 = vshrl.u32 %v5174, 16
    %v5541 = vshll.u32 %v5174, 16
    %v5543 = vrot.slane %v5541, 1
    %v5544 = vor.u32 %v5539, %v5543
    %v5546 = vshll.u32 %v5175, 16
    %v5548 = vrot.slane %v5546, 1
    %v5549 = vsel %vm2934, %v5544, %v5548
    %v5551 = vshrl.u32 %v5176, 16
    %v5553 = vshll.u32 %v5176, 16
    %v5555 = vrot.slane %v5553, 1
    %v5556 = vor.u32 %v5551, %v5555
    %v5558 = vshll.u32 %v5177, 16
    %v5560 = vrot.slane %v5558, 1
    %v5561 = vsel %vm2934, %v5556, %v5560
    %5562 = vrot.lane.b32.xlu0 %v5189, 20
    %v5563 = vpop.permute.xlu0 %5562
    %5564 = vrot.lane.b32.xlu0 %v5201, 20
    %v5565 = vpop.permute.xlu0 %5564
    %5566 = vrot.lane.b32.xlu0 %v5213, 20
    %v5567 = vpop.permute.xlu0 %5566
    %5568 = vrot.lane.b32.xlu0 %v5225, 20
    %v5569 = vpop.permute.xlu0 %5568
    %5570 = vrot.lane.b32.xlu0 %v5237, 20
    %v5571 = vpop.permute.xlu0 %5570
    %5572 = vrot.lane.b32.xlu0 %v5249, 20
    %v5573 = vpop.permute.xlu0 %5572
    %5574 = vrot.lane.b32.xlu0 %v5261, 20
    %v5575 = vpop.permute.xlu0 %5574
    %5576 = vrot.lane.b32.xlu0 %v5273, 20
    %v5577 = vpop.permute.xlu0 %5576
    %5578 = vrot.lane.b32.xlu0 %v5285, 20
    %v5579 = vpop.permute.xlu0 %5578
    %5580 = vrot.lane.b32.xlu0 %v5297, 20
    %v5581 = vpop.permute.xlu0 %5580
    %5582 = vrot.lane.b32.xlu0 %v5309, 20
    %v5583 = vpop.permute.xlu0 %5582
    %5584 = vrot.lane.b32.xlu0 %v5321, 20
    %v5585 = vpop.permute.xlu0 %5584
    %5586 = vrot.lane.b32.xlu0 %v5333, 20
    %v5587 = vpop.permute.xlu0 %5586
    %5588 = vrot.lane.b32.xlu0 %v5345, 20
    %v5589 = vpop.permute.xlu0 %5588
    %5590 = vrot.lane.b32.xlu0 %v5357, 20
    %v5591 = vpop.permute.xlu0 %5590
    %5592 = vrot.lane.b32.xlu0 %v5369, 20
    %v5593 = vpop.permute.xlu0 %5592
    %5594 = vrot.lane.b32.xlu0 %v5381, 20
    %v5595 = vpop.permute.xlu0 %5594
    %5596 = vrot.lane.b32.xlu0 %v5393, 20
    %v5597 = vpop.permute.xlu0 %5596
    %5598 = vrot.lane.b32.xlu0 %v5405, 20
    %v5599 = vpop.permute.xlu0 %5598
    %5600 = vrot.lane.b32.xlu0 %v5417, 20
    %v5601 = vpop.permute.xlu0 %5600
    %5602 = vrot.lane.b32.xlu0 %v5429, 20
    %v5603 = vpop.permute.xlu0 %5602
    %5604 = vrot.lane.b32.xlu0 %v5441, 20
    %v5605 = vpop.permute.xlu0 %5604
    %5606 = vrot.lane.b32.xlu0 %v5453, 20
    %v5607 = vpop.permute.xlu0 %5606
    %5608 = vrot.lane.b32.xlu0 %v5465, 20
    %v5609 = vpop.permute.xlu0 %5608
    %5610 = vrot.lane.b32.xlu0 %v5477, 20
    %v5611 = vpop.permute.xlu0 %5610
    %5612 = vrot.lane.b32.xlu0 %v5489, 20
    %v5613 = vpop.permute.xlu0 %5612
    %5614 = vrot.lane.b32.xlu0 %v5501, 20
    %v5615 = vpop.permute.xlu0 %5614
    %5616 = vrot.lane.b32.xlu0 %v5513, 20
    %v5617 = vpop.permute.xlu0 %5616
    %5618 = vrot.lane.b32.xlu0 %v5525, 20
    %v5619 = vpop.permute.xlu0 %5618
    %5620 = vrot.lane.b32.xlu0 %v5537, 20
    %v5621 = vpop.permute.xlu0 %5620
    %5622 = vrot.lane.b32.xlu0 %v5549, 20
    %v5623 = vpop.permute.xlu0 %5622
    %5624 = vrot.lane.b32.xlu0 %v5561, 20
    %v5625 = vpop.permute.xlu0 %5624
    %vm5658 = vcmask 195744
    %5659 = vst.msk [vmem:[#allocation3] sm:$0xff] %vm5658, %v5563
    %5660 = vst.msk [vmem:[#allocation3 + $0x8] sm:$0xff] %vm5658, %v5565
    %5661 = vst.msk [vmem:[#allocation3 + $0x10] sm:$0xff] %vm5658, %v5567
    %5662 = vst.msk [vmem:[#allocation3 + $0x18] sm:$0xff] %vm5658, %v5569
    %5663 = vst.msk [vmem:[#allocation3 + $0x20] sm:$0xff] %vm5658, %v5571
    %5664 = vst.msk [vmem:[#allocation3 + $0x28] sm:$0xff] %vm5658, %v5573
    %5665 = vst.msk [vmem:[#allocation3 + $0x30] sm:$0xff] %vm5658, %v5575
    %5666 = vst.msk [vmem:[#allocation3 + $0x38] sm:$0xff] %vm5658, %v5577
    %5667 = vst.msk [vmem:[#allocation3 + $0x40] sm:$0xff] %vm5658, %v5579
    %5668 = vst.msk [vmem:[#allocation3 + $0x48] sm:$0xff] %vm5658, %v5581
    %5669 = vst.msk [vmem:[#allocation3 + $0x50] sm:$0xff] %vm5658, %v5583
    %5670 = vst.msk [vmem:[#allocation3 + $0x58] sm:$0xff] %vm5658, %v5585
    %5671 = vst.msk [vmem:[#allocation3 + $0x60] sm:$0xff] %vm5658, %v5587
    %5672 = vst.msk [vmem:[#allocation3 + $0x68] sm:$0xff] %vm5658, %v5589
    %5673 = vst.msk [vmem:[#allocation3 + $0x70] sm:$0xff] %vm5658, %v5591
    %5674 = vst.msk [vmem:[#allocation3 + $0x78] sm:$0xff] %vm5658, %v5593
    %5675 = vst.msk [vmem:[#allocation3 + $0x80] sm:$0xff] %vm5658, %v5595
    %5676 = vst.msk [vmem:[#allocation3 + $0x88] sm:$0xff] %vm5658, %v5597
    %5677 = vst.msk [vmem:[#allocation3 + $0x90] sm:$0xff] %vm5658, %v5599
    %5678 = vst.msk [vmem:[#allocation3 + $0x98] sm:$0xff] %vm5658, %v5601
    %5679 = vst.msk [vmem:[#allocation3 + $0xa0] sm:$0xff] %vm5658, %v5603
    %5680 = vst.msk [vmem:[#allocation3 + $0xa8] sm:$0xff] %vm5658, %v5605
    %5681 = vst.msk [vmem:[#allocation3 + $0xb0] sm:$0xff] %vm5658, %v5607
    %5682 = vst.msk [vmem:[#allocation3 + $0xb8] sm:$0xff] %vm5658, %v5609
    %5683 = vst.msk [vmem:[#allocation3 + $0xc0] sm:$0xff] %vm5658, %v5611
    %5684 = vst.msk [vmem:[#allocation3 + $0xc8] sm:$0xff] %vm5658, %v5613
    %5685 = vst.msk [vmem:[#allocation3 + $0xd0] sm:$0xff] %vm5658, %v5615
    %5686 = vst.msk [vmem:[#allocation3 + $0xd8] sm:$0xff] %vm5658, %v5617
    %5687 = vst.msk [vmem:[#allocation3 + $0xe0] sm:$0xff] %vm5658, %v5619
    %5688 = vst.msk [vmem:[#allocation3 + $0xe8] sm:$0xff] %vm5658, %v5621
    %5689 = vst.msk [vmem:[#allocation3 + $0xf0] sm:$0xff] %vm5658, %v5623
    %5690 = vst.msk [vmem:[#allocation3 + $0xf8] sm:$0xff] %vm5658, %v5625
    %s5691 = scalar_lea.vmem [#allocation2], 32
    %v5692 = vld [vmem:[%s5691] sm:$0x8]
    %v5693 = vld [vmem:[%s5691 + $0x4] sm:$0xf]
    %v5694 = vld [vmem:[%s5691 + $0x8] sm:$0xf]
    %v5695 = vld [vmem:[%s5691 + $0x10] sm:$0x8]
    %v5696 = vld [vmem:[%s5691 + $0x14] sm:$0xf]
    %v5697 = vld [vmem:[%s5691 + $0x18] sm:$0xf]
    %v5698 = vld [vmem:[%s5691 + $0x20] sm:$0x8]
    %v5699 = vld [vmem:[%s5691 + $0x24] sm:$0xf]
    %v5700 = vld [vmem:[%s5691 + $0x28] sm:$0xf]
    %v5701 = vld [vmem:[%s5691 + $0x30] sm:$0x8]
    %v5702 = vld [vmem:[%s5691 + $0x34] sm:$0xf]
    %v5703 = vld [vmem:[%s5691 + $0x38] sm:$0xf]
    %v5704 = vld [vmem:[%s5691 + $0x40] sm:$0x8]
    %v5705 = vld [vmem:[%s5691 + $0x44] sm:$0xf]
    %v5706 = vld [vmem:[%s5691 + $0x48] sm:$0xf]
    %v5707 = vld [vmem:[%s5691 + $0x50] sm:$0x8]
    %v5708 = vld [vmem:[%s5691 + $0x54] sm:$0xf]
    %v5709 = vld [vmem:[%s5691 + $0x58] sm:$0xf]
    %v5710 = vld [vmem:[%s5691 + $0x60] sm:$0x8]
    %v5711 = vld [vmem:[%s5691 + $0x64] sm:$0xf]
    %v5712 = vld [vmem:[%s5691 + $0x68] sm:$0xf]
    %v5713 = vld [vmem:[%s5691 + $0x70] sm:$0x8]
    %v5714 = vld [vmem:[%s5691 + $0x74] sm:$0xf]
    %v5715 = vld [vmem:[%s5691 + $0x78] sm:$0xf]
    %v5716 = vld [vmem:[%s5691 + $0x80] sm:$0x8]
    %v5717 = vld [vmem:[%s5691 + $0x84] sm:$0xf]
    %v5718 = vld [vmem:[%s5691 + $0x88] sm:$0xf]
    %v5719 = vld [vmem:[%s5691 + $0x90] sm:$0x8]
    %v5720 = vld [vmem:[%s5691 + $0x94] sm:$0xf]
    %v5721 = vld [vmem:[%s5691 + $0x98] sm:$0xf]
    %v5722 = vld [vmem:[%s5691 + $0xa0] sm:$0x8]
    %v5723 = vld [vmem:[%s5691 + $0xa4] sm:$0xf]
    %v5724 = vld [vmem:[%s5691 + $0xa8] sm:$0xf]
    %v5725 = vld [vmem:[%s5691 + $0xb0] sm:$0x8]
    %v5726 = vld [vmem:[%s5691 + $0xb4] sm:$0xf]
    %v5727 = vld [vmem:[%s5691 + $0xb8] sm:$0xf]
    %v5728 = vld [vmem:[%s5691 + $0xc0] sm:$0x8]
    %v5729 = vld [vmem:[%s5691 + $0xc4] sm:$0xf]
    %v5730 = vld [vmem:[%s5691 + $0xc8] sm:$0xf]
    %v5731 = vld [vmem:[%s5691 + $0xd0] sm:$0x8]
    %v5732 = vld [vmem:[%s5691 + $0xd4] sm:$0xf]
    %v5733 = vld [vmem:[%s5691 + $0xd8] sm:$0xf]
    %v5734 = vld [vmem:[%s5691 + $0xe0] sm:$0x8]
    %v5735 = vld [vmem:[%s5691 + $0xe4] sm:$0xf]
    %v5736 = vld [vmem:[%s5691 + $0xe8] sm:$0xf]
    %v5737 = vld [vmem:[%s5691 + $0xf0] sm:$0x8]
    %v5738 = vld [vmem:[%s5691 + $0xf4] sm:$0xf]
    %v5739 = vld [vmem:[%s5691 + $0xf8] sm:$0xf]
    %v5740 = vld [vmem:[%s5691 + $0x120] sm:$0x8]
    %v5741 = vld [vmem:[%s5691 + $0x124] sm:$0xf]
    %v5742 = vld [vmem:[%s5691 + $0x128] sm:$0xf]
    %v5743 = vld [vmem:[%s5691 + $0x130] sm:$0x8]
    %v5744 = vld [vmem:[%s5691 + $0x134] sm:$0xf]
    %v5745 = vld [vmem:[%s5691 + $0x138] sm:$0xf]
    %v5746 = vld [vmem:[%s5691 + $0x140] sm:$0x8]
    %v5747 = vld [vmem:[%s5691 + $0x144] sm:$0xf]
    %v5748 = vld [vmem:[%s5691 + $0x148] sm:$0xf]
    %v5749 = vld [vmem:[%s5691 + $0x150] sm:$0x8]
    %v5750 = vld [vmem:[%s5691 + $0x154] sm:$0xf]
    %v5751 = vld [vmem:[%s5691 + $0x158] sm:$0xf]
    %v5752 = vld [vmem:[%s5691 + $0x160] sm:$0x8]
    %v5753 = vld [vmem:[%s5691 + $0x164] sm:$0xf]
    %v5754 = vld [vmem:[%s5691 + $0x168] sm:$0xf]
    %v5755 = vld [vmem:[%s5691 + $0x170] sm:$0x8]
    %v5756 = vld [vmem:[%s5691 + $0x174] sm:$0xf]
    %v5757 = vld [vmem:[%s5691 + $0x178] sm:$0xf]
    %v5758 = vld [vmem:[%s5691 + $0x180] sm:$0x8]
    %v5759 = vld [vmem:[%s5691 + $0x184] sm:$0xf]
    %v5760 = vld [vmem:[%s5691 + $0x188] sm:$0xf]
    %v5761 = vld [vmem:[%s5691 + $0x190] sm:$0x8]
    %v5762 = vld [vmem:[%s5691 + $0x194] sm:$0xf]
    %v5763 = vld [vmem:[%s5691 + $0x198] sm:$0xf]
    %v5764 = vld [vmem:[%s5691 + $0x1a0] sm:$0x8]
    %v5765 = vld [vmem:[%s5691 + $0x1a4] sm:$0xf]
    %v5766 = vld [vmem:[%s5691 + $0x1a8] sm:$0xf]
    %v5767 = vld [vmem:[%s5691 + $0x1b0] sm:$0x8]
    %v5768 = vld [vmem:[%s5691 + $0x1b4] sm:$0xf]
    %v5769 = vld [vmem:[%s5691 + $0x1b8] sm:$0xf]
    %v5770 = vld [vmem:[%s5691 + $0x1c0] sm:$0x8]
    %v5771 = vld [vmem:[%s5691 + $0x1c4] sm:$0xf]
    %v5772 = vld [vmem:[%s5691 + $0x1c8] sm:$0xf]
    %v5773 = vld [vmem:[%s5691 + $0x1d0] sm:$0x8]
    %v5774 = vld [vmem:[%s5691 + $0x1d4] sm:$0xf]
    %v5775 = vld [vmem:[%s5691 + $0x1d8] sm:$0xf]
    %v5776 = vld [vmem:[%s5691 + $0x1e0] sm:$0x8]
    %v5777 = vld [vmem:[%s5691 + $0x1e4] sm:$0xf]
    %v5778 = vld [vmem:[%s5691 + $0x1e8] sm:$0xf]
    %v5779 = vld [vmem:[%s5691 + $0x1f0] sm:$0x8]
    %v5780 = vld [vmem:[%s5691 + $0x1f4] sm:$0xf]
    %v5781 = vld [vmem:[%s5691 + $0x1f8] sm:$0xf]
    %v5782 = vld [vmem:[%s5691 + $0x200] sm:$0x8]
    %v5783 = vld [vmem:[%s5691 + $0x204] sm:$0xf]
    %v5784 = vld [vmem:[%s5691 + $0x208] sm:$0xf]
    %v5785 = vld [vmem:[%s5691 + $0x210] sm:$0x8]
    %v5786 = vld [vmem:[%s5691 + $0x214] sm:$0xf]
    %v5787 = vld [vmem:[%s5691 + $0x218] sm:$0xf]
    %v5884 = vunpack.c.l.b16 %v5692
    %v5885 = vunpack.c.l.b16 %v5693
    %v5886 = vunpack.c.l.b16 %v5694
    %v5887 = vunpack.c.l.b16 %v5695
    %v5888 = vunpack.c.l.b16 %v5696
    %v5889 = vunpack.c.l.b16 %v5697
    %v5890 = vunpack.c.l.b16 %v5698
    %v5891 = vunpack.c.l.b16 %v5699
    %v5892 = vunpack.c.l.b16 %v5700
    %v5893 = vunpack.c.l.b16 %v5701
    %v5894 = vunpack.c.l.b16 %v5702
    %v5895 = vunpack.c.l.b16 %v5703
    %v5896 = vunpack.c.l.b16 %v5704
    %v5897 = vunpack.c.l.b16 %v5705
    %v5898 = vunpack.c.l.b16 %v5706
    %v5899 = vunpack.c.l.b16 %v5707
    %v5900 = vunpack.c.l.b16 %v5708
    %v5901 = vunpack.c.l.b16 %v5709
    %v5902 = vunpack.c.l.b16 %v5710
    %v5903 = vunpack.c.l.b16 %v5711
    %v5904 = vunpack.c.l.b16 %v5712
    %v5905 = vunpack.c.l.b16 %v5713
    %v5906 = vunpack.c.l.b16 %v5714
    %v5907 = vunpack.c.l.b16 %v5715
    %v5908 = vunpack.c.l.b16 %v5716
    %v5909 = vunpack.c.l.b16 %v5717
    %v5910 = vunpack.c.l.b16 %v5718
    %v5911 = vunpack.c.l.b16 %v5719
    %v5912 = vunpack.c.l.b16 %v5720
    %v5913 = vunpack.c.l.b16 %v5721
    %v5914 = vunpack.c.l.b16 %v5722
    %v5915 = vunpack.c.l.b16 %v5723
    %v5916 = vunpack.c.l.b16 %v5724
    %v5917 = vunpack.c.l.b16 %v5725
    %v5918 = vunpack.c.l.b16 %v5726
    %v5919 = vunpack.c.l.b16 %v5727
    %v5920 = vunpack.c.l.b16 %v5728
    %v5921 = vunpack.c.l.b16 %v5729
    %v5922 = vunpack.c.l.b16 %v5730
    %v5923 = vunpack.c.l.b16 %v5731
    %v5924 = vunpack.c.l.b16 %v5732
    %v5925 = vunpack.c.l.b16 %v5733
    %v5926 = vunpack.c.l.b16 %v5734
    %v5927 = vunpack.c.l.b16 %v5735
    %v5928 = vunpack.c.l.b16 %v5736
    %v5929 = vunpack.c.l.b16 %v5737
    %v5930 = vunpack.c.l.b16 %v5738
    %v5931 = vunpack.c.l.b16 %v5739
    %v5932 = vunpack.c.l.b16 %v5740
    %v5933 = vunpack.c.l.b16 %v5741
    %v5934 = vunpack.c.l.b16 %v5742
    %v5935 = vunpack.c.l.b16 %v5743
    %v5936 = vunpack.c.l.b16 %v5744
    %v5937 = vunpack.c.l.b16 %v5745
    %v5938 = vunpack.c.l.b16 %v5746
    %v5939 = vunpack.c.l.b16 %v5747
    %v5940 = vunpack.c.l.b16 %v5748
    %v5941 = vunpack.c.l.b16 %v5749
    %v5942 = vunpack.c.l.b16 %v5750
    %v5943 = vunpack.c.l.b16 %v5751
    %v5944 = vunpack.c.l.b16 %v5752
    %v5945 = vunpack.c.l.b16 %v5753
    %v5946 = vunpack.c.l.b16 %v5754
    %v5947 = vunpack.c.l.b16 %v5755
    %v5948 = vunpack.c.l.b16 %v5756
    %v5949 = vunpack.c.l.b16 %v5757
    %v5950 = vunpack.c.l.b16 %v5758
    %v5951 = vunpack.c.l.b16 %v5759
    %v5952 = vunpack.c.l.b16 %v5760
    %v5953 = vunpack.c.l.b16 %v5761
    %v5954 = vunpack.c.l.b16 %v5762
    %v5955 = vunpack.c.l.b16 %v5763
    %v5956 = vunpack.c.l.b16 %v5764
    %v5957 = vunpack.c.l.b16 %v5765
    %v5958 = vunpack.c.l.b16 %v5766
    %v5959 = vunpack.c.l.b16 %v5767
    %v5960 = vunpack.c.l.b16 %v5768
    %v5961 = vunpack.c.l.b16 %v5769
    %v5962 = vunpack.c.l.b16 %v5770
    %v5963 = vunpack.c.l.b16 %v5771
    %v5964 = vunpack.c.l.b16 %v5772
    %v5965 = vunpack.c.l.b16 %v5773
    %v5966 = vunpack.c.l.b16 %v5774
    %v5967 = vunpack.c.l.b16 %v5775
    %v5968 = vunpack.c.l.b16 %v5776
    %v5969 = vunpack.c.l.b16 %v5777
    %v5970 = vunpack.c.l.b16 %v5778
    %v5971 = vunpack.c.l.b16 %v5779
    %v5972 = vunpack.c.l.b16 %v5780
    %v5973 = vunpack.c.l.b16 %v5781
    %v5974 = vunpack.c.l.b16 %v5782
    %v5975 = vunpack.c.l.b16 %v5783
    %v5976 = vunpack.c.l.b16 %v5784
    %v5977 = vunpack.c.l.b16 %v5785
    %v5978 = vunpack.c.l.b16 %v5786
    %v5979 = vunpack.c.l.b16 %v5787
    %v5980 = vpack.c.b16 %v5885, %v5884
    %v5981 = vpack.c.b16 %v5886, %v5886
    %v5982 = vpack.c.b16 %v5888, %v5887
    %v5983 = vpack.c.b16 %v5889, %v5889
    %v5984 = vpack.c.b16 %v5891, %v5890
    %v5985 = vpack.c.b16 %v5892, %v5892
    %v5986 = vpack.c.b16 %v5894, %v5893
    %v5987 = vpack.c.b16 %v5895, %v5895
    %v5988 = vpack.c.b16 %v5897, %v5896
    %v5989 = vpack.c.b16 %v5898, %v5898
    %v5990 = vpack.c.b16 %v5900, %v5899
    %v5991 = vpack.c.b16 %v5901, %v5901
    %v5992 = vpack.c.b16 %v5903, %v5902
    %v5993 = vpack.c.b16 %v5904, %v5904
    %v5994 = vpack.c.b16 %v5906, %v5905
    %v5995 = vpack.c.b16 %v5907, %v5907
    %v5996 = vpack.c.b16 %v5909, %v5908
    %v5997 = vpack.c.b16 %v5910, %v5910
    %v5998 = vpack.c.b16 %v5912, %v5911
    %v5999 = vpack.c.b16 %v5913, %v5913
    %v6000 = vpack.c.b16 %v5915, %v5914
    %v6001 = vpack.c.b16 %v5916, %v5916
    %v6002 = vpack.c.b16 %v5918, %v5917
    %v6003 = vpack.c.b16 %v5919, %v5919
    %v6004 = vpack.c.b16 %v5921, %v5920
    %v6005 = vpack.c.b16 %v5922, %v5922
    %v6006 = vpack.c.b16 %v5924, %v5923
    %v6007 = vpack.c.b16 %v5925, %v5925
    %v6008 = vpack.c.b16 %v5927, %v5926
    %v6009 = vpack.c.b16 %v5928, %v5928
    %v6010 = vpack.c.b16 %v5930, %v5929
    %v6011 = vpack.c.b16 %v5931, %v5931
    %v6012 = vpack.c.b16 %v5933, %v5932
    %v6013 = vpack.c.b16 %v5934, %v5934
    %v6014 = vpack.c.b16 %v5936, %v5935
    %v6015 = vpack.c.b16 %v5937, %v5937
    %v6016 = vpack.c.b16 %v5939, %v5938
    %v6017 = vpack.c.b16 %v5940, %v5940
    %v6018 = vpack.c.b16 %v5942, %v5941
    %v6019 = vpack.c.b16 %v5943, %v5943
    %v6020 = vpack.c.b16 %v5945, %v5944
    %v6021 = vpack.c.b16 %v5946, %v5946
    %v6022 = vpack.c.b16 %v5948, %v5947
    %v6023 = vpack.c.b16 %v5949, %v5949
    %v6024 = vpack.c.b16 %v5951, %v5950
    %v6025 = vpack.c.b16 %v5952, %v5952
    %v6026 = vpack.c.b16 %v5954, %v5953
    %v6027 = vpack.c.b16 %v5955, %v5955
    %v6028 = vpack.c.b16 %v5957, %v5956
    %v6029 = vpack.c.b16 %v5958, %v5958
    %v6030 = vpack.c.b16 %v5960, %v5959
    %v6031 = vpack.c.b16 %v5961, %v5961
    %v6032 = vpack.c.b16 %v5963, %v5962
    %v6033 = vpack.c.b16 %v5964, %v5964
    %v6034 = vpack.c.b16 %v5966, %v5965
    %v6035 = vpack.c.b16 %v5967, %v5967
    %v6036 = vpack.c.b16 %v5969, %v5968
    %v6037 = vpack.c.b16 %v5970, %v5970
    %v6038 = vpack.c.b16 %v5972, %v5971
    %v6039 = vpack.c.b16 %v5973, %v5973
    %v6040 = vpack.c.b16 %v5975, %v5974
    %v6041 = vpack.c.b16 %v5976, %v5976
    %v6042 = vpack.c.b16 %v5978, %v5977
    %v6043 = vpack.c.b16 %v5979, %v5979
    %v6045 = vshrl.u32 %v5980, 16
    %v6047 = vrot.slane %v6045, 3
    %v6048 = vshll.u32 %v5980, 16
    %v6050 = vrot.slane %v6048, 4
    %v6051 = vor.u32 %v6047, %v6050
    %v6053 = vshrl.u32 %v5981, 16
    %v6055 = vrot.slane %v6053, 3
    %v6056 = vshll.u32 %v5981, 16
    %v6058 = vrot.slane %v6056, 4
    %v6059 = vor.u32 %v6055, %v6058
    %v6060 = vsel %vm1619, %v6051, %v6059
    %v6062 = vshrl.u32 %v5982, 16
    %v6064 = vrot.slane %v6062, 3
    %v6065 = vshll.u32 %v5982, 16
    %v6067 = vrot.slane %v6065, 4
    %v6068 = vor.u32 %v6064, %v6067
    %v6070 = vshrl.u32 %v5983, 16
    %v6072 = vrot.slane %v6070, 3
    %v6073 = vshll.u32 %v5983, 16
    %v6075 = vrot.slane %v6073, 4
    %v6076 = vor.u32 %v6072, %v6075
    %v6077 = vsel %vm1619, %v6068, %v6076
    %v6079 = vshrl.u32 %v5984, 16
    %v6081 = vrot.slane %v6079, 3
    %v6082 = vshll.u32 %v5984, 16
    %v6084 = vrot.slane %v6082, 4
    %v6085 = vor.u32 %v6081, %v6084
    %v6087 = vshrl.u32 %v5985, 16
    %v6089 = vrot.slane %v6087, 3
    %v6090 = vshll.u32 %v5985, 16
    %v6092 = vrot.slane %v6090, 4
    %v6093 = vor.u32 %v6089, %v6092
    %v6094 = vsel %vm1619, %v6085, %v6093
    %v6096 = vshrl.u32 %v5986, 16
    %v6098 = vrot.slane %v6096, 3
    %v6099 = vshll.u32 %v5986, 16
    %v6101 = vrot.slane %v6099, 4
    %v6102 = vor.u32 %v6098, %v6101
    %v6104 = vshrl.u32 %v5987, 16
    %v6106 = vrot.slane %v6104, 3
    %v6107 = vshll.u32 %v5987, 16
    %v6109 = vrot.slane %v6107, 4
    %v6110 = vor.u32 %v6106, %v6109
    %v6111 = vsel %vm1619, %v6102, %v6110
    %v6113 = vshrl.u32 %v5988, 16
    %v6115 = vrot.slane %v6113, 3
    %v6116 = vshll.u32 %v5988, 16
    %v6118 = vrot.slane %v6116, 4
    %v6119 = vor.u32 %v6115, %v6118
    %v6121 = vshrl.u32 %v5989, 16
    %v6123 = vrot.slane %v6121, 3
    %v6124 = vshll.u32 %v5989, 16
    %v6126 = vrot.slane %v6124, 4
    %v6127 = vor.u32 %v6123, %v6126
    %v6128 = vsel %vm1619, %v6119, %v6127
    %v6130 = vshrl.u32 %v5990, 16
    %v6132 = vrot.slane %v6130, 3
    %v6133 = vshll.u32 %v5990, 16
    %v6135 = vrot.slane %v6133, 4
    %v6136 = vor.u32 %v6132, %v6135
    %v6138 = vshrl.u32 %v5991, 16
    %v6140 = vrot.slane %v6138, 3
    %v6141 = vshll.u32 %v5991, 16
    %v6143 = vrot.slane %v6141, 4
    %v6144 = vor.u32 %v6140, %v6143
    %v6145 = vsel %vm1619, %v6136, %v6144
    %v6147 = vshrl.u32 %v5992, 16
    %v6149 = vrot.slane %v6147, 3
    %v6150 = vshll.u32 %v5992, 16
    %v6152 = vrot.slane %v6150, 4
    %v6153 = vor.u32 %v6149, %v6152
    %v6155 = vshrl.u32 %v5993, 16
    %v6157 = vrot.slane %v6155, 3
    %v6158 = vshll.u32 %v5993, 16
    %v6160 = vrot.slane %v6158, 4
    %v6161 = vor.u32 %v6157, %v6160
    %v6162 = vsel %vm1619, %v6153, %v6161
    %v6164 = vshrl.u32 %v5994, 16
    %v6166 = vrot.slane %v6164, 3
    %v6167 = vshll.u32 %v5994, 16
    %v6169 = vrot.slane %v6167, 4
    %v6170 = vor.u32 %v6166, %v6169
    %v6172 = vshrl.u32 %v5995, 16
    %v6174 = vrot.slane %v6172, 3
    %v6175 = vshll.u32 %v5995, 16
    %v6177 = vrot.slane %v6175, 4
    %v6178 = vor.u32 %v6174, %v6177
    %v6179 = vsel %vm1619, %v6170, %v6178
    %v6181 = vshrl.u32 %v5996, 16
    %v6183 = vrot.slane %v6181, 3
    %v6184 = vshll.u32 %v5996, 16
    %v6186 = vrot.slane %v6184, 4
    %v6187 = vor.u32 %v6183, %v6186
    %v6189 = vshrl.u32 %v5997, 16
    %v6191 = vrot.slane %v6189, 3
    %v6192 = vshll.u32 %v5997, 16
    %v6194 = vrot.slane %v6192, 4
    %v6195 = vor.u32 %v6191, %v6194
    %v6196 = vsel %vm1619, %v6187, %v6195
    %v6198 = vshrl.u32 %v5998, 16
    %v6200 = vrot.slane %v6198, 3
    %v6201 = vshll.u32 %v5998, 16
    %v6203 = vrot.slane %v6201, 4
    %v6204 = vor.u32 %v6200, %v6203
    %v6206 = vshrl.u32 %v5999, 16
    %v6208 = vrot.slane %v6206, 3
    %v6209 = vshll.u32 %v5999, 16
    %v6211 = vrot.slane %v6209, 4
    %v6212 = vor.u32 %v6208, %v6211
    %v6213 = vsel %vm1619, %v6204, %v6212
    %v6215 = vshrl.u32 %v6000, 16
    %v6217 = vrot.slane %v6215, 3
    %v6218 = vshll.u32 %v6000, 16
    %v6220 = vrot.slane %v6218, 4
    %v6221 = vor.u32 %v6217, %v6220
    %v6223 = vshrl.u32 %v6001, 16
    %v6225 = vrot.slane %v6223, 3
    %v6226 = vshll.u32 %v6001, 16
    %v6228 = vrot.slane %v6226, 4
    %v6229 = vor.u32 %v6225, %v6228
    %v6230 = vsel %vm1619, %v6221, %v6229
    %v6232 = vshrl.u32 %v6002, 16
    %v6234 = vrot.slane %v6232, 3
    %v6235 = vshll.u32 %v6002, 16
    %v6237 = vrot.slane %v6235, 4
    %v6238 = vor.u32 %v6234, %v6237
    %v6240 = vshrl.u32 %v6003, 16
    %v6242 = vrot.slane %v6240, 3
    %v6243 = vshll.u32 %v6003, 16
    %v6245 = vrot.slane %v6243, 4
    %v6246 = vor.u32 %v6242, %v6245
    %v6247 = vsel %vm1619, %v6238, %v6246
    %v6249 = vshrl.u32 %v6004, 16
    %v6251 = vrot.slane %v6249, 3
    %v6252 = vshll.u32 %v6004, 16
    %v6254 = vrot.slane %v6252, 4
    %v6255 = vor.u32 %v6251, %v6254
    %v6257 = vshrl.u32 %v6005, 16
    %v6259 = vrot.slane %v6257, 3
    %v6260 = vshll.u32 %v6005, 16
    %v6262 = vrot.slane %v6260, 4
    %v6263 = vor.u32 %v6259, %v6262
    %v6264 = vsel %vm1619, %v6255, %v6263
    %v6266 = vshrl.u32 %v6006, 16
    %v6268 = vrot.slane %v6266, 3
    %v6269 = vshll.u32 %v6006, 16
    %v6271 = vrot.slane %v6269, 4
    %v6272 = vor.u32 %v6268, %v6271
    %v6274 = vshrl.u32 %v6007, 16
    %v6276 = vrot.slane %v6274, 3
    %v6277 = vshll.u32 %v6007, 16
    %v6279 = vrot.slane %v6277, 4
    %v6280 = vor.u32 %v6276, %v6279
    %v6281 = vsel %vm1619, %v6272, %v6280
    %v6283 = vshrl.u32 %v6008, 16
    %v6285 = vrot.slane %v6283, 3
    %v6286 = vshll.u32 %v6008, 16
    %v6288 = vrot.slane %v6286, 4
    %v6289 = vor.u32 %v6285, %v6288
    %v6291 = vshrl.u32 %v6009, 16
    %v6293 = vrot.slane %v6291, 3
    %v6294 = vshll.u32 %v6009, 16
    %v6296 = vrot.slane %v6294, 4
    %v6297 = vor.u32 %v6293, %v6296
    %v6298 = vsel %vm1619, %v6289, %v6297
    %v6300 = vshrl.u32 %v6010, 16
    %v6302 = vrot.slane %v6300, 3
    %v6303 = vshll.u32 %v6010, 16
    %v6305 = vrot.slane %v6303, 4
    %v6306 = vor.u32 %v6302, %v6305
    %v6308 = vshrl.u32 %v6011, 16
    %v6310 = vrot.slane %v6308, 3
    %v6311 = vshll.u32 %v6011, 16
    %v6313 = vrot.slane %v6311, 4
    %v6314 = vor.u32 %v6310, %v6313
    %v6315 = vsel %vm1619, %v6306, %v6314
    %v6317 = vshrl.u32 %v6012, 16
    %v6319 = vrot.slane %v6317, 3
    %v6320 = vshll.u32 %v6012, 16
    %v6322 = vrot.slane %v6320, 4
    %v6323 = vor.u32 %v6319, %v6322
    %v6325 = vshrl.u32 %v6013, 16
    %v6327 = vrot.slane %v6325, 3
    %v6328 = vshll.u32 %v6013, 16
    %v6330 = vrot.slane %v6328, 4
    %v6331 = vor.u32 %v6327, %v6330
    %v6332 = vsel %vm1619, %v6323, %v6331
    %v6334 = vshrl.u32 %v6014, 16
    %v6336 = vrot.slane %v6334, 3
    %v6337 = vshll.u32 %v6014, 16
    %v6339 = vrot.slane %v6337, 4
    %v6340 = vor.u32 %v6336, %v6339
    %v6342 = vshrl.u32 %v6015, 16
    %v6344 = vrot.slane %v6342, 3
    %v6345 = vshll.u32 %v6015, 16
    %v6347 = vrot.slane %v6345, 4
    %v6348 = vor.u32 %v6344, %v6347
    %v6349 = vsel %vm1619, %v6340, %v6348
    %v6351 = vshrl.u32 %v6016, 16
    %v6353 = vrot.slane %v6351, 3
    %v6354 = vshll.u32 %v6016, 16
    %v6356 = vrot.slane %v6354, 4
    %v6357 = vor.u32 %v6353, %v6356
    %v6359 = vshrl.u32 %v6017, 16
    %v6361 = vrot.slane %v6359, 3
    %v6362 = vshll.u32 %v6017, 16
    %v6364 = vrot.slane %v6362, 4
    %v6365 = vor.u32 %v6361, %v6364
    %v6366 = vsel %vm1619, %v6357, %v6365
    %v6368 = vshrl.u32 %v6018, 16
    %v6370 = vrot.slane %v6368, 3
    %v6371 = vshll.u32 %v6018, 16
    %v6373 = vrot.slane %v6371, 4
    %v6374 = vor.u32 %v6370, %v6373
    %v6376 = vshrl.u32 %v6019, 16
    %v6378 = vrot.slane %v6376, 3
    %v6379 = vshll.u32 %v6019, 16
    %v6381 = vrot.slane %v6379, 4
    %v6382 = vor.u32 %v6378, %v6381
    %v6383 = vsel %vm1619, %v6374, %v6382
    %v6385 = vshrl.u32 %v6020, 16
    %v6387 = vrot.slane %v6385, 3
    %v6388 = vshll.u32 %v6020, 16
    %v6390 = vrot.slane %v6388, 4
    %v6391 = vor.u32 %v6387, %v6390
    %v6393 = vshrl.u32 %v6021, 16
    %v6395 = vrot.slane %v6393, 3
    %v6396 = vshll.u32 %v6021, 16
    %v6398 = vrot.slane %v6396, 4
    %v6399 = vor.u32 %v6395, %v6398
    %v6400 = vsel %vm1619, %v6391, %v6399
    %v6402 = vshrl.u32 %v6022, 16
    %v6404 = vrot.slane %v6402, 3
    %v6405 = vshll.u32 %v6022, 16
    %v6407 = vrot.slane %v6405, 4
    %v6408 = vor.u32 %v6404, %v6407
    %v6410 = vshrl.u32 %v6023, 16
    %v6412 = vrot.slane %v6410, 3
    %v6413 = vshll.u32 %v6023, 16
    %v6415 = vrot.slane %v6413, 4
    %v6416 = vor.u32 %v6412, %v6415
    %v6417 = vsel %vm1619, %v6408, %v6416
    %v6419 = vshrl.u32 %v6024, 16
    %v6421 = vrot.slane %v6419, 3
    %v6422 = vshll.u32 %v6024, 16
    %v6424 = vrot.slane %v6422, 4
    %v6425 = vor.u32 %v6421, %v6424
    %v6427 = vshrl.u32 %v6025, 16
    %v6429 = vrot.slane %v6427, 3
    %v6430 = vshll.u32 %v6025, 16
    %v6432 = vrot.slane %v6430, 4
    %v6433 = vor.u32 %v6429, %v6432
    %v6434 = vsel %vm1619, %v6425, %v6433
    %v6436 = vshrl.u32 %v6026, 16
    %v6438 = vrot.slane %v6436, 3
    %v6439 = vshll.u32 %v6026, 16
    %v6441 = vrot.slane %v6439, 4
    %v6442 = vor.u32 %v6438, %v6441
    %v6444 = vshrl.u32 %v6027, 16
    %v6446 = vrot.slane %v6444, 3
    %v6447 = vshll.u32 %v6027, 16
    %v6449 = vrot.slane %v6447, 4
    %v6450 = vor.u32 %v6446, %v6449
    %v6451 = vsel %vm1619, %v6442, %v6450
    %v6453 = vshrl.u32 %v6028, 16
    %v6455 = vrot.slane %v6453, 3
    %v6456 = vshll.u32 %v6028, 16
    %v6458 = vrot.slane %v6456, 4
    %v6459 = vor.u32 %v6455, %v6458
    %v6461 = vshrl.u32 %v6029, 16
    %v6463 = vrot.slane %v6461, 3
    %v6464 = vshll.u32 %v6029, 16
    %v6466 = vrot.slane %v6464, 4
    %v6467 = vor.u32 %v6463, %v6466
    %v6468 = vsel %vm1619, %v6459, %v6467
    %v6470 = vshrl.u32 %v6030, 16
    %v6472 = vrot.slane %v6470, 3
    %v6473 = vshll.u32 %v6030, 16
    %v6475 = vrot.slane %v6473, 4
    %v6476 = vor.u32 %v6472, %v6475
    %v6478 = vshrl.u32 %v6031, 16
    %v6480 = vrot.slane %v6478, 3
    %v6481 = vshll.u32 %v6031, 16
    %v6483 = vrot.slane %v6481, 4
    %v6484 = vor.u32 %v6480, %v6483
    %v6485 = vsel %vm1619, %v6476, %v6484
    %v6487 = vshrl.u32 %v6032, 16
    %v6489 = vrot.slane %v6487, 3
    %v6490 = vshll.u32 %v6032, 16
    %v6492 = vrot.slane %v6490, 4
    %v6493 = vor.u32 %v6489, %v6492
    %v6495 = vshrl.u32 %v6033, 16
    %v6497 = vrot.slane %v6495, 3
    %v6498 = vshll.u32 %v6033, 16
    %v6500 = vrot.slane %v6498, 4
    %v6501 = vor.u32 %v6497, %v6500
    %v6502 = vsel %vm1619, %v6493, %v6501
    %v6504 = vshrl.u32 %v6034, 16
    %v6506 = vrot.slane %v6504, 3
    %v6507 = vshll.u32 %v6034, 16
    %v6509 = vrot.slane %v6507, 4
    %v6510 = vor.u32 %v6506, %v6509
    %v6512 = vshrl.u32 %v6035, 16
    %v6514 = vrot.slane %v6512, 3
    %v6515 = vshll.u32 %v6035, 16
    %v6517 = vrot.slane %v6515, 4
    %v6518 = vor.u32 %v6514, %v6517
    %v6519 = vsel %vm1619, %v6510, %v6518
    %v6521 = vshrl.u32 %v6036, 16
    %v6523 = vrot.slane %v6521, 3
    %v6524 = vshll.u32 %v6036, 16
    %v6526 = vrot.slane %v6524, 4
    %v6527 = vor.u32 %v6523, %v6526
    %v6529 = vshrl.u32 %v6037, 16
    %v6531 = vrot.slane %v6529, 3
    %v6532 = vshll.u32 %v6037, 16
    %v6534 = vrot.slane %v6532, 4
    %v6535 = vor.u32 %v6531, %v6534
    %v6536 = vsel %vm1619, %v6527, %v6535
    %v6538 = vshrl.u32 %v6038, 16
    %v6540 = vrot.slane %v6538, 3
    %v6541 = vshll.u32 %v6038, 16
    %v6543 = vrot.slane %v6541, 4
    %v6544 = vor.u32 %v6540, %v6543
    %v6546 = vshrl.u32 %v6039, 16
    %v6548 = vrot.slane %v6546, 3
    %v6549 = vshll.u32 %v6039, 16
    %v6551 = vrot.slane %v6549, 4
    %v6552 = vor.u32 %v6548, %v6551
    %v6553 = vsel %vm1619, %v6544, %v6552
    %v6555 = vshrl.u32 %v6040, 16
    %v6557 = vrot.slane %v6555, 3
    %v6558 = vshll.u32 %v6040, 16
    %v6560 = vrot.slane %v6558, 4
    %v6561 = vor.u32 %v6557, %v6560
    %v6563 = vshrl.u32 %v6041, 16
    %v6565 = vrot.slane %v6563, 3
    %v6566 = vshll.u32 %v6041, 16
    %v6568 = vrot.slane %v6566, 4
    %v6569 = vor.u32 %v6565, %v6568
    %v6570 = vsel %vm1619, %v6561, %v6569
    %v6572 = vshrl.u32 %v6042, 16
    %v6574 = vrot.slane %v6572, 3
    %v6575 = vshll.u32 %v6042, 16
    %v6577 = vrot.slane %v6575, 4
    %v6578 = vor.u32 %v6574, %v6577
    %v6580 = vshrl.u32 %v6043, 16
    %v6582 = vrot.slane %v6580, 3
    %v6583 = vshll.u32 %v6043, 16
    %v6585 = vrot.slane %v6583, 4
    %v6586 = vor.u32 %v6582, %v6585
    %v6587 = vsel %vm1619, %v6578, %v6586
    %6588 = vrot.lane.b32.xlu0 %v6060, 24
    %v6589 = vpop.permute.xlu0 %6588
    %6590 = vrot.lane.b32.xlu0 %v6077, 24
    %v6591 = vpop.permute.xlu0 %6590
    %6592 = vrot.lane.b32.xlu0 %v6094, 24
    %v6593 = vpop.permute.xlu0 %6592
    %6594 = vrot.lane.b32.xlu0 %v6111, 24
    %v6595 = vpop.permute.xlu0 %6594
    %6596 = vrot.lane.b32.xlu0 %v6128, 24
    %v6597 = vpop.permute.xlu0 %6596
    %6598 = vrot.lane.b32.xlu0 %v6145, 24
    %v6599 = vpop.permute.xlu0 %6598
    %6600 = vrot.lane.b32.xlu0 %v6162, 24
    %v6601 = vpop.permute.xlu0 %6600
    %6602 = vrot.lane.b32.xlu0 %v6179, 24
    %v6603 = vpop.permute.xlu0 %6602
    %6604 = vrot.lane.b32.xlu0 %v6196, 24
    %v6605 = vpop.permute.xlu0 %6604
    %6606 = vrot.lane.b32.xlu0 %v6213, 24
    %v6607 = vpop.permute.xlu0 %6606
    %6608 = vrot.lane.b32.xlu0 %v6230, 24
    %v6609 = vpop.permute.xlu0 %6608
    %6610 = vrot.lane.b32.xlu0 %v6247, 24
    %v6611 = vpop.permute.xlu0 %6610
    %6612 = vrot.lane.b32.xlu0 %v6264, 24
    %v6613 = vpop.permute.xlu0 %6612
    %6614 = vrot.lane.b32.xlu0 %v6281, 24
    %v6615 = vpop.permute.xlu0 %6614
    %6616 = vrot.lane.b32.xlu0 %v6298, 24
    %v6617 = vpop.permute.xlu0 %6616
    %6618 = vrot.lane.b32.xlu0 %v6315, 24
    %v6619 = vpop.permute.xlu0 %6618
    %6620 = vrot.lane.b32.xlu0 %v6332, 24
    %v6621 = vpop.permute.xlu0 %6620
    %6622 = vrot.lane.b32.xlu0 %v6349, 24
    %v6623 = vpop.permute.xlu0 %6622
    %6624 = vrot.lane.b32.xlu0 %v6366, 24
    %v6625 = vpop.permute.xlu0 %6624
    %6626 = vrot.lane.b32.xlu0 %v6383, 24
    %v6627 = vpop.permute.xlu0 %6626
    %6628 = vrot.lane.b32.xlu0 %v6400, 24
    %v6629 = vpop.permute.xlu0 %6628
    %6630 = vrot.lane.b32.xlu0 %v6417, 24
    %v6631 = vpop.permute.xlu0 %6630
    %6632 = vrot.lane.b32.xlu0 %v6434, 24
    %v6633 = vpop.permute.xlu0 %6632
    %6634 = vrot.lane.b32.xlu0 %v6451, 24
    %v6635 = vpop.permute.xlu0 %6634
    %6636 = vrot.lane.b32.xlu0 %v6468, 24
    %v6637 = vpop.permute.xlu0 %6636
    %6638 = vrot.lane.b32.xlu0 %v6485, 24
    %v6639 = vpop.permute.xlu0 %6638
    %6640 = vrot.lane.b32.xlu0 %v6502, 24
    %v6641 = vpop.permute.xlu0 %6640
    %6642 = vrot.lane.b32.xlu0 %v6519, 24
    %v6643 = vpop.permute.xlu0 %6642
    %6644 = vrot.lane.b32.xlu0 %v6536, 24
    %v6645 = vpop.permute.xlu0 %6644
    %6646 = vrot.lane.b32.xlu0 %v6553, 24
    %v6647 = vpop.permute.xlu0 %6646
    %6648 = vrot.lane.b32.xlu0 %v6570, 24
    %v6649 = vpop.permute.xlu0 %6648
    %6650 = vrot.lane.b32.xlu0 %v6587, 24
    %v6651 = vpop.permute.xlu0 %6650
    %vm6684 = vcmask 228544
    %6685 = vst.msk [vmem:[#allocation3] sm:$0xff] %vm6684, %v6589
    %6686 = vst.msk [vmem:[#allocation3 + $0x8] sm:$0xff] %vm6684, %v6591
    %6687 = vst.msk [vmem:[#allocation3 + $0x10] sm:$0xff] %vm6684, %v6593
    %6688 = vst.msk [vmem:[#allocation3 + $0x18] sm:$0xff] %vm6684, %v6595
    %6689 = vst.msk [vmem:[#allocation3 + $0x20] sm:$0xff] %vm6684, %v6597
    %6690 = vst.msk [vmem:[#allocation3 + $0x28] sm:$0xff] %vm6684, %v6599
    %6691 = vst.msk [vmem:[#allocation3 + $0x30] sm:$0xff] %vm6684, %v6601
    %6692 = vst.msk [vmem:[#allocation3 + $0x38] sm:$0xff] %vm6684, %v6603
    %6693 = vst.msk [vmem:[#allocation3 + $0x40] sm:$0xff] %vm6684, %v6605
    %6694 = vst.msk [vmem:[#allocation3 + $0x48] sm:$0xff] %vm6684, %v6607
    %6695 = vst.msk [vmem:[#allocation3 + $0x50] sm:$0xff] %vm6684, %v6609
    %6696 = vst.msk [vmem:[#allocation3 + $0x58] sm:$0xff] %vm6684, %v6611
    %6697 = vst.msk [vmem:[#allocation3 + $0x60] sm:$0xff] %vm6684, %v6613
    %6698 = vst.msk [vmem:[#allocation3 + $0x68] sm:$0xff] %vm6684, %v6615
    %6699 = vst.msk [vmem:[#allocation3 + $0x70] sm:$0xff] %vm6684, %v6617
    %6700 = vst.msk [vmem:[#allocation3 + $0x78] sm:$0xff] %vm6684, %v6619
    %6701 = vst.msk [vmem:[#allocation3 + $0x80] sm:$0xff] %vm6684, %v6621
    %6702 = vst.msk [vmem:[#allocation3 + $0x88] sm:$0xff] %vm6684, %v6623
    %6703 = vst.msk [vmem:[#allocation3 + $0x90] sm:$0xff] %vm6684, %v6625
    %6704 = vst.msk [vmem:[#allocation3 + $0x98] sm:$0xff] %vm6684, %v6627
    %6705 = vst.msk [vmem:[#allocation3 + $0xa0] sm:$0xff] %vm6684, %v6629
    %6706 = vst.msk [vmem:[#allocation3 + $0xa8] sm:$0xff] %vm6684, %v6631
    %6707 = vst.msk [vmem:[#allocation3 + $0xb0] sm:$0xff] %vm6684, %v6633
    %6708 = vst.msk [vmem:[#allocation3 + $0xb8] sm:$0xff] %vm6684, %v6635
    %6709 = vst.msk [vmem:[#allocation3 + $0xc0] sm:$0xff] %vm6684, %v6637
    %6710 = vst.msk [vmem:[#allocation3 + $0xc8] sm:$0xff] %vm6684, %v6639
    %6711 = vst.msk [vmem:[#allocation3 + $0xd0] sm:$0xff] %vm6684, %v6641
    %6712 = vst.msk [vmem:[#allocation3 + $0xd8] sm:$0xff] %vm6684, %v6643
    %6713 = vst.msk [vmem:[#allocation3 + $0xe0] sm:$0xff] %vm6684, %v6645
    %6714 = vst.msk [vmem:[#allocation3 + $0xe8] sm:$0xff] %vm6684, %v6647
    %6715 = vst.msk [vmem:[#allocation3 + $0xf0] sm:$0xff] %vm6684, %v6649
    %6716 = vst.msk [vmem:[#allocation3 + $0xf8] sm:$0xff] %vm6684, %v6651
    %v6717 = vld [vmem:[%s5691 + $0x4] sm:$0xf]
    %v6718 = vld [vmem:[%s5691 + $0x8] sm:$0xf]
    %v6719 = vld [vmem:[%s5691 + $0x14] sm:$0xf]
    %v6720 = vld [vmem:[%s5691 + $0x18] sm:$0xf]
    %v6721 = vld [vmem:[%s5691 + $0x24] sm:$0xf]
    %v6722 = vld [vmem:[%s5691 + $0x28] sm:$0xf]
    %v6723 = vld [vmem:[%s5691 + $0x34] sm:$0xf]
    %v6724 = vld [vmem:[%s5691 + $0x38] sm:$0xf]
    %v6725 = vld [vmem:[%s5691 + $0x44] sm:$0xf]
    %v6726 = vld [vmem:[%s5691 + $0x48] sm:$0xf]
    %v6727 = vld [vmem:[%s5691 + $0x54] sm:$0xf]
    %v6728 = vld [vmem:[%s5691 + $0x58] sm:$0xf]
    %v6729 = vld [vmem:[%s5691 + $0x64] sm:$0xf]
    %v6730 = vld [vmem:[%s5691 + $0x68] sm:$0xf]
    %v6731 = vld [vmem:[%s5691 + $0x74] sm:$0xf]
    %v6732 = vld [vmem:[%s5691 + $0x78] sm:$0xf]
    %v6733 = vld [vmem:[%s5691 + $0x84] sm:$0xf]
    %v6734 = vld [vmem:[%s5691 + $0x88] sm:$0xf]
    %v6735 = vld [vmem:[%s5691 + $0x94] sm:$0xf]
    %v6736 = vld [vmem:[%s5691 + $0x98] sm:$0xf]
    %v6737 = vld [vmem:[%s5691 + $0xa4] sm:$0xf]
    %v6738 = vld [vmem:[%s5691 + $0xa8] sm:$0xf]
    %v6739 = vld [vmem:[%s5691 + $0xb4] sm:$0xf]
    %v6740 = vld [vmem:[%s5691 + $0xb8] sm:$0xf]
    %v6741 = vld [vmem:[%s5691 + $0xc4] sm:$0xf]
    %v6742 = vld [vmem:[%s5691 + $0xc8] sm:$0xf]
    %v6743 = vld [vmem:[%s5691 + $0xd4] sm:$0xf]
    %v6744 = vld [vmem:[%s5691 + $0xd8] sm:$0xf]
    %v6745 = vld [vmem:[%s5691 + $0xe4] sm:$0xf]
    %v6746 = vld [vmem:[%s5691 + $0xe8] sm:$0xf]
    %v6747 = vld [vmem:[%s5691 + $0xf4] sm:$0xf]
    %v6748 = vld [vmem:[%s5691 + $0xf8] sm:$0xf]
    %v6749 = vld [vmem:[%s5691 + $0x124] sm:$0xf]
    %v6750 = vld [vmem:[%s5691 + $0x128] sm:$0xf]
    %v6751 = vld [vmem:[%s5691 + $0x134] sm:$0xf]
    %v6752 = vld [vmem:[%s5691 + $0x138] sm:$0xf]
    %v6753 = vld [vmem:[%s5691 + $0x144] sm:$0xf]
    %v6754 = vld [vmem:[%s5691 + $0x148] sm:$0xf]
    %v6755 = vld [vmem:[%s5691 + $0x154] sm:$0xf]
    %v6756 = vld [vmem:[%s5691 + $0x158] sm:$0xf]
    %v6757 = vld [vmem:[%s5691 + $0x164] sm:$0xf]
    %v6758 = vld [vmem:[%s5691 + $0x168] sm:$0xf]
    %v6759 = vld [vmem:[%s5691 + $0x174] sm:$0xf]
    %v6760 = vld [vmem:[%s5691 + $0x178] sm:$0xf]
    %v6761 = vld [vmem:[%s5691 + $0x184] sm:$0xf]
    %v6762 = vld [vmem:[%s5691 + $0x188] sm:$0xf]
    %v6763 = vld [vmem:[%s5691 + $0x194] sm:$0xf]
    %v6764 = vld [vmem:[%s5691 + $0x198] sm:$0xf]
    %v6765 = vld [vmem:[%s5691 + $0x1a4] sm:$0xf]
    %v6766 = vld [vmem:[%s5691 + $0x1a8] sm:$0xf]
    %v6767 = vld [vmem:[%s5691 + $0x1b4] sm:$0xf]
    %v6768 = vld [vmem:[%s5691 + $0x1b8] sm:$0xf]
    %v6769 = vld [vmem:[%s5691 + $0x1c4] sm:$0xf]
    %v6770 = vld [vmem:[%s5691 + $0x1c8] sm:$0xf]
    %v6771 = vld [vmem:[%s5691 + $0x1d4] sm:$0xf]
    %v6772 = vld [vmem:[%s5691 + $0x1d8] sm:$0xf]
    %v6773 = vld [vmem:[%s5691 + $0x1e4] sm:$0xf]
    %v6774 = vld [vmem:[%s5691 + $0x1e8] sm:$0xf]
    %v6775 = vld [vmem:[%s5691 + $0x1f4] sm:$0xf]
    %v6776 = vld [vmem:[%s5691 + $0x1f8] sm:$0xf]
    %v6777 = vld [vmem:[%s5691 + $0x204] sm:$0xf]
    %v6778 = vld [vmem:[%s5691 + $0x208] sm:$0xf]
    %v6779 = vld [vmem:[%s5691 + $0x214] sm:$0xf]
    %v6780 = vld [vmem:[%s5691 + $0x218] sm:$0xf]
    %v6845 = vunpack.c.l.b16 %v6717
    %v6846 = vunpack.c.l.b16 %v6718
    %v6847 = vunpack.c.l.b16 %v6719
    %v6848 = vunpack.c.l.b16 %v6720
    %v6849 = vunpack.c.l.b16 %v6721
    %v6850 = vunpack.c.l.b16 %v6722
    %v6851 = vunpack.c.l.b16 %v6723
    %v6852 = vunpack.c.l.b16 %v6724
    %v6853 = vunpack.c.l.b16 %v6725
    %v6854 = vunpack.c.l.b16 %v6726
    %v6855 = vunpack.c.l.b16 %v6727
    %v6856 = vunpack.c.l.b16 %v6728
    %v6857 = vunpack.c.l.b16 %v6729
    %v6858 = vunpack.c.l.b16 %v6730
    %v6859 = vunpack.c.l.b16 %v6731
    %v6860 = vunpack.c.l.b16 %v6732
    %v6861 = vunpack.c.l.b16 %v6733
    %v6862 = vunpack.c.l.b16 %v6734
    %v6863 = vunpack.c.l.b16 %v6735
    %v6864 = vunpack.c.l.b16 %v6736
    %v6865 = vunpack.c.l.b16 %v6737
    %v6866 = vunpack.c.l.b16 %v6738
    %v6867 = vunpack.c.l.b16 %v6739
    %v6868 = vunpack.c.l.b16 %v6740
    %v6869 = vunpack.c.l.b16 %v6741
    %v6870 = vunpack.c.l.b16 %v6742
    %v6871 = vunpack.c.l.b16 %v6743
    %v6872 = vunpack.c.l.b16 %v6744
    %v6873 = vunpack.c.l.b16 %v6745
    %v6874 = vunpack.c.l.b16 %v6746
    %v6875 = vunpack.c.l.b16 %v6747
    %v6876 = vunpack.c.l.b16 %v6748
    %v6877 = vunpack.c.l.b16 %v6749
    %v6878 = vunpack.c.l.b16 %v6750
    %v6879 = vunpack.c.l.b16 %v6751
    %v6880 = vunpack.c.l.b16 %v6752
    %v6881 = vunpack.c.l.b16 %v6753
    %v6882 = vunpack.c.l.b16 %v6754
    %v6883 = vunpack.c.l.b16 %v6755
    %v6884 = vunpack.c.l.b16 %v6756
    %v6885 = vunpack.c.l.b16 %v6757
    %v6886 = vunpack.c.l.b16 %v6758
    %v6887 = vunpack.c.l.b16 %v6759
    %v6888 = vunpack.c.l.b16 %v6760
    %v6889 = vunpack.c.l.b16 %v6761
    %v6890 = vunpack.c.l.b16 %v6762
    %v6891 = vunpack.c.l.b16 %v6763
    %v6892 = vunpack.c.l.b16 %v6764
    %v6893 = vunpack.c.l.b16 %v6765
    %v6894 = vunpack.c.l.b16 %v6766
    %v6895 = vunpack.c.l.b16 %v6767
    %v6896 = vunpack.c.l.b16 %v6768
    %v6897 = vunpack.c.l.b16 %v6769
    %v6898 = vunpack.c.l.b16 %v6770
    %v6899 = vunpack.c.l.b16 %v6771
    %v6900 = vunpack.c.l.b16 %v6772
    %v6901 = vunpack.c.l.b16 %v6773
    %v6902 = vunpack.c.l.b16 %v6774
    %v6903 = vunpack.c.l.b16 %v6775
    %v6904 = vunpack.c.l.b16 %v6776
    %v6905 = vunpack.c.l.b16 %v6777
    %v6906 = vunpack.c.l.b16 %v6778
    %v6907 = vunpack.c.l.b16 %v6779
    %v6908 = vunpack.c.l.b16 %v6780
    %v6909 = vpack.c.b16 %v6846, %v6845
    %v6910 = vpack.c.b16 %v6848, %v6847
    %v6911 = vpack.c.b16 %v6850, %v6849
    %v6912 = vpack.c.b16 %v6852, %v6851
    %v6913 = vpack.c.b16 %v6854, %v6853
    %v6914 = vpack.c.b16 %v6856, %v6855
    %v6915 = vpack.c.b16 %v6858, %v6857
    %v6916 = vpack.c.b16 %v6860, %v6859
    %v6917 = vpack.c.b16 %v6862, %v6861
    %v6918 = vpack.c.b16 %v6864, %v6863
    %v6919 = vpack.c.b16 %v6866, %v6865
    %v6920 = vpack.c.b16 %v6868, %v6867
    %v6921 = vpack.c.b16 %v6870, %v6869
    %v6922 = vpack.c.b16 %v6872, %v6871
    %v6923 = vpack.c.b16 %v6874, %v6873
    %v6924 = vpack.c.b16 %v6876, %v6875
    %v6925 = vpack.c.b16 %v6878, %v6877
    %v6926 = vpack.c.b16 %v6880, %v6879
    %v6927 = vpack.c.b16 %v6882, %v6881
    %v6928 = vpack.c.b16 %v6884, %v6883
    %v6929 = vpack.c.b16 %v6886, %v6885
    %v6930 = vpack.c.b16 %v6888, %v6887
    %v6931 = vpack.c.b16 %v6890, %v6889
    %v6932 = vpack.c.b16 %v6892, %v6891
    %v6933 = vpack.c.b16 %v6894, %v6893
    %v6934 = vpack.c.b16 %v6896, %v6895
    %v6935 = vpack.c.b16 %v6898, %v6897
    %v6936 = vpack.c.b16 %v6900, %v6899
    %v6937 = vpack.c.b16 %v6902, %v6901
    %v6938 = vpack.c.b16 %v6904, %v6903
    %v6939 = vpack.c.b16 %v6906, %v6905
    %v6940 = vpack.c.b16 %v6908, %v6907
    %6941 = vrot.lane.b32.xlu0 %v6909, 28
    %v6942 = vpop.permute.xlu0 %6941
    %6943 = vrot.lane.b32.xlu0 %v6910, 28
    %v6944 = vpop.permute.xlu0 %6943
    %6945 = vrot.lane.b32.xlu0 %v6911, 28
    %v6946 = vpop.permute.xlu0 %6945
    %6947 = vrot.lane.b32.xlu0 %v6912, 28
    %v6948 = vpop.permute.xlu0 %6947
    %6949 = vrot.lane.b32.xlu0 %v6913, 28
    %v6950 = vpop.permute.xlu0 %6949
    %6951 = vrot.lane.b32.xlu0 %v6914, 28
    %v6952 = vpop.permute.xlu0 %6951
    %6953 = vrot.lane.b32.xlu0 %v6915, 28
    %v6954 = vpop.permute.xlu0 %6953
    %6955 = vrot.lane.b32.xlu0 %v6916, 28
    %v6956 = vpop.permute.xlu0 %6955
    %6957 = vrot.lane.b32.xlu0 %v6917, 28
    %v6958 = vpop.permute.xlu0 %6957
    %6959 = vrot.lane.b32.xlu0 %v6918, 28
    %v6960 = vpop.permute.xlu0 %6959
    %6961 = vrot.lane.b32.xlu0 %v6919, 28
    %v6962 = vpop.permute.xlu0 %6961
    %6963 = vrot.lane.b32.xlu0 %v6920, 28
    %v6964 = vpop.permute.xlu0 %6963
    %6965 = vrot.lane.b32.xlu0 %v6921, 28
    %v6966 = vpop.permute.xlu0 %6965
    %6967 = vrot.lane.b32.xlu0 %v6922, 28
    %v6968 = vpop.permute.xlu0 %6967
    %6969 = vrot.lane.b32.xlu0 %v6923, 28
    %v6970 = vpop.permute.xlu0 %6969
    %6971 = vrot.lane.b32.xlu0 %v6924, 28
    %v6972 = vpop.permute.xlu0 %6971
    %6973 = vrot.lane.b32.xlu0 %v6925, 28
    %v6974 = vpop.permute.xlu0 %6973
    %6975 = vrot.lane.b32.xlu0 %v6926, 28
    %v6976 = vpop.permute.xlu0 %6975
    %6977 = vrot.lane.b32.xlu0 %v6927, 28
    %v6978 = vpop.permute.xlu0 %6977
    %6979 = vrot.lane.b32.xlu0 %v6928, 28
    %v6980 = vpop.permute.xlu0 %6979
    %6981 = vrot.lane.b32.xlu0 %v6929, 28
    %v6982 = vpop.permute.xlu0 %6981
    %6983 = vrot.lane.b32.xlu0 %v6930, 28
    %v6984 = vpop.permute.xlu0 %6983
    %6985 = vrot.lane.b32.xlu0 %v6931, 28
    %v6986 = vpop.permute.xlu0 %6985
    %6987 = vrot.lane.b32.xlu0 %v6932, 28
    %v6988 = vpop.permute.xlu0 %6987
    %6989 = vrot.lane.b32.xlu0 %v6933, 28
    %v6990 = vpop.permute.xlu0 %6989
    %6991 = vrot.lane.b32.xlu0 %v6934, 28
    %v6992 = vpop.permute.xlu0 %6991
    %6993 = vrot.lane.b32.xlu0 %v6935, 28
    %v6994 = vpop.permute.xlu0 %6993
    %6995 = vrot.lane.b32.xlu0 %v6936, 28
    %v6996 = vpop.permute.xlu0 %6995
    %6997 = vrot.lane.b32.xlu0 %v6937, 28
    %v6998 = vpop.permute.xlu0 %6997
    %6999 = vrot.lane.b32.xlu0 %v6938, 28
    %v7000 = vpop.permute.xlu0 %6999
    %7001 = vrot.lane.b32.xlu0 %v6939, 28
    %v7002 = vpop.permute.xlu0 %7001
    %7003 = vrot.lane.b32.xlu0 %v6940, 28
    %v7004 = vpop.permute.xlu0 %7003
    %vm7037 = vcmask 261344
    %7038 = vst.msk [vmem:[#allocation3] sm:$0xff] %vm7037, %v6942
    %7039 = vst.msk [vmem:[#allocation3 + $0x8] sm:$0xff] %vm7037, %v6944
    %7040 = vst.msk [vmem:[#allocation3 + $0x10] sm:$0xff] %vm7037, %v6946
    %7041 = vst.msk [vmem:[#allocation3 + $0x18] sm:$0xff] %vm7037, %v6948
    %7042 = vst.msk [vmem:[#allocation3 + $0x20] sm:$0xff] %vm7037, %v6950
    %7043 = vst.msk [vmem:[#allocation3 + $0x28] sm:$0xff] %vm7037, %v6952
    %7044 = vst.msk [vmem:[#allocation3 + $0x30] sm:$0xff] %vm7037, %v6954
    %7045 = vst.msk [vmem:[#allocation3 + $0x38] sm:$0xff] %vm7037, %v6956
    %7046 = vst.msk [vmem:[#allocation3 + $0x40] sm:$0xff] %vm7037, %v6958
    %7047 = vst.msk [vmem:[#allocation3 + $0x48] sm:$0xff] %vm7037, %v6960
    %7048 = vst.msk [vmem:[#allocation3 + $0x50] sm:$0xff] %vm7037, %v6962
    %7049 = vst.msk [vmem:[#allocation3 + $0x58] sm:$0xff] %vm7037, %v6964
    %7050 = vst.msk [vmem:[#allocation3 + $0x60] sm:$0xff] %vm7037, %v6966
    %7051 = vst.msk [vmem:[#allocation3 + $0x68] sm:$0xff] %vm7037, %v6968
    %7052 = vst.msk [vmem:[#allocation3 + $0x70] sm:$0xff] %vm7037, %v6970
    %7053 = vst.msk [vmem:[#allocation3 + $0x78] sm:$0xff] %vm7037, %v6972
    %7054 = vst.msk [vmem:[#allocation3 + $0x80] sm:$0xff] %vm7037, %v6974
    %7055 = vst.msk [vmem:[#allocation3 + $0x88] sm:$0xff] %vm7037, %v6976
    %7056 = vst.msk [vmem:[#allocation3 + $0x90] sm:$0xff] %vm7037, %v6978
    %7057 = vst.msk [vmem:[#allocation3 + $0x98] sm:$0xff] %vm7037, %v6980
    %7058 = vst.msk [vmem:[#allocation3 + $0xa0] sm:$0xff] %vm7037, %v6982
    %7059 = vst.msk [vmem:[#allocation3 + $0xa8] sm:$0xff] %vm7037, %v6984
    %7060 = vst.msk [vmem:[#allocation3 + $0xb0] sm:$0xff] %vm7037, %v6986
    %7061 = vst.msk [vmem:[#allocation3 + $0xb8] sm:$0xff] %vm7037, %v6988
    %7062 = vst.msk [vmem:[#allocation3 + $0xc0] sm:$0xff] %vm7037, %v6990
    %7063 = vst.msk [vmem:[#allocation3 + $0xc8] sm:$0xff] %vm7037, %v6992
    %7064 = vst.msk [vmem:[#allocation3 + $0xd0] sm:$0xff] %vm7037, %v6994
    %7065 = vst.msk [vmem:[#allocation3 + $0xd8] sm:$0xff] %vm7037, %v6996
    %7066 = vst.msk [vmem:[#allocation3 + $0xe0] sm:$0xff] %vm7037, %v6998
    %7067 = vst.msk [vmem:[#allocation3 + $0xe8] sm:$0xff] %vm7037, %v7000
    %7068 = vst.msk [vmem:[#allocation3 + $0xf0] sm:$0xff] %vm7037, %v7002
    %7069 = vst.msk [vmem:[#allocation3 + $0xf8] sm:$0xff] %vm7037, %v7004
    %v7070 = vld [vmem:[%s5691 + $0x4] sm:$0xf]
    %v7071 = vld [vmem:[%s5691 + $0x8] sm:$0xf]
    %v7072 = vld [vmem:[%s5691 + $0xc] sm:$0x1]
    %v7073 = vld [vmem:[%s5691 + $0x14] sm:$0xf]
    %v7074 = vld [vmem:[%s5691 + $0x18] sm:$0xf]
    %v7075 = vld [vmem:[%s5691 + $0x1c] sm:$0x1]
    %v7076 = vld [vmem:[%s5691 + $0x24] sm:$0xf]
    %v7077 = vld [vmem:[%s5691 + $0x28] sm:$0xf]
    %v7078 = vld [vmem:[%s5691 + $0x2c] sm:$0x1]
    %v7079 = vld [vmem:[%s5691 + $0x34] sm:$0xf]
    %v7080 = vld [vmem:[%s5691 + $0x38] sm:$0xf]
    %v7081 = vld [vmem:[%s5691 + $0x3c] sm:$0x1]
    %v7082 = vld [vmem:[%s5691 + $0x44] sm:$0xf]
    %v7083 = vld [vmem:[%s5691 + $0x48] sm:$0xf]
    %v7084 = vld [vmem:[%s5691 + $0x4c] sm:$0x1]
    %v7085 = vld [vmem:[%s5691 + $0x54] sm:$0xf]
    %v7086 = vld [vmem:[%s5691 + $0x58] sm:$0xf]
    %v7087 = vld [vmem:[%s5691 + $0x5c] sm:$0x1]
    %v7088 = vld [vmem:[%s5691 + $0x64] sm:$0xf]
    %v7089 = vld [vmem:[%s5691 + $0x68] sm:$0xf]
    %v7090 = vld [vmem:[%s5691 + $0x6c] sm:$0x1]
    %v7091 = vld [vmem:[%s5691 + $0x74] sm:$0xf]
    %v7092 = vld [vmem:[%s5691 + $0x78] sm:$0xf]
    %v7093 = vld [vmem:[%s5691 + $0x7c] sm:$0x1]
    %v7094 = vld [vmem:[%s5691 + $0x84] sm:$0xf]
    %v7095 = vld [vmem:[%s5691 + $0x88] sm:$0xf]
    %v7096 = vld [vmem:[%s5691 + $0x8c] sm:$0x1]
    %v7097 = vld [vmem:[%s5691 + $0x94] sm:$0xf]
    %v7098 = vld [vmem:[%s5691 + $0x98] sm:$0xf]
    %v7099 = vld [vmem:[%s5691 + $0x9c] sm:$0x1]
    %v7100 = vld [vmem:[%s5691 + $0xa4] sm:$0xf]
    %v7101 = vld [vmem:[%s5691 + $0xa8] sm:$0xf]
    %v7102 = vld [vmem:[%s5691 + $0xac] sm:$0x1]
    %v7103 = vld [vmem:[%s5691 + $0xb4] sm:$0xf]
    %v7104 = vld [vmem:[%s5691 + $0xb8] sm:$0xf]
    %v7105 = vld [vmem:[%s5691 + $0xbc] sm:$0x1]
    %v7106 = vld [vmem:[%s5691 + $0xc4] sm:$0xf]
    %v7107 = vld [vmem:[%s5691 + $0xc8] sm:$0xf]
    %v7108 = vld [vmem:[%s5691 + $0xcc] sm:$0x1]
    %v7109 = vld [vmem:[%s5691 + $0xd4] sm:$0xf]
    %v7110 = vld [vmem:[%s5691 + $0xd8] sm:$0xf]
    %v7111 = vld [vmem:[%s5691 + $0xdc] sm:$0x1]
    %v7112 = vld [vmem:[%s5691 + $0xe4] sm:$0xf]
    %v7113 = vld [vmem:[%s5691 + $0xe8] sm:$0xf]
    %v7114 = vld [vmem:[%s5691 + $0xec] sm:$0x1]
    %v7115 = vld [vmem:[%s5691 + $0xf4] sm:$0xf]
    %v7116 = vld [vmem:[%s5691 + $0xf8] sm:$0xf]
    %v7117 = vld [vmem:[%s5691 + $0xfc] sm:$0x1]
    %v7118 = vld [vmem:[%s5691 + $0x124] sm:$0xf]
    %v7119 = vld [vmem:[%s5691 + $0x128] sm:$0xf]
    %v7120 = vld [vmem:[%s5691 + $0x12c] sm:$0x1]
    %v7121 = vld [vmem:[%s5691 + $0x134] sm:$0xf]
    %v7122 = vld [vmem:[%s5691 + $0x138] sm:$0xf]
    %v7123 = vld [vmem:[%s5691 + $0x13c] sm:$0x1]
    %v7124 = vld [vmem:[%s5691 + $0x144] sm:$0xf]
    %v7125 = vld [vmem:[%s5691 + $0x148] sm:$0xf]
    %v7126 = vld [vmem:[%s5691 + $0x14c] sm:$0x1]
    %v7127 = vld [vmem:[%s5691 + $0x154] sm:$0xf]
    %v7128 = vld [vmem:[%s5691 + $0x158] sm:$0xf]
    %v7129 = vld [vmem:[%s5691 + $0x15c] sm:$0x1]
    %v7130 = vld [vmem:[%s5691 + $0x164] sm:$0xf]
    %v7131 = vld [vmem:[%s5691 + $0x168] sm:$0xf]
    %v7132 = vld [vmem:[%s5691 + $0x16c] sm:$0x1]
    %v7133 = vld [vmem:[%s5691 + $0x174] sm:$0xf]
    %v7134 = vld [vmem:[%s5691 + $0x178] sm:$0xf]
    %v7135 = vld [vmem:[%s5691 + $0x17c] sm:$0x1]
    %v7136 = vld [vmem:[%s5691 + $0x184] sm:$0xf]
    %v7137 = vld [vmem:[%s5691 + $0x188] sm:$0xf]
    %v7138 = vld [vmem:[%s5691 + $0x18c] sm:$0x1]
    %v7139 = vld [vmem:[%s5691 + $0x194] sm:$0xf]
    %v7140 = vld [vmem:[%s5691 + $0x198] sm:$0xf]
    %v7141 = vld [vmem:[%s5691 + $0x19c] sm:$0x1]
    %v7142 = vld [vmem:[%s5691 + $0x1a4] sm:$0xf]
    %v7143 = vld [vmem:[%s5691 + $0x1a8] sm:$0xf]
    %v7144 = vld [vmem:[%s5691 + $0x1ac] sm:$0x1]
    %v7145 = vld [vmem:[%s5691 + $0x1b4] sm:$0xf]
    %v7146 = vld [vmem:[%s5691 + $0x1b8] sm:$0xf]
    %v7147 = vld [vmem:[%s5691 + $0x1bc] sm:$0x1]
    %v7148 = vld [vmem:[%s5691 + $0x1c4] sm:$0xf]
    %v7149 = vld [vmem:[%s5691 + $0x1c8] sm:$0xf]
    %v7150 = vld [vmem:[%s5691 + $0x1cc] sm:$0x1]
    %v7151 = vld [vmem:[%s5691 + $0x1d4] sm:$0xf]
    %v7152 = vld [vmem:[%s5691 + $0x1d8] sm:$0xf]
    %v7153 = vld [vmem:[%s5691 + $0x1dc] sm:$0x1]
    %v7154 = vld [vmem:[%s5691 + $0x1e4] sm:$0xf]
    %v7155 = vld [vmem:[%s5691 + $0x1e8] sm:$0xf]
    %v7156 = vld [vmem:[%s5691 + $0x1ec] sm:$0x1]
    %v7157 = vld [vmem:[%s5691 + $0x1f4] sm:$0xf]
    %v7158 = vld [vmem:[%s5691 + $0x1f8] sm:$0xf]
    %v7159 = vld [vmem:[%s5691 + $0x1fc] sm:$0x1]
    %v7160 = vld [vmem:[%s5691 + $0x204] sm:$0xf]
    %v7161 = vld [vmem:[%s5691 + $0x208] sm:$0xf]
    %v7162 = vld [vmem:[%s5691 + $0x20c] sm:$0x1]
    %v7163 = vld [vmem:[%s5691 + $0x214] sm:$0xf]
    %v7164 = vld [vmem:[%s5691 + $0x218] sm:$0xf]
    %v7165 = vld [vmem:[%s5691 + $0x21c] sm:$0x1]
    %v7262 = vunpack.c.l.b16 %v7070
    %v7263 = vunpack.c.l.b16 %v7071
    %v7264 = vunpack.c.l.b16 %v7072
    %v7265 = vunpack.c.l.b16 %v7073
    %v7266 = vunpack.c.l.b16 %v7074
    %v7267 = vunpack.c.l.b16 %v7075
    %v7268 = vunpack.c.l.b16 %v7076
    %v7269 = vunpack.c.l.b16 %v7077
    %v7270 = vunpack.c.l.b16 %v7078
    %v7271 = vunpack.c.l.b16 %v7079
    %v7272 = vunpack.c.l.b16 %v7080
    %v7273 = vunpack.c.l.b16 %v7081
    %v7274 = vunpack.c.l.b16 %v7082
    %v7275 = vunpack.c.l.b16 %v7083
    %v7276 = vunpack.c.l.b16 %v7084
    %v7277 = vunpack.c.l.b16 %v7085
    %v7278 = vunpack.c.l.b16 %v7086
    %v7279 = vunpack.c.l.b16 %v7087
    %v7280 = vunpack.c.l.b16 %v7088
    %v7281 = vunpack.c.l.b16 %v7089
    %v7282 = vunpack.c.l.b16 %v7090
    %v7283 = vunpack.c.l.b16 %v7091
    %v7284 = vunpack.c.l.b16 %v7092
    %v7285 = vunpack.c.l.b16 %v7093
    %v7286 = vunpack.c.l.b16 %v7094
    %v7287 = vunpack.c.l.b16 %v7095
    %v7288 = vunpack.c.l.b16 %v7096
    %v7289 = vunpack.c.l.b16 %v7097
    %v7290 = vunpack.c.l.b16 %v7098
    %v7291 = vunpack.c.l.b16 %v7099
    %v7292 = vunpack.c.l.b16 %v7100
    %v7293 = vunpack.c.l.b16 %v7101
    %v7294 = vunpack.c.l.b16 %v7102
    %v7295 = vunpack.c.l.b16 %v7103
    %v7296 = vunpack.c.l.b16 %v7104
    %v7297 = vunpack.c.l.b16 %v7105
    %v7298 = vunpack.c.l.b16 %v7106
    %v7299 = vunpack.c.l.b16 %v7107
    %v7300 = vunpack.c.l.b16 %v7108
    %v7301 = vunpack.c.l.b16 %v7109
    %v7302 = vunpack.c.l.b16 %v7110
    %v7303 = vunpack.c.l.b16 %v7111
    %v7304 = vunpack.c.l.b16 %v7112
    %v7305 = vunpack.c.l.b16 %v7113
    %v7306 = vunpack.c.l.b16 %v7114
    %v7307 = vunpack.c.l.b16 %v7115
    %v7308 = vunpack.c.l.b16 %v7116
    %v7309 = vunpack.c.l.b16 %v7117
    %v7310 = vunpack.c.l.b16 %v7118
    %v7311 = vunpack.c.l.b16 %v7119
    %v7312 = vunpack.c.l.b16 %v7120
    %v7313 = vunpack.c.l.b16 %v7121
    %v7314 = vunpack.c.l.b16 %v7122
    %v7315 = vunpack.c.l.b16 %v7123
    %v7316 = vunpack.c.l.b16 %v7124
    %v7317 = vunpack.c.l.b16 %v7125
    %v7318 = vunpack.c.l.b16 %v7126
    %v7319 = vunpack.c.l.b16 %v7127
    %v7320 = vunpack.c.l.b16 %v7128
    %v7321 = vunpack.c.l.b16 %v7129
    %v7322 = vunpack.c.l.b16 %v7130
    %v7323 = vunpack.c.l.b16 %v7131
    %v7324 = vunpack.c.l.b16 %v7132
    %v7325 = vunpack.c.l.b16 %v7133
    %v7326 = vunpack.c.l.b16 %v7134
    %v7327 = vunpack.c.l.b16 %v7135
    %v7328 = vunpack.c.l.b16 %v7136
    %v7329 = vunpack.c.l.b16 %v7137
    %v7330 = vunpack.c.l.b16 %v7138
    %v7331 = vunpack.c.l.b16 %v7139
    %v7332 = vunpack.c.l.b16 %v7140
    %v7333 = vunpack.c.l.b16 %v7141
    %v7334 = vunpack.c.l.b16 %v7142
    %v7335 = vunpack.c.l.b16 %v7143
    %v7336 = vunpack.c.l.b16 %v7144
    %v7337 = vunpack.c.l.b16 %v7145
    %v7338 = vunpack.c.l.b16 %v7146
    %v7339 = vunpack.c.l.b16 %v7147
    %v7340 = vunpack.c.l.b16 %v7148
    %v7341 = vunpack.c.l.b16 %v7149
    %v7342 = vunpack.c.l.b16 %v7150
    %v7343 = vunpack.c.l.b16 %v7151
    %v7344 = vunpack.c.l.b16 %v7152
    %v7345 = vunpack.c.l.b16 %v7153
    %v7346 = vunpack.c.l.b16 %v7154
    %v7347 = vunpack.c.l.b16 %v7155
    %v7348 = vunpack.c.l.b16 %v7156
    %v7349 = vunpack.c.l.b16 %v7157
    %v7350 = vunpack.c.l.b16 %v7158
    %v7351 = vunpack.c.l.b16 %v7159
    %v7352 = vunpack.c.l.b16 %v7160
    %v7353 = vunpack.c.l.b16 %v7161
    %v7354 = vunpack.c.l.b16 %v7162
    %v7355 = vunpack.c.l.b16 %v7163
    %v7356 = vunpack.c.l.b16 %v7164
    %v7357 = vunpack.c.l.b16 %v7165
    %v7358 = vpack.c.b16 %v7263, %v7262
    %v7359 = vpack.c.b16 %v7264, %v7264
    %v7360 = vpack.c.b16 %v7266, %v7265
    %v7361 = vpack.c.b16 %v7267, %v7267
    %v7362 = vpack.c.b16 %v7269, %v7268
    %v7363 = vpack.c.b16 %v7270, %v7270
    %v7364 = vpack.c.b16 %v7272, %v7271
    %v7365 = vpack.c.b16 %v7273, %v7273
    %v7366 = vpack.c.b16 %v7275, %v7274
    %v7367 = vpack.c.b16 %v7276, %v7276
    %v7368 = vpack.c.b16 %v7278, %v7277
    %v7369 = vpack.c.b16 %v7279, %v7279
    %v7370 = vpack.c.b16 %v7281, %v7280
    %v7371 = vpack.c.b16 %v7282, %v7282
    %v7372 = vpack.c.b16 %v7284, %v7283
    %v7373 = vpack.c.b16 %v7285, %v7285
    %v7374 = vpack.c.b16 %v7287, %v7286
    %v7375 = vpack.c.b16 %v7288, %v7288
    %v7376 = vpack.c.b16 %v7290, %v7289
    %v7377 = vpack.c.b16 %v7291, %v7291
    %v7378 = vpack.c.b16 %v7293, %v7292
    %v7379 = vpack.c.b16 %v7294, %v7294
    %v7380 = vpack.c.b16 %v7296, %v7295
    %v7381 = vpack.c.b16 %v7297, %v7297
    %v7382 = vpack.c.b16 %v7299, %v7298
    %v7383 = vpack.c.b16 %v7300, %v7300
    %v7384 = vpack.c.b16 %v7302, %v7301
    %v7385 = vpack.c.b16 %v7303, %v7303
    %v7386 = vpack.c.b16 %v7305, %v7304
    %v7387 = vpack.c.b16 %v7306, %v7306
    %v7388 = vpack.c.b16 %v7308, %v7307
    %v7389 = vpack.c.b16 %v7309, %v7309
    %v7390 = vpack.c.b16 %v7311, %v7310
    %v7391 = vpack.c.b16 %v7312, %v7312
    %v7392 = vpack.c.b16 %v7314, %v7313
    %v7393 = vpack.c.b16 %v7315, %v7315
    %v7394 = vpack.c.b16 %v7317, %v7316
    %v7395 = vpack.c.b16 %v7318, %v7318
    %v7396 = vpack.c.b16 %v7320, %v7319
    %v7397 = vpack.c.b16 %v7321, %v7321
    %v7398 = vpack.c.b16 %v7323, %v7322
    %v7399 = vpack.c.b16 %v7324, %v7324
    %v7400 = vpack.c.b16 %v7326, %v7325
    %v7401 = vpack.c.b16 %v7327, %v7327
    %v7402 = vpack.c.b16 %v7329, %v7328
    %v7403 = vpack.c.b16 %v7330, %v7330
    %v7404 = vpack.c.b16 %v7332, %v7331
    %v7405 = vpack.c.b16 %v7333, %v7333
    %v7406 = vpack.c.b16 %v7335, %v7334
    %v7407 = vpack.c.b16 %v7336, %v7336
    %v7408 = vpack.c.b16 %v7338, %v7337
    %v7409 = vpack.c.b16 %v7339, %v7339
    %v7410 = vpack.c.b16 %v7341, %v7340
    %v7411 = vpack.c.b16 %v7342, %v7342
    %v7412 = vpack.c.b16 %v7344, %v7343
    %v7413 = vpack.c.b16 %v7345, %v7345
    %v7414 = vpack.c.b16 %v7347, %v7346
    %v7415 = vpack.c.b16 %v7348, %v7348
    %v7416 = vpack.c.b16 %v7350, %v7349
    %v7417 = vpack.c.b16 %v7351, %v7351
    %v7418 = vpack.c.b16 %v7353, %v7352
    %v7419 = vpack.c.b16 %v7354, %v7354
    %v7420 = vpack.c.b16 %v7356, %v7355
    %v7421 = vpack.c.b16 %v7357, %v7357
    %v7423 = vshrl.u32 %v7358, 16
    %v7425 = vshll.u32 %v7358, 16
    %v7427 = vrot.slane %v7425, 1
    %v7428 = vor.u32 %v7423, %v7427
    %v7430 = vshll.u32 %v7359, 16
    %v7432 = vrot.slane %v7430, 1
    %v7433 = vsel %vm2934, %v7428, %v7432
    %v7435 = vshrl.u32 %v7360, 16
    %v7437 = vshll.u32 %v7360, 16
    %v7439 = vrot.slane %v7437, 1
    %v7440 = vor.u32 %v7435, %v7439
    %v7442 = vshll.u32 %v7361, 16
    %v7444 = vrot.slane %v7442, 1
    %v7445 = vsel %vm2934, %v7440, %v7444
    %v7447 = vshrl.u32 %v7362, 16
    %v7449 = vshll.u32 %v7362, 16
    %v7451 = vrot.slane %v7449, 1
    %v7452 = vor.u32 %v7447, %v7451
    %v7454 = vshll.u32 %v7363, 16
    %v7456 = vrot.slane %v7454, 1
    %v7457 = vsel %vm2934, %v7452, %v7456
    %v7459 = vshrl.u32 %v7364, 16
    %v7461 = vshll.u32 %v7364, 16
    %v7463 = vrot.slane %v7461, 1
    %v7464 = vor.u32 %v7459, %v7463
    %v7466 = vshll.u32 %v7365, 16
    %v7468 = vrot.slane %v7466, 1
    %v7469 = vsel %vm2934, %v7464, %v7468
    %v7471 = vshrl.u32 %v7366, 16
    %v7473 = vshll.u32 %v7366, 16
    %v7475 = vrot.slane %v7473, 1
    %v7476 = vor.u32 %v7471, %v7475
    %v7478 = vshll.u32 %v7367, 16
    %v7480 = vrot.slane %v7478, 1
    %v7481 = vsel %vm2934, %v7476, %v7480
    %v7483 = vshrl.u32 %v7368, 16
    %v7485 = vshll.u32 %v7368, 16
    %v7487 = vrot.slane %v7485, 1
    %v7488 = vor.u32 %v7483, %v7487
    %v7490 = vshll.u32 %v7369, 16
    %v7492 = vrot.slane %v7490, 1
    %v7493 = vsel %vm2934, %v7488, %v7492
    %v7495 = vshrl.u32 %v7370, 16
    %v7497 = vshll.u32 %v7370, 16
    %v7499 = vrot.slane %v7497, 1
    %v7500 = vor.u32 %v7495, %v7499
    %v7502 = vshll.u32 %v7371, 16
    %v7504 = vrot.slane %v7502, 1
    %v7505 = vsel %vm2934, %v7500, %v7504
    %v7507 = vshrl.u32 %v7372, 16
    %v7509 = vshll.u32 %v7372, 16
    %v7511 = vrot.slane %v7509, 1
    %v7512 = vor.u32 %v7507, %v7511
    %v7514 = vshll.u32 %v7373, 16
    %v7516 = vrot.slane %v7514, 1
    %v7517 = vsel %vm2934, %v7512, %v7516
    %v7519 = vshrl.u32 %v7374, 16
    %v7521 = vshll.u32 %v7374, 16
    %v7523 = vrot.slane %v7521, 1
    %v7524 = vor.u32 %v7519, %v7523
    %v7526 = vshll.u32 %v7375, 16
    %v7528 = vrot.slane %v7526, 1
    %v7529 = vsel %vm2934, %v7524, %v7528
    %v7531 = vshrl.u32 %v7376, 16
    %v7533 = vshll.u32 %v7376, 16
    %v7535 = vrot.slane %v7533, 1
    %v7536 = vor.u32 %v7531, %v7535
    %v7538 = vshll.u32 %v7377, 16
    %v7540 = vrot.slane %v7538, 1
    %v7541 = vsel %vm2934, %v7536, %v7540
    %v7543 = vshrl.u32 %v7378, 16
    %v7545 = vshll.u32 %v7378, 16
    %v7547 = vrot.slane %v7545, 1
    %v7548 = vor.u32 %v7543, %v7547
    %v7550 = vshll.u32 %v7379, 16
    %v7552 = vrot.slane %v7550, 1
    %v7553 = vsel %vm2934, %v7548, %v7552
    %v7555 = vshrl.u32 %v7380, 16
    %v7557 = vshll.u32 %v7380, 16
    %v7559 = vrot.slane %v7557, 1
    %v7560 = vor.u32 %v7555, %v7559
    %v7562 = vshll.u32 %v7381, 16
    %v7564 = vrot.slane %v7562, 1
    %v7565 = vsel %vm2934, %v7560, %v7564
    %v7567 = vshrl.u32 %v7382, 16
    %v7569 = vshll.u32 %v7382, 16
    %v7571 = vrot.slane %v7569, 1
    %v7572 = vor.u32 %v7567, %v7571
    %v7574 = vshll.u32 %v7383, 16
    %v7576 = vrot.slane %v7574, 1
    %v7577 = vsel %vm2934, %v7572, %v7576
    %v7579 = vshrl.u32 %v7384, 16
    %v7581 = vshll.u32 %v7384, 16
    %v7583 = vrot.slane %v7581, 1
    %v7584 = vor.u32 %v7579, %v7583
    %v7586 = vshll.u32 %v7385, 16
    %v7588 = vrot.slane %v7586, 1
    %v7589 = vsel %vm2934, %v7584, %v7588
    %v7591 = vshrl.u32 %v7386, 16
    %v7593 = vshll.u32 %v7386, 16
    %v7595 = vrot.slane %v7593, 1
    %v7596 = vor.u32 %v7591, %v7595
    %v7598 = vshll.u32 %v7387, 16
    %v7600 = vrot.slane %v7598, 1
    %v7601 = vsel %vm2934, %v7596, %v7600
    %v7603 = vshrl.u32 %v7388, 16
    %v7605 = vshll.u32 %v7388, 16
    %v7607 = vrot.slane %v7605, 1
    %v7608 = vor.u32 %v7603, %v7607
    %v7610 = vshll.u32 %v7389, 16
    %v7612 = vrot.slane %v7610, 1
    %v7613 = vsel %vm2934, %v7608, %v7612
    %v7615 = vshrl.u32 %v7390, 16
    %v7617 = vshll.u32 %v7390, 16
    %v7619 = vrot.slane %v7617, 1
    %v7620 = vor.u32 %v7615, %v7619
    %v7622 = vshll.u32 %v7391, 16
    %v7624 = vrot.slane %v7622, 1
    %v7625 = vsel %vm2934, %v7620, %v7624
    %v7627 = vshrl.u32 %v7392, 16
    %v7629 = vshll.u32 %v7392, 16
    %v7631 = vrot.slane %v7629, 1
    %v7632 = vor.u32 %v7627, %v7631
    %v7634 = vshll.u32 %v7393, 16
    %v7636 = vrot.slane %v7634, 1
    %v7637 = vsel %vm2934, %v7632, %v7636
    %v7639 = vshrl.u32 %v7394, 16
    %v7641 = vshll.u32 %v7394, 16
    %v7643 = vrot.slane %v7641, 1
    %v7644 = vor.u32 %v7639, %v7643
    %v7646 = vshll.u32 %v7395, 16
    %v7648 = vrot.slane %v7646, 1
    %v7649 = vsel %vm2934, %v7644, %v7648
    %v7651 = vshrl.u32 %v7396, 16
    %v7653 = vshll.u32 %v7396, 16
    %v7655 = vrot.slane %v7653, 1
    %v7656 = vor.u32 %v7651, %v7655
    %v7658 = vshll.u32 %v7397, 16
    %v7660 = vrot.slane %v7658, 1
    %v7661 = vsel %vm2934, %v7656, %v7660
    %v7663 = vshrl.u32 %v7398, 16
    %v7665 = vshll.u32 %v7398, 16
    %v7667 = vrot.slane %v7665, 1
    %v7668 = vor.u32 %v7663, %v7667
    %v7670 = vshll.u32 %v7399, 16
    %v7672 = vrot.slane %v7670, 1
    %v7673 = vsel %vm2934, %v7668, %v7672
    %v7675 = vshrl.u32 %v7400, 16
    %v7677 = vshll.u32 %v7400, 16
    %v7679 = vrot.slane %v7677, 1
    %v7680 = vor.u32 %v7675, %v7679
    %v7682 = vshll.u32 %v7401, 16
    %v7684 = vrot.slane %v7682, 1
    %v7685 = vsel %vm2934, %v7680, %v7684
    %v7687 = vshrl.u32 %v7402, 16
    %v7689 = vshll.u32 %v7402, 16
    %v7691 = vrot.slane %v7689, 1
    %v7692 = vor.u32 %v7687, %v7691
    %v7694 = vshll.u32 %v7403, 16
    %v7696 = vrot.slane %v7694, 1
    %v7697 = vsel %vm2934, %v7692, %v7696
    %v7699 = vshrl.u32 %v7404, 16
    %v7701 = vshll.u32 %v7404, 16
    %v7703 = vrot.slane %v7701, 1
    %v7704 = vor.u32 %v7699, %v7703
    %v7706 = vshll.u32 %v7405, 16
    %v7708 = vrot.slane %v7706, 1
    %v7709 = vsel %vm2934, %v7704, %v7708
    %v7711 = vshrl.u32 %v7406, 16
    %v7713 = vshll.u32 %v7406, 16
    %v7715 = vrot.slane %v7713, 1
    %v7716 = vor.u32 %v7711, %v7715
    %v7718 = vshll.u32 %v7407, 16
    %v7720 = vrot.slane %v7718, 1
    %v7721 = vsel %vm2934, %v7716, %v7720
    %v7723 = vshrl.u32 %v7408, 16
    %v7725 = vshll.u32 %v7408, 16
    %v7727 = vrot.slane %v7725, 1
    %v7728 = vor.u32 %v7723, %v7727
    %v7730 = vshll.u32 %v7409, 16
    %v7732 = vrot.slane %v7730, 1
    %v7733 = vsel %vm2934, %v7728, %v7732
    %v7735 = vshrl.u32 %v7410, 16
    %v7737 = vshll.u32 %v7410, 16
    %v7739 = vrot.slane %v7737, 1
    %v7740 = vor.u32 %v7735, %v7739
    %v7742 = vshll.u32 %v7411, 16
    %v7744 = vrot.slane %v7742, 1
    %v7745 = vsel %vm2934, %v7740, %v7744
    %v7747 = vshrl.u32 %v7412, 16
    %v7749 = vshll.u32 %v7412, 16
    %v7751 = vrot.slane %v7749, 1
    %v7752 = vor.u32 %v7747, %v7751
    %v7754 = vshll.u32 %v7413, 16
    %v7756 = vrot.slane %v7754, 1
    %v7757 = vsel %vm2934, %v7752, %v7756
    %v7759 = vshrl.u32 %v7414, 16
    %v7761 = vshll.u32 %v7414, 16
    %v7763 = vrot.slane %v7761, 1
    %v7764 = vor.u32 %v7759, %v7763
    %v7766 = vshll.u32 %v7415, 16
    %v7768 = vrot.slane %v7766, 1
    %v7769 = vsel %vm2934, %v7764, %v7768
    %v7771 = vshrl.u32 %v7416, 16
    %v7773 = vshll.u32 %v7416, 16
    %v7775 = vrot.slane %v7773, 1
    %v7776 = vor.u32 %v7771, %v7775
    %v7778 = vshll.u32 %v7417, 16
    %v7780 = vrot.slane %v7778, 1
    %v7781 = vsel %vm2934, %v7776, %v7780
    %v7783 = vshrl.u32 %v7418, 16
    %v7785 = vshll.u32 %v7418, 16
    %v7787 = vrot.slane %v7785, 1
    %v7788 = vor.u32 %v7783, %v7787
    %v7790 = vshll.u32 %v7419, 16
    %v7792 = vrot.slane %v7790, 1
    %v7793 = vsel %vm2934, %v7788, %v7792
    %v7795 = vshrl.u32 %v7420, 16
    %v7797 = vshll.u32 %v7420, 16
    %v7799 = vrot.slane %v7797, 1
    %v7800 = vor.u32 %v7795, %v7799
    %v7802 = vshll.u32 %v7421, 16
    %v7804 = vrot.slane %v7802, 1
    %v7805 = vsel %vm2934, %v7800, %v7804
    %7806 = vrot.lane.b32.xlu0 %v7433, 32
    %v7807 = vpop.permute.xlu0 %7806
    %7808 = vrot.lane.b32.xlu0 %v7445, 32
    %v7809 = vpop.permute.xlu0 %7808
    %7810 = vrot.lane.b32.xlu0 %v7457, 32
    %v7811 = vpop.permute.xlu0 %7810
    %7812 = vrot.lane.b32.xlu0 %v7469, 32
    %v7813 = vpop.permute.xlu0 %7812
    %7814 = vrot.lane.b32.xlu0 %v7481, 32
    %v7815 = vpop.permute.xlu0 %7814
    %7816 = vrot.lane.b32.xlu0 %v7493, 32
    %v7817 = vpop.permute.xlu0 %7816
    %7818 = vrot.lane.b32.xlu0 %v7505, 32
    %v7819 = vpop.permute.xlu0 %7818
    %7820 = vrot.lane.b32.xlu0 %v7517, 32
    %v7821 = vpop.permute.xlu0 %7820
    %7822 = vrot.lane.b32.xlu0 %v7529, 32
    %v7823 = vpop.permute.xlu0 %7822
    %7824 = vrot.lane.b32.xlu0 %v7541, 32
    %v7825 = vpop.permute.xlu0 %7824
    %7826 = vrot.lane.b32.xlu0 %v7553, 32
    %v7827 = vpop.permute.xlu0 %7826
    %7828 = vrot.lane.b32.xlu0 %v7565, 32
    %v7829 = vpop.permute.xlu0 %7828
    %7830 = vrot.lane.b32.xlu0 %v7577, 32
    %v7831 = vpop.permute.xlu0 %7830
    %7832 = vrot.lane.b32.xlu0 %v7589, 32
    %v7833 = vpop.permute.xlu0 %7832
    %7834 = vrot.lane.b32.xlu0 %v7601, 32
    %v7835 = vpop.permute.xlu0 %7834
    %7836 = vrot.lane.b32.xlu0 %v7613, 32
    %v7837 = vpop.permute.xlu0 %7836
    %7838 = vrot.lane.b32.xlu0 %v7625, 32
    %v7839 = vpop.permute.xlu0 %7838
    %7840 = vrot.lane.b32.xlu0 %v7637, 32
    %v7841 = vpop.permute.xlu0 %7840
    %7842 = vrot.lane.b32.xlu0 %v7649, 32
    %v7843 = vpop.permute.xlu0 %7842
    %7844 = vrot.lane.b32.xlu0 %v7661, 32
    %v7845 = vpop.permute.xlu0 %7844
    %7846 = vrot.lane.b32.xlu0 %v7673, 32
    %v7847 = vpop.permute.xlu0 %7846
    %7848 = vrot.lane.b32.xlu0 %v7685, 32
    %v7849 = vpop.permute.xlu0 %7848
    %7850 = vrot.lane.b32.xlu0 %v7697, 32
    %v7851 = vpop.permute.xlu0 %7850
    %7852 = vrot.lane.b32.xlu0 %v7709, 32
    %v7853 = vpop.permute.xlu0 %7852
    %7854 = vrot.lane.b32.xlu0 %v7721, 32
    %v7855 = vpop.permute.xlu0 %7854
    %7856 = vrot.lane.b32.xlu0 %v7733, 32
    %v7857 = vpop.permute.xlu0 %7856
    %7858 = vrot.lane.b32.xlu0 %v7745, 32
    %v7859 = vpop.permute.xlu0 %7858
    %7860 = vrot.lane.b32.xlu0 %v7757, 32
    %v7861 = vpop.permute.xlu0 %7860
    %7862 = vrot.lane.b32.xlu0 %v7769, 32
    %v7863 = vpop.permute.xlu0 %7862
    %7864 = vrot.lane.b32.xlu0 %v7781, 32
    %v7865 = vpop.permute.xlu0 %7864
    %7866 = vrot.lane.b32.xlu0 %v7793, 32
    %v7867 = vpop.permute.xlu0 %7866
    %7868 = vrot.lane.b32.xlu0 %v7805, 32
    %v7869 = vpop.permute.xlu0 %7868
    %vm7902 = vcmask 294144
    %7903 = vst.msk [vmem:[#allocation3] sm:$0xff] %vm7902, %v7807
    %7904 = vst.msk [vmem:[#allocation3 + $0x8] sm:$0xff] %vm7902, %v7809
    %7905 = vst.msk [vmem:[#allocation3 + $0x10] sm:$0xff] %vm7902, %v7811
    %7906 = vst.msk [vmem:[#allocation3 + $0x18] sm:$0xff] %vm7902, %v7813
    %7907 = vst.msk [vmem:[#allocation3 + $0x20] sm:$0xff] %vm7902, %v7815
    %7908 = vst.msk [vmem:[#allocation3 + $0x28] sm:$0xff] %vm7902, %v7817
    %7909 = vst.msk [vmem:[#allocation3 + $0x30] sm:$0xff] %vm7902, %v7819
    %7910 = vst.msk [vmem:[#allocation3 + $0x38] sm:$0xff] %vm7902, %v7821
    %7911 = vst.msk [vmem:[#allocation3 + $0x40] sm:$0xff] %vm7902, %v7823
    %7912 = vst.msk [vmem:[#allocation3 + $0x48] sm:$0xff] %vm7902, %v7825
    %7913 = vst.msk [vmem:[#allocation3 + $0x50] sm:$0xff] %vm7902, %v7827
    %7914 = vst.msk [vmem:[#allocation3 + $0x58] sm:$0xff] %vm7902, %v7829
    %7915 = vst.msk [vmem:[#allocation3 + $0x60] sm:$0xff] %vm7902, %v7831
    %7916 = vst.msk [vmem:[#allocation3 + $0x68] sm:$0xff] %vm7902, %v7833
    %7917 = vst.msk [vmem:[#allocation3 + $0x70] sm:$0xff] %vm7902, %v7835
    %7918 = vst.msk [vmem:[#allocation3 + $0x78] sm:$0xff] %vm7902, %v7837
    %7919 = vst.msk [vmem:[#allocation3 + $0x80] sm:$0xff] %vm7902, %v7839
    %7920 = vst.msk [vmem:[#allocation3 + $0x88] sm:$0xff] %vm7902, %v7841
    %7921 = vst.msk [vmem:[#allocation3 + $0x90] sm:$0xff] %vm7902, %v7843
    %7922 = vst.msk [vmem:[#allocation3 + $0x98] sm:$0xff] %vm7902, %v7845
    %7923 = vst.msk [vmem:[#allocation3 + $0xa0] sm:$0xff] %vm7902, %v7847
    %7924 = vst.msk [vmem:[#allocation3 + $0xa8] sm:$0xff] %vm7902, %v7849
    %7925 = vst.msk [vmem:[#allocation3 + $0xb0] sm:$0xff] %vm7902, %v7851
    %7926 = vst.msk [vmem:[#allocation3 + $0xb8] sm:$0xff] %vm7902, %v7853
    %7927 = vst.msk [vmem:[#allocation3 + $0xc0] sm:$0xff] %vm7902, %v7855
    %7928 = vst.msk [vmem:[#allocation3 + $0xc8] sm:$0xff] %vm7902, %v7857
    %7929 = vst.msk [vmem:[#allocation3 + $0xd0] sm:$0xff] %vm7902, %v7859
    %7930 = vst.msk [vmem:[#allocation3 + $0xd8] sm:$0xff] %vm7902, %v7861
    %7931 = vst.msk [vmem:[#allocation3 + $0xe0] sm:$0xff] %vm7902, %v7863
    %7932 = vst.msk [vmem:[#allocation3 + $0xe8] sm:$0xff] %vm7902, %v7865
    %7933 = vst.msk [vmem:[#allocation3 + $0xf0] sm:$0xff] %vm7902, %v7867
    %7934 = vst.msk [vmem:[#allocation3 + $0xf8] sm:$0xff] %vm7902, %v7869
    %v7935 = vld [vmem:[#allocation3] sm:$0xff]
    %v7936 = vld [vmem:[#allocation3 + $0x8] sm:$0xff]
    %v7937 = vld [vmem:[#allocation3 + $0x10] sm:$0xff]
    %v7938 = vld [vmem:[#allocation3 + $0x18] sm:$0xff]
    %v7939 = vld [vmem:[#allocation3 + $0x20] sm:$0xff]
    %v7940 = vld [vmem:[#allocation3 + $0x28] sm:$0xff]
    %v7941 = vld [vmem:[#allocation3 + $0x30] sm:$0xff]
    %v7942 = vld [vmem:[#allocation3 + $0x38] sm:$0xff]
    %v7943 = vld [vmem:[#allocation3 + $0x40] sm:$0xff]
    %v7944 = vld [vmem:[#allocation3 + $0x48] sm:$0xff]
    %v7945 = vld [vmem:[#allocation3 + $0x50] sm:$0xff]
    %v7946 = vld [vmem:[#allocation3 + $0x58] sm:$0xff]
    %v7947 = vld [vmem:[#allocation3 + $0x60] sm:$0xff]
    %v7948 = vld [vmem:[#allocation3 + $0x68] sm:$0xff]
    %v7949 = vld [vmem:[#allocation3 + $0x70] sm:$0xff]
    %v7950 = vld [vmem:[#allocation3 + $0x78] sm:$0xff]
    %v7951 = vld [vmem:[#allocation3 + $0x80] sm:$0xff]
    %v7952 = vld [vmem:[#allocation3 + $0x88] sm:$0xff]
    %v7953 = vld [vmem:[#allocation3 + $0x90] sm:$0xff]
    %v7954 = vld [vmem:[#allocation3 + $0x98] sm:$0xff]
    %v7955 = vld [vmem:[#allocation3 + $0xa0] sm:$0xff]
    %v7956 = vld [vmem:[#allocation3 + $0xa8] sm:$0xff]
    %v7957 = vld [vmem:[#allocation3 + $0xb0] sm:$0xff]
    %v7958 = vld [vmem:[#allocation3 + $0xb8] sm:$0xff]
    %v7959 = vld [vmem:[#allocation3 + $0xc0] sm:$0xff]
    %v7960 = vld [vmem:[#allocation3 + $0xc8] sm:$0xff]
    %v7961 = vld [vmem:[#allocation3 + $0xd0] sm:$0xff]
    %v7962 = vld [vmem:[#allocation3 + $0xd8] sm:$0xff]
    %v7963 = vld [vmem:[#allocation3 + $0xe0] sm:$0xff]
    %v7964 = vld [vmem:[#allocation3 + $0xe8] sm:$0xff]
    %v7965 = vld [vmem:[#allocation3 + $0xf0] sm:$0xff]
    %v7966 = vld [vmem:[#allocation3 + $0xf8] sm:$0xff]
    %v7967 = vld [vmem:[%s3] sm:$0xf]
    %v7968 = vld [vmem:[%s3 + $0x4] sm:$0xf]
    %v7969 = vld [vmem:[%s3 + $0x8] sm:$0xf]
    %v7970 = vld [vmem:[%s3 + $0xc] sm:$0xf]
    %v7971 = vld [vmem:[%s3 + $0x10] sm:$0x3]
    %v7972 = vld [vmem:[%s4] sm:$0x1]
    %v7974 = vlaneseq
    %v7975 = vshrl.u32 %v7974, 7
    %v7976 = vsub.s32 0, %v7975
    %v7977 = vrot.slane %v7972, %v7976
    %v7984 = vunpack.c.l.b16 %v7967
    %v7985 = vunpack.c.l.b16 %v7968
    %v7986 = vunpack.c.l.b16 %v7969
    %v7987 = vunpack.c.l.b16 %v7970
    %v7988 = vunpack.c.l.b16 %v7971
    %v7989 = vpack.c.b16 %v7985, %v7984
    %v7990 = vpack.c.b16 %v7987, %v7986
    %v7991 = vpack.c.b16 %v7988, %v7988
    %vm7994 = vcmask 293888
    %v7996 = vsel %vm7994, %v7935, 0
    %v7999 = vsel %vm7994, %v7936, 0
    %v8002 = vsel %vm7994, %v7937, 0
    %v8005 = vsel %vm7994, %v7938, 0
    %v8008 = vsel %vm7994, %v7939, 0
    %v8011 = vsel %vm7994, %v7940, 0
    %v8014 = vsel %vm7994, %v7941, 0
    %v8017 = vsel %vm7994, %v7942, 0
    %v8020 = vsel %vm7994, %v7943, 0
    %v8023 = vsel %vm7994, %v7944, 0
    %v8026 = vsel %vm7994, %v7945, 0
    %v8029 = vsel %vm7994, %v7946, 0
    %v8032 = vsel %vm7994, %v7947, 0
    %v8035 = vsel %vm7994, %v7948, 0
    %v8038 = vsel %vm7994, %v7949, 0
    %v8041 = vsel %vm7994, %v7950, 0
    %v8044 = vsel %vm7994, %v7951, 0
    %v8047 = vsel %vm7994, %v7952, 0
    %v8050 = vsel %vm7994, %v7953, 0
    %v8053 = vsel %vm7994, %v7954, 0
    %v8056 = vsel %vm7994, %v7955, 0
    %v8059 = vsel %vm7994, %v7956, 0
    %v8062 = vsel %vm7994, %v7957, 0
    %v8065 = vsel %vm7994, %v7958, 0
    %v8068 = vsel %vm7994, %v7959, 0
    %v8071 = vsel %vm7994, %v7960, 0
    %v8074 = vsel %vm7994, %v7961, 0
    %v8077 = vsel %vm7994, %v7962, 0
    %v8080 = vsel %vm7994, %v7963, 0
    %v8083 = vsel %vm7994, %v7964, 0
    %v8086 = vsel %vm7994, %v7965, 0
    %v8089 = vsel %vm7994, %v7966, 0
    %vm8091 = vcmask 1041408
    %v8093 = vsel %vm8091, %v7991, 0
    %8095 = vmatprep.subr.bf16.mxu0 0
    %8096 = vmatpush1.bf16.msra.mxu0 %v7989
    %8097 = vmatprep.subr.bf16.mxu0 0
    %8098 = vmatpush1.bf16.msra.mxu0 %v7990
    %8099 = vmatprep.subr.bf16.mxu0 0
    %8100 = vmatpush1.bf16.msra.mxu0 %v8093
    %8101 = vmatprep.subr.bf16.mxu0 0
    %8102 = vmatpush1.bf16.msra.mxu0 0
    %8103 = vmatprep.subr.bf16.mxu0 0
    %8104 = vmatpush1.bf16.msra.mxu0 0
    %8105 = vmatprep.subr.bf16.mxu0 0
    %8106 = vmatpush1.bf16.msra.mxu0 0
    %8107 = vmatprep.subr.bf16.mxu0 0
    %8108 = vmatpush1.bf16.msra.mxu0 0
    %8109 = vmatprep.subr.bf16.mxu0 0
    %8110 = vmatpush1.bf16.msra.mxu0 0
    %8111 = vmatprep.subr.bf16.mxu0 0
    %8112 = vmatpush1.bf16.msra.mxu0 0
    %8113 = vmatprep.subr.bf16.mxu0 0
    %8114 = vmatpush1.bf16.msra.mxu0 0
    %8115 = vmatprep.subr.bf16.mxu0 0
    %8116 = vmatpush1.bf16.msra.mxu0 0
    %8117 = vmatprep.subr.bf16.mxu0 0
    %8118 = vmatpush1.bf16.msra.mxu0 0
    %8119 = vmatprep.subr.bf16.mxu0 0
    %8120 = vmatpush1.bf16.msra.mxu0 0
    %8121 = vmatprep.subr.bf16.mxu0 0
    %8122 = vmatpush1.bf16.msra.mxu0 0
    %8123 = vmatprep.subr.bf16.mxu0 0
    %8124 = vmatpush1.bf16.msra.mxu0 0
    %8125 = vmatprep.subr.bf16.mxu0 0
    %8126 = vmatpush1.bf16.msra.mxu0 0
    %8127 = vmatprep.mubr.bf16.mxu0 0
    %8128 = vmatmul.mubr.bf16.gmra.mrb[0].mxu0 %v7996
    %v8129 = vpop.f32.mrb[0].mxu0
    %v8130 = vadd.f32 %v7977, %v8129
    %v8131 = vpop.f32.mrb[0].mxu0
    %v8132 = vpop.f32.mrb[0].mxu0
    %v8133 = vadd.f32 %v7977, %v8132
    %v8134 = vpop.f32.mrb[0].mxu0
    %8135 = vmatprep.mubr.bf16.mxu0 0
    %8136 = vmatmul.mubr.bf16.gmra.mrb[0].mxu0 %v7999
    %v8137 = vpop.f32.mrb[0].mxu0
    %v8138 = vadd.f32 %v7977, %v8137
    %v8139 = vpop.f32.mrb[0].mxu0
    %v8140 = vpop.f32.mrb[0].mxu0
    %v8141 = vadd.f32 %v7977, %v8140
    %v8142 = vpop.f32.mrb[0].mxu0
    %8143 = vmatprep.mubr.bf16.mxu0 0
    %8144 = vmatmul.mubr.bf16.gmra.mrb[0].mxu0 %v8002
    %v8145 = vpop.f32.mrb[0].mxu0
    %v8146 = vadd.f32 %v7977, %v8145
    %v8147 = vpop.f32.mrb[0].mxu0
    %v8148 = vpop.f32.mrb[0].mxu0
    %v8149 = vadd.f32 %v7977, %v8148
    %v8150 = vpop.f32.mrb[0].mxu0
    %8151 = vmatprep.mubr.bf16.mxu0 0
    %8152 = vmatmul.mubr.bf16.gmra.mrb[0].mxu0 %v8005
    %v8153 = vpop.f32.mrb[0].mxu0
    %v8154 = vadd.f32 %v7977, %v8153
    %v8155 = vpop.f32.mrb[0].mxu0
    %v8156 = vpop.f32.mrb[0].mxu0
    %v8157 = vadd.f32 %v7977, %v8156
    %v8158 = vpop.f32.mrb[0].mxu0
    %8159 = vmatprep.mubr.bf16.mxu0 0
    %8160 = vmatmul.mubr.bf16.gmra.mrb[0].mxu0 %v8008
    %v8161 = vpop.f32.mrb[0].mxu0
    %v8162 = vadd.f32 %v7977, %v8161
    %v8163 = vpop.f32.mrb[0].mxu0
    %v8164 = vpop.f32.mrb[0].mxu0
    %v8165 = vadd.f32 %v7977, %v8164
    %v8166 = vpop.f32.mrb[0].mxu0
    %8167 = vmatprep.mubr.bf16.mxu0 0
    %8168 = vmatmul.mubr.bf16.gmra.mrb[0].mxu0 %v8011
    %v8169 = vpop.f32.mrb[0].mxu0
    %v8170 = vadd.f32 %v7977, %v8169
    %v8171 = vpop.f32.mrb[0].mxu0
    %v8172 = vpop.f32.mrb[0].mxu0
    %v8173 = vadd.f32 %v7977, %v8172
    %v8174 = vpop.f32.mrb[0].mxu0
    %8175 = vmatprep.mubr.bf16.mxu0 0
    %8176 = vmatmul.mubr.bf16.gmra.mrb[0].mxu0 %v8014
    %v8177 = vpop.f32.mrb[0].mxu0
    %v8178 = vadd.f32 %v7977, %v8177
    %v8179 = vpop.f32.mrb[0].mxu0
    %v8180 = vpop.f32.mrb[0].mxu0
    %v8181 = vadd.f32 %v7977, %v8180
    %v8182 = vpop.f32.mrb[0].mxu0
    %8183 = vmatprep.mubr.bf16.mxu0 0
    %8184 = vmatmul.mubr.bf16.gmra.mrb[0].mxu0 %v8017
    %v8185 = vpop.f32.mrb[0].mxu0
    %v8186 = vadd.f32 %v7977, %v8185
    %v8187 = vpop.f32.mrb[0].mxu0
    %v8188 = vpop.f32.mrb[0].mxu0
    %v8189 = vadd.f32 %v7977, %v8188
    %v8190 = vpop.f32.mrb[0].mxu0
    %8191 = vmatprep.mubr.bf16.mxu0 0
    %8192 = vmatmul.mubr.bf16.gmra.mrb[0].mxu0 %v8020
    %v8193 = vpop.f32.mrb[0].mxu0
    %v8194 = vadd.f32 %v7977, %v8193
    %v8195 = vpop.f32.mrb[0].mxu0
    %v8196 = vpop.f32.mrb[0].mxu0
    %v8197 = vadd.f32 %v7977, %v8196
    %v8198 = vpop.f32.mrb[0].mxu0
    %8199 = vmatprep.mubr.bf16.mxu0 0
    %8200 = vmatmul.mubr.bf16.gmra.mrb[0].mxu0 %v8023
    %v8201 = vpop.f32.mrb[0].mxu0
    %v8202 = vadd.f32 %v7977, %v8201
    %v8203 = vpop.f32.mrb[0].mxu0
    %v8204 = vpop.f32.mrb[0].mxu0
    %v8205 = vadd.f32 %v7977, %v8204
    %v8206 = vpop.f32.mrb[0].mxu0
    %8207 = vmatprep.mubr.bf16.mxu0 0
    %8208 = vmatmul.mubr.bf16.gmra.mrb[0].mxu0 %v8026
    %v8209 = vpop.f32.mrb[0].mxu0
    %v8210 = vadd.f32 %v7977, %v8209
    %v8211 = vpop.f32.mrb[0].mxu0
    %v8212 = vpop.f32.mrb[0].mxu0
    %v8213 = vadd.f32 %v7977, %v8212
    %v8214 = vpop.f32.mrb[0].mxu0
    %8215 = vmatprep.mubr.bf16.mxu0 0
    %8216 = vmatmul.mubr.bf16.gmra.mrb[0].mxu0 %v8029
    %v8217 = vpop.f32.mrb[0].mxu0
    %v8218 = vadd.f32 %v7977, %v8217
    %v8219 = vpop.f32.mrb[0].mxu0
    %v8220 = vpop.f32.mrb[0].mxu0
    %v8221 = vadd.f32 %v7977, %v8220
    %v8222 = vpop.f32.mrb[0].mxu0
    %8223 = vmatprep.mubr.bf16.mxu0 0
    %8224 = vmatmul.mubr.bf16.gmra.mrb[0].mxu0 %v8032
    %v8225 = vpop.f32.mrb[0].mxu0
    %v8226 = vadd.f32 %v7977, %v8225
    %v8227 = vpop.f32.mrb[0].mxu0
    %v8228 = vpop.f32.mrb[0].mxu0
    %v8229 = vadd.f32 %v7977, %v8228
    %v8230 = vpop.f32.mrb[0].mxu0
    %8231 = vmatprep.mubr.bf16.mxu0 0
    %8232 = vmatmul.mubr.bf16.gmra.mrb[0].mxu0 %v8035
    %v8233 = vpop.f32.mrb[0].mxu0
    %v8234 = vadd.f32 %v7977, %v8233
    %v8235 = vpop.f32.mrb[0].mxu0
    %v8236 = vpop.f32.mrb[0].mxu0
    %v8237 = vadd.f32 %v7977, %v8236
    %v8238 = vpop.f32.mrb[0].mxu0
    %8239 = vmatprep.mubr.bf16.mxu0 0
    %8240 = vmatmul.mubr.bf16.gmra.mrb[0].mxu0 %v8038
    %v8241 = vpop.f32.mrb[0].mxu0
    %v8242 = vadd.f32 %v7977, %v8241
    %v8243 = vpop.f32.mrb[0].mxu0
    %v8244 = vpop.f32.mrb[0].mxu0
    %v8245 = vadd.f32 %v7977, %v8244
    %v8246 = vpop.f32.mrb[0].mxu0
    %8247 = vmatprep.mubr.bf16.mxu0 0
    %8248 = vmatmul.mubr.bf16.gmra.mrb[0].mxu0 %v8041
    %v8249 = vpop.f32.mrb[0].mxu0
    %v8250 = vadd.f32 %v7977, %v8249
    %v8251 = vpop.f32.mrb[0].mxu0
    %v8252 = vpop.f32.mrb[0].mxu0
    %v8253 = vadd.f32 %v7977, %v8252
    %v8254 = vpop.f32.mrb[0].mxu0
    %8255 = vmatprep.mubr.bf16.mxu0 0
    %8256 = vmatmul.mubr.bf16.gmra.mrb[0].mxu0 %v8044
    %v8257 = vpop.f32.mrb[0].mxu0
    %v8258 = vadd.f32 %v7977, %v8257
    %v8259 = vpop.f32.mrb[0].mxu0
    %v8260 = vpop.f32.mrb[0].mxu0
    %v8261 = vadd.f32 %v7977, %v8260
    %v8262 = vpop.f32.mrb[0].mxu0
    %8263 = vmatprep.mubr.bf16.mxu0 0
    %8264 = vmatmul.mubr.bf16.gmra.mrb[0].mxu0 %v8047
    %v8265 = vpop.f32.mrb[0].mxu0
    %v8266 = vadd.f32 %v7977, %v8265
    %v8267 = vpop.f32.mrb[0].mxu0
    %v8268 = vpop.f32.mrb[0].mxu0
    %v8269 = vadd.f32 %v7977, %v8268
    %v8270 = vpop.f32.mrb[0].mxu0
    %8271 = vmatprep.mubr.bf16.mxu0 0
    %8272 = vmatmul.mubr.bf16.gmra.mrb[0].mxu0 %v8050
    %v8273 = vpop.f32.mrb[0].mxu0
    %v8274 = vadd.f32 %v7977, %v8273
    %v8275 = vpop.f32.mrb[0].mxu0
    %v8276 = vpop.f32.mrb[0].mxu0
    %v8277 = vadd.f32 %v7977, %v8276
    %v8278 = vpop.f32.mrb[0].mxu0
    %8279 = vmatprep.mubr.bf16.mxu0 0
    %8280 = vmatmul.mubr.bf16.gmra.mrb[0].mxu0 %v8053
    %v8281 = vpop.f32.mrb[0].mxu0
    %v8282 = vadd.f32 %v7977, %v8281
    %v8283 = vpop.f32.mrb[0].mxu0
    %v8284 = vpop.f32.mrb[0].mxu0
    %v8285 = vadd.f32 %v7977, %v8284
    %v8286 = vpop.f32.mrb[0].mxu0
    %8287 = vmatprep.mubr.bf16.mxu0 0
    %8288 = vmatmul.mubr.bf16.gmra.mrb[0].mxu0 %v8056
    %v8289 = vpop.f32.mrb[0].mxu0
    %v8290 = vadd.f32 %v7977, %v8289
    %v8291 = vpop.f32.mrb[0].mxu0
    %v8292 = vpop.f32.mrb[0].mxu0
    %v8293 = vadd.f32 %v7977, %v8292
    %v8294 = vpop.f32.mrb[0].mxu0
    %8295 = vmatprep.mubr.bf16.mxu0 0
    %8296 = vmatmul.mubr.bf16.gmra.mrb[0].mxu0 %v8059
    %v8297 = vpop.f32.mrb[0].mxu0
    %v8298 = vadd.f32 %v7977, %v8297
    %v8299 = vpop.f32.mrb[0].mxu0
    %v8300 = vpop.f32.mrb[0].mxu0
    %v8301 = vadd.f32 %v7977, %v8300
    %v8302 = vpop.f32.mrb[0].mxu0
    %8303 = vmatprep.mubr.bf16.mxu0 0
    %8304 = vmatmul.mubr.bf16.gmra.mrb[0].mxu0 %v8062
    %v8305 = vpop.f32.mrb[0].mxu0
    %v8306 = vadd.f32 %v7977, %v8305
    %v8307 = vpop.f32.mrb[0].mxu0
    %v8308 = vpop.f32.mrb[0].mxu0
    %v8309 = vadd.f32 %v7977, %v8308
    %v8310 = vpop.f32.mrb[0].mxu0
    %8311 = vmatprep.mubr.bf16.mxu0 0
    %8312 = vmatmul.mubr.bf16.gmra.mrb[0].mxu0 %v8065
    %v8313 = vpop.f32.mrb[0].mxu0
    %v8314 = vadd.f32 %v7977, %v8313
    %v8315 = vpop.f32.mrb[0].mxu0
    %v8316 = vpop.f32.mrb[0].mxu0
    %v8317 = vadd.f32 %v7977, %v8316
    %v8318 = vpop.f32.mrb[0].mxu0
    %8319 = vmatprep.mubr.bf16.mxu0 0
    %8320 = vmatmul.mubr.bf16.gmra.mrb[0].mxu0 %v8068
    %v8321 = vpop.f32.mrb[0].mxu0
    %v8322 = vadd.f32 %v7977, %v8321
    %v8323 = vpop.f32.mrb[0].mxu0
    %v8324 = vpop.f32.mrb[0].mxu0
    %v8325 = vadd.f32 %v7977, %v8324
    %v8326 = vpop.f32.mrb[0].mxu0
    %8327 = vmatprep.mubr.bf16.mxu0 0
    %8328 = vmatmul.mubr.bf16.gmra.mrb[0].mxu0 %v8071
    %v8329 = vpop.f32.mrb[0].mxu0
    %v8330 = vadd.f32 %v7977, %v8329
    %v8331 = vpop.f32.mrb[0].mxu0
    %v8332 = vpop.f32.mrb[0].mxu0
    %v8333 = vadd.f32 %v7977, %v8332
    %v8334 = vpop.f32.mrb[0].mxu0
    %8335 = vmatprep.mubr.bf16.mxu0 0
    %8336 = vmatmul.mubr.bf16.gmra.mrb[0].mxu0 %v8074
    %v8337 = vpop.f32.mrb[0].mxu0
    %v8338 = vadd.f32 %v7977, %v8337
    %v8339 = vpop.f32.mrb[0].mxu0
    %v8340 = vpop.f32.mrb[0].mxu0
    %v8341 = vadd.f32 %v7977, %v8340
    %v8342 = vpop.f32.mrb[0].mxu0
    %8343 = vmatprep.mubr.bf16.mxu0 0
    %8344 = vmatmul.mubr.bf16.gmra.mrb[0].mxu0 %v8077
    %v8345 = vpop.f32.mrb[0].mxu0
    %v8346 = vadd.f32 %v7977, %v8345
    %v8347 = vpop.f32.mrb[0].mxu0
    %v8348 = vpop.f32.mrb[0].mxu0
    %v8349 = vadd.f32 %v7977, %v8348
    %v8350 = vpop.f32.mrb[0].mxu0
    %8351 = vmatprep.mubr.bf16.mxu0 0
    %8352 = vmatmul.mubr.bf16.gmra.mrb[0].mxu0 %v8080
    %v8353 = vpop.f32.mrb[0].mxu0
    %v8354 = vadd.f32 %v7977, %v8353
    %v8355 = vpop.f32.mrb[0].mxu0
    %v8356 = vpop.f32.mrb[0].mxu0
    %v8357 = vadd.f32 %v7977, %v8356
    %v8358 = vpop.f32.mrb[0].mxu0
    %8359 = vmatprep.mubr.bf16.mxu0 0
    %8360 = vmatmul.mubr.bf16.gmra.mrb[0].mxu0 %v8083
    %v8361 = vpop.f32.mrb[0].mxu0
    %v8362 = vadd.f32 %v7977, %v8361
    %v8363 = vpop.f32.mrb[0].mxu0
    %v8364 = vpop.f32.mrb[0].mxu0
    %v8365 = vadd.f32 %v7977, %v8364
    %v8366 = vpop.f32.mrb[0].mxu0
    %8367 = vmatprep.mubr.bf16.mxu0 0
    %8368 = vmatmul.mubr.bf16.gmra.mrb[0].mxu0 %v8086
    %v8369 = vpop.f32.mrb[0].mxu0
    %v8370 = vadd.f32 %v7977, %v8369
    %v8371 = vpop.f32.mrb[0].mxu0
    %v8372 = vpop.f32.mrb[0].mxu0
    %v8373 = vadd.f32 %v7977, %v8372
    %v8374 = vpop.f32.mrb[0].mxu0
    %8375 = vmatprep.mubr.bf16.mxu0 0
    %8376 = vmatmul.mubr.bf16.gmra.mrb[0].mxu0 %v8089
    %v8377 = vpop.f32.mrb[0].mxu0
    %v8378 = vadd.f32 %v7977, %v8377
    %v8379 = vpop.f32.mrb[0].mxu0
    %v8380 = vpop.f32.mrb[0].mxu0
    %v8381 = vadd.f32 %v7977, %v8380
    %v8382 = vpop.f32.mrb[0].mxu0
    %8383 = vdwg.mxu0
    %v8384 = vmax.f32 %v8130, 0.0
    %v8385 = vmax.f32 %v8133, 0.0
    %v8386 = vmax.f32 %v8138, 0.0
    %v8387 = vmax.f32 %v8141, 0.0
    %v8388 = vmax.f32 %v8146, 0.0
    %v8389 = vmax.f32 %v8149, 0.0
    %v8390 = vmax.f32 %v8154, 0.0
    %v8391 = vmax.f32 %v8157, 0.0
    %v8392 = vmax.f32 %v8162, 0.0
    %v8393 = vmax.f32 %v8165, 0.0
    %v8394 = vmax.f32 %v8170, 0.0
    %v8395 = vmax.f32 %v8173, 0.0
    %v8396 = vmax.f32 %v8178, 0.0
    %v8397 = vmax.f32 %v8181, 0.0
    %v8398 = vmax.f32 %v8186, 0.0
    %v8399 = vmax.f32 %v8189, 0.0
    %v8400 = vmax.f32 %v8194, 0.0
    %v8401 = vmax.f32 %v8197, 0.0
    %v8402 = vmax.f32 %v8202, 0.0
    %v8403 = vmax.f32 %v8205, 0.0
    %v8404 = vmax.f32 %v8210, 0.0
    %v8405 = vmax.f32 %v8213, 0.0
    %v8406 = vmax.f32 %v8218, 0.0
    %v8407 = vmax.f32 %v8221, 0.0
    %v8408 = vmax.f32 %v8226, 0.0
    %v8409 = vmax.f32 %v8229, 0.0
    %v8410 = vmax.f32 %v8234, 0.0
    %v8411 = vmax.f32 %v8237, 0.0
    %v8412 = vmax.f32 %v8242, 0.0
    %v8413 = vmax.f32 %v8245, 0.0
    %v8414 = vmax.f32 %v8250, 0.0
    %v8415 = vmax.f32 %v8253, 0.0
    %v8416 = vmax.f32 %v8258, 0.0
    %v8417 = vmax.f32 %v8261, 0.0
    %v8418 = vmax.f32 %v8266, 0.0
    %v8419 = vmax.f32 %v8269, 0.0
    %v8420 = vmax.f32 %v8274, 0.0
    %v8421 = vmax.f32 %v8277, 0.0
    %v8422 = vmax.f32 %v8282, 0.0
    %v8423 = vmax.f32 %v8285, 0.0
    %v8424 = vmax.f32 %v8290, 0.0
    %v8425 = vmax.f32 %v8293, 0.0
    %v8426 = vmax.f32 %v8298, 0.0
    %v8427 = vmax.f32 %v8301, 0.0
    %v8428 = vmax.f32 %v8306, 0.0
    %v8429 = vmax.f32 %v8309, 0.0
    %v8430 = vmax.f32 %v8314, 0.0
    %v8431 = vmax.f32 %v8317, 0.0
    %v8432 = vmax.f32 %v8322, 0.0
    %v8433 = vmax.f32 %v8325, 0.0
    %v8434 = vmax.f32 %v8330, 0.0
    %v8435 = vmax.f32 %v8333, 0.0
    %v8436 = vmax.f32 %v8338, 0.0
    %v8437 = vmax.f32 %v8341, 0.0
    %v8438 = vmax.f32 %v8346, 0.0
    %v8439 = vmax.f32 %v8349, 0.0
    %v8440 = vmax.f32 %v8354, 0.0
    %v8441 = vmax.f32 %v8357, 0.0
    %v8442 = vmax.f32 %v8362, 0.0
    %v8443 = vmax.f32 %v8365, 0.0
    %v8444 = vmax.f32 %v8370, 0.0
    %v8445 = vmax.f32 %v8373, 0.0
    %v8446 = vmax.f32 %v8378, 0.0
    %v8447 = vmax.f32 %v8381, 0.0
    %v8448 = vld [vmem:[%s0] sm:$0xf]
    %v8449 = vld [vmem:[%s0 + $0x4] sm:$0xf]
    %v8450 = vld [vmem:[%s0 + $0x8] sm:$0xf]
    %v8451 = vld [vmem:[%s0 + $0xc] sm:$0xf]
    %v8452 = vld [vmem:[%s0 + $0x10] sm:$0xf]
    %v8453 = vld [vmem:[%s0 + $0x14] sm:$0xf]
    %v8454 = vld [vmem:[%s0 + $0x18] sm:$0xf]
    %v8455 = vld [vmem:[%s0 + $0x1c] sm:$0xf]
    %v8456 = vld [vmem:[%s0 + $0x20] sm:$0xf]
    %v8457 = vld [vmem:[%s0 + $0x24] sm:$0xf]
    %v8458 = vld [vmem:[%s0 + $0x28] sm:$0xf]
    %v8459 = vld [vmem:[%s0 + $0x2c] sm:$0xf]
    %v8460 = vld [vmem:[%s0 + $0x30] sm:$0xf]
    %v8461 = vld [vmem:[%s0 + $0x34] sm:$0xf]
    %v8462 = vld [vmem:[%s0 + $0x38] sm:$0xf]
    %v8463 = vld [vmem:[%s0 + $0x3c] sm:$0xf]
    %v8464 = vld [vmem:[%s0 + $0x40] sm:$0xf]
    %v8465 = vld [vmem:[%s0 + $0x44] sm:$0xf]
    %v8466 = vld [vmem:[%s0 + $0x48] sm:$0xf]
    %v8467 = vld [vmem:[%s0 + $0x4c] sm:$0xf]
    %v8468 = vld [vmem:[%s0 + $0x50] sm:$0xf]
    %v8469 = vld [vmem:[%s0 + $0x54] sm:$0xf]
    %v8470 = vld [vmem:[%s0 + $0x58] sm:$0xf]
    %v8471 = vld [vmem:[%s0 + $0x5c] sm:$0xf]
    %v8472 = vld [vmem:[%s0 + $0x60] sm:$0xf]
    %v8473 = vld [vmem:[%s0 + $0x64] sm:$0xf]
    %v8474 = vld [vmem:[%s0 + $0x68] sm:$0xf]
    %v8475 = vld [vmem:[%s0 + $0x6c] sm:$0xf]
    %v8476 = vld [vmem:[%s0 + $0x70] sm:$0xf]
    %v8477 = vld [vmem:[%s0 + $0x74] sm:$0xf]
    %v8478 = vld [vmem:[%s0 + $0x78] sm:$0xf]
    %v8479 = vld [vmem:[%s0 + $0x7c] sm:$0xf]
    %v8480 = vld [vmem:[%s0 + $0x80] sm:$0xf]
    %v8481 = vld [vmem:[%s0 + $0x84] sm:$0xf]
    %v8482 = vld [vmem:[%s0 + $0x88] sm:$0xf]
    %v8483 = vld [vmem:[%s0 + $0x8c] sm:$0xf]
    %v8484 = vld [vmem:[%s0 + $0x90] sm:$0xf]
    %v8485 = vld [vmem:[%s0 + $0x94] sm:$0xf]
    %v8486 = vld [vmem:[%s0 + $0x98] sm:$0xf]
    %v8487 = vld [vmem:[%s0 + $0x9c] sm:$0xf]
    %v8488 = vld [vmem:[%s0 + $0xa0] sm:$0xf]
    %v8489 = vld [vmem:[%s0 + $0xa4] sm:$0xf]
    %v8490 = vld [vmem:[%s0 + $0xa8] sm:$0xf]
    %v8491 = vld [vmem:[%s0 + $0xac] sm:$0xf]
    %v8492 = vld [vmem:[%s0 + $0xb0] sm:$0xf]
    %v8493 = vld [vmem:[%s0 + $0xb4] sm:$0xf]
    %v8494 = vld [vmem:[%s0 + $0xb8] sm:$0xf]
    %v8495 = vld [vmem:[%s0 + $0xbc] sm:$0xf]
    %v8496 = vld [vmem:[%s0 + $0xc0] sm:$0xf]
    %v8497 = vld [vmem:[%s0 + $0xc4] sm:$0xf]
    %v8498 = vld [vmem:[%s0 + $0xc8] sm:$0xf]
    %v8499 = vld [vmem:[%s0 + $0xcc] sm:$0xf]
    %v8500 = vld [vmem:[%s0 + $0xd0] sm:$0xf]
    %v8501 = vld [vmem:[%s0 + $0xd4] sm:$0xf]
    %v8502 = vld [vmem:[%s0 + $0xd8] sm:$0xf]
    %v8503 = vld [vmem:[%s0 + $0xdc] sm:$0xf]
    %v8504 = vld [vmem:[%s0 + $0xe0] sm:$0xf]
    %v8505 = vld [vmem:[%s0 + $0xe4] sm:$0xf]
    %v8506 = vld [vmem:[%s0 + $0xe8] sm:$0xf]
    %v8507 = vld [vmem:[%s0 + $0xec] sm:$0xf]
    %v8508 = vld [vmem:[%s0 + $0xf0] sm:$0xf]
    %v8509 = vld [vmem:[%s0 + $0xf4] sm:$0xf]
    %v8510 = vld [vmem:[%s0 + $0xf8] sm:$0xf]
    %v8511 = vld [vmem:[%s0 + $0xfc] sm:$0xf]
    %v8512 = vpack.c.bf16 %v8385, %v8384
    %v8513 = vpack.c.bf16 %v8387, %v8386
    %v8514 = vpack.c.bf16 %v8389, %v8388
    %v8515 = vpack.c.bf16 %v8391, %v8390
    %v8516 = vpack.c.bf16 %v8393, %v8392
    %v8517 = vpack.c.bf16 %v8395, %v8394
    %v8518 = vpack.c.bf16 %v8397, %v8396
    %v8519 = vpack.c.bf16 %v8399, %v8398
    %v8520 = vpack.c.bf16 %v8401, %v8400
    %v8521 = vpack.c.bf16 %v8403, %v8402
    %v8522 = vpack.c.bf16 %v8405, %v8404
    %v8523 = vpack.c.bf16 %v8407, %v8406
    %v8524 = vpack.c.bf16 %v8409, %v8408
    %v8525 = vpack.c.bf16 %v8411, %v8410
    %v8526 = vpack.c.bf16 %v8413, %v8412
    %v8527 = vpack.c.bf16 %v8415, %v8414
    %v8528 = vpack.c.bf16 %v8417, %v8416
    %v8529 = vpack.c.bf16 %v8419, %v8418
    %v8530 = vpack.c.bf16 %v8421, %v8420
    %v8531 = vpack.c.bf16 %v8423, %v8422
    %v8532 = vpack.c.bf16 %v8425, %v8424
    %v8533 = vpack.c.bf16 %v8427, %v8426
    %v8534 = vpack.c.bf16 %v8429, %v8428
    %v8535 = vpack.c.bf16 %v8431, %v8430
    %v8536 = vpack.c.bf16 %v8433, %v8432
    %v8537 = vpack.c.bf16 %v8435, %v8434
    %v8538 = vpack.c.bf16 %v8437, %v8436
    %v8539 = vpack.c.bf16 %v8439, %v8438
    %v8540 = vpack.c.bf16 %v8441, %v8440
    %v8541 = vpack.c.bf16 %v8443, %v8442
    %v8542 = vpack.c.bf16 %v8445, %v8444
    %v8543 = vpack.c.bf16 %v8447, %v8446
    %v8608 = vunpack.c.l.b16 %v8448
    %v8609 = vunpack.c.l.b16 %v8449
    %v8610 = vunpack.c.l.b16 %v8450
    %v8611 = vunpack.c.l.b16 %v8451
    %v8612 = vunpack.c.l.b16 %v8452
    %v8613 = vunpack.c.l.b16 %v8453
    %v8614 = vunpack.c.l.b16 %v8454
    %v8615 = vunpack.c.l.b16 %v8455
    %v8616 = vunpack.c.l.b16 %v8456
    %v8617 = vunpack.c.l.b16 %v8457
    %v8618 = vunpack.c.l.b16 %v8458
    %v8619 = vunpack.c.l.b16 %v8459
    %v8620 = vunpack.c.l.b16 %v8460
    %v8621 = vunpack.c.l.b16 %v8461
    %v8622 = vunpack.c.l.b16 %v8462
    %v8623 = vunpack.c.l.b16 %v8463
    %v8624 = vunpack.c.l.b16 %v8464
    %v8625 = vunpack.c.l.b16 %v8465
    %v8626 = vunpack.c.l.b16 %v8466
    %v8627 = vunpack.c.l.b16 %v8467
    %v8628 = vunpack.c.l.b16 %v8468
    %v8629 = vunpack.c.l.b16 %v8469
    %v8630 = vunpack.c.l.b16 %v8470
    %v8631 = vunpack.c.l.b16 %v8471
    %v8632 = vunpack.c.l.b16 %v8472
    %v8633 = vunpack.c.l.b16 %v8473
    %v8634 = vunpack.c.l.b16 %v8474
    %v8635 = vunpack.c.l.b16 %v8475
    %v8636 = vunpack.c.l.b16 %v8476
    %v8637 = vunpack.c.l.b16 %v8477
    %v8638 = vunpack.c.l.b16 %v8478
    %v8639 = vunpack.c.l.b16 %v8479
    %v8640 = vunpack.c.l.b16 %v8480
    %v8641 = vunpack.c.l.b16 %v8481
    %v8642 = vunpack.c.l.b16 %v8482
    %v8643 = vunpack.c.l.b16 %v8483
    %v8644 = vunpack.c.l.b16 %v8484
    %v8645 = vunpack.c.l.b16 %v8485
    %v8646 = vunpack.c.l.b16 %v8486
    %v8647 = vunpack.c.l.b16 %v8487
    %v8648 = vunpack.c.l.b16 %v8488
    %v8649 = vunpack.c.l.b16 %v8489
    %v8650 = vunpack.c.l.b16 %v8490
    %v8651 = vunpack.c.l.b16 %v8491
    %v8652 = vunpack.c.l.b16 %v8492
    %v8653 = vunpack.c.l.b16 %v8493
    %v8654 = vunpack.c.l.b16 %v8494
    %v8655 = vunpack.c.l.b16 %v8495
    %v8656 = vunpack.c.l.b16 %v8496
    %v8657 = vunpack.c.l.b16 %v8497
    %v8658 = vunpack.c.l.b16 %v8498
    %v8659 = vunpack.c.l.b16 %v8499
    %v8660 = vunpack.c.l.b16 %v8500
    %v8661 = vunpack.c.l.b16 %v8501
    %v8662 = vunpack.c.l.b16 %v8502
    %v8663 = vunpack.c.l.b16 %v8503
    %v8664 = vunpack.c.l.b16 %v8504
    %v8665 = vunpack.c.l.b16 %v8505
    %v8666 = vunpack.c.l.b16 %v8506
    %v8667 = vunpack.c.l.b16 %v8507
    %v8668 = vunpack.c.l.b16 %v8508
    %v8669 = vunpack.c.l.b16 %v8509
    %v8670 = vunpack.c.l.b16 %v8510
    %v8671 = vunpack.c.l.b16 %v8511
    %v8672 = vpack.c.b16 %v8609, %v8608
    %v8673 = vpack.c.b16 %v8611, %v8610
    %v8674 = vpack.c.b16 %v8613, %v8612
    %v8675 = vpack.c.b16 %v8615, %v8614
    %v8676 = vpack.c.b16 %v8617, %v8616
    %v8677 = vpack.c.b16 %v8619, %v8618
    %v8678 = vpack.c.b16 %v8621, %v8620
    %v8679 = vpack.c.b16 %v8623, %v8622
    %v8680 = vpack.c.b16 %v8625, %v8624
    %v8681 = vpack.c.b16 %v8627, %v8626
    %v8682 = vpack.c.b16 %v8629, %v8628
    %v8683 = vpack.c.b16 %v8631, %v8630
    %v8684 = vpack.c.b16 %v8633, %v8632
    %v8685 = vpack.c.b16 %v8635, %v8634
    %v8686 = vpack.c.b16 %v8637, %v8636
    %v8687 = vpack.c.b16 %v8639, %v8638
    %v8688 = vpack.c.b16 %v8641, %v8640
    %v8689 = vpack.c.b16 %v8643, %v8642
    %v8690 = vpack.c.b16 %v8645, %v8644
    %v8691 = vpack.c.b16 %v8647, %v8646
    %v8692 = vpack.c.b16 %v8649, %v8648
    %v8693 = vpack.c.b16 %v8651, %v8650
    %v8694 = vpack.c.b16 %v8653, %v8652
    %v8695 = vpack.c.b16 %v8655, %v8654
    %v8696 = vpack.c.b16 %v8657, %v8656
    %v8697 = vpack.c.b16 %v8659, %v8658
    %v8698 = vpack.c.b16 %v8661, %v8660
    %v8699 = vpack.c.b16 %v8663, %v8662
    %v8700 = vpack.c.b16 %v8665, %v8664
    %v8701 = vpack.c.b16 %v8667, %v8666
    %v8702 = vpack.c.b16 %v8669, %v8668
    %v8703 = vpack.c.b16 %v8671, %v8670
    %8704 = vrot.lane.b32.xlu0 %v8672, 4
    %v8705 = vpop.permute.xlu0 %8704
    %8706 = vrot.lane.b32.xlu0 %v8673, 4
    %v8707 = vpop.permute.xlu0 %8706
    %8708 = vrot.lane.b32.xlu0 %v8674, 4
    %v8709 = vpop.permute.xlu0 %8708
    %8710 = vrot.lane.b32.xlu0 %v8675, 4
    %v8711 = vpop.permute.xlu0 %8710
    %8712 = vrot.lane.b32.xlu0 %v8676, 4
    %v8713 = vpop.permute.xlu0 %8712
    %8714 = vrot.lane.b32.xlu0 %v8677, 4
    %v8715 = vpop.permute.xlu0 %8714
    %8716 = vrot.lane.b32.xlu0 %v8678, 4
    %v8717 = vpop.permute.xlu0 %8716
    %8718 = vrot.lane.b32.xlu0 %v8679, 4
    %v8719 = vpop.permute.xlu0 %8718
    %8720 = vrot.lane.b32.xlu0 %v8680, 4
    %v8721 = vpop.permute.xlu0 %8720
    %8722 = vrot.lane.b32.xlu0 %v8681, 4
    %v8723 = vpop.permute.xlu0 %8722
    %8724 = vrot.lane.b32.xlu0 %v8682, 4
    %v8725 = vpop.permute.xlu0 %8724
    %8726 = vrot.lane.b32.xlu0 %v8683, 4
    %v8727 = vpop.permute.xlu0 %8726
    %8728 = vrot.lane.b32.xlu0 %v8684, 4
    %v8729 = vpop.permute.xlu0 %8728
    %8730 = vrot.lane.b32.xlu0 %v8685, 4
    %v8731 = vpop.permute.xlu0 %8730
    %8732 = vrot.lane.b32.xlu0 %v8686, 4
    %v8733 = vpop.permute.xlu0 %8732
    %8734 = vrot.lane.b32.xlu0 %v8687, 4
    %v8735 = vpop.permute.xlu0 %8734
    %8736 = vrot.lane.b32.xlu0 %v8688, 4
    %v8737 = vpop.permute.xlu0 %8736
    %8738 = vrot.lane.b32.xlu0 %v8689, 4
    %v8739 = vpop.permute.xlu0 %8738
    %8740 = vrot.lane.b32.xlu0 %v8690, 4
    %v8741 = vpop.permute.xlu0 %8740
    %8742 = vrot.lane.b32.xlu0 %v8691, 4
    %v8743 = vpop.permute.xlu0 %8742
    %8744 = vrot.lane.b32.xlu0 %v8692, 4
    %v8745 = vpop.permute.xlu0 %8744
    %8746 = vrot.lane.b32.xlu0 %v8693, 4
    %v8747 = vpop.permute.xlu0 %8746
    %8748 = vrot.lane.b32.xlu0 %v8694, 4
    %v8749 = vpop.permute.xlu0 %8748
    %8750 = vrot.lane.b32.xlu0 %v8695, 4
    %v8751 = vpop.permute.xlu0 %8750
    %8752 = vrot.lane.b32.xlu0 %v8696, 4
    %v8753 = vpop.permute.xlu0 %8752
    %8754 = vrot.lane.b32.xlu0 %v8697, 4
    %v8755 = vpop.permute.xlu0 %8754
    %8756 = vrot.lane.b32.xlu0 %v8698, 4
    %v8757 = vpop.permute.xlu0 %8756
    %8758 = vrot.lane.b32.xlu0 %v8699, 4
    %v8759 = vpop.permute.xlu0 %8758
    %8760 = vrot.lane.b32.xlu0 %v8700, 4
    %v8761 = vpop.permute.xlu0 %8760
    %8762 = vrot.lane.b32.xlu0 %v8701, 4
    %v8763 = vpop.permute.xlu0 %8762
    %8764 = vrot.lane.b32.xlu0 %v8702, 4
    %v8765 = vpop.permute.xlu0 %8764
    %8766 = vrot.lane.b32.xlu0 %v8703, 4
    %v8767 = vpop.permute.xlu0 %8766
    %v8770 = vsel %vm2196, %v8512, %v8705
    %v8773 = vsel %vm2196, %v8513, %v8707
    %v8776 = vsel %vm2196, %v8514, %v8709
    %v8779 = vsel %vm2196, %v8515, %v8711
    %v8782 = vsel %vm2196, %v8516, %v8713
    %v8785 = vsel %vm2196, %v8517, %v8715
    %v8788 = vsel %vm2196, %v8518, %v8717
    %v8791 = vsel %vm2196, %v8519, %v8719
    %v8794 = vsel %vm2196, %v8520, %v8721
    %v8797 = vsel %vm2196, %v8521, %v8723
    %v8800 = vsel %vm2196, %v8522, %v8725
    %v8803 = vsel %vm2196, %v8523, %v8727
    %v8806 = vsel %vm2196, %v8524, %v8729
    %v8809 = vsel %vm2196, %v8525, %v8731
    %v8812 = vsel %vm2196, %v8526, %v8733
    %v8815 = vsel %vm2196, %v8527, %v8735
    %v8818 = vsel %vm2196, %v8528, %v8737
    %v8821 = vsel %vm2196, %v8529, %v8739
    %v8824 = vsel %vm2196, %v8530, %v8741
    %v8827 = vsel %vm2196, %v8531, %v8743
    %v8830 = vsel %vm2196, %v8532, %v8745
    %v8833 = vsel %vm2196, %v8533, %v8747
    %v8836 = vsel %vm2196, %v8534, %v8749
    %v8839 = vsel %vm2196, %v8535, %v8751
    %v8842 = vsel %vm2196, %v8536, %v8753
    %v8845 = vsel %vm2196, %v8537, %v8755
    %v8848 = vsel %vm2196, %v8538, %v8757
    %v8851 = vsel %vm2196, %v8539, %v8759
    %v8854 = vsel %vm2196, %v8540, %v8761
    %v8857 = vsel %vm2196, %v8541, %v8763
    %v8860 = vsel %vm2196, %v8542, %v8765
    %v8863 = vsel %vm2196, %v8543, %v8767
    %v8864 = vld [vmem:[%s5] sm:$0xf]
    %v8865 = vld [vmem:[%s5 + $0x4] sm:$0x3]
    %v8866 = vld [vmem:[%s6] sm:$0x1]
    %v8868 = vlaneseq
    %v8869 = vshrl.u32 %v8868, 7
    %v8870 = vsub.s32 0, %v8869
    %v8871 = vrot.slane %v8866, %v8870
    %v8875 = vunpack.c.l.b16 %v8864
    %v8876 = vunpack.c.l.b16 %v8865
    %v8877 = vpack.c.b16 %v8876, %v8875
    %vm8878 = vcmask 97280
    %v8879 = vsel %vm8878, %v8770, 0
    %v8881 = vsel %vm8878, %v8773, 0
    %v8883 = vsel %vm8878, %v8776, 0
    %v8885 = vsel %vm8878, %v8779, 0
    %v8887 = vsel %vm8878, %v8782, 0
    %v8889 = vsel %vm8878, %v8785, 0
    %v8891 = vsel %vm8878, %v8788, 0
    %v8893 = vsel %vm8878, %v8791, 0
    %v8895 = vsel %vm8878, %v8794, 0
    %v8897 = vsel %vm8878, %v8797, 0
    %v8899 = vsel %vm8878, %v8800, 0
    %v8901 = vsel %vm8878, %v8803, 0
    %v8903 = vsel %vm8878, %v8806, 0
    %v8905 = vsel %vm8878, %v8809, 0
    %v8907 = vsel %vm8878, %v8812, 0
    %v8909 = vsel %vm8878, %v8815, 0
    %v8911 = vsel %vm8878, %v8818, 0
    %v8913 = vsel %vm8878, %v8821, 0
    %v8915 = vsel %vm8878, %v8824, 0
    %v8917 = vsel %vm8878, %v8827, 0
    %v8919 = vsel %vm8878, %v8830, 0
    %v8921 = vsel %vm8878, %v8833, 0
    %v8923 = vsel %vm8878, %v8836, 0
    %v8925 = vsel %vm8878, %v8839, 0
    %v8927 = vsel %vm8878, %v8842, 0
    %v8929 = vsel %vm8878, %v8845, 0
    %v8931 = vsel %vm8878, %v8848, 0
    %v8933 = vsel %vm8878, %v8851, 0
    %v8935 = vsel %vm8878, %v8854, 0
    %v8937 = vsel %vm8878, %v8857, 0
    %v8939 = vsel %vm8878, %v8860, 0
    %v8941 = vsel %vm8878, %v8863, 0
    %vm8943 = vcmask 1045504
    %v8945 = vsel %vm8943, %v8877, 0
    %8947 = vmatprep.subr.bf16.mxu0 0
    %8948 = vmatpush1.bf16.msra.mxu0 %v8945
    %8949 = vmatprep.subr.bf16.mxu0 0
    %8950 = vmatpush1.bf16.msra.mxu0 0
    %8951 = vmatprep.subr.bf16.mxu0 0
    %8952 = vmatpush1.bf16.msra.mxu0 0
    %8953 = vmatprep.subr.bf16.mxu0 0
    %8954 = vmatpush1.bf16.msra.mxu0 0
    %8955 = vmatprep.subr.bf16.mxu0 0
    %8956 = vmatpush1.bf16.msra.mxu0 0
    %8957 = vmatprep.subr.bf16.mxu0 0
    %8958 = vmatpush1.bf16.msra.mxu0 0
    %8959 = vmatprep.subr.bf16.mxu0 0
    %8960 = vmatpush1.bf16.msra.mxu0 0
    %8961 = vmatprep.subr.bf16.mxu0 0
    %8962 = vmatpush1.bf16.msra.mxu0 0
    %8963 = vmatprep.subr.bf16.mxu0 0
    %8964 = vmatpush1.bf16.msra.mxu0 0
    %8965 = vmatprep.subr.bf16.mxu0 0
    %8966 = vmatpush1.bf16.msra.mxu0 0
    %8967 = vmatprep.subr.bf16.mxu0 0
    %8968 = vmatpush1.bf16.msra.mxu0 0
    %8969 = vmatprep.subr.bf16.mxu0 0
    %8970 = vmatpush1.bf16.msra.mxu0 0
    %8971 = vmatprep.subr.bf16.mxu0 0
    %8972 = vmatpush1.bf16.msra.mxu0 0
    %8973 = vmatprep.subr.bf16.mxu0 0
    %8974 = vmatpush1.bf16.msra.mxu0 0
    %8975 = vmatprep.subr.bf16.mxu0 0
    %8976 = vmatpush1.bf16.msra.mxu0 0
    %8977 = vmatprep.subr.bf16.mxu0 0
    %8978 = vmatpush1.bf16.msra.mxu0 0
    %8979 = vmatprep.mubr.bf16.mxu0 0
    %8980 = vmatmul.mubr.bf16.gmra.mrb[0].mxu0 %v8879
    %v8981 = vpop.f32.mrb[0].mxu0
    %v8982 = vadd.f32 %v8871, %v8981
    %v8983 = vpop.f32.mrb[0].mxu0
    %v8984 = vpop.f32.mrb[0].mxu0
    %v8985 = vadd.f32 %v8871, %v8984
    %v8986 = vpop.f32.mrb[0].mxu0
    %8987 = vmatprep.mubr.bf16.mxu0 0
    %8988 = vmatmul.mubr.bf16.gmra.mrb[0].mxu0 %v8881
    %v8989 = vpop.f32.mrb[0].mxu0
    %v8990 = vadd.f32 %v8871, %v8989
    %v8991 = vpop.f32.mrb[0].mxu0
    %v8992 = vpop.f32.mrb[0].mxu0
    %v8993 = vadd.f32 %v8871, %v8992
    %v8994 = vpop.f32.mrb[0].mxu0
    %8995 = vmatprep.mubr.bf16.mxu0 0
    %8996 = vmatmul.mubr.bf16.gmra.mrb[0].mxu0 %v8883
    %v8997 = vpop.f32.mrb[0].mxu0
    %v8998 = vadd.f32 %v8871, %v8997
    %v8999 = vpop.f32.mrb[0].mxu0
    %v9000 = vpop.f32.mrb[0].mxu0
    %v9001 = vadd.f32 %v8871, %v9000
    %v9002 = vpop.f32.mrb[0].mxu0
    %9003 = vmatprep.mubr.bf16.mxu0 0
    %9004 = vmatmul.mubr.bf16.gmra.mrb[0].mxu0 %v8885
    %v9005 = vpop.f32.mrb[0].mxu0
    %v9006 = vadd.f32 %v8871, %v9005
    %v9007 = vpop.f32.mrb[0].mxu0
    %v9008 = vpop.f32.mrb[0].mxu0
    %v9009 = vadd.f32 %v8871, %v9008
    %v9010 = vpop.f32.mrb[0].mxu0
    %9011 = vmatprep.mubr.bf16.mxu0 0
    %9012 = vmatmul.mubr.bf16.gmra.mrb[0].mxu0 %v8887
    %v9013 = vpop.f32.mrb[0].mxu0
    %v9014 = vadd.f32 %v8871, %v9013
    %v9015 = vpop.f32.mrb[0].mxu0
    %v9016 = vpop.f32.mrb[0].mxu0
    %v9017 = vadd.f32 %v8871, %v9016
    %v9018 = vpop.f32.mrb[0].mxu0
    %9019 = vmatprep.mubr.bf16.mxu0 0
    %9020 = vmatmul.mubr.bf16.gmra.mrb[0].mxu0 %v8889
    %v9021 = vpop.f32.mrb[0].mxu0
    %v9022 = vadd.f32 %v8871, %v9021
    %v9023 = vpop.f32.mrb[0].mxu0
    %v9024 = vpop.f32.mrb[0].mxu0
    %v9025 = vadd.f32 %v8871, %v9024
    %v9026 = vpop.f32.mrb[0].mxu0
    %9027 = vmatprep.mubr.bf16.mxu0 0
    %9028 = vmatmul.mubr.bf16.gmra.mrb[0].mxu0 %v8891
    %v9029 = vpop.f32.mrb[0].mxu0
    %v9030 = vadd.f32 %v8871, %v9029
    %v9031 = vpop.f32.mrb[0].mxu0
    %v9032 = vpop.f32.mrb[0].mxu0
    %v9033 = vadd.f32 %v8871, %v9032
    %v9034 = vpop.f32.mrb[0].mxu0
    %9035 = vmatprep.mubr.bf16.mxu0 0
    %9036 = vmatmul.mubr.bf16.gmra.mrb[0].mxu0 %v8893
    %v9037 = vpop.f32.mrb[0].mxu0
    %v9038 = vadd.f32 %v8871, %v9037
    %v9039 = vpop.f32.mrb[0].mxu0
    %v9040 = vpop.f32.mrb[0].mxu0
    %v9041 = vadd.f32 %v8871, %v9040
    %v9042 = vpop.f32.mrb[0].mxu0
    %9043 = vmatprep.mubr.bf16.mxu0 0
    %9044 = vmatmul.mubr.bf16.gmra.mrb[0].mxu0 %v8895
    %v9045 = vpop.f32.mrb[0].mxu0
    %v9046 = vadd.f32 %v8871, %v9045
    %v9047 = vpop.f32.mrb[0].mxu0
    %v9048 = vpop.f32.mrb[0].mxu0
    %v9049 = vadd.f32 %v8871, %v9048
    %v9050 = vpop.f32.mrb[0].mxu0
    %9051 = vmatprep.mubr.bf16.mxu0 0
    %9052 = vmatmul.mubr.bf16.gmra.mrb[0].mxu0 %v8897
    %v9053 = vpop.f32.mrb[0].mxu0
    %v9054 = vadd.f32 %v8871, %v9053
    %v9055 = vpop.f32.mrb[0].mxu0
    %v9056 = vpop.f32.mrb[0].mxu0
    %v9057 = vadd.f32 %v8871, %v9056
    %v9058 = vpop.f32.mrb[0].mxu0
    %9059 = vmatprep.mubr.bf16.mxu0 0
    %9060 = vmatmul.mubr.bf16.gmra.mrb[0].mxu0 %v8899
    %v9061 = vpop.f32.mrb[0].mxu0
    %v9062 = vadd.f32 %v8871, %v9061
    %v9063 = vpop.f32.mrb[0].mxu0
    %v9064 = vpop.f32.mrb[0].mxu0
    %v9065 = vadd.f32 %v8871, %v9064
    %v9066 = vpop.f32.mrb[0].mxu0
    %9067 = vmatprep.mubr.bf16.mxu0 0
    %9068 = vmatmul.mubr.bf16.gmra.mrb[0].mxu0 %v8901
    %v9069 = vpop.f32.mrb[0].mxu0
    %v9070 = vadd.f32 %v8871, %v9069
    %v9071 = vpop.f32.mrb[0].mxu0
    %v9072 = vpop.f32.mrb[0].mxu0
    %v9073 = vadd.f32 %v8871, %v9072
    %v9074 = vpop.f32.mrb[0].mxu0
    %9075 = vmatprep.mubr.bf16.mxu0 0
    %9076 = vmatmul.mubr.bf16.gmra.mrb[0].mxu0 %v8903
    %v9077 = vpop.f32.mrb[0].mxu0
    %v9078 = vadd.f32 %v8871, %v9077
    %v9079 = vpop.f32.mrb[0].mxu0
    %v9080 = vpop.f32.mrb[0].mxu0
    %v9081 = vadd.f32 %v8871, %v9080
    %v9082 = vpop.f32.mrb[0].mxu0
    %9083 = vmatprep.mubr.bf16.mxu0 0
    %9084 = vmatmul.mubr.bf16.gmra.mrb[0].mxu0 %v8905
    %v9085 = vpop.f32.mrb[0].mxu0
    %v9086 = vadd.f32 %v8871, %v9085
    %v9087 = vpop.f32.mrb[0].mxu0
    %v9088 = vpop.f32.mrb[0].mxu0
    %v9089 = vadd.f32 %v8871, %v9088
    %v9090 = vpop.f32.mrb[0].mxu0
    %9091 = vmatprep.mubr.bf16.mxu0 0
    %9092 = vmatmul.mubr.bf16.gmra.mrb[0].mxu0 %v8907
    %v9093 = vpop.f32.mrb[0].mxu0
    %v9094 = vadd.f32 %v8871, %v9093
    %v9095 = vpop.f32.mrb[0].mxu0
    %v9096 = vpop.f32.mrb[0].mxu0
    %v9097 = vadd.f32 %v8871, %v9096
    %v9098 = vpop.f32.mrb[0].mxu0
    %9099 = vmatprep.mubr.bf16.mxu0 0
    %9100 = vmatmul.mubr.bf16.gmra.mrb[0].mxu0 %v8909
    %v9101 = vpop.f32.mrb[0].mxu0
    %v9102 = vadd.f32 %v8871, %v9101
    %v9103 = vpop.f32.mrb[0].mxu0
    %v9104 = vpop.f32.mrb[0].mxu0
    %v9105 = vadd.f32 %v8871, %v9104
    %v9106 = vpop.f32.mrb[0].mxu0
    %9107 = vmatprep.mubr.bf16.mxu0 0
    %9108 = vmatmul.mubr.bf16.gmra.mrb[0].mxu0 %v8911
    %v9109 = vpop.f32.mrb[0].mxu0
    %v9110 = vadd.f32 %v8871, %v9109
    %v9111 = vpop.f32.mrb[0].mxu0
    %v9112 = vpop.f32.mrb[0].mxu0
    %v9113 = vadd.f32 %v8871, %v9112
    %v9114 = vpop.f32.mrb[0].mxu0
    %9115 = vmatprep.mubr.bf16.mxu0 0
    %9116 = vmatmul.mubr.bf16.gmra.mrb[0].mxu0 %v8913
    %v9117 = vpop.f32.mrb[0].mxu0
    %v9118 = vadd.f32 %v8871, %v9117
    %v9119 = vpop.f32.mrb[0].mxu0
    %v9120 = vpop.f32.mrb[0].mxu0
    %v9121 = vadd.f32 %v8871, %v9120
    %v9122 = vpop.f32.mrb[0].mxu0
    %9123 = vmatprep.mubr.bf16.mxu0 0
    %9124 = vmatmul.mubr.bf16.gmra.mrb[0].mxu0 %v8915
    %v9125 = vpop.f32.mrb[0].mxu0
    %v9126 = vadd.f32 %v8871, %v9125
    %v9127 = vpop.f32.mrb[0].mxu0
    %v9128 = vpop.f32.mrb[0].mxu0
    %v9129 = vadd.f32 %v8871, %v9128
    %v9130 = vpop.f32.mrb[0].mxu0
    %9131 = vmatprep.mubr.bf16.mxu0 0
    %9132 = vmatmul.mubr.bf16.gmra.mrb[0].mxu0 %v8917
    %v9133 = vpop.f32.mrb[0].mxu0
    %v9134 = vadd.f32 %v8871, %v9133
    %v9135 = vpop.f32.mrb[0].mxu0
    %v9136 = vpop.f32.mrb[0].mxu0
    %v9137 = vadd.f32 %v8871, %v9136
    %v9138 = vpop.f32.mrb[0].mxu0
    %9139 = vmatprep.mubr.bf16.mxu0 0
    %9140 = vmatmul.mubr.bf16.gmra.mrb[0].mxu0 %v8919
    %v9141 = vpop.f32.mrb[0].mxu0
    %v9142 = vadd.f32 %v8871, %v9141
    %v9143 = vpop.f32.mrb[0].mxu0
    %v9144 = vpop.f32.mrb[0].mxu0
    %v9145 = vadd.f32 %v8871, %v9144
    %v9146 = vpop.f32.mrb[0].mxu0
    %9147 = vmatprep.mubr.bf16.mxu0 0
    %9148 = vmatmul.mubr.bf16.gmra.mrb[0].mxu0 %v8921
    %v9149 = vpop.f32.mrb[0].mxu0
    %v9150 = vadd.f32 %v8871, %v9149
    %v9151 = vpop.f32.mrb[0].mxu0
    %v9152 = vpop.f32.mrb[0].mxu0
    %v9153 = vadd.f32 %v8871, %v9152
    %v9154 = vpop.f32.mrb[0].mxu0
    %9155 = vmatprep.mubr.bf16.mxu0 0
    %9156 = vmatmul.mubr.bf16.gmra.mrb[0].mxu0 %v8923
    %v9157 = vpop.f32.mrb[0].mxu0
    %v9158 = vadd.f32 %v8871, %v9157
    %v9159 = vpop.f32.mrb[0].mxu0
    %v9160 = vpop.f32.mrb[0].mxu0
    %v9161 = vadd.f32 %v8871, %v9160
    %v9162 = vpop.f32.mrb[0].mxu0
    %9163 = vmatprep.mubr.bf16.mxu0 0
    %9164 = vmatmul.mubr.bf16.gmra.mrb[0].mxu0 %v8925
    %v9165 = vpop.f32.mrb[0].mxu0
    %v9166 = vadd.f32 %v8871, %v9165
    %v9167 = vpop.f32.mrb[0].mxu0
    %v9168 = vpop.f32.mrb[0].mxu0
    %v9169 = vadd.f32 %v8871, %v9168
    %v9170 = vpop.f32.mrb[0].mxu0
    %9171 = vmatprep.mubr.bf16.mxu0 0
    %9172 = vmatmul.mubr.bf16.gmra.mrb[0].mxu0 %v8927
    %v9173 = vpop.f32.mrb[0].mxu0
    %v9174 = vadd.f32 %v8871, %v9173
    %v9175 = vpop.f32.mrb[0].mxu0
    %v9176 = vpop.f32.mrb[0].mxu0
    %v9177 = vadd.f32 %v8871, %v9176
    %v9178 = vpop.f32.mrb[0].mxu0
    %9179 = vmatprep.mubr.bf16.mxu0 0
    %9180 = vmatmul.mubr.bf16.gmra.mrb[0].mxu0 %v8929
    %v9181 = vpop.f32.mrb[0].mxu0
    %v9182 = vadd.f32 %v8871, %v9181
    %v9183 = vpop.f32.mrb[0].mxu0
    %v9184 = vpop.f32.mrb[0].mxu0
    %v9185 = vadd.f32 %v8871, %v9184
    %v9186 = vpop.f32.mrb[0].mxu0
    %9187 = vmatprep.mubr.bf16.mxu0 0
    %9188 = vmatmul.mubr.bf16.gmra.mrb[0].mxu0 %v8931
    %v9189 = vpop.f32.mrb[0].mxu0
    %v9190 = vadd.f32 %v8871, %v9189
    %v9191 = vpop.f32.mrb[0].mxu0
    %v9192 = vpop.f32.mrb[0].mxu0
    %v9193 = vadd.f32 %v8871, %v9192
    %v9194 = vpop.f32.mrb[0].mxu0
    %9195 = vmatprep.mubr.bf16.mxu0 0
    %9196 = vmatmul.mubr.bf16.gmra.mrb[0].mxu0 %v8933
    %v9197 = vpop.f32.mrb[0].mxu0
    %v9198 = vadd.f32 %v8871, %v9197
    %v9199 = vpop.f32.mrb[0].mxu0
    %v9200 = vpop.f32.mrb[0].mxu0
    %v9201 = vadd.f32 %v8871, %v9200
    %v9202 = vpop.f32.mrb[0].mxu0
    %9203 = vmatprep.mubr.bf16.mxu0 0
    %9204 = vmatmul.mubr.bf16.gmra.mrb[0].mxu0 %v8935
    %v9205 = vpop.f32.mrb[0].mxu0
    %v9206 = vadd.f32 %v8871, %v9205
    %v9207 = vpop.f32.mrb[0].mxu0
    %v9208 = vpop.f32.mrb[0].mxu0
    %v9209 = vadd.f32 %v8871, %v9208
    %v9210 = vpop.f32.mrb[0].mxu0
    %9211 = vmatprep.mubr.bf16.mxu0 0
    %9212 = vmatmul.mubr.bf16.gmra.mrb[0].mxu0 %v8937
    %v9213 = vpop.f32.mrb[0].mxu0
    %v9214 = vadd.f32 %v8871, %v9213
    %v9215 = vpop.f32.mrb[0].mxu0
    %v9216 = vpop.f32.mrb[0].mxu0
    %v9217 = vadd.f32 %v8871, %v9216
    %v9218 = vpop.f32.mrb[0].mxu0
    %9219 = vmatprep.mubr.bf16.mxu0 0
    %9220 = vmatmul.mubr.bf16.gmra.mrb[0].mxu0 %v8939
    %v9221 = vpop.f32.mrb[0].mxu0
    %v9222 = vadd.f32 %v8871, %v9221
    %v9223 = vpop.f32.mrb[0].mxu0
    %v9224 = vpop.f32.mrb[0].mxu0
    %v9225 = vadd.f32 %v8871, %v9224
    %v9226 = vpop.f32.mrb[0].mxu0
    %9227 = vmatprep.mubr.bf16.mxu0 0
    %9228 = vmatmul.mubr.bf16.gmra.mrb[0].mxu0 %v8941
    %v9229 = vpop.f32.mrb[0].mxu0
    %v9230 = vadd.f32 %v8871, %v9229
    %v9231 = vpop.f32.mrb[0].mxu0
    %v9232 = vpop.f32.mrb[0].mxu0
    %v9233 = vadd.f32 %v8871, %v9232
    %v9234 = vpop.f32.mrb[0].mxu0
    %9235 = vdwg.mxu0
    %v9236 = vmax.f32 %v8982, 0.0
    %v9237 = vmax.f32 %v8985, 0.0
    %v9238 = vmax.f32 %v8990, 0.0
    %v9239 = vmax.f32 %v8993, 0.0
    %v9240 = vmax.f32 %v8998, 0.0
    %v9241 = vmax.f32 %v9001, 0.0
    %v9242 = vmax.f32 %v9006, 0.0
    %v9243 = vmax.f32 %v9009, 0.0
    %v9244 = vmax.f32 %v9014, 0.0
    %v9245 = vmax.f32 %v9017, 0.0
    %v9246 = vmax.f32 %v9022, 0.0
    %v9247 = vmax.f32 %v9025, 0.0
    %v9248 = vmax.f32 %v9030, 0.0
    %v9249 = vmax.f32 %v9033, 0.0
    %v9250 = vmax.f32 %v9038, 0.0
    %v9251 = vmax.f32 %v9041, 0.0
    %v9252 = vmax.f32 %v9046, 0.0
    %v9253 = vmax.f32 %v9049, 0.0
    %v9254 = vmax.f32 %v9054, 0.0
    %v9255 = vmax.f32 %v9057, 0.0
    %v9256 = vmax.f32 %v9062, 0.0
    %v9257 = vmax.f32 %v9065, 0.0
    %v9258 = vmax.f32 %v9070, 0.0
    %v9259 = vmax.f32 %v9073, 0.0
    %v9260 = vmax.f32 %v9078, 0.0
    %v9261 = vmax.f32 %v9081, 0.0
    %v9262 = vmax.f32 %v9086, 0.0
    %v9263 = vmax.f32 %v9089, 0.0
    %v9264 = vmax.f32 %v9094, 0.0
    %v9265 = vmax.f32 %v9097, 0.0
    %v9266 = vmax.f32 %v9102, 0.0
    %v9267 = vmax.f32 %v9105, 0.0
    %v9268 = vmax.f32 %v9110, 0.0
    %v9269 = vmax.f32 %v9113, 0.0
    %v9270 = vmax.f32 %v9118, 0.0
    %v9271 = vmax.f32 %v9121, 0.0
    %v9272 = vmax.f32 %v9126, 0.0
    %v9273 = vmax.f32 %v9129, 0.0
    %v9274 = vmax.f32 %v9134, 0.0
    %v9275 = vmax.f32 %v9137, 0.0
    %v9276 = vmax.f32 %v9142, 0.0
    %v9277 = vmax.f32 %v9145, 0.0
    %v9278 = vmax.f32 %v9150, 0.0
    %v9279 = vmax.f32 %v9153, 0.0
    %v9280 = vmax.f32 %v9158, 0.0
    %v9281 = vmax.f32 %v9161, 0.0
    %v9282 = vmax.f32 %v9166, 0.0
    %v9283 = vmax.f32 %v9169, 0.0
    %v9284 = vmax.f32 %v9174, 0.0
    %v9285 = vmax.f32 %v9177, 0.0
    %v9286 = vmax.f32 %v9182, 0.0
    %v9287 = vmax.f32 %v9185, 0.0
    %v9288 = vmax.f32 %v9190, 0.0
    %v9289 = vmax.f32 %v9193, 0.0
    %v9290 = vmax.f32 %v9198, 0.0
    %v9291 = vmax.f32 %v9201, 0.0
    %v9292 = vmax.f32 %v9206, 0.0
    %v9293 = vmax.f32 %v9209, 0.0
    %v9294 = vmax.f32 %v9214, 0.0
    %v9295 = vmax.f32 %v9217, 0.0
    %v9296 = vmax.f32 %v9222, 0.0
    %v9297 = vmax.f32 %v9225, 0.0
    %v9298 = vmax.f32 %v9230, 0.0
    %v9299 = vmax.f32 %v9233, 0.0
    %v9300 = vpack.c.bf16 %v9237, %v9236
    %v9301 = vpack.c.bf16 %v9239, %v9238
    %v9302 = vpack.c.bf16 %v9241, %v9240
    %v9303 = vpack.c.bf16 %v9243, %v9242
    %v9304 = vpack.c.bf16 %v9245, %v9244
    %v9305 = vpack.c.bf16 %v9247, %v9246
    %v9306 = vpack.c.bf16 %v9249, %v9248
    %v9307 = vpack.c.bf16 %v9251, %v9250
    %v9308 = vpack.c.bf16 %v9253, %v9252
    %v9309 = vpack.c.bf16 %v9255, %v9254
    %v9310 = vpack.c.bf16 %v9257, %v9256
    %v9311 = vpack.c.bf16 %v9259, %v9258
    %v9312 = vpack.c.bf16 %v9261, %v9260
    %v9313 = vpack.c.bf16 %v9263, %v9262
    %v9314 = vpack.c.bf16 %v9265, %v9264
    %v9315 = vpack.c.bf16 %v9267, %v9266
    %v9316 = vpack.c.bf16 %v9269, %v9268
    %v9317 = vpack.c.bf16 %v9271, %v9270
    %v9318 = vpack.c.bf16 %v9273, %v9272
    %v9319 = vpack.c.bf16 %v9275, %v9274
    %v9320 = vpack.c.bf16 %v9277, %v9276
    %v9321 = vpack.c.bf16 %v9279, %v9278
    %v9322 = vpack.c.bf16 %v9281, %v9280
    %v9323 = vpack.c.bf16 %v9283, %v9282
    %v9324 = vpack.c.bf16 %v9285, %v9284
    %v9325 = vpack.c.bf16 %v9287, %v9286
    %v9326 = vpack.c.bf16 %v9289, %v9288
    %v9327 = vpack.c.bf16 %v9291, %v9290
    %v9328 = vpack.c.bf16 %v9293, %v9292
    %v9329 = vpack.c.bf16 %v9295, %v9294
    %v9330 = vpack.c.bf16 %v9297, %v9296
    %v9331 = vpack.c.bf16 %v9299, %v9298
    %v9364 = vunpack.c.l.b16 %v9300
    %v9365 = vunpack.c.h.b16 %v9300
    %v9366 = vunpack.c.l.b16 %v9301
    %v9367 = vunpack.c.h.b16 %v9301
    %v9368 = vunpack.c.l.b16 %v9302
    %v9369 = vunpack.c.h.b16 %v9302
    %v9370 = vunpack.c.l.b16 %v9303
    %v9371 = vunpack.c.h.b16 %v9303
    %v9372 = vunpack.c.l.b16 %v9304
    %v9373 = vunpack.c.h.b16 %v9304
    %v9374 = vunpack.c.l.b16 %v9305
    %v9375 = vunpack.c.h.b16 %v9305
    %v9376 = vunpack.c.l.b16 %v9306
    %v9377 = vunpack.c.h.b16 %v9306
    %v9378 = vunpack.c.l.b16 %v9307
    %v9379 = vunpack.c.h.b16 %v9307
    %v9380 = vunpack.c.l.b16 %v9308
    %v9381 = vunpack.c.h.b16 %v9308
    %v9382 = vunpack.c.l.b16 %v9309
    %v9383 = vunpack.c.h.b16 %v9309
    %v9384 = vunpack.c.l.b16 %v9310
    %v9385 = vunpack.c.h.b16 %v9310
    %v9386 = vunpack.c.l.b16 %v9311
    %v9387 = vunpack.c.h.b16 %v9311
    %v9388 = vunpack.c.l.b16 %v9312
    %v9389 = vunpack.c.h.b16 %v9312
    %v9390 = vunpack.c.l.b16 %v9313
    %v9391 = vunpack.c.h.b16 %v9313
    %v9392 = vunpack.c.l.b16 %v9314
    %v9393 = vunpack.c.h.b16 %v9314
    %v9394 = vunpack.c.l.b16 %v9315
    %v9395 = vunpack.c.h.b16 %v9315
    %v9396 = vunpack.c.l.b16 %v9316
    %v9397 = vunpack.c.h.b16 %v9316
    %v9398 = vunpack.c.l.b16 %v9317
    %v9399 = vunpack.c.h.b16 %v9317
    %v9400 = vunpack.c.l.b16 %v9318
    %v9401 = vunpack.c.h.b16 %v9318
    %v9402 = vunpack.c.l.b16 %v9319
    %v9403 = vunpack.c.h.b16 %v9319
    %v9404 = vunpack.c.l.b16 %v9320
    %v9405 = vunpack.c.h.b16 %v9320
    %v9406 = vunpack.c.l.b16 %v9321
    %v9407 = vunpack.c.h.b16 %v9321
    %v9408 = vunpack.c.l.b16 %v9322
    %v9409 = vunpack.c.h.b16 %v9322
    %v9410 = vunpack.c.l.b16 %v9323
    %v9411 = vunpack.c.h.b16 %v9323
    %v9412 = vunpack.c.l.b16 %v9324
    %v9413 = vunpack.c.h.b16 %v9324
    %v9414 = vunpack.c.l.b16 %v9325
    %v9415 = vunpack.c.h.b16 %v9325
    %v9416 = vunpack.c.l.b16 %v9326
    %v9417 = vunpack.c.h.b16 %v9326
    %v9418 = vunpack.c.l.b16 %v9327
    %v9419 = vunpack.c.h.b16 %v9327
    %v9420 = vunpack.c.l.b16 %v9328
    %v9421 = vunpack.c.h.b16 %v9328
    %v9422 = vunpack.c.l.b16 %v9329
    %v9423 = vunpack.c.h.b16 %v9329
    %v9424 = vunpack.c.l.b16 %v9330
    %v9425 = vunpack.c.h.b16 %v9330
    %v9426 = vunpack.c.l.b16 %v9331
    %v9427 = vunpack.c.h.b16 %v9331
    %v9428 = vpack.c.b16 %v9364, %v9364
    %v9429 = vpack.c.b16 %v9365, %v9365
    %v9430 = vpack.c.b16 %v9366, %v9366
    %v9431 = vpack.c.b16 %v9367, %v9367
    %v9432 = vpack.c.b16 %v9368, %v9368
    %v9433 = vpack.c.b16 %v9369, %v9369
    %v9434 = vpack.c.b16 %v9370, %v9370
    %v9435 = vpack.c.b16 %v9371, %v9371
    %v9436 = vpack.c.b16 %v9372, %v9372
    %v9437 = vpack.c.b16 %v9373, %v9373
    %v9438 = vpack.c.b16 %v9374, %v9374
    %v9439 = vpack.c.b16 %v9375, %v9375
    %v9440 = vpack.c.b16 %v9376, %v9376
    %v9441 = vpack.c.b16 %v9377, %v9377
    %v9442 = vpack.c.b16 %v9378, %v9378
    %v9443 = vpack.c.b16 %v9379, %v9379
    %v9444 = vpack.c.b16 %v9380, %v9380
    %v9445 = vpack.c.b16 %v9381, %v9381
    %v9446 = vpack.c.b16 %v9382, %v9382
    %v9447 = vpack.c.b16 %v9383, %v9383
    %v9448 = vpack.c.b16 %v9384, %v9384
    %v9449 = vpack.c.b16 %v9385, %v9385
    %v9450 = vpack.c.b16 %v9386, %v9386
    %v9451 = vpack.c.b16 %v9387, %v9387
    %v9452 = vpack.c.b16 %v9388, %v9388
    %v9453 = vpack.c.b16 %v9389, %v9389
    %v9454 = vpack.c.b16 %v9390, %v9390
    %v9455 = vpack.c.b16 %v9391, %v9391
    %v9456 = vpack.c.b16 %v9392, %v9392
    %v9457 = vpack.c.b16 %v9393, %v9393
    %v9458 = vpack.c.b16 %v9394, %v9394
    %v9459 = vpack.c.b16 %v9395, %v9395
    %v9460 = vpack.c.b16 %v9396, %v9396
    %v9461 = vpack.c.b16 %v9397, %v9397
    %v9462 = vpack.c.b16 %v9398, %v9398
    %v9463 = vpack.c.b16 %v9399, %v9399
    %v9464 = vpack.c.b16 %v9400, %v9400
    %v9465 = vpack.c.b16 %v9401, %v9401
    %v9466 = vpack.c.b16 %v9402, %v9402
    %v9467 = vpack.c.b16 %v9403, %v9403
    %v9468 = vpack.c.b16 %v9404, %v9404
    %v9469 = vpack.c.b16 %v9405, %v9405
    %v9470 = vpack.c.b16 %v9406, %v9406
    %v9471 = vpack.c.b16 %v9407, %v9407
    %v9472 = vpack.c.b16 %v9408, %v9408
    %v9473 = vpack.c.b16 %v9409, %v9409
    %v9474 = vpack.c.b16 %v9410, %v9410
    %v9475 = vpack.c.b16 %v9411, %v9411
    %v9476 = vpack.c.b16 %v9412, %v9412
    %v9477 = vpack.c.b16 %v9413, %v9413
    %v9478 = vpack.c.b16 %v9414, %v9414
    %v9479 = vpack.c.b16 %v9415, %v9415
    %v9480 = vpack.c.b16 %v9416, %v9416
    %v9481 = vpack.c.b16 %v9417, %v9417
    %v9482 = vpack.c.b16 %v9418, %v9418
    %v9483 = vpack.c.b16 %v9419, %v9419
    %v9484 = vpack.c.b16 %v9420, %v9420
    %v9485 = vpack.c.b16 %v9421, %v9421
    %v9486 = vpack.c.b16 %v9422, %v9422
    %v9487 = vpack.c.b16 %v9423, %v9423
    %v9488 = vpack.c.b16 %v9424, %v9424
    %v9489 = vpack.c.b16 %v9425, %v9425
    %v9490 = vpack.c.b16 %v9426, %v9426
    %v9491 = vpack.c.b16 %v9427, %v9427
    %vm9556 = vcmask 125952
    %9557 = vst.msk [vmem:[#allocation4] sm:$0xf] %vm9556, %v9428
    %9558 = vst.msk [vmem:[#allocation4 + $0x4] sm:$0xf] %vm9556, %v9429
    %9559 = vst.msk [vmem:[#allocation4 + $0x8] sm:$0xf] %vm9556, %v9430
    %9560 = vst.msk [vmem:[#allocation4 + $0xc] sm:$0xf] %vm9556, %v9431
    %9561 = vst.msk [vmem:[#allocation4 + $0x10] sm:$0xf] %vm9556, %v9432
    %9562 = vst.msk [vmem:[#allocation4 + $0x14] sm:$0xf] %vm9556, %v9433
    %9563 = vst.msk [vmem:[#allocation4 + $0x18] sm:$0xf] %vm9556, %v9434
    %9564 = vst.msk [vmem:[#allocation4 + $0x1c] sm:$0xf] %vm9556, %v9435
    %9565 = vst.msk [vmem:[#allocation4 + $0x20] sm:$0xf] %vm9556, %v9436
    %9566 = vst.msk [vmem:[#allocation4 + $0x24] sm:$0xf] %vm9556, %v9437
    %9567 = vst.msk [vmem:[#allocation4 + $0x28] sm:$0xf] %vm9556, %v9438
    %9568 = vst.msk [vmem:[#allocation4 + $0x2c] sm:$0xf] %vm9556, %v9439
    %9569 = vst.msk [vmem:[#allocation4 + $0x30] sm:$0xf] %vm9556, %v9440
    %9570 = vst.msk [vmem:[#allocation4 + $0x34] sm:$0xf] %vm9556, %v9441
    %9571 = vst.msk [vmem:[#allocation4 + $0x38] sm:$0xf] %vm9556, %v9442
    %9572 = vst.msk [vmem:[#allocation4 + $0x3c] sm:$0xf] %vm9556, %v9443
    %9573 = vst.msk [vmem:[#allocation4 + $0x40] sm:$0xf] %vm9556, %v9444
    %9574 = vst.msk [vmem:[#allocation4 + $0x44] sm:$0xf] %vm9556, %v9445
    %9575 = vst.msk [vmem:[#allocation4 + $0x48] sm:$0xf] %vm9556, %v9446
    %9576 = vst.msk [vmem:[#allocation4 + $0x4c] sm:$0xf] %vm9556, %v9447
    %9577 = vst.msk [vmem:[#allocation4 + $0x50] sm:$0xf] %vm9556, %v9448
    %9578 = vst.msk [vmem:[#allocation4 + $0x54] sm:$0xf] %vm9556, %v9449
    %9579 = vst.msk [vmem:[#allocation4 + $0x58] sm:$0xf] %vm9556, %v9450
    %9580 = vst.msk [vmem:[#allocation4 + $0x5c] sm:$0xf] %vm9556, %v9451
    %9581 = vst.msk [vmem:[#allocation4 + $0x60] sm:$0xf] %vm9556, %v9452
    %9582 = vst.msk [vmem:[#allocation4 + $0x64] sm:$0xf] %vm9556, %v9453
    %9583 = vst.msk [vmem:[#allocation4 + $0x68] sm:$0xf] %vm9556, %v9454
    %9584 = vst.msk [vmem:[#allocation4 + $0x6c] sm:$0xf] %vm9556, %v9455
    %9585 = vst.msk [vmem:[#allocation4 + $0x70] sm:$0xf] %vm9556, %v9456
    %9586 = vst.msk [vmem:[#allocation4 + $0x74] sm:$0xf] %vm9556, %v9457
    %9587 = vst.msk [vmem:[#allocation4 + $0x78] sm:$0xf] %vm9556, %v9458
    %9588 = vst.msk [vmem:[#allocation4 + $0x7c] sm:$0xf] %vm9556, %v9459
    %9589 = vst.msk [vmem:[#allocation4 + $0x80] sm:$0xf] %vm9556, %v9460
    %9590 = vst.msk [vmem:[#allocation4 + $0x84] sm:$0xf] %vm9556, %v9461
    %9591 = vst.msk [vmem:[#allocation4 + $0x88] sm:$0xf] %vm9556, %v9462
    %9592 = vst.msk [vmem:[#allocation4 + $0x8c] sm:$0xf] %vm9556, %v9463
    %9593 = vst.msk [vmem:[#allocation4 + $0x90] sm:$0xf] %vm9556, %v9464
    %9594 = vst.msk [vmem:[#allocation4 + $0x94] sm:$0xf] %vm9556, %v9465
    %9595 = vst.msk [vmem:[#allocation4 + $0x98] sm:$0xf] %vm9556, %v9466
    %9596 = vst.msk [vmem:[#allocation4 + $0x9c] sm:$0xf] %vm9556, %v9467
    %9597 = vst.msk [vmem:[#allocation4 + $0xa0] sm:$0xf] %vm9556, %v9468
    %9598 = vst.msk [vmem:[#allocation4 + $0xa4] sm:$0xf] %vm9556, %v9469
    %9599 = vst.msk [vmem:[#allocation4 + $0xa8] sm:$0xf] %vm9556, %v9470
    %9600 = vst.msk [vmem:[#allocation4 + $0xac] sm:$0xf] %vm9556, %v9471
    %9601 = vst.msk [vmem:[#allocation4 + $0xb0] sm:$0xf] %vm9556, %v9472
    %9602 = vst.msk [vmem:[#allocation4 + $0xb4] sm:$0xf] %vm9556, %v9473
    %9603 = vst.msk [vmem:[#allocation4 + $0xb8] sm:$0xf] %vm9556, %v9474
    %9604 = vst.msk [vmem:[#allocation4 + $0xbc] sm:$0xf] %vm9556, %v9475
    %9605 = vst.msk [vmem:[#allocation4 + $0xc0] sm:$0xf] %vm9556, %v9476
    %9606 = vst.msk [vmem:[#allocation4 + $0xc4] sm:$0xf] %vm9556, %v9477
    %9607 = vst.msk [vmem:[#allocation4 + $0xc8] sm:$0xf] %vm9556, %v9478
    %9608 = vst.msk [vmem:[#allocation4 + $0xcc] sm:$0xf] %vm9556, %v9479
    %9609 = vst.msk [vmem:[#allocation4 + $0xd0] sm:$0xf] %vm9556, %v9480
    %9610 = vst.msk [vmem:[#allocation4 + $0xd4] sm:$0xf] %vm9556, %v9481
    %9611 = vst.msk [vmem:[#allocation4 + $0xd8] sm:$0xf] %vm9556, %v9482
    %9612 = vst.msk [vmem:[#allocation4 + $0xdc] sm:$0xf] %vm9556, %v9483
    %9613 = vst.msk [vmem:[#allocation4 + $0xe0] sm:$0xf] %vm9556, %v9484
    %9614 = vst.msk [vmem:[#allocation4 + $0xe4] sm:$0xf] %vm9556, %v9485
    %9615 = vst.msk [vmem:[#allocation4 + $0xe8] sm:$0xf] %vm9556, %v9486
    %9616 = vst.msk [vmem:[#allocation4 + $0xec] sm:$0xf] %vm9556, %v9487
    %9617 = vst.msk [vmem:[#allocation4 + $0xf0] sm:$0xf] %vm9556, %v9488
    %9618 = vst.msk [vmem:[#allocation4 + $0xf4] sm:$0xf] %vm9556, %v9489
    %9619 = vst.msk [vmem:[#allocation4 + $0xf8] sm:$0xf] %vm9556, %v9490
    %9620 = vst.msk [vmem:[#allocation4 + $0xfc] sm:$0xf] %vm9556, %v9491
    // Predicated region
    $region30: #{tpu_custom_call.1} parent=1 // pred_check
      _
    $region31: #{tpu_custom_call.1} parent=1 // pred_check_branch
      %9622 = sbr.rel (0) target = $region33
    $region32: #{tpu_custom_call.1} parent=1 // pred_region
      %s9624 = ssub.s32 4096, 4096
      %9625 = vsyncadd [#allocation5], %s9624
      %s9626 = sshll.u32 [#allocation4], 4
      %s9627 = int_to_ptr.vmem [resolvable:$true] %s9626
      %9632 = dma.vmem_to_hbm [thread:$0]  %s9627, 4096, %s7, [#allocation5], 64, 64, 4
    $region33: #{tpu_custom_call.1} parent=1 // pred_fallthru
      _
    // Predicated region
    $region34: #{tpu_custom_call.1} parent=1 // pred_check
      _
    $region35: #{tpu_custom_call.1} parent=1 // pred_check_branch
      %9634 = sbr.rel (0) target = $region37
    $region36: #{tpu_custom_call.1} parent=1 // pred_region
      %9635 = dma.done [#allocation5], 4096
    $region37: #{tpu_custom_call.1} parent=1 // pred_fallthru
      _
    %9636 = vsyncpa [#allocation5], 1

</llo_original>
